<compile_context>
chip_gen: v6e
topology: v6e:2x2x1
jax: 0.10.0
libtpu: 0.0.40
codegen_flags: <defaults>
</compile_context>

<pallas_src>
import functools

import jax
import jax.numpy as jnp
from jax.experimental import pallas as pl
from jax.experimental.pallas import tpu as pltpu


LANES = 128


def _round_up(x, m):
    return (x + m - 1) // m * m


# ---------------------------------------------------------------------------
# Kernel 1: fused Conv(5x5, valid) + folded-BN + ReLU + MaxPool(2x2).
# One image per grid step; im2col patches are read straight from the VMEM-resident
# activation block (never written to HBM).
# ---------------------------------------------------------------------------

def conv_bn_relu_pool_kernel(x_ref, w_ref, shift_ref, o_ref, row_scr, *,
                             ksize, cin, wo, hp, wp):
    """x_ref: (1, H, W, cin) f32; w_ref: (ksize*ksize*cin, 128) bf16 (BN scale folded);
    shift_ref: (1, 128) f32; o_ref: (1, hp, wp, 128) f32; row_scr: (wo, 128) f32 VMEM.
    """
    shift = shift_ref[...]                                        # (1, 128)

    @pl.loop(0, hp)
    def _(i):
        # --- compute the two conv output rows (2i, 2i+1) of this pool row ---
        row_max = None
        for a in range(2):                                        # unrolled pool pair
            h = 2 * i + a
            acc = jnp.zeros((wo, LANES), jnp.float32)
            for di in range(ksize):                               # unrolled 5x5 taps
                for dj in range(ksize):
                    xs = x_ref[0, h + di, pl.ds(dj, wo), :]       # (wo, cin)
                    ws = w_ref[pl.ds((di * ksize + dj) * cin, cin), :]   # (cin, 128)
                    acc = acc + jnp.dot(xs.astype(jnp.bfloat16), ws,
                                        preferred_element_type=jnp.float32)
            row_max = acc if row_max is None else jnp.maximum(row_max, acc)

        # --- 2x2 max-pool: height pair done above, width pair via strided read ---
        row_scr[...] = row_max
        pooled = jnp.maximum(row_scr[pl.ds(0, wp, stride=2), :],
                             row_scr[pl.ds(1, wp, stride=2), :])  # (wp, 128)
        # Folded-BN shift + ReLU (both commute with the spatial max; scale is already
        # folded into the weights).
        pooled = jnp.maximum(pooled + shift, 0.0)
        o_ref[0, i] = pooled.astype(o_ref.dtype)


def conv_bn_relu_pool(x, w_col, shift, *, ksize):
    """x: (B, H, W, Cin) f32 -> (B, (H-k+1)//2, (W-k+1)//2, 128) f32 (lane-dense)."""
    B, H, W, cin = x.shape
    ho, wo = H - ksize + 1, W - ksize + 1
    hp, wp = ho // 2, wo // 2
    kernel = functools.partial(conv_bn_relu_pool_kernel, ksize=ksize, cin=cin,
                               wo=wo, hp=hp, wp=wp)
    return pl.pallas_call(
        kernel,
        out_shape=jax.ShapeDtypeStruct((B, hp, wp, LANES), jnp.float32),
        grid=(B,),
        in_specs=[
            pl.BlockSpec((1, H, W, cin), lambda b: (b, 0, 0, 0)),
            pl.BlockSpec((ksize * ksize * cin, LANES), lambda b: (0, 0)),
            pl.BlockSpec((1, LANES), lambda b: (0, 0)),
        ],
        out_specs=pl.BlockSpec((1, hp, wp, LANES), lambda b: (b, 0, 0, 0)),
        scratch_shapes=[pltpu.VMEM((wo, LANES), jnp.float32)],
        compiler_params=pltpu.CompilerParams(dimension_semantics=("parallel",)),
    )(x, w_col, shift)


# ---------------------------------------------------------------------------
# Kernel 2: fused classifier head (Linear+BN+ReLU -> Linear+BN+ReLU -> Linear).
# All three matmuls in one launch; intermediates never leave VMEM/vregs.
# ---------------------------------------------------------------------------

def mlp_head_kernel(x_ref, w1_ref, s1_ref, w2_ref, s2_ref, w3_ref, s3_ref, o_ref):
    h = jnp.dot(x_ref[...].astype(jnp.bfloat16), w1_ref[...],
                preferred_element_type=jnp.float32)
    h = jnp.maximum(h + s1_ref[...], 0.0)                 # Linear + folded BN + ReLU
    h = jnp.dot(h.astype(jnp.bfloat16), w2_ref[...],
                preferred_element_type=jnp.float32)
    h = jnp.maximum(h + s2_ref[...], 0.0)                 # Linear + folded BN + ReLU
    h = jnp.dot(h.astype(jnp.bfloat16), w3_ref[...],
                preferred_element_type=jnp.float32)
    o_ref[...] = (h + s3_ref[...]).astype(o_ref.dtype)    # Linear + bias


def mlp_head(feat, w1, s1, w2, s2, w3, s3):
    """feat: (B, K) f32 -> (B, 128) f32 (columns >= 10 are zero padding)."""
    B, K = feat.shape
    tm = 256 if B >= 256 else _round_up(B, 8)             # fixed tile, never one huge block
    Bp = _round_up(B, tm)
    if Bp != B:
        feat = jnp.pad(feat, ((0, Bp - B), (0, 0)))
    out = pl.pallas_call(
        mlp_head_kernel,
        out_shape=jax.ShapeDtypeStruct((Bp, LANES), jnp.float32),
        grid=(Bp // tm,),
        in_specs=[
            pl.BlockSpec((tm, K), lambda i: (i, 0)),
            pl.BlockSpec(w1.shape, lambda i: (0, 0)),
            pl.BlockSpec((1, LANES), lambda i: (0, 0)),
            pl.BlockSpec(w2.shape, lambda i: (0, 0)),
            pl.BlockSpec((1, LANES), lambda i: (0, 0)),
            pl.BlockSpec(w3.shape, lambda i: (0, 0)),
            pl.BlockSpec((1, LANES), lambda i: (0, 0)),
        ],
        out_specs=pl.BlockSpec((tm, LANES), lambda i: (i, 0)),
        compiler_params=pltpu.CompilerParams(dimension_semantics=("parallel",)),
    )(feat, w1, s1, w2, s2, w3, s3)
    return out[:B]


# ---------------------------------------------------------------------------
# Host-side glue: BN folding and kernel-ready (scale-folded, 128-padded) weights.
# ---------------------------------------------------------------------------

def fold_bn(gamma, beta, mean, var, bias, eps=1e-5):
    """Fold eval-mode BatchNorm applied after (conv/linear + bias)."""
    s = gamma / jnp.sqrt(var + eps)
    shift = (bias - mean) * s + beta
    return s, shift


def _pad_vec(v):
    """(n,) -> (1, 128) f32, zero padded."""
    return jnp.pad(v.astype(jnp.float32), (0, LANES - v.shape[0])).reshape(1, LANES)


def prep_conv(w_oihw, scale, cin_pad):
    """PyTorch (Cout, Cin, kh, kw) -> (kh*kw*cin_pad, 128) bf16, BN scale folded."""
    co, ci, kh, kw = w_oihw.shape
    w = jnp.transpose(w_oihw, (2, 3, 1, 0)) * scale[None, None, None, :]   # (kh,kw,ci,co)
    w = jnp.pad(w, ((0, 0), (0, 0), (0, cin_pad - ci), (0, LANES - co)))
    return w.reshape(kh * kw * cin_pad, LANES).astype(jnp.bfloat16)


def prep_fc1(w_oi, scale):
    """fc1 (100, 768) with k = c*16 + h*4 + w (NCHW flatten) -> (4*4*128, 128) bf16
    matching our NHWC(128-channel) flatten, so no runtime activation transpose."""
    w = w_oi.reshape(100, 48, 4, 4)
    w = jnp.transpose(w, (2, 3, 1, 0)) * scale[None, None, None, :]        # (h, w, c, o)
    w = jnp.pad(w, ((0, 0), (0, 0), (0, LANES - 48), (0, LANES - 100)))
    return w.reshape(4 * 4 * LANES, LANES).astype(jnp.bfloat16)


def prep_fc(w_oi, scale):
    """PyTorch (out, in) -> (in_pad128, 128) bf16, BN scale folded into columns."""
    o, i = w_oi.shape
    w = w_oi.T * scale[None, :]
    w = jnp.pad(w, ((0, _round_up(i, LANES) - i), (0, LANES - o)))
    return w.astype(jnp.bfloat16)


def init_params(key):
    ks = jax.random.split(key, 16)
    p = {}
    # Conv1: (32, 3, 5, 5), BN2d(32)
    p["conv1_w"] = 0.05 * jax.random.normal(ks[0], (32, 3, 5, 5), jnp.float32)
    p["conv1_b"] = 0.01 * jax.random.normal(ks[1], (32,), jnp.float32)
    p["bn1_g"] = 1.0 + 0.1 * jax.random.normal(ks[2], (32,), jnp.float32)
    p["bn1_b"] = 0.01 * jax.random.normal(ks[3], (32,), jnp.float32)
    # Conv2: (48, 32, 5, 5), BN2d(48)
    p["conv2_w"] = 0.05 * jax.random.normal(ks[4], (48, 32, 5, 5), jnp.float32)
    p["conv2_b"] = 0.01 * jax.random.normal(ks[5], (48,), jnp.float32)
    p["bn2_g"] = 1.0 + 0.1 * jax.random.normal(ks[6], (48,), jnp.float32)
    p["bn2_b"] = 0.01 * jax.random.normal(ks[7], (48,), jnp.float32)
    # Linear(768, 100) + BN1d(100)
    p["fc1_w"] = 0.05 * jax.random.normal(ks[8], (100, 768), jnp.float32)
    p["fc1_b"] = 0.01 * jax.random.normal(ks[9], (100,), jnp.float32)
    p["bn3_g"] = 1.0 + 0.1 * jax.random.normal(ks[10], (100,), jnp.float32)
    p["bn3_b"] = 0.01 * jax.random.normal(ks[11], (100,), jnp.float32)
    # Linear(100, 100) + BN1d(100)
    p["fc2_w"] = 0.05 * jax.random.normal(ks[12], (100, 100), jnp.float32)
    p["fc2_b"] = 0.01 * jax.random.normal(ks[13], (100,), jnp.float32)
    p["bn4_g"] = 1.0 + 0.1 * jax.random.normal(ks[14], (100,), jnp.float32)
    p["bn4_b"] = 0.01 * jax.random.normal(ks[15], (100,), jnp.float32)
    # Linear(100, 10)
    p["fc3_w"] = 0.05 * jax.random.normal(jax.random.fold_in(key, 99), (10, 100), jnp.float32)
    p["fc3_b"] = 0.01 * jax.random.normal(jax.random.fold_in(key, 100), (10,), jnp.float32)
    # Running stats (PyTorch BN defaults): mean=0, var=1
    for n, c in (("bn1", 32), ("bn2", 48), ("bn3", 100), ("bn4", 100)):
        p[n + "_mean"] = jnp.zeros((c,), jnp.float32)
        p[n + "_var"] = jnp.ones((c,), jnp.float32)
    return p


# ---------------------------------------------------------------------------
# Forward pass
# ---------------------------------------------------------------------------

def simple_classifier_forward(x_nchw, p):
    x = jnp.transpose(x_nchw.astype(jnp.float32), (0, 2, 3, 1))        # (B, 28, 28, 3)
    B = x.shape[0]

    # --- feature block 1: Conv(3->32, 5x5) + BN + ReLU + MaxPool(2), fully fused ---
    s1, t1 = fold_bn(p["bn1_g"], p["bn1_b"], p["bn1_mean"], p["bn1_var"], p["conv1_b"])
    w1 = prep_conv(p["conv1_w"], s1, cin_pad=3)
    y = conv_bn_relu_pool(x, w1, _pad_vec(t1), ksize=5)                 # (B, 12, 12, 128)

    # --- feature block 2: Conv(32->48, 5x5) + BN + Dropout2d(eval id) + ReLU + MaxPool(2) ---
    s2, t2 = fold_bn(p["bn2_g"], p["bn2_b"], p["bn2_mean"], p["bn2_var"], p["conv2_b"])
    w2 = prep_conv(p["conv2_w"], s2, cin_pad=LANES)
    y = conv_bn_relu_pool(y, w2, _pad_vec(t2), ksize=5)                 # (B, 4, 4, 128)

    # --- classifier head: single fused kernel; flatten handled by fc1-weight permute ---
    feat = y.reshape(B, 4 * 4 * LANES)                                  # (B, 2048)
    s3, t3 = fold_bn(p["bn3_g"], p["bn3_b"], p["bn3_mean"], p["bn3_var"], p["fc1_b"])
    s4, t4 = fold_bn(p["bn4_g"], p["bn4_b"], p["bn4_mean"], p["bn4_var"], p["fc2_b"])
    logits = mlp_head(
        feat,
        prep_fc1(p["fc1_w"], s3), _pad_vec(t3),
        prep_fc(p["fc2_w"], s4), _pad_vec(t4),
        prep_fc(p["fc3_w"], jnp.ones((10,), jnp.float32)), _pad_vec(p["fc3_b"]),
    )
    return logits[:, :10]


# ---------------------------------------------------------------------------
# Main
# ---------------------------------------------------------------------------

if __name__ == "__main__":
    key = jax.random.PRNGKey(0)
    k_in, k_par = jax.random.split(key)

    # Input spatial size must be 28x28 so the feature map flattens to 48*4*4.
    B = 2
    x = jax.random.normal(k_in, (B, 3, 28, 28), jnp.float32)   # NCHW like PyTorch

    params = init_params(k_par)

    fwd = jax.jit(simple_classifier_forward)
    out = jax.block_until_ready(fwd(x, params))

    assert out.shape == (B, 10), out.shape
    assert bool(jnp.all(jnp.isfinite(out)))
    print("KERNEL_OK")
</pallas_src>

<mosaic_0001>
module attributes {stable_mosaic.version = 11 : i64} {
  func.func @conv_bn_relu_pool_kernel(%arg0: i32, %arg1: memref<1x28x28x3xf32, #tpu.memory_space<vmem>>, %arg2: memref<75x128xbf16, #tpu.memory_space<vmem>>, %arg3: memref<1x128xf32, #tpu.memory_space<vmem>>, %arg4: memref<1x12x12x128xf32, #tpu.memory_space<vmem>>, %arg5: memref<24x128xf32, #tpu.memory_space<vmem>>) attributes {dimension_semantics = [#tpu.dimension_semantics<parallel>], iteration_bounds = array<i64: 2>, scalar_prefetch = 0 : i64, scratch_operands = 1 : i64, tpu.core_type = #tpu.core_type<tc>, window_params = [{transform_indices = @transform_0, window_bounds = array<i64: 1, 28, 28, 3>}, {pipeline_mode = #tpu.pipeline_mode<synchronous>, transform_indices = @transform_1, window_bounds = array<i64: 75, 128>}, {pipeline_mode = #tpu.pipeline_mode<synchronous>, transform_indices = @transform_2, window_bounds = array<i64: 1, 128>}, {transform_indices = @transform_3, window_bounds = array<i64: 1, 12, 12, 128>}]} {
    %c0 = arith.constant 0 : index
    %c0_0 = arith.constant 0 : index
    %0 = vector.load %arg3[%c0, %c0_0] : memref<1x128xf32, #tpu.memory_space<vmem>>, vector<1x128xf32>
    %c0_i32 = arith.constant 0 : i32
    %c12_i32 = arith.constant 12 : i32
    %1 = arith.addi %c0_i32, %c12_i32 : i32
    %c1_i32 = arith.constant 1 : i32
    scf.for %arg6 = %c0_i32 to %1 step %c1_i32  : i32 {
      %c1_i32_2 = arith.constant 1 : i32
      %2 = arith.muli %arg6, %c1_i32_2 : i32
      %c0_i32_3 = arith.constant 0 : i32
      %3 = arith.addi %c0_i32_3, %2 : i32
      %c2_i32 = arith.constant 2 : i32
      %4 = arith.muli %c2_i32, %3 : i32
      %c0_i32_4 = arith.constant 0 : i32
      %5 = arith.addi %4, %c0_i32_4 : i32
      %cst = arith.constant 0.000000e+00 : f32
      %6 = vector.broadcast %cst : f32 to vector<24x128xf32>
      %c0_i32_5 = arith.constant 0 : i32
      %7 = arith.addi %5, %c0_i32_5 : i32
      %c0_6 = arith.constant 0 : index
      %8 = arith.index_cast %7 : i32 to index
      %c0_7 = arith.constant 0 : index
      %c0_8 = arith.constant 0 : index
      %9 = vector.load %arg1[%c0_6, %8, %c0_7, %c0_8] : memref<1x28x28x3xf32, #tpu.memory_space<vmem>>, vector<1x1x24x3xf32>
      %10 = vector.shape_cast %9 : vector<1x1x24x3xf32> to vector<24x3xf32>
      %c0_9 = arith.constant 0 : index
      %c0_10 = arith.constant 0 : index
      %11 = vector.load %arg2[%c0_9, %c0_10] : memref<75x128xbf16, #tpu.memory_space<vmem>>, vector<3x128xbf16>
      %12 = arith.truncf %10 : vector<24x3xf32> to vector<24x3xbf16>
      %cst_11 = arith.constant dense<0.000000e+00> : vector<24x128xf32>
      %13 = tpu.matmul %12, %11, %cst_11 {dimension_numbers = #tpu.dot_dimension_numbers<[1], [0], [0], [1], [0, 0, 1, 1], [], []>} : vector<24x3xbf16>, vector<3x128xbf16>, vector<24x128xf32> -> vector<24x128xf32>
      %14 = arith.addf %6, %13 : vector<24x128xf32>
      %c0_i32_12 = arith.constant 0 : i32
      %15 = arith.addi %5, %c0_i32_12 : i32
      %c0_13 = arith.constant 0 : index
      %16 = arith.index_cast %15 : i32 to index
      %c1 = arith.constant 1 : index
      %c0_14 = arith.constant 0 : index
      %17 = vector.load %arg1[%c0_13, %16, %c1, %c0_14] : memref<1x28x28x3xf32, #tpu.memory_space<vmem>>, vector<1x1x24x3xf32>
      %18 = vector.shape_cast %17 : vector<1x1x24x3xf32> to vector<24x3xf32>
      %c3 = arith.constant 3 : index
      %c0_15 = arith.constant 0 : index
      %19 = vector.load %arg2[%c3, %c0_15] : memref<75x128xbf16, #tpu.memory_space<vmem>>, vector<3x128xbf16>
      %20 = arith.truncf %18 : vector<24x3xf32> to vector<24x3xbf16>
      %cst_16 = arith.constant dense<0.000000e+00> : vector<24x128xf32>
      %21 = tpu.matmul %20, %19, %cst_16 {dimension_numbers = #tpu.dot_dimension_numbers<[1], [0], [0], [1], [0, 0, 1, 1], [], []>} : vector<24x3xbf16>, vector<3x128xbf16>, vector<24x128xf32> -> vector<24x128xf32>
      %22 = arith.addf %14, %21 : vector<24x128xf32>
      %c0_i32_17 = arith.constant 0 : i32
      %23 = arith.addi %5, %c0_i32_17 : i32
      %c0_18 = arith.constant 0 : index
      %24 = arith.index_cast %23 : i32 to index
      %c2 = arith.constant 2 : index
      %c0_19 = arith.constant 0 : index
      %25 = vector.load %arg1[%c0_18, %24, %c2, %c0_19] : memref<1x28x28x3xf32, #tpu.memory_space<vmem>>, vector<1x1x24x3xf32>
      %26 = vector.shape_cast %25 : vector<1x1x24x3xf32> to vector<24x3xf32>
      %c6 = arith.constant 6 : index
      %c0_20 = arith.constant 0 : index
      %27 = vector.load %arg2[%c6, %c0_20] : memref<75x128xbf16, #tpu.memory_space<vmem>>, vector<3x128xbf16>
      %28 = arith.truncf %26 : vector<24x3xf32> to vector<24x3xbf16>
      %cst_21 = arith.constant dense<0.000000e+00> : vector<24x128xf32>
      %29 = tpu.matmul %28, %27, %cst_21 {dimension_numbers = #tpu.dot_dimension_numbers<[1], [0], [0], [1], [0, 0, 1, 1], [], []>} : vector<24x3xbf16>, vector<3x128xbf16>, vector<24x128xf32> -> vector<24x128xf32>
      %30 = arith.addf %22, %29 : vector<24x128xf32>
      %c0_i32_22 = arith.constant 0 : i32
      %31 = arith.addi %5, %c0_i32_22 : i32
      %c0_23 = arith.constant 0 : index
      %32 = arith.index_cast %31 : i32 to index
      %c3_24 = arith.constant 3 : index
      %c0_25 = arith.constant 0 : index
      %33 = vector.load %arg1[%c0_23, %32, %c3_24, %c0_25] : memref<1x28x28x3xf32, #tpu.memory_space<vmem>>, vector<1x1x24x3xf32>
      %34 = vector.shape_cast %33 : vector<1x1x24x3xf32> to vector<24x3xf32>
      %c9 = arith.constant 9 : index
      %c0_26 = arith.constant 0 : index
      %35 = vector.load %arg2[%c9, %c0_26] : memref<75x128xbf16, #tpu.memory_space<vmem>>, vector<3x128xbf16>
      %36 = arith.truncf %34 : vector<24x3xf32> to vector<24x3xbf16>
      %cst_27 = arith.constant dense<0.000000e+00> : vector<24x128xf32>
      %37 = tpu.matmul %36, %35, %cst_27 {dimension_numbers = #tpu.dot_dimension_numbers<[1], [0], [0], [1], [0, 0, 1, 1], [], []>} : vector<24x3xbf16>, vector<3x128xbf16>, vector<24x128xf32> -> vector<24x128xf32>
      %38 = arith.addf %30, %37 : vector<24x128xf32>
      %c0_i32_28 = arith.constant 0 : i32
      %39 = arith.addi %5, %c0_i32_28 : i32
      %c0_29 = arith.constant 0 : index
      %40 = arith.index_cast %39 : i32 to index
      %c4 = arith.constant 4 : index
      %c0_30 = arith.constant 0 : index
      %41 = vector.load %arg1[%c0_29, %40, %c4, %c0_30] : memref<1x28x28x3xf32, #tpu.memory_space<vmem>>, vector<1x1x24x3xf32>
      %42 = vector.shape_cast %41 : vector<1x1x24x3xf32> to vector<24x3xf32>
      %c12 = arith.constant 12 : index
      %c0_31 = arith.constant 0 : index
      %43 = vector.load %arg2[%c12, %c0_31] : memref<75x128xbf16, #tpu.memory_space<vmem>>, vector<3x128xbf16>
      %44 = arith.truncf %42 : vector<24x3xf32> to vector<24x3xbf16>
      %cst_32 = arith.constant dense<0.000000e+00> : vector<24x128xf32>
      %45 = tpu.matmul %44, %43, %cst_32 {dimension_numbers = #tpu.dot_dimension_numbers<[1], [0], [0], [1], [0, 0, 1, 1], [], []>} : vector<24x3xbf16>, vector<3x128xbf16>, vector<24x128xf32> -> vector<24x128xf32>
      %46 = arith.addf %38, %45 : vector<24x128xf32>
      %c1_i32_33 = arith.constant 1 : i32
      %47 = arith.addi %5, %c1_i32_33 : i32
      %c0_34 = arith.constant 0 : index
      %48 = arith.index_cast %47 : i32 to index
      %c0_35 = arith.constant 0 : index
      %c0_36 = arith.constant 0 : index
      %49 = vector.load %arg1[%c0_34, %48, %c0_35, %c0_36] : memref<1x28x28x3xf32, #tpu.memory_space<vmem>>, vector<1x1x24x3xf32>
      %50 = vector.shape_cast %49 : vector<1x1x24x3xf32> to vector<24x3xf32>
      %c15 = arith.constant 15 : index
      %c0_37 = arith.constant 0 : index
      %51 = vector.load %arg2[%c15, %c0_37] : memref<75x128xbf16, #tpu.memory_space<vmem>>, vector<3x128xbf16>
      %52 = arith.truncf %50 : vector<24x3xf32> to vector<24x3xbf16>
      %cst_38 = arith.constant dense<0.000000e+00> : vector<24x128xf32>
      %53 = tpu.matmul %52, %51, %cst_38 {dimension_numbers = #tpu.dot_dimension_numbers<[1], [0], [0], [1], [0, 0, 1, 1], [], []>} : vector<24x3xbf16>, vector<3x128xbf16>, vector<24x128xf32> -> vector<24x128xf32>
      %54 = arith.addf %46, %53 : vector<24x128xf32>
      %c1_i32_39 = arith.constant 1 : i32
      %55 = arith.addi %5, %c1_i32_39 : i32
      %c0_40 = arith.constant 0 : index
      %56 = arith.index_cast %55 : i32 to index
      %c1_41 = arith.constant 1 : index
      %c0_42 = arith.constant 0 : index
      %57 = vector.load %arg1[%c0_40, %56, %c1_41, %c0_42] : memref<1x28x28x3xf32, #tpu.memory_space<vmem>>, vector<1x1x24x3xf32>
      %58 = vector.shape_cast %57 : vector<1x1x24x3xf32> to vector<24x3xf32>
      %c18 = arith.constant 18 : index
      %c0_43 = arith.constant 0 : index
      %59 = vector.load %arg2[%c18, %c0_43] : memref<75x128xbf16, #tpu.memory_space<vmem>>, vector<3x128xbf16>
      %60 = arith.truncf %58 : vector<24x3xf32> to vector<24x3xbf16>
      %cst_44 = arith.constant dense<0.000000e+00> : vector<24x128xf32>
      %61 = tpu.matmul %60, %59, %cst_44 {dimension_numbers = #tpu.dot_dimension_numbers<[1], [0], [0], [1], [0, 0, 1, 1], [], []>} : vector<24x3xbf16>, vector<3x128xbf16>, vector<24x128xf32> -> vector<24x128xf32>
      %62 = arith.addf %54, %61 : vector<24x128xf32>
      %c1_i32_45 = arith.constant 1 : i32
      %63 = arith.addi %5, %c1_i32_45 : i32
      %c0_46 = arith.constant 0 : index
      %64 = arith.index_cast %63 : i32 to index
      %c2_47 = arith.constant 2 : index
      %c0_48 = arith.constant 0 : index
      %65 = vector.load %arg1[%c0_46, %64, %c2_47, %c0_48] : memref<1x28x28x3xf32, #tpu.memory_space<vmem>>, vector<1x1x24x3xf32>
      %66 = vector.shape_cast %65 : vector<1x1x24x3xf32> to vector<24x3xf32>
      %c21 = arith.constant 21 : index
      %c0_49 = arith.constant 0 : index
      %67 = vector.load %arg2[%c21, %c0_49] : memref<75x128xbf16, #tpu.memory_space<vmem>>, vector<3x128xbf16>
      %68 = arith.truncf %66 : vector<24x3xf32> to vector<24x3xbf16>
      %cst_50 = arith.constant dense<0.000000e+00> : vector<24x128xf32>
      %69 = tpu.matmul %68, %67, %cst_50 {dimension_numbers = #tpu.dot_dimension_numbers<[1], [0], [0], [1], [0, 0, 1, 1], [], []>} : vector<24x3xbf16>, vector<3x128xbf16>, vector<24x128xf32> -> vector<24x128xf32>
      %70 = arith.addf %62, %69 : vector<24x128xf32>
      %c1_i32_51 = arith.constant 1 : i32
      %71 = arith.addi %5, %c1_i32_51 : i32
      %c0_52 = arith.constant 0 : index
      %72 = arith.index_cast %71 : i32 to index
      %c3_53 = arith.constant 3 : index
      %c0_54 = arith.constant 0 : index
      %73 = vector.load %arg1[%c0_52, %72, %c3_53, %c0_54] : memref<1x28x28x3xf32, #tpu.memory_space<vmem>>, vector<1x1x24x3xf32>
      %74 = vector.shape_cast %73 : vector<1x1x24x3xf32> to vector<24x3xf32>
      %c24 = arith.constant 24 : index
      %c0_55 = arith.constant 0 : index
      %75 = vector.load %arg2[%c24, %c0_55] : memref<75x128xbf16, #tpu.memory_space<vmem>>, vector<3x128xbf16>
      %76 = arith.truncf %74 : vector<24x3xf32> to vector<24x3xbf16>
      %cst_56 = arith.constant dense<0.000000e+00> : vector<24x128xf32>
      %77 = tpu.matmul %76, %75, %cst_56 {dimension_numbers = #tpu.dot_dimension_numbers<[1], [0], [0], [1], [0, 0, 1, 1], [], []>} : vector<24x3xbf16>, vector<3x128xbf16>, vector<24x128xf32> -> vector<24x128xf32>
      %78 = arith.addf %70, %77 : vector<24x128xf32>
      %c1_i32_57 = arith.constant 1 : i32
      %79 = arith.addi %5, %c1_i32_57 : i32
      %c0_58 = arith.constant 0 : index
      %80 = arith.index_cast %79 : i32 to index
      %c4_59 = arith.constant 4 : index
      %c0_60 = arith.constant 0 : index
      %81 = vector.load %arg1[%c0_58, %80, %c4_59, %c0_60] : memref<1x28x28x3xf32, #tpu.memory_space<vmem>>, vector<1x1x24x3xf32>
      %82 = vector.shape_cast %81 : vector<1x1x24x3xf32> to vector<24x3xf32>
      %c27 = arith.constant 27 : index
      %c0_61 = arith.constant 0 : index
      %83 = vector.load %arg2[%c27, %c0_61] : memref<75x128xbf16, #tpu.memory_space<vmem>>, vector<3x128xbf16>
      %84 = arith.truncf %82 : vector<24x3xf32> to vector<24x3xbf16>
      %cst_62 = arith.constant dense<0.000000e+00> : vector<24x128xf32>
      %85 = tpu.matmul %84, %83, %cst_62 {dimension_numbers = #tpu.dot_dimension_numbers<[1], [0], [0], [1], [0, 0, 1, 1], [], []>} : vector<24x3xbf16>, vector<3x128xbf16>, vector<24x128xf32> -> vector<24x128xf32>
      %86 = arith.addf %78, %85 : vector<24x128xf32>
      %c2_i32_63 = arith.constant 2 : i32
      %87 = arith.addi %5, %c2_i32_63 : i32
      %c0_64 = arith.constant 0 : index
      %88 = arith.index_cast %87 : i32 to index
      %c0_65 = arith.constant 0 : index
      %c0_66 = arith.constant 0 : index
      %89 = vector.load %arg1[%c0_64, %88, %c0_65, %c0_66] : memref<1x28x28x3xf32, #tpu.memory_space<vmem>>, vector<1x1x24x3xf32>
      %90 = vector.shape_cast %89 : vector<1x1x24x3xf32> to vector<24x3xf32>
      %c30 = arith.constant 30 : index
      %c0_67 = arith.constant 0 : index
      %91 = vector.load %arg2[%c30, %c0_67] : memref<75x128xbf16, #tpu.memory_space<vmem>>, vector<3x128xbf16>
      %92 = arith.truncf %90 : vector<24x3xf32> to vector<24x3xbf16>
      %cst_68 = arith.constant dense<0.000000e+00> : vector<24x128xf32>
      %93 = tpu.matmul %92, %91, %cst_68 {dimension_numbers = #tpu.dot_dimension_numbers<[1], [0], [0], [1], [0, 0, 1, 1], [], []>} : vector<24x3xbf16>, vector<3x128xbf16>, vector<24x128xf32> -> vector<24x128xf32>
      %94 = arith.addf %86, %93 : vector<24x128xf32>
      %c2_i32_69 = arith.constant 2 : i32
      %95 = arith.addi %5, %c2_i32_69 : i32
      %c0_70 = arith.constant 0 : index
      %96 = arith.index_cast %95 : i32 to index
      %c1_71 = arith.constant 1 : index
      %c0_72 = arith.constant 0 : index
      %97 = vector.load %arg1[%c0_70, %96, %c1_71, %c0_72] : memref<1x28x28x3xf32, #tpu.memory_space<vmem>>, vector<1x1x24x3xf32>
      %98 = vector.shape_cast %97 : vector<1x1x24x3xf32> to vector<24x3xf32>
      %c33 = arith.constant 33 : index
      %c0_73 = arith.constant 0 : index
      %99 = vector.load %arg2[%c33, %c0_73] : memref<75x128xbf16, #tpu.memory_space<vmem>>, vector<3x128xbf16>
      %100 = arith.truncf %98 : vector<24x3xf32> to vector<24x3xbf16>
      %cst_74 = arith.constant dense<0.000000e+00> : vector<24x128xf32>
      %101 = tpu.matmul %100, %99, %cst_74 {dimension_numbers = #tpu.dot_dimension_numbers<[1], [0], [0], [1], [0, 0, 1, 1], [], []>} : vector<24x3xbf16>, vector<3x128xbf16>, vector<24x128xf32> -> vector<24x128xf32>
      %102 = arith.addf %94, %101 : vector<24x128xf32>
      %c2_i32_75 = arith.constant 2 : i32
      %103 = arith.addi %5, %c2_i32_75 : i32
      %c0_76 = arith.constant 0 : index
      %104 = arith.index_cast %103 : i32 to index
      %c2_77 = arith.constant 2 : index
      %c0_78 = arith.constant 0 : index
      %105 = vector.load %arg1[%c0_76, %104, %c2_77, %c0_78] : memref<1x28x28x3xf32, #tpu.memory_space<vmem>>, vector<1x1x24x3xf32>
      %106 = vector.shape_cast %105 : vector<1x1x24x3xf32> to vector<24x3xf32>
      %c36 = arith.constant 36 : index
      %c0_79 = arith.constant 0 : index
      %107 = vector.load %arg2[%c36, %c0_79] : memref<75x128xbf16, #tpu.memory_space<vmem>>, vector<3x128xbf16>
      %108 = arith.truncf %106 : vector<24x3xf32> to vector<24x3xbf16>
      %cst_80 = arith.constant dense<0.000000e+00> : vector<24x128xf32>
      %109 = tpu.matmul %108, %107, %cst_80 {dimension_numbers = #tpu.dot_dimension_numbers<[1], [0], [0], [1], [0, 0, 1, 1], [], []>} : vector<24x3xbf16>, vector<3x128xbf16>, vector<24x128xf32> -> vector<24x128xf32>
      %110 = arith.addf %102, %109 : vector<24x128xf32>
      %c2_i32_81 = arith.constant 2 : i32
      %111 = arith.addi %5, %c2_i32_81 : i32
      %c0_82 = arith.constant 0 : index
      %112 = arith.index_cast %111 : i32 to index
      %c3_83 = arith.constant 3 : index
      %c0_84 = arith.constant 0 : index
      %113 = vector.load %arg1[%c0_82, %112, %c3_83, %c0_84] : memref<1x28x28x3xf32, #tpu.memory_space<vmem>>, vector<1x1x24x3xf32>
      %114 = vector.shape_cast %113 : vector<1x1x24x3xf32> to vector<24x3xf32>
      %c39 = arith.constant 39 : index
      %c0_85 = arith.constant 0 : index
      %115 = vector.load %arg2[%c39, %c0_85] : memref<75x128xbf16, #tpu.memory_space<vmem>>, vector<3x128xbf16>
      %116 = arith.truncf %114 : vector<24x3xf32> to vector<24x3xbf16>
      %cst_86 = arith.constant dense<0.000000e+00> : vector<24x128xf32>
      %117 = tpu.matmul %116, %115, %cst_86 {dimension_numbers = #tpu.dot_dimension_numbers<[1], [0], [0], [1], [0, 0, 1, 1], [], []>} : vector<24x3xbf16>, vector<3x128xbf16>, vector<24x128xf32> -> vector<24x128xf32>
      %118 = arith.addf %110, %117 : vector<24x128xf32>
      %c2_i32_87 = arith.constant 2 : i32
      %119 = arith.addi %5, %c2_i32_87 : i32
      %c0_88 = arith.constant 0 : index
      %120 = arith.index_cast %119 : i32 to index
      %c4_89 = arith.constant 4 : index
      %c0_90 = arith.constant 0 : index
      %121 = vector.load %arg1[%c0_88, %120, %c4_89, %c0_90] : memref<1x28x28x3xf32, #tpu.memory_space<vmem>>, vector<1x1x24x3xf32>
      %122 = vector.shape_cast %121 : vector<1x1x24x3xf32> to vector<24x3xf32>
      %c42 = arith.constant 42 : index
      %c0_91 = arith.constant 0 : index
      %123 = vector.load %arg2[%c42, %c0_91] : memref<75x128xbf16, #tpu.memory_space<vmem>>, vector<3x128xbf16>
      %124 = arith.truncf %122 : vector<24x3xf32> to vector<24x3xbf16>
      %cst_92 = arith.constant dense<0.000000e+00> : vector<24x128xf32>
      %125 = tpu.matmul %124, %123, %cst_92 {dimension_numbers = #tpu.dot_dimension_numbers<[1], [0], [0], [1], [0, 0, 1, 1], [], []>} : vector<24x3xbf16>, vector<3x128xbf16>, vector<24x128xf32> -> vector<24x128xf32>
      %126 = arith.addf %118, %125 : vector<24x128xf32>
      %c3_i32 = arith.constant 3 : i32
      %127 = arith.addi %5, %c3_i32 : i32
      %c0_93 = arith.constant 0 : index
      %128 = arith.index_cast %127 : i32 to index
      %c0_94 = arith.constant 0 : index
      %c0_95 = arith.constant 0 : index
      %129 = vector.load %arg1[%c0_93, %128, %c0_94, %c0_95] : memref<1x28x28x3xf32, #tpu.memory_space<vmem>>, vector<1x1x24x3xf32>
      %130 = vector.shape_cast %129 : vector<1x1x24x3xf32> to vector<24x3xf32>
      %c45 = arith.constant 45 : index
      %c0_96 = arith.constant 0 : index
      %131 = vector.load %arg2[%c45, %c0_96] : memref<75x128xbf16, #tpu.memory_space<vmem>>, vector<3x128xbf16>
      %132 = arith.truncf %130 : vector<24x3xf32> to vector<24x3xbf16>
      %cst_97 = arith.constant dense<0.000000e+00> : vector<24x128xf32>
      %133 = tpu.matmul %132, %131, %cst_97 {dimension_numbers = #tpu.dot_dimension_numbers<[1], [0], [0], [1], [0, 0, 1, 1], [], []>} : vector<24x3xbf16>, vector<3x128xbf16>, vector<24x128xf32> -> vector<24x128xf32>
      %134 = arith.addf %126, %133 : vector<24x128xf32>
      %c3_i32_98 = arith.constant 3 : i32
      %135 = arith.addi %5, %c3_i32_98 : i32
      %c0_99 = arith.constant 0 : index
      %136 = arith.index_cast %135 : i32 to index
      %c1_100 = arith.constant 1 : index
      %c0_101 = arith.constant 0 : index
      %137 = vector.load %arg1[%c0_99, %136, %c1_100, %c0_101] : memref<1x28x28x3xf32, #tpu.memory_space<vmem>>, vector<1x1x24x3xf32>
      %138 = vector.shape_cast %137 : vector<1x1x24x3xf32> to vector<24x3xf32>
      %c48 = arith.constant 48 : index
      %c0_102 = arith.constant 0 : index
      %139 = vector.load %arg2[%c48, %c0_102] : memref<75x128xbf16, #tpu.memory_space<vmem>>, vector<3x128xbf16>
      %140 = arith.truncf %138 : vector<24x3xf32> to vector<24x3xbf16>
      %cst_103 = arith.constant dense<0.000000e+00> : vector<24x128xf32>
      %141 = tpu.matmul %140, %139, %cst_103 {dimension_numbers = #tpu.dot_dimension_numbers<[1], [0], [0], [1], [0, 0, 1, 1], [], []>} : vector<24x3xbf16>, vector<3x128xbf16>, vector<24x128xf32> -> vector<24x128xf32>
      %142 = arith.addf %134, %141 : vector<24x128xf32>
      %c3_i32_104 = arith.constant 3 : i32
      %143 = arith.addi %5, %c3_i32_104 : i32
      %c0_105 = arith.constant 0 : index
      %144 = arith.index_cast %143 : i32 to index
      %c2_106 = arith.constant 2 : index
      %c0_107 = arith.constant 0 : index
      %145 = vector.load %arg1[%c0_105, %144, %c2_106, %c0_107] : memref<1x28x28x3xf32, #tpu.memory_space<vmem>>, vector<1x1x24x3xf32>
      %146 = vector.shape_cast %145 : vector<1x1x24x3xf32> to vector<24x3xf32>
      %c51 = arith.constant 51 : index
      %c0_108 = arith.constant 0 : index
      %147 = vector.load %arg2[%c51, %c0_108] : memref<75x128xbf16, #tpu.memory_space<vmem>>, vector<3x128xbf16>
      %148 = arith.truncf %146 : vector<24x3xf32> to vector<24x3xbf16>
      %cst_109 = arith.constant dense<0.000000e+00> : vector<24x128xf32>
      %149 = tpu.matmul %148, %147, %cst_109 {dimension_numbers = #tpu.dot_dimension_numbers<[1], [0], [0], [1], [0, 0, 1, 1], [], []>} : vector<24x3xbf16>, vector<3x128xbf16>, vector<24x128xf32> -> vector<24x128xf32>
      %150 = arith.addf %142, %149 : vector<24x128xf32>
      %c3_i32_110 = arith.constant 3 : i32
      %151 = arith.addi %5, %c3_i32_110 : i32
      %c0_111 = arith.constant 0 : index
      %152 = arith.index_cast %151 : i32 to index
      %c3_112 = arith.constant 3 : index
      %c0_113 = arith.constant 0 : index
      %153 = vector.load %arg1[%c0_111, %152, %c3_112, %c0_113] : memref<1x28x28x3xf32, #tpu.memory_space<vmem>>, vector<1x1x24x3xf32>
      %154 = vector.shape_cast %153 : vector<1x1x24x3xf32> to vector<24x3xf32>
      %c54 = arith.constant 54 : index
      %c0_114 = arith.constant 0 : index
      %155 = vector.load %arg2[%c54, %c0_114] : memref<75x128xbf16, #tpu.memory_space<vmem>>, vector<3x128xbf16>
      %156 = arith.truncf %154 : vector<24x3xf32> to vector<24x3xbf16>
      %cst_115 = arith.constant dense<0.000000e+00> : vector<24x128xf32>
      %157 = tpu.matmul %156, %155, %cst_115 {dimension_numbers = #tpu.dot_dimension_numbers<[1], [0], [0], [1], [0, 0, 1, 1], [], []>} : vector<24x3xbf16>, vector<3x128xbf16>, vector<24x128xf32> -> vector<24x128xf32>
      %158 = arith.addf %150, %157 : vector<24x128xf32>
      %c3_i32_116 = arith.constant 3 : i32
      %159 = arith.addi %5, %c3_i32_116 : i32
      %c0_117 = arith.constant 0 : index
      %160 = arith.index_cast %159 : i32 to index
      %c4_118 = arith.constant 4 : index
      %c0_119 = arith.constant 0 : index
      %161 = vector.load %arg1[%c0_117, %160, %c4_118, %c0_119] : memref<1x28x28x3xf32, #tpu.memory_space<vmem>>, vector<1x1x24x3xf32>
      %162 = vector.shape_cast %161 : vector<1x1x24x3xf32> to vector<24x3xf32>
      %c57 = arith.constant 57 : index
      %c0_120 = arith.constant 0 : index
      %163 = vector.load %arg2[%c57, %c0_120] : memref<75x128xbf16, #tpu.memory_space<vmem>>, vector<3x128xbf16>
      %164 = arith.truncf %162 : vector<24x3xf32> to vector<24x3xbf16>
      %cst_121 = arith.constant dense<0.000000e+00> : vector<24x128xf32>
      %165 = tpu.matmul %164, %163, %cst_121 {dimension_numbers = #tpu.dot_dimension_numbers<[1], [0], [0], [1], [0, 0, 1, 1], [], []>} : vector<24x3xbf16>, vector<3x128xbf16>, vector<24x128xf32> -> vector<24x128xf32>
      %166 = arith.addf %158, %165 : vector<24x128xf32>
      %c4_i32 = arith.constant 4 : i32
      %167 = arith.addi %5, %c4_i32 : i32
      %c0_122 = arith.constant 0 : index
      %168 = arith.index_cast %167 : i32 to index
      %c0_123 = arith.constant 0 : index
      %c0_124 = arith.constant 0 : index
      %169 = vector.load %arg1[%c0_122, %168, %c0_123, %c0_124] : memref<1x28x28x3xf32, #tpu.memory_space<vmem>>, vector<1x1x24x3xf32>
      %170 = vector.shape_cast %169 : vector<1x1x24x3xf32> to vector<24x3xf32>
      %c60 = arith.constant 60 : index
      %c0_125 = arith.constant 0 : index
      %171 = vector.load %arg2[%c60, %c0_125] : memref<75x128xbf16, #tpu.memory_space<vmem>>, vector<3x128xbf16>
      %172 = arith.truncf %170 : vector<24x3xf32> to vector<24x3xbf16>
      %cst_126 = arith.constant dense<0.000000e+00> : vector<24x128xf32>
      %173 = tpu.matmul %172, %171, %cst_126 {dimension_numbers = #tpu.dot_dimension_numbers<[1], [0], [0], [1], [0, 0, 1, 1], [], []>} : vector<24x3xbf16>, vector<3x128xbf16>, vector<24x128xf32> -> vector<24x128xf32>
      %174 = arith.addf %166, %173 : vector<24x128xf32>
      %c4_i32_127 = arith.constant 4 : i32
      %175 = arith.addi %5, %c4_i32_127 : i32
      %c0_128 = arith.constant 0 : index
      %176 = arith.index_cast %175 : i32 to index
      %c1_129 = arith.constant 1 : index
      %c0_130 = arith.constant 0 : index
      %177 = vector.load %arg1[%c0_128, %176, %c1_129, %c0_130] : memref<1x28x28x3xf32, #tpu.memory_space<vmem>>, vector<1x1x24x3xf32>
      %178 = vector.shape_cast %177 : vector<1x1x24x3xf32> to vector<24x3xf32>
      %c63 = arith.constant 63 : index
      %c0_131 = arith.constant 0 : index
      %179 = vector.load %arg2[%c63, %c0_131] : memref<75x128xbf16, #tpu.memory_space<vmem>>, vector<3x128xbf16>
      %180 = arith.truncf %178 : vector<24x3xf32> to vector<24x3xbf16>
      %cst_132 = arith.constant dense<0.000000e+00> : vector<24x128xf32>
      %181 = tpu.matmul %180, %179, %cst_132 {dimension_numbers = #tpu.dot_dimension_numbers<[1], [0], [0], [1], [0, 0, 1, 1], [], []>} : vector<24x3xbf16>, vector<3x128xbf16>, vector<24x128xf32> -> vector<24x128xf32>
      %182 = arith.addf %174, %181 : vector<24x128xf32>
      %c4_i32_133 = arith.constant 4 : i32
      %183 = arith.addi %5, %c4_i32_133 : i32
      %c0_134 = arith.constant 0 : index
      %184 = arith.index_cast %183 : i32 to index
      %c2_135 = arith.constant 2 : index
      %c0_136 = arith.constant 0 : index
      %185 = vector.load %arg1[%c0_134, %184, %c2_135, %c0_136] : memref<1x28x28x3xf32, #tpu.memory_space<vmem>>, vector<1x1x24x3xf32>
      %186 = vector.shape_cast %185 : vector<1x1x24x3xf32> to vector<24x3xf32>
      %c66 = arith.constant 66 : index
      %c0_137 = arith.constant 0 : index
      %187 = vector.load %arg2[%c66, %c0_137] : memref<75x128xbf16, #tpu.memory_space<vmem>>, vector<3x128xbf16>
      %188 = arith.truncf %186 : vector<24x3xf32> to vector<24x3xbf16>
      %cst_138 = arith.constant dense<0.000000e+00> : vector<24x128xf32>
      %189 = tpu.matmul %188, %187, %cst_138 {dimension_numbers = #tpu.dot_dimension_numbers<[1], [0], [0], [1], [0, 0, 1, 1], [], []>} : vector<24x3xbf16>, vector<3x128xbf16>, vector<24x128xf32> -> vector<24x128xf32>
      %190 = arith.addf %182, %189 : vector<24x128xf32>
      %c4_i32_139 = arith.constant 4 : i32
      %191 = arith.addi %5, %c4_i32_139 : i32
      %c0_140 = arith.constant 0 : index
      %192 = arith.index_cast %191 : i32 to index
      %c3_141 = arith.constant 3 : index
      %c0_142 = arith.constant 0 : index
      %193 = vector.load %arg1[%c0_140, %192, %c3_141, %c0_142] : memref<1x28x28x3xf32, #tpu.memory_space<vmem>>, vector<1x1x24x3xf32>
      %194 = vector.shape_cast %193 : vector<1x1x24x3xf32> to vector<24x3xf32>
      %c69 = arith.constant 69 : index
      %c0_143 = arith.constant 0 : index
      %195 = vector.load %arg2[%c69, %c0_143] : memref<75x128xbf16, #tpu.memory_space<vmem>>, vector<3x128xbf16>
      %196 = arith.truncf %194 : vector<24x3xf32> to vector<24x3xbf16>
      %cst_144 = arith.constant dense<0.000000e+00> : vector<24x128xf32>
      %197 = tpu.matmul %196, %195, %cst_144 {dimension_numbers = #tpu.dot_dimension_numbers<[1], [0], [0], [1], [0, 0, 1, 1], [], []>} : vector<24x3xbf16>, vector<3x128xbf16>, vector<24x128xf32> -> vector<24x128xf32>
      %198 = arith.addf %190, %197 : vector<24x128xf32>
      %c4_i32_145 = arith.constant 4 : i32
      %199 = arith.addi %5, %c4_i32_145 : i32
      %c0_146 = arith.constant 0 : index
      %200 = arith.index_cast %199 : i32 to index
      %c4_147 = arith.constant 4 : index
      %c0_148 = arith.constant 0 : index
      %201 = vector.load %arg1[%c0_146, %200, %c4_147, %c0_148] : memref<1x28x28x3xf32, #tpu.memory_space<vmem>>, vector<1x1x24x3xf32>
      %202 = vector.shape_cast %201 : vector<1x1x24x3xf32> to vector<24x3xf32>
      %c72 = arith.constant 72 : index
      %c0_149 = arith.constant 0 : index
      %203 = vector.load %arg2[%c72, %c0_149] : memref<75x128xbf16, #tpu.memory_space<vmem>>, vector<3x128xbf16>
      %204 = arith.truncf %202 : vector<24x3xf32> to vector<24x3xbf16>
      %cst_150 = arith.constant dense<0.000000e+00> : vector<24x128xf32>
      %205 = tpu.matmul %204, %203, %cst_150 {dimension_numbers = #tpu.dot_dimension_numbers<[1], [0], [0], [1], [0, 0, 1, 1], [], []>} : vector<24x3xbf16>, vector<3x128xbf16>, vector<24x128xf32> -> vector<24x128xf32>
      %206 = arith.addf %198, %205 : vector<24x128xf32>
      %c2_i32_151 = arith.constant 2 : i32
      %207 = arith.muli %c2_i32_151, %3 : i32
      %c1_i32_152 = arith.constant 1 : i32
      %208 = arith.addi %207, %c1_i32_152 : i32
      %cst_153 = arith.constant 0.000000e+00 : f32
      %209 = vector.broadcast %cst_153 : f32 to vector<24x128xf32>
      %c0_i32_154 = arith.constant 0 : i32
      %210 = arith.addi %208, %c0_i32_154 : i32
      %c0_155 = arith.constant 0 : index
      %211 = arith.index_cast %210 : i32 to index
      %c0_156 = arith.constant 0 : index
      %c0_157 = arith.constant 0 : index
      %212 = vector.load %arg1[%c0_155, %211, %c0_156, %c0_157] : memref<1x28x28x3xf32, #tpu.memory_space<vmem>>, vector<1x1x24x3xf32>
      %213 = vector.shape_cast %212 : vector<1x1x24x3xf32> to vector<24x3xf32>
      %c0_158 = arith.constant 0 : index
      %c0_159 = arith.constant 0 : index
      %214 = vector.load %arg2[%c0_158, %c0_159] : memref<75x128xbf16, #tpu.memory_space<vmem>>, vector<3x128xbf16>
      %215 = arith.truncf %213 : vector<24x3xf32> to vector<24x3xbf16>
      %cst_160 = arith.constant dense<0.000000e+00> : vector<24x128xf32>
      %216 = tpu.matmul %215, %214, %cst_160 {dimension_numbers = #tpu.dot_dimension_numbers<[1], [0], [0], [1], [0, 0, 1, 1], [], []>} : vector<24x3xbf16>, vector<3x128xbf16>, vector<24x128xf32> -> vector<24x128xf32>
      %217 = arith.addf %209, %216 : vector<24x128xf32>
      %c0_i32_161 = arith.constant 0 : i32
      %218 = arith.addi %208, %c0_i32_161 : i32
      %c0_162 = arith.constant 0 : index
      %219 = arith.index_cast %218 : i32 to index
      %c1_163 = arith.constant 1 : index
      %c0_164 = arith.constant 0 : index
      %220 = vector.load %arg1[%c0_162, %219, %c1_163, %c0_164] : memref<1x28x28x3xf32, #tpu.memory_space<vmem>>, vector<1x1x24x3xf32>
      %221 = vector.shape_cast %220 : vector<1x1x24x3xf32> to vector<24x3xf32>
      %c3_165 = arith.constant 3 : index
      %c0_166 = arith.constant 0 : index
      %222 = vector.load %arg2[%c3_165, %c0_166] : memref<75x128xbf16, #tpu.memory_space<vmem>>, vector<3x128xbf16>
      %223 = arith.truncf %221 : vector<24x3xf32> to vector<24x3xbf16>
      %cst_167 = arith.constant dense<0.000000e+00> : vector<24x128xf32>
      %224 = tpu.matmul %223, %222, %cst_167 {dimension_numbers = #tpu.dot_dimension_numbers<[1], [0], [0], [1], [0, 0, 1, 1], [], []>} : vector<24x3xbf16>, vector<3x128xbf16>, vector<24x128xf32> -> vector<24x128xf32>
      %225 = arith.addf %217, %224 : vector<24x128xf32>
      %c0_i32_168 = arith.constant 0 : i32
      %226 = arith.addi %208, %c0_i32_168 : i32
      %c0_169 = arith.constant 0 : index
      %227 = arith.index_cast %226 : i32 to index
      %c2_170 = arith.constant 2 : index
      %c0_171 = arith.constant 0 : index
      %228 = vector.load %arg1[%c0_169, %227, %c2_170, %c0_171] : memref<1x28x28x3xf32, #tpu.memory_space<vmem>>, vector<1x1x24x3xf32>
      %229 = vector.shape_cast %228 : vector<1x1x24x3xf32> to vector<24x3xf32>
      %c6_172 = arith.constant 6 : index
      %c0_173 = arith.constant 0 : index
      %230 = vector.load %arg2[%c6_172, %c0_173] : memref<75x128xbf16, #tpu.memory_space<vmem>>, vector<3x128xbf16>
      %231 = arith.truncf %229 : vector<24x3xf32> to vector<24x3xbf16>
      %cst_174 = arith.constant dense<0.000000e+00> : vector<24x128xf32>
      %232 = tpu.matmul %231, %230, %cst_174 {dimension_numbers = #tpu.dot_dimension_numbers<[1], [0], [0], [1], [0, 0, 1, 1], [], []>} : vector<24x3xbf16>, vector<3x128xbf16>, vector<24x128xf32> -> vector<24x128xf32>
      %233 = arith.addf %225, %232 : vector<24x128xf32>
      %c0_i32_175 = arith.constant 0 : i32
      %234 = arith.addi %208, %c0_i32_175 : i32
      %c0_176 = arith.constant 0 : index
      %235 = arith.index_cast %234 : i32 to index
      %c3_177 = arith.constant 3 : index
      %c0_178 = arith.constant 0 : index
      %236 = vector.load %arg1[%c0_176, %235, %c3_177, %c0_178] : memref<1x28x28x3xf32, #tpu.memory_space<vmem>>, vector<1x1x24x3xf32>
      %237 = vector.shape_cast %236 : vector<1x1x24x3xf32> to vector<24x3xf32>
      %c9_179 = arith.constant 9 : index
      %c0_180 = arith.constant 0 : index
      %238 = vector.load %arg2[%c9_179, %c0_180] : memref<75x128xbf16, #tpu.memory_space<vmem>>, vector<3x128xbf16>
      %239 = arith.truncf %237 : vector<24x3xf32> to vector<24x3xbf16>
      %cst_181 = arith.constant dense<0.000000e+00> : vector<24x128xf32>
      %240 = tpu.matmul %239, %238, %cst_181 {dimension_numbers = #tpu.dot_dimension_numbers<[1], [0], [0], [1], [0, 0, 1, 1], [], []>} : vector<24x3xbf16>, vector<3x128xbf16>, vector<24x128xf32> -> vector<24x128xf32>
      %241 = arith.addf %233, %240 : vector<24x128xf32>
      %c0_i32_182 = arith.constant 0 : i32
      %242 = arith.addi %208, %c0_i32_182 : i32
      %c0_183 = arith.constant 0 : index
      %243 = arith.index_cast %242 : i32 to index
      %c4_184 = arith.constant 4 : index
      %c0_185 = arith.constant 0 : index
      %244 = vector.load %arg1[%c0_183, %243, %c4_184, %c0_185] : memref<1x28x28x3xf32, #tpu.memory_space<vmem>>, vector<1x1x24x3xf32>
      %245 = vector.shape_cast %244 : vector<1x1x24x3xf32> to vector<24x3xf32>
      %c12_186 = arith.constant 12 : index
      %c0_187 = arith.constant 0 : index
      %246 = vector.load %arg2[%c12_186, %c0_187] : memref<75x128xbf16, #tpu.memory_space<vmem>>, vector<3x128xbf16>
      %247 = arith.truncf %245 : vector<24x3xf32> to vector<24x3xbf16>
      %cst_188 = arith.constant dense<0.000000e+00> : vector<24x128xf32>
      %248 = tpu.matmul %247, %246, %cst_188 {dimension_numbers = #tpu.dot_dimension_numbers<[1], [0], [0], [1], [0, 0, 1, 1], [], []>} : vector<24x3xbf16>, vector<3x128xbf16>, vector<24x128xf32> -> vector<24x128xf32>
      %249 = arith.addf %241, %248 : vector<24x128xf32>
      %c1_i32_189 = arith.constant 1 : i32
      %250 = arith.addi %208, %c1_i32_189 : i32
      %c0_190 = arith.constant 0 : index
      %251 = arith.index_cast %250 : i32 to index
      %c0_191 = arith.constant 0 : index
      %c0_192 = arith.constant 0 : index
      %252 = vector.load %arg1[%c0_190, %251, %c0_191, %c0_192] : memref<1x28x28x3xf32, #tpu.memory_space<vmem>>, vector<1x1x24x3xf32>
      %253 = vector.shape_cast %252 : vector<1x1x24x3xf32> to vector<24x3xf32>
      %c15_193 = arith.constant 15 : index
      %c0_194 = arith.constant 0 : index
      %254 = vector.load %arg2[%c15_193, %c0_194] : memref<75x128xbf16, #tpu.memory_space<vmem>>, vector<3x128xbf16>
      %255 = arith.truncf %253 : vector<24x3xf32> to vector<24x3xbf16>
      %cst_195 = arith.constant dense<0.000000e+00> : vector<24x128xf32>
      %256 = tpu.matmul %255, %254, %cst_195 {dimension_numbers = #tpu.dot_dimension_numbers<[1], [0], [0], [1], [0, 0, 1, 1], [], []>} : vector<24x3xbf16>, vector<3x128xbf16>, vector<24x128xf32> -> vector<24x128xf32>
      %257 = arith.addf %249, %256 : vector<24x128xf32>
      %c1_i32_196 = arith.constant 1 : i32
      %258 = arith.addi %208, %c1_i32_196 : i32
      %c0_197 = arith.constant 0 : index
      %259 = arith.index_cast %258 : i32 to index
      %c1_198 = arith.constant 1 : index
      %c0_199 = arith.constant 0 : index
      %260 = vector.load %arg1[%c0_197, %259, %c1_198, %c0_199] : memref<1x28x28x3xf32, #tpu.memory_space<vmem>>, vector<1x1x24x3xf32>
      %261 = vector.shape_cast %260 : vector<1x1x24x3xf32> to vector<24x3xf32>
      %c18_200 = arith.constant 18 : index
      %c0_201 = arith.constant 0 : index
      %262 = vector.load %arg2[%c18_200, %c0_201] : memref<75x128xbf16, #tpu.memory_space<vmem>>, vector<3x128xbf16>
      %263 = arith.truncf %261 : vector<24x3xf32> to vector<24x3xbf16>
      %cst_202 = arith.constant dense<0.000000e+00> : vector<24x128xf32>
      %264 = tpu.matmul %263, %262, %cst_202 {dimension_numbers = #tpu.dot_dimension_numbers<[1], [0], [0], [1], [0, 0, 1, 1], [], []>} : vector<24x3xbf16>, vector<3x128xbf16>, vector<24x128xf32> -> vector<24x128xf32>
      %265 = arith.addf %257, %264 : vector<24x128xf32>
      %c1_i32_203 = arith.constant 1 : i32
      %266 = arith.addi %208, %c1_i32_203 : i32
      %c0_204 = arith.constant 0 : index
      %267 = arith.index_cast %266 : i32 to index
      %c2_205 = arith.constant 2 : index
      %c0_206 = arith.constant 0 : index
      %268 = vector.load %arg1[%c0_204, %267, %c2_205, %c0_206] : memref<1x28x28x3xf32, #tpu.memory_space<vmem>>, vector<1x1x24x3xf32>
      %269 = vector.shape_cast %268 : vector<1x1x24x3xf32> to vector<24x3xf32>
      %c21_207 = arith.constant 21 : index
      %c0_208 = arith.constant 0 : index
      %270 = vector.load %arg2[%c21_207, %c0_208] : memref<75x128xbf16, #tpu.memory_space<vmem>>, vector<3x128xbf16>
      %271 = arith.truncf %269 : vector<24x3xf32> to vector<24x3xbf16>
      %cst_209 = arith.constant dense<0.000000e+00> : vector<24x128xf32>
      %272 = tpu.matmul %271, %270, %cst_209 {dimension_numbers = #tpu.dot_dimension_numbers<[1], [0], [0], [1], [0, 0, 1, 1], [], []>} : vector<24x3xbf16>, vector<3x128xbf16>, vector<24x128xf32> -> vector<24x128xf32>
      %273 = arith.addf %265, %272 : vector<24x128xf32>
      %c1_i32_210 = arith.constant 1 : i32
      %274 = arith.addi %208, %c1_i32_210 : i32
      %c0_211 = arith.constant 0 : index
      %275 = arith.index_cast %274 : i32 to index
      %c3_212 = arith.constant 3 : index
      %c0_213 = arith.constant 0 : index
      %276 = vector.load %arg1[%c0_211, %275, %c3_212, %c0_213] : memref<1x28x28x3xf32, #tpu.memory_space<vmem>>, vector<1x1x24x3xf32>
      %277 = vector.shape_cast %276 : vector<1x1x24x3xf32> to vector<24x3xf32>
      %c24_214 = arith.constant 24 : index
      %c0_215 = arith.constant 0 : index
      %278 = vector.load %arg2[%c24_214, %c0_215] : memref<75x128xbf16, #tpu.memory_space<vmem>>, vector<3x128xbf16>
      %279 = arith.truncf %277 : vector<24x3xf32> to vector<24x3xbf16>
      %cst_216 = arith.constant dense<0.000000e+00> : vector<24x128xf32>
      %280 = tpu.matmul %279, %278, %cst_216 {dimension_numbers = #tpu.dot_dimension_numbers<[1], [0], [0], [1], [0, 0, 1, 1], [], []>} : vector<24x3xbf16>, vector<3x128xbf16>, vector<24x128xf32> -> vector<24x128xf32>
      %281 = arith.addf %273, %280 : vector<24x128xf32>
      %c1_i32_217 = arith.constant 1 : i32
      %282 = arith.addi %208, %c1_i32_217 : i32
      %c0_218 = arith.constant 0 : index
      %283 = arith.index_cast %282 : i32 to index
      %c4_219 = arith.constant 4 : index
      %c0_220 = arith.constant 0 : index
      %284 = vector.load %arg1[%c0_218, %283, %c4_219, %c0_220] : memref<1x28x28x3xf32, #tpu.memory_space<vmem>>, vector<1x1x24x3xf32>
      %285 = vector.shape_cast %284 : vector<1x1x24x3xf32> to vector<24x3xf32>
      %c27_221 = arith.constant 27 : index
      %c0_222 = arith.constant 0 : index
      %286 = vector.load %arg2[%c27_221, %c0_222] : memref<75x128xbf16, #tpu.memory_space<vmem>>, vector<3x128xbf16>
      %287 = arith.truncf %285 : vector<24x3xf32> to vector<24x3xbf16>
      %cst_223 = arith.constant dense<0.000000e+00> : vector<24x128xf32>
      %288 = tpu.matmul %287, %286, %cst_223 {dimension_numbers = #tpu.dot_dimension_numbers<[1], [0], [0], [1], [0, 0, 1, 1], [], []>} : vector<24x3xbf16>, vector<3x128xbf16>, vector<24x128xf32> -> vector<24x128xf32>
      %289 = arith.addf %281, %288 : vector<24x128xf32>
      %c2_i32_224 = arith.constant 2 : i32
      %290 = arith.addi %208, %c2_i32_224 : i32
      %c0_225 = arith.constant 0 : index
      %291 = arith.index_cast %290 : i32 to index
      %c0_226 = arith.constant 0 : index
      %c0_227 = arith.constant 0 : index
      %292 = vector.load %arg1[%c0_225, %291, %c0_226, %c0_227] : memref<1x28x28x3xf32, #tpu.memory_space<vmem>>, vector<1x1x24x3xf32>
      %293 = vector.shape_cast %292 : vector<1x1x24x3xf32> to vector<24x3xf32>
      %c30_228 = arith.constant 30 : index
      %c0_229 = arith.constant 0 : index
      %294 = vector.load %arg2[%c30_228, %c0_229] : memref<75x128xbf16, #tpu.memory_space<vmem>>, vector<3x128xbf16>
      %295 = arith.truncf %293 : vector<24x3xf32> to vector<24x3xbf16>
      %cst_230 = arith.constant dense<0.000000e+00> : vector<24x128xf32>
      %296 = tpu.matmul %295, %294, %cst_230 {dimension_numbers = #tpu.dot_dimension_numbers<[1], [0], [0], [1], [0, 0, 1, 1], [], []>} : vector<24x3xbf16>, vector<3x128xbf16>, vector<24x128xf32> -> vector<24x128xf32>
      %297 = arith.addf %289, %296 : vector<24x128xf32>
      %c2_i32_231 = arith.constant 2 : i32
      %298 = arith.addi %208, %c2_i32_231 : i32
      %c0_232 = arith.constant 0 : index
      %299 = arith.index_cast %298 : i32 to index
      %c1_233 = arith.constant 1 : index
      %c0_234 = arith.constant 0 : index
      %300 = vector.load %arg1[%c0_232, %299, %c1_233, %c0_234] : memref<1x28x28x3xf32, #tpu.memory_space<vmem>>, vector<1x1x24x3xf32>
      %301 = vector.shape_cast %300 : vector<1x1x24x3xf32> to vector<24x3xf32>
      %c33_235 = arith.constant 33 : index
      %c0_236 = arith.constant 0 : index
      %302 = vector.load %arg2[%c33_235, %c0_236] : memref<75x128xbf16, #tpu.memory_space<vmem>>, vector<3x128xbf16>
      %303 = arith.truncf %301 : vector<24x3xf32> to vector<24x3xbf16>
      %cst_237 = arith.constant dense<0.000000e+00> : vector<24x128xf32>
      %304 = tpu.matmul %303, %302, %cst_237 {dimension_numbers = #tpu.dot_dimension_numbers<[1], [0], [0], [1], [0, 0, 1, 1], [], []>} : vector<24x3xbf16>, vector<3x128xbf16>, vector<24x128xf32> -> vector<24x128xf32>
      %305 = arith.addf %297, %304 : vector<24x128xf32>
      %c2_i32_238 = arith.constant 2 : i32
      %306 = arith.addi %208, %c2_i32_238 : i32
      %c0_239 = arith.constant 0 : index
      %307 = arith.index_cast %306 : i32 to index
      %c2_240 = arith.constant 2 : index
      %c0_241 = arith.constant 0 : index
      %308 = vector.load %arg1[%c0_239, %307, %c2_240, %c0_241] : memref<1x28x28x3xf32, #tpu.memory_space<vmem>>, vector<1x1x24x3xf32>
      %309 = vector.shape_cast %308 : vector<1x1x24x3xf32> to vector<24x3xf32>
      %c36_242 = arith.constant 36 : index
      %c0_243 = arith.constant 0 : index
      %310 = vector.load %arg2[%c36_242, %c0_243] : memref<75x128xbf16, #tpu.memory_space<vmem>>, vector<3x128xbf16>
      %311 = arith.truncf %309 : vector<24x3xf32> to vector<24x3xbf16>
      %cst_244 = arith.constant dense<0.000000e+00> : vector<24x128xf32>
      %312 = tpu.matmul %311, %310, %cst_244 {dimension_numbers = #tpu.dot_dimension_numbers<[1], [0], [0], [1], [0, 0, 1, 1], [], []>} : vector<24x3xbf16>, vector<3x128xbf16>, vector<24x128xf32> -> vector<24x128xf32>
      %313 = arith.addf %305, %312 : vector<24x128xf32>
      %c2_i32_245 = arith.constant 2 : i32
      %314 = arith.addi %208, %c2_i32_245 : i32
      %c0_246 = arith.constant 0 : index
      %315 = arith.index_cast %314 : i32 to index
      %c3_247 = arith.constant 3 : index
      %c0_248 = arith.constant 0 : index
      %316 = vector.load %arg1[%c0_246, %315, %c3_247, %c0_248] : memref<1x28x28x3xf32, #tpu.memory_space<vmem>>, vector<1x1x24x3xf32>
      %317 = vector.shape_cast %316 : vector<1x1x24x3xf32> to vector<24x3xf32>
      %c39_249 = arith.constant 39 : index
      %c0_250 = arith.constant 0 : index
      %318 = vector.load %arg2[%c39_249, %c0_250] : memref<75x128xbf16, #tpu.memory_space<vmem>>, vector<3x128xbf16>
      %319 = arith.truncf %317 : vector<24x3xf32> to vector<24x3xbf16>
      %cst_251 = arith.constant dense<0.000000e+00> : vector<24x128xf32>
      %320 = tpu.matmul %319, %318, %cst_251 {dimension_numbers = #tpu.dot_dimension_numbers<[1], [0], [0], [1], [0, 0, 1, 1], [], []>} : vector<24x3xbf16>, vector<3x128xbf16>, vector<24x128xf32> -> vector<24x128xf32>
      %321 = arith.addf %313, %320 : vector<24x128xf32>
      %c2_i32_252 = arith.constant 2 : i32
      %322 = arith.addi %208, %c2_i32_252 : i32
      %c0_253 = arith.constant 0 : index
      %323 = arith.index_cast %322 : i32 to index
      %c4_254 = arith.constant 4 : index
      %c0_255 = arith.constant 0 : index
      %324 = vector.load %arg1[%c0_253, %323, %c4_254, %c0_255] : memref<1x28x28x3xf32, #tpu.memory_space<vmem>>, vector<1x1x24x3xf32>
      %325 = vector.shape_cast %324 : vector<1x1x24x3xf32> to vector<24x3xf32>
      %c42_256 = arith.constant 42 : index
      %c0_257 = arith.constant 0 : index
      %326 = vector.load %arg2[%c42_256, %c0_257] : memref<75x128xbf16, #tpu.memory_space<vmem>>, vector<3x128xbf16>
      %327 = arith.truncf %325 : vector<24x3xf32> to vector<24x3xbf16>
      %cst_258 = arith.constant dense<0.000000e+00> : vector<24x128xf32>
      %328 = tpu.matmul %327, %326, %cst_258 {dimension_numbers = #tpu.dot_dimension_numbers<[1], [0], [0], [1], [0, 0, 1, 1], [], []>} : vector<24x3xbf16>, vector<3x128xbf16>, vector<24x128xf32> -> vector<24x128xf32>
      %329 = arith.addf %321, %328 : vector<24x128xf32>
      %c3_i32_259 = arith.constant 3 : i32
      %330 = arith.addi %208, %c3_i32_259 : i32
      %c0_260 = arith.constant 0 : index
      %331 = arith.index_cast %330 : i32 to index
      %c0_261 = arith.constant 0 : index
      %c0_262 = arith.constant 0 : index
      %332 = vector.load %arg1[%c0_260, %331, %c0_261, %c0_262] : memref<1x28x28x3xf32, #tpu.memory_space<vmem>>, vector<1x1x24x3xf32>
      %333 = vector.shape_cast %332 : vector<1x1x24x3xf32> to vector<24x3xf32>
      %c45_263 = arith.constant 45 : index
      %c0_264 = arith.constant 0 : index
      %334 = vector.load %arg2[%c45_263, %c0_264] : memref<75x128xbf16, #tpu.memory_space<vmem>>, vector<3x128xbf16>
      %335 = arith.truncf %333 : vector<24x3xf32> to vector<24x3xbf16>
      %cst_265 = arith.constant dense<0.000000e+00> : vector<24x128xf32>
      %336 = tpu.matmul %335, %334, %cst_265 {dimension_numbers = #tpu.dot_dimension_numbers<[1], [0], [0], [1], [0, 0, 1, 1], [], []>} : vector<24x3xbf16>, vector<3x128xbf16>, vector<24x128xf32> -> vector<24x128xf32>
      %337 = arith.addf %329, %336 : vector<24x128xf32>
      %c3_i32_266 = arith.constant 3 : i32
      %338 = arith.addi %208, %c3_i32_266 : i32
      %c0_267 = arith.constant 0 : index
      %339 = arith.index_cast %338 : i32 to index
      %c1_268 = arith.constant 1 : index
      %c0_269 = arith.constant 0 : index
      %340 = vector.load %arg1[%c0_267, %339, %c1_268, %c0_269] : memref<1x28x28x3xf32, #tpu.memory_space<vmem>>, vector<1x1x24x3xf32>
      %341 = vector.shape_cast %340 : vector<1x1x24x3xf32> to vector<24x3xf32>
      %c48_270 = arith.constant 48 : index
      %c0_271 = arith.constant 0 : index
      %342 = vector.load %arg2[%c48_270, %c0_271] : memref<75x128xbf16, #tpu.memory_space<vmem>>, vector<3x128xbf16>
      %343 = arith.truncf %341 : vector<24x3xf32> to vector<24x3xbf16>
      %cst_272 = arith.constant dense<0.000000e+00> : vector<24x128xf32>
      %344 = tpu.matmul %343, %342, %cst_272 {dimension_numbers = #tpu.dot_dimension_numbers<[1], [0], [0], [1], [0, 0, 1, 1], [], []>} : vector<24x3xbf16>, vector<3x128xbf16>, vector<24x128xf32> -> vector<24x128xf32>
      %345 = arith.addf %337, %344 : vector<24x128xf32>
      %c3_i32_273 = arith.constant 3 : i32
      %346 = arith.addi %208, %c3_i32_273 : i32
      %c0_274 = arith.constant 0 : index
      %347 = arith.index_cast %346 : i32 to index
      %c2_275 = arith.constant 2 : index
      %c0_276 = arith.constant 0 : index
      %348 = vector.load %arg1[%c0_274, %347, %c2_275, %c0_276] : memref<1x28x28x3xf32, #tpu.memory_space<vmem>>, vector<1x1x24x3xf32>
      %349 = vector.shape_cast %348 : vector<1x1x24x3xf32> to vector<24x3xf32>
      %c51_277 = arith.constant 51 : index
      %c0_278 = arith.constant 0 : index
      %350 = vector.load %arg2[%c51_277, %c0_278] : memref<75x128xbf16, #tpu.memory_space<vmem>>, vector<3x128xbf16>
      %351 = arith.truncf %349 : vector<24x3xf32> to vector<24x3xbf16>
      %cst_279 = arith.constant dense<0.000000e+00> : vector<24x128xf32>
      %352 = tpu.matmul %351, %350, %cst_279 {dimension_numbers = #tpu.dot_dimension_numbers<[1], [0], [0], [1], [0, 0, 1, 1], [], []>} : vector<24x3xbf16>, vector<3x128xbf16>, vector<24x128xf32> -> vector<24x128xf32>
      %353 = arith.addf %345, %352 : vector<24x128xf32>
      %c3_i32_280 = arith.constant 3 : i32
      %354 = arith.addi %208, %c3_i32_280 : i32
      %c0_281 = arith.constant 0 : index
      %355 = arith.index_cast %354 : i32 to index
      %c3_282 = arith.constant 3 : index
      %c0_283 = arith.constant 0 : index
      %356 = vector.load %arg1[%c0_281, %355, %c3_282, %c0_283] : memref<1x28x28x3xf32, #tpu.memory_space<vmem>>, vector<1x1x24x3xf32>
      %357 = vector.shape_cast %356 : vector<1x1x24x3xf32> to vector<24x3xf32>
      %c54_284 = arith.constant 54 : index
      %c0_285 = arith.constant 0 : index
      %358 = vector.load %arg2[%c54_284, %c0_285] : memref<75x128xbf16, #tpu.memory_space<vmem>>, vector<3x128xbf16>
      %359 = arith.truncf %357 : vector<24x3xf32> to vector<24x3xbf16>
      %cst_286 = arith.constant dense<0.000000e+00> : vector<24x128xf32>
      %360 = tpu.matmul %359, %358, %cst_286 {dimension_numbers = #tpu.dot_dimension_numbers<[1], [0], [0], [1], [0, 0, 1, 1], [], []>} : vector<24x3xbf16>, vector<3x128xbf16>, vector<24x128xf32> -> vector<24x128xf32>
      %361 = arith.addf %353, %360 : vector<24x128xf32>
      %c3_i32_287 = arith.constant 3 : i32
      %362 = arith.addi %208, %c3_i32_287 : i32
      %c0_288 = arith.constant 0 : index
      %363 = arith.index_cast %362 : i32 to index
      %c4_289 = arith.constant 4 : index
      %c0_290 = arith.constant 0 : index
      %364 = vector.load %arg1[%c0_288, %363, %c4_289, %c0_290] : memref<1x28x28x3xf32, #tpu.memory_space<vmem>>, vector<1x1x24x3xf32>
      %365 = vector.shape_cast %364 : vector<1x1x24x3xf32> to vector<24x3xf32>
      %c57_291 = arith.constant 57 : index
      %c0_292 = arith.constant 0 : index
      %366 = vector.load %arg2[%c57_291, %c0_292] : memref<75x128xbf16, #tpu.memory_space<vmem>>, vector<3x128xbf16>
      %367 = arith.truncf %365 : vector<24x3xf32> to vector<24x3xbf16>
      %cst_293 = arith.constant dense<0.000000e+00> : vector<24x128xf32>
      %368 = tpu.matmul %367, %366, %cst_293 {dimension_numbers = #tpu.dot_dimension_numbers<[1], [0], [0], [1], [0, 0, 1, 1], [], []>} : vector<24x3xbf16>, vector<3x128xbf16>, vector<24x128xf32> -> vector<24x128xf32>
      %369 = arith.addf %361, %368 : vector<24x128xf32>
      %c4_i32_294 = arith.constant 4 : i32
      %370 = arith.addi %208, %c4_i32_294 : i32
      %c0_295 = arith.constant 0 : index
      %371 = arith.index_cast %370 : i32 to index
      %c0_296 = arith.constant 0 : index
      %c0_297 = arith.constant 0 : index
      %372 = vector.load %arg1[%c0_295, %371, %c0_296, %c0_297] : memref<1x28x28x3xf32, #tpu.memory_space<vmem>>, vector<1x1x24x3xf32>
      %373 = vector.shape_cast %372 : vector<1x1x24x3xf32> to vector<24x3xf32>
      %c60_298 = arith.constant 60 : index
      %c0_299 = arith.constant 0 : index
      %374 = vector.load %arg2[%c60_298, %c0_299] : memref<75x128xbf16, #tpu.memory_space<vmem>>, vector<3x128xbf16>
      %375 = arith.truncf %373 : vector<24x3xf32> to vector<24x3xbf16>
      %cst_300 = arith.constant dense<0.000000e+00> : vector<24x128xf32>
      %376 = tpu.matmul %375, %374, %cst_300 {dimension_numbers = #tpu.dot_dimension_numbers<[1], [0], [0], [1], [0, 0, 1, 1], [], []>} : vector<24x3xbf16>, vector<3x128xbf16>, vector<24x128xf32> -> vector<24x128xf32>
      %377 = arith.addf %369, %376 : vector<24x128xf32>
      %c4_i32_301 = arith.constant 4 : i32
      %378 = arith.addi %208, %c4_i32_301 : i32
      %c0_302 = arith.constant 0 : index
      %379 = arith.index_cast %378 : i32 to index
      %c1_303 = arith.constant 1 : index
      %c0_304 = arith.constant 0 : index
      %380 = vector.load %arg1[%c0_302, %379, %c1_303, %c0_304] : memref<1x28x28x3xf32, #tpu.memory_space<vmem>>, vector<1x1x24x3xf32>
      %381 = vector.shape_cast %380 : vector<1x1x24x3xf32> to vector<24x3xf32>
      %c63_305 = arith.constant 63 : index
      %c0_306 = arith.constant 0 : index
      %382 = vector.load %arg2[%c63_305, %c0_306] : memref<75x128xbf16, #tpu.memory_space<vmem>>, vector<3x128xbf16>
      %383 = arith.truncf %381 : vector<24x3xf32> to vector<24x3xbf16>
      %cst_307 = arith.constant dense<0.000000e+00> : vector<24x128xf32>
      %384 = tpu.matmul %383, %382, %cst_307 {dimension_numbers = #tpu.dot_dimension_numbers<[1], [0], [0], [1], [0, 0, 1, 1], [], []>} : vector<24x3xbf16>, vector<3x128xbf16>, vector<24x128xf32> -> vector<24x128xf32>
      %385 = arith.addf %377, %384 : vector<24x128xf32>
      %c4_i32_308 = arith.constant 4 : i32
      %386 = arith.addi %208, %c4_i32_308 : i32
      %c0_309 = arith.constant 0 : index
      %387 = arith.index_cast %386 : i32 to index
      %c2_310 = arith.constant 2 : index
      %c0_311 = arith.constant 0 : index
      %388 = vector.load %arg1[%c0_309, %387, %c2_310, %c0_311] : memref<1x28x28x3xf32, #tpu.memory_space<vmem>>, vector<1x1x24x3xf32>
      %389 = vector.shape_cast %388 : vector<1x1x24x3xf32> to vector<24x3xf32>
      %c66_312 = arith.constant 66 : index
      %c0_313 = arith.constant 0 : index
      %390 = vector.load %arg2[%c66_312, %c0_313] : memref<75x128xbf16, #tpu.memory_space<vmem>>, vector<3x128xbf16>
      %391 = arith.truncf %389 : vector<24x3xf32> to vector<24x3xbf16>
      %cst_314 = arith.constant dense<0.000000e+00> : vector<24x128xf32>
      %392 = tpu.matmul %391, %390, %cst_314 {dimension_numbers = #tpu.dot_dimension_numbers<[1], [0], [0], [1], [0, 0, 1, 1], [], []>} : vector<24x3xbf16>, vector<3x128xbf16>, vector<24x128xf32> -> vector<24x128xf32>
      %393 = arith.addf %385, %392 : vector<24x128xf32>
      %c4_i32_315 = arith.constant 4 : i32
      %394 = arith.addi %208, %c4_i32_315 : i32
      %c0_316 = arith.constant 0 : index
      %395 = arith.index_cast %394 : i32 to index
      %c3_317 = arith.constant 3 : index
      %c0_318 = arith.constant 0 : index
      %396 = vector.load %arg1[%c0_316, %395, %c3_317, %c0_318] : memref<1x28x28x3xf32, #tpu.memory_space<vmem>>, vector<1x1x24x3xf32>
      %397 = vector.shape_cast %396 : vector<1x1x24x3xf32> to vector<24x3xf32>
      %c69_319 = arith.constant 69 : index
      %c0_320 = arith.constant 0 : index
      %398 = vector.load %arg2[%c69_319, %c0_320] : memref<75x128xbf16, #tpu.memory_space<vmem>>, vector<3x128xbf16>
      %399 = arith.truncf %397 : vector<24x3xf32> to vector<24x3xbf16>
      %cst_321 = arith.constant dense<0.000000e+00> : vector<24x128xf32>
      %400 = tpu.matmul %399, %398, %cst_321 {dimension_numbers = #tpu.dot_dimension_numbers<[1], [0], [0], [1], [0, 0, 1, 1], [], []>} : vector<24x3xbf16>, vector<3x128xbf16>, vector<24x128xf32> -> vector<24x128xf32>
      %401 = arith.addf %393, %400 : vector<24x128xf32>
      %c4_i32_322 = arith.constant 4 : i32
      %402 = arith.addi %208, %c4_i32_322 : i32
      %c0_323 = arith.constant 0 : index
      %403 = arith.index_cast %402 : i32 to index
      %c4_324 = arith.constant 4 : index
      %c0_325 = arith.constant 0 : index
      %404 = vector.load %arg1[%c0_323, %403, %c4_324, %c0_325] : memref<1x28x28x3xf32, #tpu.memory_space<vmem>>, vector<1x1x24x3xf32>
      %405 = vector.shape_cast %404 : vector<1x1x24x3xf32> to vector<24x3xf32>
      %c72_326 = arith.constant 72 : index
      %c0_327 = arith.constant 0 : index
      %406 = vector.load %arg2[%c72_326, %c0_327] : memref<75x128xbf16, #tpu.memory_space<vmem>>, vector<3x128xbf16>
      %407 = arith.truncf %405 : vector<24x3xf32> to vector<24x3xbf16>
      %cst_328 = arith.constant dense<0.000000e+00> : vector<24x128xf32>
      %408 = tpu.matmul %407, %406, %cst_328 {dimension_numbers = #tpu.dot_dimension_numbers<[1], [0], [0], [1], [0, 0, 1, 1], [], []>} : vector<24x3xbf16>, vector<3x128xbf16>, vector<24x128xf32> -> vector<24x128xf32>
      %409 = arith.addf %401, %408 : vector<24x128xf32>
      %410 = arith.maximumf %206, %409 : vector<24x128xf32>
      %c0_329 = arith.constant 0 : index
      %c0_330 = arith.constant 0 : index
      %411 = vector.load %arg5[%c0_329, %c0_330] : memref<24x128xf32, #tpu.memory_space<vmem>>, vector<24x128xf32>
      tpu.vector_store %arg5[%c0_329, %c0_330], %410 {strides = array<i32>} : memref<24x128xf32, #tpu.memory_space<vmem>>, vector<24x128xf32>,
      %c0_331 = arith.constant 0 : index
      %c0_332 = arith.constant 0 : index
      %412 = tpu.strided_load %arg5[%c0_331, %c0_332] {strides = array<i32: 2, 1>} : memref<24x128xf32, #tpu.memory_space<vmem>>, vector<12x128xf32>
      %c1_333 = arith.constant 1 : index
      %c0_334 = arith.constant 0 : index
      %413 = tpu.strided_load %arg5[%c1_333, %c0_334] {strides = array<i32: 2, 1>} : memref<24x128xf32, #tpu.memory_space<vmem>>, vector<12x128xf32>
      %414 = arith.maximumf %412, %413 : vector<12x128xf32>
      %415 = vector.broadcast %0 : vector<1x128xf32> to vector<12x128xf32>
      %416 = arith.addf %414, %415 : vector<12x128xf32>
      %cst_335 = arith.constant 0.000000e+00 : f32
      %417 = vector.broadcast %cst_335 : f32 to vector<12x128xf32>
      %418 = arith.maximumf %416, %417 : vector<12x128xf32>
      %c0_336 = arith.constant 0 : index
      %419 = arith.index_cast %3 : i32 to index
      %c0_337 = arith.constant 0 : index
      %c0_338 = arith.constant 0 : index
      %420 = vector.load %arg4[%c0_336, %419, %c0_337, %c0_338] : memref<1x12x12x128xf32, #tpu.memory_space<vmem>>, vector<1x1x12x128xf32>
      %421 = vector.shape_cast %420 : vector<1x1x12x128xf32> to vector<12x128xf32>
      %422 = vector.shape_cast %418 : vector<12x128xf32> to vector<1x1x12x128xf32>
      tpu.vector_store %arg4[%c0_336, %419, %c0_337, %c0_338], %422 {strides = array<i32>} : memref<1x12x12x128xf32, #tpu.memory_space<vmem>>, vector<1x1x12x128xf32>,
    }
    %c12_i32_1 = arith.constant 12 : i32
    return
  }
  func.func @transform_0(%arg0: i32) -> (i32, i32, i32, i32) {
    %c0_i32 = arith.constant 0 : i32
    %c0_i32_0 = arith.constant 0 : i32
    %c0_i32_1 = arith.constant 0 : i32
    %c0_i32_2 = arith.constant 0 : i32
    return %arg0, %c0_i32, %c0_i32_0, %c0_i32_1 : i32, i32, i32, i32
  }
  func.func @transform_1(%arg0: i32) -> (i32, i32) {
    %c0_i32 = arith.constant 0 : i32
    %c0_i32_0 = arith.constant 0 : i32
    %c0_i32_1 = arith.constant 0 : i32
    return %c0_i32, %c0_i32_0 : i32, i32
  }
  func.func @transform_2(%arg0: i32) -> (i32, i32) {
    %c0_i32 = arith.constant 0 : i32
    %c0_i32_0 = arith.constant 0 : i32
    %c0_i32_1 = arith.constant 0 : i32
    return %c0_i32, %c0_i32_0 : i32, i32
  }
  func.func @transform_3(%arg0: i32) -> (i32, i32, i32, i32) {
    %c0_i32 = arith.constant 0 : i32
    %c0_i32_0 = arith.constant 0 : i32
    %c0_i32_1 = arith.constant 0 : i32
    %c0_i32_2 = arith.constant 0 : i32
    return %arg0, %c0_i32, %c0_i32_0, %c0_i32_1 : i32, i32, i32, i32
  }
}

module attributes {stable_mosaic.version = 11 : i64} {
  func.func @conv_bn_relu_pool_kernel(%arg0: i32, %arg1: memref<1x12x12x128xf32, #tpu.memory_space<vmem>>, %arg2: memref<3200x128xbf16, #tpu.memory_space<vmem>>, %arg3: memref<1x128xf32, #tpu.memory_space<vmem>>, %arg4: memref<1x4x4x128xf32, #tpu.memory_space<vmem>>, %arg5: memref<8x128xf32, #tpu.memory_space<vmem>>) attributes {dimension_semantics = [#tpu.dimension_semantics<parallel>], iteration_bounds = array<i64: 2>, scalar_prefetch = 0 : i64, scratch_operands = 1 : i64, tpu.core_type = #tpu.core_type<tc>, window_params = [{transform_indices = @transform_0, window_bounds = array<i64: 1, 12, 12, 128>}, {pipeline_mode = #tpu.pipeline_mode<synchronous>, transform_indices = @transform_1, window_bounds = array<i64: 3200, 128>}, {pipeline_mode = #tpu.pipeline_mode<synchronous>, transform_indices = @transform_2, window_bounds = array<i64: 1, 128>}, {transform_indices = @transform_3, window_bounds = array<i64: 1, 4, 4, 128>}]} {
    %c0 = arith.constant 0 : index
    %c0_0 = arith.constant 0 : index
    %0 = vector.load %arg3[%c0, %c0_0] : memref<1x128xf32, #tpu.memory_space<vmem>>, vector<1x128xf32>
    %c0_i32 = arith.constant 0 : i32
    %c4_i32 = arith.constant 4 : i32
    %1 = arith.addi %c0_i32, %c4_i32 : i32
    %c1_i32 = arith.constant 1 : i32
    scf.for %arg6 = %c0_i32 to %1 step %c1_i32  : i32 {
      %c1_i32_2 = arith.constant 1 : i32
      %2 = arith.muli %arg6, %c1_i32_2 : i32
      %c0_i32_3 = arith.constant 0 : i32
      %3 = arith.addi %c0_i32_3, %2 : i32
      %c2_i32 = arith.constant 2 : i32
      %4 = arith.muli %c2_i32, %3 : i32
      %c0_i32_4 = arith.constant 0 : i32
      %5 = arith.addi %4, %c0_i32_4 : i32
      %cst = arith.constant 0.000000e+00 : f32
      %6 = vector.broadcast %cst : f32 to vector<8x128xf32>
      %c0_i32_5 = arith.constant 0 : i32
      %7 = arith.addi %5, %c0_i32_5 : i32
      %c0_6 = arith.constant 0 : index
      %8 = arith.index_cast %7 : i32 to index
      %c0_7 = arith.constant 0 : index
      %c0_8 = arith.constant 0 : index
      %9 = vector.load %arg1[%c0_6, %8, %c0_7, %c0_8] : memref<1x12x12x128xf32, #tpu.memory_space<vmem>>, vector<1x1x8x128xf32>
      %10 = vector.shape_cast %9 : vector<1x1x8x128xf32> to vector<8x128xf32>
      %c0_9 = arith.constant 0 : index
      %c0_10 = arith.constant 0 : index
      %11 = vector.load %arg2[%c0_9, %c0_10] : memref<3200x128xbf16, #tpu.memory_space<vmem>>, vector<128x128xbf16>
      %12 = arith.truncf %10 : vector<8x128xf32> to vector<8x128xbf16>
      %cst_11 = arith.constant dense<0.000000e+00> : vector<8x128xf32>
      %13 = tpu.matmul %12, %11, %cst_11 {dimension_numbers = #tpu.dot_dimension_numbers<[1], [0], [0], [1], [0, 0, 1, 1], [], []>} : vector<8x128xbf16>, vector<128x128xbf16>, vector<8x128xf32> -> vector<8x128xf32>
      %14 = arith.addf %6, %13 : vector<8x128xf32>
      %c0_i32_12 = arith.constant 0 : i32
      %15 = arith.addi %5, %c0_i32_12 : i32
      %c0_13 = arith.constant 0 : index
      %16 = arith.index_cast %15 : i32 to index
      %c1 = arith.constant 1 : index
      %c0_14 = arith.constant 0 : index
      %17 = vector.load %arg1[%c0_13, %16, %c1, %c0_14] : memref<1x12x12x128xf32, #tpu.memory_space<vmem>>, vector<1x1x8x128xf32>
      %18 = vector.shape_cast %17 : vector<1x1x8x128xf32> to vector<8x128xf32>
      %c128 = arith.constant 128 : index
      %c0_15 = arith.constant 0 : index
      %19 = vector.load %arg2[%c128, %c0_15] : memref<3200x128xbf16, #tpu.memory_space<vmem>>, vector<128x128xbf16>
      %20 = arith.truncf %18 : vector<8x128xf32> to vector<8x128xbf16>
      %cst_16 = arith.constant dense<0.000000e+00> : vector<8x128xf32>
      %21 = tpu.matmul %20, %19, %cst_16 {dimension_numbers = #tpu.dot_dimension_numbers<[1], [0], [0], [1], [0, 0, 1, 1], [], []>} : vector<8x128xbf16>, vector<128x128xbf16>, vector<8x128xf32> -> vector<8x128xf32>
      %22 = arith.addf %14, %21 : vector<8x128xf32>
      %c0_i32_17 = arith.constant 0 : i32
      %23 = arith.addi %5, %c0_i32_17 : i32
      %c0_18 = arith.constant 0 : index
      %24 = arith.index_cast %23 : i32 to index
      %c2 = arith.constant 2 : index
      %c0_19 = arith.constant 0 : index
      %25 = vector.load %arg1[%c0_18, %24, %c2, %c0_19] : memref<1x12x12x128xf32, #tpu.memory_space<vmem>>, vector<1x1x8x128xf32>
      %26 = vector.shape_cast %25 : vector<1x1x8x128xf32> to vector<8x128xf32>
      %c256 = arith.constant 256 : index
      %c0_20 = arith.constant 0 : index
      %27 = vector.load %arg2[%c256, %c0_20] : memref<3200x128xbf16, #tpu.memory_space<vmem>>, vector<128x128xbf16>
      %28 = arith.truncf %26 : vector<8x128xf32> to vector<8x128xbf16>
      %cst_21 = arith.constant dense<0.000000e+00> : vector<8x128xf32>
      %29 = tpu.matmul %28, %27, %cst_21 {dimension_numbers = #tpu.dot_dimension_numbers<[1], [0], [0], [1], [0, 0, 1, 1], [], []>} : vector<8x128xbf16>, vector<128x128xbf16>, vector<8x128xf32> -> vector<8x128xf32>
      %30 = arith.addf %22, %29 : vector<8x128xf32>
      %c0_i32_22 = arith.constant 0 : i32
      %31 = arith.addi %5, %c0_i32_22 : i32
      %c0_23 = arith.constant 0 : index
      %32 = arith.index_cast %31 : i32 to index
      %c3 = arith.constant 3 : index
      %c0_24 = arith.constant 0 : index
      %33 = vector.load %arg1[%c0_23, %32, %c3, %c0_24] : memref<1x12x12x128xf32, #tpu.memory_space<vmem>>, vector<1x1x8x128xf32>
      %34 = vector.shape_cast %33 : vector<1x1x8x128xf32> to vector<8x128xf32>
      %c384 = arith.constant 384 : index
      %c0_25 = arith.constant 0 : index
      %35 = vector.load %arg2[%c384, %c0_25] : memref<3200x128xbf16, #tpu.memory_space<vmem>>, vector<128x128xbf16>
      %36 = arith.truncf %34 : vector<8x128xf32> to vector<8x128xbf16>
      %cst_26 = arith.constant dense<0.000000e+00> : vector<8x128xf32>
      %37 = tpu.matmul %36, %35, %cst_26 {dimension_numbers = #tpu.dot_dimension_numbers<[1], [0], [0], [1], [0, 0, 1, 1], [], []>} : vector<8x128xbf16>, vector<128x128xbf16>, vector<8x128xf32> -> vector<8x128xf32>
      %38 = arith.addf %30, %37 : vector<8x128xf32>
      %c0_i32_27 = arith.constant 0 : i32
      %39 = arith.addi %5, %c0_i32_27 : i32
      %c0_28 = arith.constant 0 : index
      %40 = arith.index_cast %39 : i32 to index
      %c4 = arith.constant 4 : index
      %c0_29 = arith.constant 0 : index
      %41 = vector.load %arg1[%c0_28, %40, %c4, %c0_29] : memref<1x12x12x128xf32, #tpu.memory_space<vmem>>, vector<1x1x8x128xf32>
      %42 = vector.shape_cast %41 : vector<1x1x8x128xf32> to vector<8x128xf32>
      %c512 = arith.constant 512 : index
      %c0_30 = arith.constant 0 : index
      %43 = vector.load %arg2[%c512, %c0_30] : memref<3200x128xbf16, #tpu.memory_space<vmem>>, vector<128x128xbf16>
      %44 = arith.truncf %42 : vector<8x128xf32> to vector<8x128xbf16>
      %cst_31 = arith.constant dense<0.000000e+00> : vector<8x128xf32>
      %45 = tpu.matmul %44, %43, %cst_31 {dimension_numbers = #tpu.dot_dimension_numbers<[1], [0], [0], [1], [0, 0, 1, 1], [], []>} : vector<8x128xbf16>, vector<128x128xbf16>, vector<8x128xf32> -> vector<8x128xf32>
      %46 = arith.addf %38, %45 : vector<8x128xf32>
      %c1_i32_32 = arith.constant 1 : i32
      %47 = arith.addi %5, %c1_i32_32 : i32
      %c0_33 = arith.constant 0 : index
      %48 = arith.index_cast %47 : i32 to index
      %c0_34 = arith.constant 0 : index
      %c0_35 = arith.constant 0 : index
      %49 = vector.load %arg1[%c0_33, %48, %c0_34, %c0_35] : memref<1x12x12x128xf32, #tpu.memory_space<vmem>>, vector<1x1x8x128xf32>
      %50 = vector.shape_cast %49 : vector<1x1x8x128xf32> to vector<8x128xf32>
      %c640 = arith.constant 640 : index
      %c0_36 = arith.constant 0 : index
      %51 = vector.load %arg2[%c640, %c0_36] : memref<3200x128xbf16, #tpu.memory_space<vmem>>, vector<128x128xbf16>
      %52 = arith.truncf %50 : vector<8x128xf32> to vector<8x128xbf16>
      %cst_37 = arith.constant dense<0.000000e+00> : vector<8x128xf32>
      %53 = tpu.matmul %52, %51, %cst_37 {dimension_numbers = #tpu.dot_dimension_numbers<[1], [0], [0], [1], [0, 0, 1, 1], [], []>} : vector<8x128xbf16>, vector<128x128xbf16>, vector<8x128xf32> -> vector<8x128xf32>
      %54 = arith.addf %46, %53 : vector<8x128xf32>
      %c1_i32_38 = arith.constant 1 : i32
      %55 = arith.addi %5, %c1_i32_38 : i32
      %c0_39 = arith.constant 0 : index
      %56 = arith.index_cast %55 : i32 to index
      %c1_40 = arith.constant 1 : index
      %c0_41 = arith.constant 0 : index
      %57 = vector.load %arg1[%c0_39, %56, %c1_40, %c0_41] : memref<1x12x12x128xf32, #tpu.memory_space<vmem>>, vector<1x1x8x128xf32>
      %58 = vector.shape_cast %57 : vector<1x1x8x128xf32> to vector<8x128xf32>
      %c768 = arith.constant 768 : index
      %c0_42 = arith.constant 0 : index
      %59 = vector.load %arg2[%c768, %c0_42] : memref<3200x128xbf16, #tpu.memory_space<vmem>>, vector<128x128xbf16>
      %60 = arith.truncf %58 : vector<8x128xf32> to vector<8x128xbf16>
      %cst_43 = arith.constant dense<0.000000e+00> : vector<8x128xf32>
      %61 = tpu.matmul %60, %59, %cst_43 {dimension_numbers = #tpu.dot_dimension_numbers<[1], [0], [0], [1], [0, 0, 1, 1], [], []>} : vector<8x128xbf16>, vector<128x128xbf16>, vector<8x128xf32> -> vector<8x128xf32>
      %62 = arith.addf %54, %61 : vector<8x128xf32>
      %c1_i32_44 = arith.constant 1 : i32
      %63 = arith.addi %5, %c1_i32_44 : i32
      %c0_45 = arith.constant 0 : index
      %64 = arith.index_cast %63 : i32 to index
      %c2_46 = arith.constant 2 : index
      %c0_47 = arith.constant 0 : index
      %65 = vector.load %arg1[%c0_45, %64, %c2_46, %c0_47] : memref<1x12x12x128xf32, #tpu.memory_space<vmem>>, vector<1x1x8x128xf32>
      %66 = vector.shape_cast %65 : vector<1x1x8x128xf32> to vector<8x128xf32>
      %c896 = arith.constant 896 : index
      %c0_48 = arith.constant 0 : index
      %67 = vector.load %arg2[%c896, %c0_48] : memref<3200x128xbf16, #tpu.memory_space<vmem>>, vector<128x128xbf16>
      %68 = arith.truncf %66 : vector<8x128xf32> to vector<8x128xbf16>
      %cst_49 = arith.constant dense<0.000000e+00> : vector<8x128xf32>
      %69 = tpu.matmul %68, %67, %cst_49 {dimension_numbers = #tpu.dot_dimension_numbers<[1], [0], [0], [1], [0, 0, 1, 1], [], []>} : vector<8x128xbf16>, vector<128x128xbf16>, vector<8x128xf32> -> vector<8x128xf32>
      %70 = arith.addf %62, %69 : vector<8x128xf32>
      %c1_i32_50 = arith.constant 1 : i32
      %71 = arith.addi %5, %c1_i32_50 : i32
      %c0_51 = arith.constant 0 : index
      %72 = arith.index_cast %71 : i32 to index
      %c3_52 = arith.constant 3 : index
      %c0_53 = arith.constant 0 : index
      %73 = vector.load %arg1[%c0_51, %72, %c3_52, %c0_53] : memref<1x12x12x128xf32, #tpu.memory_space<vmem>>, vector<1x1x8x128xf32>
      %74 = vector.shape_cast %73 : vector<1x1x8x128xf32> to vector<8x128xf32>
      %c1024 = arith.constant 1024 : index
      %c0_54 = arith.constant 0 : index
      %75 = vector.load %arg2[%c1024, %c0_54] : memref<3200x128xbf16, #tpu.memory_space<vmem>>, vector<128x128xbf16>
      %76 = arith.truncf %74 : vector<8x128xf32> to vector<8x128xbf16>
      %cst_55 = arith.constant dense<0.000000e+00> : vector<8x128xf32>
      %77 = tpu.matmul %76, %75, %cst_55 {dimension_numbers = #tpu.dot_dimension_numbers<[1], [0], [0], [1], [0, 0, 1, 1], [], []>} : vector<8x128xbf16>, vector<128x128xbf16>, vector<8x128xf32> -> vector<8x128xf32>
      %78 = arith.addf %70, %77 : vector<8x128xf32>
      %c1_i32_56 = arith.constant 1 : i32
      %79 = arith.addi %5, %c1_i32_56 : i32
      %c0_57 = arith.constant 0 : index
      %80 = arith.index_cast %79 : i32 to index
      %c4_58 = arith.constant 4 : index
      %c0_59 = arith.constant 0 : index
      %81 = vector.load %arg1[%c0_57, %80, %c4_58, %c0_59] : memref<1x12x12x128xf32, #tpu.memory_space<vmem>>, vector<1x1x8x128xf32>
      %82 = vector.shape_cast %81 : vector<1x1x8x128xf32> to vector<8x128xf32>
      %c1152 = arith.constant 1152 : index
      %c0_60 = arith.constant 0 : index
      %83 = vector.load %arg2[%c1152, %c0_60] : memref<3200x128xbf16, #tpu.memory_space<vmem>>, vector<128x128xbf16>
      %84 = arith.truncf %82 : vector<8x128xf32> to vector<8x128xbf16>
      %cst_61 = arith.constant dense<0.000000e+00> : vector<8x128xf32>
      %85 = tpu.matmul %84, %83, %cst_61 {dimension_numbers = #tpu.dot_dimension_numbers<[1], [0], [0], [1], [0, 0, 1, 1], [], []>} : vector<8x128xbf16>, vector<128x128xbf16>, vector<8x128xf32> -> vector<8x128xf32>
      %86 = arith.addf %78, %85 : vector<8x128xf32>
      %c2_i32_62 = arith.constant 2 : i32
      %87 = arith.addi %5, %c2_i32_62 : i32
      %c0_63 = arith.constant 0 : index
      %88 = arith.index_cast %87 : i32 to index
      %c0_64 = arith.constant 0 : index
      %c0_65 = arith.constant 0 : index
      %89 = vector.load %arg1[%c0_63, %88, %c0_64, %c0_65] : memref<1x12x12x128xf32, #tpu.memory_space<vmem>>, vector<1x1x8x128xf32>
      %90 = vector.shape_cast %89 : vector<1x1x8x128xf32> to vector<8x128xf32>
      %c1280 = arith.constant 1280 : index
      %c0_66 = arith.constant 0 : index
      %91 = vector.load %arg2[%c1280, %c0_66] : memref<3200x128xbf16, #tpu.memory_space<vmem>>, vector<128x128xbf16>
      %92 = arith.truncf %90 : vector<8x128xf32> to vector<8x128xbf16>
      %cst_67 = arith.constant dense<0.000000e+00> : vector<8x128xf32>
      %93 = tpu.matmul %92, %91, %cst_67 {dimension_numbers = #tpu.dot_dimension_numbers<[1], [0], [0], [1], [0, 0, 1, 1], [], []>} : vector<8x128xbf16>, vector<128x128xbf16>, vector<8x128xf32> -> vector<8x128xf32>
      %94 = arith.addf %86, %93 : vector<8x128xf32>
      %c2_i32_68 = arith.constant 2 : i32
      %95 = arith.addi %5, %c2_i32_68 : i32
      %c0_69 = arith.constant 0 : index
      %96 = arith.index_cast %95 : i32 to index
      %c1_70 = arith.constant 1 : index
      %c0_71 = arith.constant 0 : index
      %97 = vector.load %arg1[%c0_69, %96, %c1_70, %c0_71] : memref<1x12x12x128xf32, #tpu.memory_space<vmem>>, vector<1x1x8x128xf32>
      %98 = vector.shape_cast %97 : vector<1x1x8x128xf32> to vector<8x128xf32>
      %c1408 = arith.constant 1408 : index
      %c0_72 = arith.constant 0 : index
      %99 = vector.load %arg2[%c1408, %c0_72] : memref<3200x128xbf16, #tpu.memory_space<vmem>>, vector<128x128xbf16>
      %100 = arith.truncf %98 : vector<8x128xf32> to vector<8x128xbf16>
      %cst_73 = arith.constant dense<0.000000e+00> : vector<8x128xf32>
      %101 = tpu.matmul %100, %99, %cst_73 {dimension_numbers = #tpu.dot_dimension_numbers<[1], [0], [0], [1], [0, 0, 1, 1], [], []>} : vector<8x128xbf16>, vector<128x128xbf16>, vector<8x128xf32> -> vector<8x128xf32>
      %102 = arith.addf %94, %101 : vector<8x128xf32>
      %c2_i32_74 = arith.constant 2 : i32
      %103 = arith.addi %5, %c2_i32_74 : i32
      %c0_75 = arith.constant 0 : index
      %104 = arith.index_cast %103 : i32 to index
      %c2_76 = arith.constant 2 : index
      %c0_77 = arith.constant 0 : index
      %105 = vector.load %arg1[%c0_75, %104, %c2_76, %c0_77] : memref<1x12x12x128xf32, #tpu.memory_space<vmem>>, vector<1x1x8x128xf32>
      %106 = vector.shape_cast %105 : vector<1x1x8x128xf32> to vector<8x128xf32>
      %c1536 = arith.constant 1536 : index
      %c0_78 = arith.constant 0 : index
      %107 = vector.load %arg2[%c1536, %c0_78] : memref<3200x128xbf16, #tpu.memory_space<vmem>>, vector<128x128xbf16>
      %108 = arith.truncf %106 : vector<8x128xf32> to vector<8x128xbf16>
      %cst_79 = arith.constant dense<0.000000e+00> : vector<8x128xf32>
      %109 = tpu.matmul %108, %107, %cst_79 {dimension_numbers = #tpu.dot_dimension_numbers<[1], [0], [0], [1], [0, 0, 1, 1], [], []>} : vector<8x128xbf16>, vector<128x128xbf16>, vector<8x128xf32> -> vector<8x128xf32>
      %110 = arith.addf %102, %109 : vector<8x128xf32>
      %c2_i32_80 = arith.constant 2 : i32
      %111 = arith.addi %5, %c2_i32_80 : i32
      %c0_81 = arith.constant 0 : index
      %112 = arith.index_cast %111 : i32 to index
      %c3_82 = arith.constant 3 : index
      %c0_83 = arith.constant 0 : index
      %113 = vector.load %arg1[%c0_81, %112, %c3_82, %c0_83] : memref<1x12x12x128xf32, #tpu.memory_space<vmem>>, vector<1x1x8x128xf32>
      %114 = vector.shape_cast %113 : vector<1x1x8x128xf32> to vector<8x128xf32>
      %c1664 = arith.constant 1664 : index
      %c0_84 = arith.constant 0 : index
      %115 = vector.load %arg2[%c1664, %c0_84] : memref<3200x128xbf16, #tpu.memory_space<vmem>>, vector<128x128xbf16>
      %116 = arith.truncf %114 : vector<8x128xf32> to vector<8x128xbf16>
      %cst_85 = arith.constant dense<0.000000e+00> : vector<8x128xf32>
      %117 = tpu.matmul %116, %115, %cst_85 {dimension_numbers = #tpu.dot_dimension_numbers<[1], [0], [0], [1], [0, 0, 1, 1], [], []>} : vector<8x128xbf16>, vector<128x128xbf16>, vector<8x128xf32> -> vector<8x128xf32>
      %118 = arith.addf %110, %117 : vector<8x128xf32>
      %c2_i32_86 = arith.constant 2 : i32
      %119 = arith.addi %5, %c2_i32_86 : i32
      %c0_87 = arith.constant 0 : index
      %120 = arith.index_cast %119 : i32 to index
      %c4_88 = arith.constant 4 : index
      %c0_89 = arith.constant 0 : index
      %121 = vector.load %arg1[%c0_87, %120, %c4_88, %c0_89] : memref<1x12x12x128xf32, #tpu.memory_space<vmem>>, vector<1x1x8x128xf32>
      %122 = vector.shape_cast %121 : vector<1x1x8x128xf32> to vector<8x128xf32>
      %c1792 = arith.constant 1792 : index
      %c0_90 = arith.constant 0 : index
      %123 = vector.load %arg2[%c1792, %c0_90] : memref<3200x128xbf16, #tpu.memory_space<vmem>>, vector<128x128xbf16>
      %124 = arith.truncf %122 : vector<8x128xf32> to vector<8x128xbf16>
      %cst_91 = arith.constant dense<0.000000e+00> : vector<8x128xf32>
      %125 = tpu.matmul %124, %123, %cst_91 {dimension_numbers = #tpu.dot_dimension_numbers<[1], [0], [0], [1], [0, 0, 1, 1], [], []>} : vector<8x128xbf16>, vector<128x128xbf16>, vector<8x128xf32> -> vector<8x128xf32>
      %126 = arith.addf %118, %125 : vector<8x128xf32>
      %c3_i32 = arith.constant 3 : i32
      %127 = arith.addi %5, %c3_i32 : i32
      %c0_92 = arith.constant 0 : index
      %128 = arith.index_cast %127 : i32 to index
      %c0_93 = arith.constant 0 : index
      %c0_94 = arith.constant 0 : index
      %129 = vector.load %arg1[%c0_92, %128, %c0_93, %c0_94] : memref<1x12x12x128xf32, #tpu.memory_space<vmem>>, vector<1x1x8x128xf32>
      %130 = vector.shape_cast %129 : vector<1x1x8x128xf32> to vector<8x128xf32>
      %c1920 = arith.constant 1920 : index
      %c0_95 = arith.constant 0 : index
      %131 = vector.load %arg2[%c1920, %c0_95] : memref<3200x128xbf16, #tpu.memory_space<vmem>>, vector<128x128xbf16>
      %132 = arith.truncf %130 : vector<8x128xf32> to vector<8x128xbf16>
      %cst_96 = arith.constant dense<0.000000e+00> : vector<8x128xf32>
      %133 = tpu.matmul %132, %131, %cst_96 {dimension_numbers = #tpu.dot_dimension_numbers<[1], [0], [0], [1], [0, 0, 1, 1], [], []>} : vector<8x128xbf16>, vector<128x128xbf16>, vector<8x128xf32> -> vector<8x128xf32>
      %134 = arith.addf %126, %133 : vector<8x128xf32>
      %c3_i32_97 = arith.constant 3 : i32
      %135 = arith.addi %5, %c3_i32_97 : i32
      %c0_98 = arith.constant 0 : index
      %136 = arith.index_cast %135 : i32 to index
      %c1_99 = arith.constant 1 : index
      %c0_100 = arith.constant 0 : index
      %137 = vector.load %arg1[%c0_98, %136, %c1_99, %c0_100] : memref<1x12x12x128xf32, #tpu.memory_space<vmem>>, vector<1x1x8x128xf32>
      %138 = vector.shape_cast %137 : vector<1x1x8x128xf32> to vector<8x128xf32>
      %c2048 = arith.constant 2048 : index
      %c0_101 = arith.constant 0 : index
      %139 = vector.load %arg2[%c2048, %c0_101] : memref<3200x128xbf16, #tpu.memory_space<vmem>>, vector<128x128xbf16>
      %140 = arith.truncf %138 : vector<8x128xf32> to vector<8x128xbf16>
      %cst_102 = arith.constant dense<0.000000e+00> : vector<8x128xf32>
      %141 = tpu.matmul %140, %139, %cst_102 {dimension_numbers = #tpu.dot_dimension_numbers<[1], [0], [0], [1], [0, 0, 1, 1], [], []>} : vector<8x128xbf16>, vector<128x128xbf16>, vector<8x128xf32> -> vector<8x128xf32>
      %142 = arith.addf %134, %141 : vector<8x128xf32>
      %c3_i32_103 = arith.constant 3 : i32
      %143 = arith.addi %5, %c3_i32_103 : i32
      %c0_104 = arith.constant 0 : index
      %144 = arith.index_cast %143 : i32 to index
      %c2_105 = arith.constant 2 : index
      %c0_106 = arith.constant 0 : index
      %145 = vector.load %arg1[%c0_104, %144, %c2_105, %c0_106] : memref<1x12x12x128xf32, #tpu.memory_space<vmem>>, vector<1x1x8x128xf32>
      %146 = vector.shape_cast %145 : vector<1x1x8x128xf32> to vector<8x128xf32>
      %c2176 = arith.constant 2176 : index
      %c0_107 = arith.constant 0 : index
      %147 = vector.load %arg2[%c2176, %c0_107] : memref<3200x128xbf16, #tpu.memory_space<vmem>>, vector<128x128xbf16>
      %148 = arith.truncf %146 : vector<8x128xf32> to vector<8x128xbf16>
      %cst_108 = arith.constant dense<0.000000e+00> : vector<8x128xf32>
      %149 = tpu.matmul %148, %147, %cst_108 {dimension_numbers = #tpu.dot_dimension_numbers<[1], [0], [0], [1], [0, 0, 1, 1], [], []>} : vector<8x128xbf16>, vector<128x128xbf16>, vector<8x128xf32> -> vector<8x128xf32>
      %150 = arith.addf %142, %149 : vector<8x128xf32>
      %c3_i32_109 = arith.constant 3 : i32
      %151 = arith.addi %5, %c3_i32_109 : i32
      %c0_110 = arith.constant 0 : index
      %152 = arith.index_cast %151 : i32 to index
      %c3_111 = arith.constant 3 : index
      %c0_112 = arith.constant 0 : index
      %153 = vector.load %arg1[%c0_110, %152, %c3_111, %c0_112] : memref<1x12x12x128xf32, #tpu.memory_space<vmem>>, vector<1x1x8x128xf32>
      %154 = vector.shape_cast %153 : vector<1x1x8x128xf32> to vector<8x128xf32>
      %c2304 = arith.constant 2304 : index
      %c0_113 = arith.constant 0 : index
      %155 = vector.load %arg2[%c2304, %c0_113] : memref<3200x128xbf16, #tpu.memory_space<vmem>>, vector<128x128xbf16>
      %156 = arith.truncf %154 : vector<8x128xf32> to vector<8x128xbf16>
      %cst_114 = arith.constant dense<0.000000e+00> : vector<8x128xf32>
      %157 = tpu.matmul %156, %155, %cst_114 {dimension_numbers = #tpu.dot_dimension_numbers<[1], [0], [0], [1], [0, 0, 1, 1], [], []>} : vector<8x128xbf16>, vector<128x128xbf16>, vector<8x128xf32> -> vector<8x128xf32>
      %158 = arith.addf %150, %157 : vector<8x128xf32>
      %c3_i32_115 = arith.constant 3 : i32
      %159 = arith.addi %5, %c3_i32_115 : i32
      %c0_116 = arith.constant 0 : index
      %160 = arith.index_cast %159 : i32 to index
      %c4_117 = arith.constant 4 : index
      %c0_118 = arith.constant 0 : index
      %161 = vector.load %arg1[%c0_116, %160, %c4_117, %c0_118] : memref<1x12x12x128xf32, #tpu.memory_space<vmem>>, vector<1x1x8x128xf32>
      %162 = vector.shape_cast %161 : vector<1x1x8x128xf32> to vector<8x128xf32>
      %c2432 = arith.constant 2432 : index
      %c0_119 = arith.constant 0 : index
      %163 = vector.load %arg2[%c2432, %c0_119] : memref<3200x128xbf16, #tpu.memory_space<vmem>>, vector<128x128xbf16>
      %164 = arith.truncf %162 : vector<8x128xf32> to vector<8x128xbf16>
      %cst_120 = arith.constant dense<0.000000e+00> : vector<8x128xf32>
      %165 = tpu.matmul %164, %163, %cst_120 {dimension_numbers = #tpu.dot_dimension_numbers<[1], [0], [0], [1], [0, 0, 1, 1], [], []>} : vector<8x128xbf16>, vector<128x128xbf16>, vector<8x128xf32> -> vector<8x128xf32>
      %166 = arith.addf %158, %165 : vector<8x128xf32>
      %c4_i32_121 = arith.constant 4 : i32
      %167 = arith.addi %5, %c4_i32_121 : i32
      %c0_122 = arith.constant 0 : index
      %168 = arith.index_cast %167 : i32 to index
      %c0_123 = arith.constant 0 : index
      %c0_124 = arith.constant 0 : index
      %169 = vector.load %arg1[%c0_122, %168, %c0_123, %c0_124] : memref<1x12x12x128xf32, #tpu.memory_space<vmem>>, vector<1x1x8x128xf32>
      %170 = vector.shape_cast %169 : vector<1x1x8x128xf32> to vector<8x128xf32>
      %c2560 = arith.constant 2560 : index
      %c0_125 = arith.constant 0 : index
      %171 = vector.load %arg2[%c2560, %c0_125] : memref<3200x128xbf16, #tpu.memory_space<vmem>>, vector<128x128xbf16>
      %172 = arith.truncf %170 : vector<8x128xf32> to vector<8x128xbf16>
      %cst_126 = arith.constant dense<0.000000e+00> : vector<8x128xf32>
      %173 = tpu.matmul %172, %171, %cst_126 {dimension_numbers = #tpu.dot_dimension_numbers<[1], [0], [0], [1], [0, 0, 1, 1], [], []>} : vector<8x128xbf16>, vector<128x128xbf16>, vector<8x128xf32> -> vector<8x128xf32>
      %174 = arith.addf %166, %173 : vector<8x128xf32>
      %c4_i32_127 = arith.constant 4 : i32
      %175 = arith.addi %5, %c4_i32_127 : i32
      %c0_128 = arith.constant 0 : index
      %176 = arith.index_cast %175 : i32 to index
      %c1_129 = arith.constant 1 : index
      %c0_130 = arith.constant 0 : index
      %177 = vector.load %arg1[%c0_128, %176, %c1_129, %c0_130] : memref<1x12x12x128xf32, #tpu.memory_space<vmem>>, vector<1x1x8x128xf32>
      %178 = vector.shape_cast %177 : vector<1x1x8x128xf32> to vector<8x128xf32>
      %c2688 = arith.constant 2688 : index
      %c0_131 = arith.constant 0 : index
      %179 = vector.load %arg2[%c2688, %c0_131] : memref<3200x128xbf16, #tpu.memory_space<vmem>>, vector<128x128xbf16>
      %180 = arith.truncf %178 : vector<8x128xf32> to vector<8x128xbf16>
      %cst_132 = arith.constant dense<0.000000e+00> : vector<8x128xf32>
      %181 = tpu.matmul %180, %179, %cst_132 {dimension_numbers = #tpu.dot_dimension_numbers<[1], [0], [0], [1], [0, 0, 1, 1], [], []>} : vector<8x128xbf16>, vector<128x128xbf16>, vector<8x128xf32> -> vector<8x128xf32>
      %182 = arith.addf %174, %181 : vector<8x128xf32>
      %c4_i32_133 = arith.constant 4 : i32
      %183 = arith.addi %5, %c4_i32_133 : i32
      %c0_134 = arith.constant 0 : index
      %184 = arith.index_cast %183 : i32 to index
      %c2_135 = arith.constant 2 : index
      %c0_136 = arith.constant 0 : index
      %185 = vector.load %arg1[%c0_134, %184, %c2_135, %c0_136] : memref<1x12x12x128xf32, #tpu.memory_space<vmem>>, vector<1x1x8x128xf32>
      %186 = vector.shape_cast %185 : vector<1x1x8x128xf32> to vector<8x128xf32>
      %c2816 = arith.constant 2816 : index
      %c0_137 = arith.constant 0 : index
      %187 = vector.load %arg2[%c2816, %c0_137] : memref<3200x128xbf16, #tpu.memory_space<vmem>>, vector<128x128xbf16>
      %188 = arith.truncf %186 : vector<8x128xf32> to vector<8x128xbf16>
      %cst_138 = arith.constant dense<0.000000e+00> : vector<8x128xf32>
      %189 = tpu.matmul %188, %187, %cst_138 {dimension_numbers = #tpu.dot_dimension_numbers<[1], [0], [0], [1], [0, 0, 1, 1], [], []>} : vector<8x128xbf16>, vector<128x128xbf16>, vector<8x128xf32> -> vector<8x128xf32>
      %190 = arith.addf %182, %189 : vector<8x128xf32>
      %c4_i32_139 = arith.constant 4 : i32
      %191 = arith.addi %5, %c4_i32_139 : i32
      %c0_140 = arith.constant 0 : index
      %192 = arith.index_cast %191 : i32 to index
      %c3_141 = arith.constant 3 : index
      %c0_142 = arith.constant 0 : index
      %193 = vector.load %arg1[%c0_140, %192, %c3_141, %c0_142] : memref<1x12x12x128xf32, #tpu.memory_space<vmem>>, vector<1x1x8x128xf32>
      %194 = vector.shape_cast %193 : vector<1x1x8x128xf32> to vector<8x128xf32>
      %c2944 = arith.constant 2944 : index
      %c0_143 = arith.constant 0 : index
      %195 = vector.load %arg2[%c2944, %c0_143] : memref<3200x128xbf16, #tpu.memory_space<vmem>>, vector<128x128xbf16>
      %196 = arith.truncf %194 : vector<8x128xf32> to vector<8x128xbf16>
      %cst_144 = arith.constant dense<0.000000e+00> : vector<8x128xf32>
      %197 = tpu.matmul %196, %195, %cst_144 {dimension_numbers = #tpu.dot_dimension_numbers<[1], [0], [0], [1], [0, 0, 1, 1], [], []>} : vector<8x128xbf16>, vector<128x128xbf16>, vector<8x128xf32> -> vector<8x128xf32>
      %198 = arith.addf %190, %197 : vector<8x128xf32>
      %c4_i32_145 = arith.constant 4 : i32
      %199 = arith.addi %5, %c4_i32_145 : i32
      %c0_146 = arith.constant 0 : index
      %200 = arith.index_cast %199 : i32 to index
      %c4_147 = arith.constant 4 : index
      %c0_148 = arith.constant 0 : index
      %201 = vector.load %arg1[%c0_146, %200, %c4_147, %c0_148] : memref<1x12x12x128xf32, #tpu.memory_space<vmem>>, vector<1x1x8x128xf32>
      %202 = vector.shape_cast %201 : vector<1x1x8x128xf32> to vector<8x128xf32>
      %c3072 = arith.constant 3072 : index
      %c0_149 = arith.constant 0 : index
      %203 = vector.load %arg2[%c3072, %c0_149] : memref<3200x128xbf16, #tpu.memory_space<vmem>>, vector<128x128xbf16>
      %204 = arith.truncf %202 : vector<8x128xf32> to vector<8x128xbf16>
      %cst_150 = arith.constant dense<0.000000e+00> : vector<8x128xf32>
      %205 = tpu.matmul %204, %203, %cst_150 {dimension_numbers = #tpu.dot_dimension_numbers<[1], [0], [0], [1], [0, 0, 1, 1], [], []>} : vector<8x128xbf16>, vector<128x128xbf16>, vector<8x128xf32> -> vector<8x128xf32>
      %206 = arith.addf %198, %205 : vector<8x128xf32>
      %c2_i32_151 = arith.constant 2 : i32
      %207 = arith.muli %c2_i32_151, %3 : i32
      %c1_i32_152 = arith.constant 1 : i32
      %208 = arith.addi %207, %c1_i32_152 : i32
      %cst_153 = arith.constant 0.000000e+00 : f32
      %209 = vector.broadcast %cst_153 : f32 to vector<8x128xf32>
      %c0_i32_154 = arith.constant 0 : i32
      %210 = arith.addi %208, %c0_i32_154 : i32
      %c0_155 = arith.constant 0 : index
      %211 = arith.index_cast %210 : i32 to index
      %c0_156 = arith.constant 0 : index
      %c0_157 = arith.constant 0 : index
      %212 = vector.load %arg1[%c0_155, %211, %c0_156, %c0_157] : memref<1x12x12x128xf32, #tpu.memory_space<vmem>>, vector<1x1x8x128xf32>
      %213 = vector.shape_cast %212 : vector<1x1x8x128xf32> to vector<8x128xf32>
      %c0_158 = arith.constant 0 : index
      %c0_159 = arith.constant 0 : index
      %214 = vector.load %arg2[%c0_158, %c0_159] : memref<3200x128xbf16, #tpu.memory_space<vmem>>, vector<128x128xbf16>
      %215 = arith.truncf %213 : vector<8x128xf32> to vector<8x128xbf16>
      %cst_160 = arith.constant dense<0.000000e+00> : vector<8x128xf32>
      %216 = tpu.matmul %215, %214, %cst_160 {dimension_numbers = #tpu.dot_dimension_numbers<[1], [0], [0], [1], [0, 0, 1, 1], [], []>} : vector<8x128xbf16>, vector<128x128xbf16>, vector<8x128xf32> -> vector<8x128xf32>
      %217 = arith.addf %209, %216 : vector<8x128xf32>
      %c0_i32_161 = arith.constant 0 : i32
      %218 = arith.addi %208, %c0_i32_161 : i32
      %c0_162 = arith.constant 0 : index
      %219 = arith.index_cast %218 : i32 to index
      %c1_163 = arith.constant 1 : index
      %c0_164 = arith.constant 0 : index
      %220 = vector.load %arg1[%c0_162, %219, %c1_163, %c0_164] : memref<1x12x12x128xf32, #tpu.memory_space<vmem>>, vector<1x1x8x128xf32>
      %221 = vector.shape_cast %220 : vector<1x1x8x128xf32> to vector<8x128xf32>
      %c128_165 = arith.constant 128 : index
      %c0_166 = arith.constant 0 : index
      %222 = vector.load %arg2[%c128_165, %c0_166] : memref<3200x128xbf16, #tpu.memory_space<vmem>>, vector<128x128xbf16>
      %223 = arith.truncf %221 : vector<8x128xf32> to vector<8x128xbf16>
      %cst_167 = arith.constant dense<0.000000e+00> : vector<8x128xf32>
      %224 = tpu.matmul %223, %222, %cst_167 {dimension_numbers = #tpu.dot_dimension_numbers<[1], [0], [0], [1], [0, 0, 1, 1], [], []>} : vector<8x128xbf16>, vector<128x128xbf16>, vector<8x128xf32> -> vector<8x128xf32>
      %225 = arith.addf %217, %224 : vector<8x128xf32>
      %c0_i32_168 = arith.constant 0 : i32
      %226 = arith.addi %208, %c0_i32_168 : i32
      %c0_169 = arith.constant 0 : index
      %227 = arith.index_cast %226 : i32 to index
      %c2_170 = arith.constant 2 : index
      %c0_171 = arith.constant 0 : index
      %228 = vector.load %arg1[%c0_169, %227, %c2_170, %c0_171] : memref<1x12x12x128xf32, #tpu.memory_space<vmem>>, vector<1x1x8x128xf32>
      %229 = vector.shape_cast %228 : vector<1x1x8x128xf32> to vector<8x128xf32>
      %c256_172 = arith.constant 256 : index
      %c0_173 = arith.constant 0 : index
      %230 = vector.load %arg2[%c256_172, %c0_173] : memref<3200x128xbf16, #tpu.memory_space<vmem>>, vector<128x128xbf16>
      %231 = arith.truncf %229 : vector<8x128xf32> to vector<8x128xbf16>
      %cst_174 = arith.constant dense<0.000000e+00> : vector<8x128xf32>
      %232 = tpu.matmul %231, %230, %cst_174 {dimension_numbers = #tpu.dot_dimension_numbers<[1], [0], [0], [1], [0, 0, 1, 1], [], []>} : vector<8x128xbf16>, vector<128x128xbf16>, vector<8x128xf32> -> vector<8x128xf32>
      %233 = arith.addf %225, %232 : vector<8x128xf32>
      %c0_i32_175 = arith.constant 0 : i32
      %234 = arith.addi %208, %c0_i32_175 : i32
      %c0_176 = arith.constant 0 : index
      %235 = arith.index_cast %234 : i32 to index
      %c3_177 = arith.constant 3 : index
      %c0_178 = arith.constant 0 : index
      %236 = vector.load %arg1[%c0_176, %235, %c3_177, %c0_178] : memref<1x12x12x128xf32, #tpu.memory_space<vmem>>, vector<1x1x8x128xf32>
      %237 = vector.shape_cast %236 : vector<1x1x8x128xf32> to vector<8x128xf32>
      %c384_179 = arith.constant 384 : index
      %c0_180 = arith.constant 0 : index
      %238 = vector.load %arg2[%c384_179, %c0_180] : memref<3200x128xbf16, #tpu.memory_space<vmem>>, vector<128x128xbf16>
      %239 = arith.truncf %237 : vector<8x128xf32> to vector<8x128xbf16>
      %cst_181 = arith.constant dense<0.000000e+00> : vector<8x128xf32>
      %240 = tpu.matmul %239, %238, %cst_181 {dimension_numbers = #tpu.dot_dimension_numbers<[1], [0], [0], [1], [0, 0, 1, 1], [], []>} : vector<8x128xbf16>, vector<128x128xbf16>, vector<8x128xf32> -> vector<8x128xf32>
      %241 = arith.addf %233, %240 : vector<8x128xf32>
      %c0_i32_182 = arith.constant 0 : i32
      %242 = arith.addi %208, %c0_i32_182 : i32
      %c0_183 = arith.constant 0 : index
      %243 = arith.index_cast %242 : i32 to index
      %c4_184 = arith.constant 4 : index
      %c0_185 = arith.constant 0 : index
      %244 = vector.load %arg1[%c0_183, %243, %c4_184, %c0_185] : memref<1x12x12x128xf32, #tpu.memory_space<vmem>>, vector<1x1x8x128xf32>
      %245 = vector.shape_cast %244 : vector<1x1x8x128xf32> to vector<8x128xf32>
      %c512_186 = arith.constant 512 : index
      %c0_187 = arith.constant 0 : index
      %246 = vector.load %arg2[%c512_186, %c0_187] : memref<3200x128xbf16, #tpu.memory_space<vmem>>, vector<128x128xbf16>
      %247 = arith.truncf %245 : vector<8x128xf32> to vector<8x128xbf16>
      %cst_188 = arith.constant dense<0.000000e+00> : vector<8x128xf32>
      %248 = tpu.matmul %247, %246, %cst_188 {dimension_numbers = #tpu.dot_dimension_numbers<[1], [0], [0], [1], [0, 0, 1, 1], [], []>} : vector<8x128xbf16>, vector<128x128xbf16>, vector<8x128xf32> -> vector<8x128xf32>
      %249 = arith.addf %241, %248 : vector<8x128xf32>
      %c1_i32_189 = arith.constant 1 : i32
      %250 = arith.addi %208, %c1_i32_189 : i32
      %c0_190 = arith.constant 0 : index
      %251 = arith.index_cast %250 : i32 to index
      %c0_191 = arith.constant 0 : index
      %c0_192 = arith.constant 0 : index
      %252 = vector.load %arg1[%c0_190, %251, %c0_191, %c0_192] : memref<1x12x12x128xf32, #tpu.memory_space<vmem>>, vector<1x1x8x128xf32>
      %253 = vector.shape_cast %252 : vector<1x1x8x128xf32> to vector<8x128xf32>
      %c640_193 = arith.constant 640 : index
      %c0_194 = arith.constant 0 : index
      %254 = vector.load %arg2[%c640_193, %c0_194] : memref<3200x128xbf16, #tpu.memory_space<vmem>>, vector<128x128xbf16>
      %255 = arith.truncf %253 : vector<8x128xf32> to vector<8x128xbf16>
      %cst_195 = arith.constant dense<0.000000e+00> : vector<8x128xf32>
      %256 = tpu.matmul %255, %254, %cst_195 {dimension_numbers = #tpu.dot_dimension_numbers<[1], [0], [0], [1], [0, 0, 1, 1], [], []>} : vector<8x128xbf16>, vector<128x128xbf16>, vector<8x128xf32> -> vector<8x128xf32>
      %257 = arith.addf %249, %256 : vector<8x128xf32>
      %c1_i32_196 = arith.constant 1 : i32
      %258 = arith.addi %208, %c1_i32_196 : i32
      %c0_197 = arith.constant 0 : index
      %259 = arith.index_cast %258 : i32 to index
      %c1_198 = arith.constant 1 : index
      %c0_199 = arith.constant 0 : index
      %260 = vector.load %arg1[%c0_197, %259, %c1_198, %c0_199] : memref<1x12x12x128xf32, #tpu.memory_space<vmem>>, vector<1x1x8x128xf32>
      %261 = vector.shape_cast %260 : vector<1x1x8x128xf32> to vector<8x128xf32>
      %c768_200 = arith.constant 768 : index
      %c0_201 = arith.constant 0 : index
      %262 = vector.load %arg2[%c768_200, %c0_201] : memref<3200x128xbf16, #tpu.memory_space<vmem>>, vector<128x128xbf16>
      %263 = arith.truncf %261 : vector<8x128xf32> to vector<8x128xbf16>
      %cst_202 = arith.constant dense<0.000000e+00> : vector<8x128xf32>
      %264 = tpu.matmul %263, %262, %cst_202 {dimension_numbers = #tpu.dot_dimension_numbers<[1], [0], [0], [1], [0, 0, 1, 1], [], []>} : vector<8x128xbf16>, vector<128x128xbf16>, vector<8x128xf32> -> vector<8x128xf32>
      %265 = arith.addf %257, %264 : vector<8x128xf32>
      %c1_i32_203 = arith.constant 1 : i32
      %266 = arith.addi %208, %c1_i32_203 : i32
      %c0_204 = arith.constant 0 : index
      %267 = arith.index_cast %266 : i32 to index
      %c2_205 = arith.constant 2 : index
      %c0_206 = arith.constant 0 : index
      %268 = vector.load %arg1[%c0_204, %267, %c2_205, %c0_206] : memref<1x12x12x128xf32, #tpu.memory_space<vmem>>, vector<1x1x8x128xf32>
      %269 = vector.shape_cast %268 : vector<1x1x8x128xf32> to vector<8x128xf32>
      %c896_207 = arith.constant 896 : index
      %c0_208 = arith.constant 0 : index
      %270 = vector.load %arg2[%c896_207, %c0_208] : memref<3200x128xbf16, #tpu.memory_space<vmem>>, vector<128x128xbf16>
      %271 = arith.truncf %269 : vector<8x128xf32> to vector<8x128xbf16>
      %cst_209 = arith.constant dense<0.000000e+00> : vector<8x128xf32>
      %272 = tpu.matmul %271, %270, %cst_209 {dimension_numbers = #tpu.dot_dimension_numbers<[1], [0], [0], [1], [0, 0, 1, 1], [], []>} : vector<8x128xbf16>, vector<128x128xbf16>, vector<8x128xf32> -> vector<8x128xf32>
      %273 = arith.addf %265, %272 : vector<8x128xf32>
      %c1_i32_210 = arith.constant 1 : i32
      %274 = arith.addi %208, %c1_i32_210 : i32
      %c0_211 = arith.constant 0 : index
      %275 = arith.index_cast %274 : i32 to index
      %c3_212 = arith.constant 3 : index
      %c0_213 = arith.constant 0 : index
      %276 = vector.load %arg1[%c0_211, %275, %c3_212, %c0_213] : memref<1x12x12x128xf32, #tpu.memory_space<vmem>>, vector<1x1x8x128xf32>
      %277 = vector.shape_cast %276 : vector<1x1x8x128xf32> to vector<8x128xf32>
      %c1024_214 = arith.constant 1024 : index
      %c0_215 = arith.constant 0 : index
      %278 = vector.load %arg2[%c1024_214, %c0_215] : memref<3200x128xbf16, #tpu.memory_space<vmem>>, vector<128x128xbf16>
      %279 = arith.truncf %277 : vector<8x128xf32> to vector<8x128xbf16>
      %cst_216 = arith.constant dense<0.000000e+00> : vector<8x128xf32>
      %280 = tpu.matmul %279, %278, %cst_216 {dimension_numbers = #tpu.dot_dimension_numbers<[1], [0], [0], [1], [0, 0, 1, 1], [], []>} : vector<8x128xbf16>, vector<128x128xbf16>, vector<8x128xf32> -> vector<8x128xf32>
      %281 = arith.addf %273, %280 : vector<8x128xf32>
      %c1_i32_217 = arith.constant 1 : i32
      %282 = arith.addi %208, %c1_i32_217 : i32
      %c0_218 = arith.constant 0 : index
      %283 = arith.index_cast %282 : i32 to index
      %c4_219 = arith.constant 4 : index
      %c0_220 = arith.constant 0 : index
      %284 = vector.load %arg1[%c0_218, %283, %c4_219, %c0_220] : memref<1x12x12x128xf32, #tpu.memory_space<vmem>>, vector<1x1x8x128xf32>
      %285 = vector.shape_cast %284 : vector<1x1x8x128xf32> to vector<8x128xf32>
      %c1152_221 = arith.constant 1152 : index
      %c0_222 = arith.constant 0 : index
      %286 = vector.load %arg2[%c1152_221, %c0_222] : memref<3200x128xbf16, #tpu.memory_space<vmem>>, vector<128x128xbf16>
      %287 = arith.truncf %285 : vector<8x128xf32> to vector<8x128xbf16>
      %cst_223 = arith.constant dense<0.000000e+00> : vector<8x128xf32>
      %288 = tpu.matmul %287, %286, %cst_223 {dimension_numbers = #tpu.dot_dimension_numbers<[1], [0], [0], [1], [0, 0, 1, 1], [], []>} : vector<8x128xbf16>, vector<128x128xbf16>, vector<8x128xf32> -> vector<8x128xf32>
      %289 = arith.addf %281, %288 : vector<8x128xf32>
      %c2_i32_224 = arith.constant 2 : i32
      %290 = arith.addi %208, %c2_i32_224 : i32
      %c0_225 = arith.constant 0 : index
      %291 = arith.index_cast %290 : i32 to index
      %c0_226 = arith.constant 0 : index
      %c0_227 = arith.constant 0 : index
      %292 = vector.load %arg1[%c0_225, %291, %c0_226, %c0_227] : memref<1x12x12x128xf32, #tpu.memory_space<vmem>>, vector<1x1x8x128xf32>
      %293 = vector.shape_cast %292 : vector<1x1x8x128xf32> to vector<8x128xf32>
      %c1280_228 = arith.constant 1280 : index
      %c0_229 = arith.constant 0 : index
      %294 = vector.load %arg2[%c1280_228, %c0_229] : memref<3200x128xbf16, #tpu.memory_space<vmem>>, vector<128x128xbf16>
      %295 = arith.truncf %293 : vector<8x128xf32> to vector<8x128xbf16>
      %cst_230 = arith.constant dense<0.000000e+00> : vector<8x128xf32>
      %296 = tpu.matmul %295, %294, %cst_230 {dimension_numbers = #tpu.dot_dimension_numbers<[1], [0], [0], [1], [0, 0, 1, 1], [], []>} : vector<8x128xbf16>, vector<128x128xbf16>, vector<8x128xf32> -> vector<8x128xf32>
      %297 = arith.addf %289, %296 : vector<8x128xf32>
      %c2_i32_231 = arith.constant 2 : i32
      %298 = arith.addi %208, %c2_i32_231 : i32
      %c0_232 = arith.constant 0 : index
      %299 = arith.index_cast %298 : i32 to index
      %c1_233 = arith.constant 1 : index
      %c0_234 = arith.constant 0 : index
      %300 = vector.load %arg1[%c0_232, %299, %c1_233, %c0_234] : memref<1x12x12x128xf32, #tpu.memory_space<vmem>>, vector<1x1x8x128xf32>
      %301 = vector.shape_cast %300 : vector<1x1x8x128xf32> to vector<8x128xf32>
      %c1408_235 = arith.constant 1408 : index
      %c0_236 = arith.constant 0 : index
      %302 = vector.load %arg2[%c1408_235, %c0_236] : memref<3200x128xbf16, #tpu.memory_space<vmem>>, vector<128x128xbf16>
      %303 = arith.truncf %301 : vector<8x128xf32> to vector<8x128xbf16>
      %cst_237 = arith.constant dense<0.000000e+00> : vector<8x128xf32>
      %304 = tpu.matmul %303, %302, %cst_237 {dimension_numbers = #tpu.dot_dimension_numbers<[1], [0], [0], [1], [0, 0, 1, 1], [], []>} : vector<8x128xbf16>, vector<128x128xbf16>, vector<8x128xf32> -> vector<8x128xf32>
      %305 = arith.addf %297, %304 : vector<8x128xf32>
      %c2_i32_238 = arith.constant 2 : i32
      %306 = arith.addi %208, %c2_i32_238 : i32
      %c0_239 = arith.constant 0 : index
      %307 = arith.index_cast %306 : i32 to index
      %c2_240 = arith.constant 2 : index
      %c0_241 = arith.constant 0 : index
      %308 = vector.load %arg1[%c0_239, %307, %c2_240, %c0_241] : memref<1x12x12x128xf32, #tpu.memory_space<vmem>>, vector<1x1x8x128xf32>
      %309 = vector.shape_cast %308 : vector<1x1x8x128xf32> to vector<8x128xf32>
      %c1536_242 = arith.constant 1536 : index
      %c0_243 = arith.constant 0 : index
      %310 = vector.load %arg2[%c1536_242, %c0_243] : memref<3200x128xbf16, #tpu.memory_space<vmem>>, vector<128x128xbf16>
      %311 = arith.truncf %309 : vector<8x128xf32> to vector<8x128xbf16>
      %cst_244 = arith.constant dense<0.000000e+00> : vector<8x128xf32>
      %312 = tpu.matmul %311, %310, %cst_244 {dimension_numbers = #tpu.dot_dimension_numbers<[1], [0], [0], [1], [0, 0, 1, 1], [], []>} : vector<8x128xbf16>, vector<128x128xbf16>, vector<8x128xf32> -> vector<8x128xf32>
      %313 = arith.addf %305, %312 : vector<8x128xf32>
      %c2_i32_245 = arith.constant 2 : i32
      %314 = arith.addi %208, %c2_i32_245 : i32
      %c0_246 = arith.constant 0 : index
      %315 = arith.index_cast %314 : i32 to index
      %c3_247 = arith.constant 3 : index
      %c0_248 = arith.constant 0 : index
      %316 = vector.load %arg1[%c0_246, %315, %c3_247, %c0_248] : memref<1x12x12x128xf32, #tpu.memory_space<vmem>>, vector<1x1x8x128xf32>
      %317 = vector.shape_cast %316 : vector<1x1x8x128xf32> to vector<8x128xf32>
      %c1664_249 = arith.constant 1664 : index
      %c0_250 = arith.constant 0 : index
      %318 = vector.load %arg2[%c1664_249, %c0_250] : memref<3200x128xbf16, #tpu.memory_space<vmem>>, vector<128x128xbf16>
      %319 = arith.truncf %317 : vector<8x128xf32> to vector<8x128xbf16>
      %cst_251 = arith.constant dense<0.000000e+00> : vector<8x128xf32>
      %320 = tpu.matmul %319, %318, %cst_251 {dimension_numbers = #tpu.dot_dimension_numbers<[1], [0], [0], [1], [0, 0, 1, 1], [], []>} : vector<8x128xbf16>, vector<128x128xbf16>, vector<8x128xf32> -> vector<8x128xf32>
      %321 = arith.addf %313, %320 : vector<8x128xf32>
      %c2_i32_252 = arith.constant 2 : i32
      %322 = arith.addi %208, %c2_i32_252 : i32
      %c0_253 = arith.constant 0 : index
      %323 = arith.index_cast %322 : i32 to index
      %c4_254 = arith.constant 4 : index
      %c0_255 = arith.constant 0 : index
      %324 = vector.load %arg1[%c0_253, %323, %c4_254, %c0_255] : memref<1x12x12x128xf32, #tpu.memory_space<vmem>>, vector<1x1x8x128xf32>
      %325 = vector.shape_cast %324 : vector<1x1x8x128xf32> to vector<8x128xf32>
      %c1792_256 = arith.constant 1792 : index
      %c0_257 = arith.constant 0 : index
      %326 = vector.load %arg2[%c1792_256, %c0_257] : memref<3200x128xbf16, #tpu.memory_space<vmem>>, vector<128x128xbf16>
      %327 = arith.truncf %325 : vector<8x128xf32> to vector<8x128xbf16>
      %cst_258 = arith.constant dense<0.000000e+00> : vector<8x128xf32>
      %328 = tpu.matmul %327, %326, %cst_258 {dimension_numbers = #tpu.dot_dimension_numbers<[1], [0], [0], [1], [0, 0, 1, 1], [], []>} : vector<8x128xbf16>, vector<128x128xbf16>, vector<8x128xf32> -> vector<8x128xf32>
      %329 = arith.addf %321, %328 : vector<8x128xf32>
      %c3_i32_259 = arith.constant 3 : i32
      %330 = arith.addi %208, %c3_i32_259 : i32
      %c0_260 = arith.constant 0 : index
      %331 = arith.index_cast %330 : i32 to index
      %c0_261 = arith.constant 0 : index
      %c0_262 = arith.constant 0 : index
      %332 = vector.load %arg1[%c0_260, %331, %c0_261, %c0_262] : memref<1x12x12x128xf32, #tpu.memory_space<vmem>>, vector<1x1x8x128xf32>
      %333 = vector.shape_cast %332 : vector<1x1x8x128xf32> to vector<8x128xf32>
      %c1920_263 = arith.constant 1920 : index
      %c0_264 = arith.constant 0 : index
      %334 = vector.load %arg2[%c1920_263, %c0_264] : memref<3200x128xbf16, #tpu.memory_space<vmem>>, vector<128x128xbf16>
      %335 = arith.truncf %333 : vector<8x128xf32> to vector<8x128xbf16>
      %cst_265 = arith.constant dense<0.000000e+00> : vector<8x128xf32>
      %336 = tpu.matmul %335, %334, %cst_265 {dimension_numbers = #tpu.dot_dimension_numbers<[1], [0], [0], [1], [0, 0, 1, 1], [], []>} : vector<8x128xbf16>, vector<128x128xbf16>, vector<8x128xf32> -> vector<8x128xf32>
      %337 = arith.addf %329, %336 : vector<8x128xf32>
      %c3_i32_266 = arith.constant 3 : i32
      %338 = arith.addi %208, %c3_i32_266 : i32
      %c0_267 = arith.constant 0 : index
      %339 = arith.index_cast %338 : i32 to index
      %c1_268 = arith.constant 1 : index
      %c0_269 = arith.constant 0 : index
      %340 = vector.load %arg1[%c0_267, %339, %c1_268, %c0_269] : memref<1x12x12x128xf32, #tpu.memory_space<vmem>>, vector<1x1x8x128xf32>
      %341 = vector.shape_cast %340 : vector<1x1x8x128xf32> to vector<8x128xf32>
      %c2048_270 = arith.constant 2048 : index
      %c0_271 = arith.constant 0 : index
      %342 = vector.load %arg2[%c2048_270, %c0_271] : memref<3200x128xbf16, #tpu.memory_space<vmem>>, vector<128x128xbf16>
      %343 = arith.truncf %341 : vector<8x128xf32> to vector<8x128xbf16>
      %cst_272 = arith.constant dense<0.000000e+00> : vector<8x128xf32>
      %344 = tpu.matmul %343, %342, %cst_272 {dimension_numbers = #tpu.dot_dimension_numbers<[1], [0], [0], [1], [0, 0, 1, 1], [], []>} : vector<8x128xbf16>, vector<128x128xbf16>, vector<8x128xf32> -> vector<8x128xf32>
      %345 = arith.addf %337, %344 : vector<8x128xf32>
      %c3_i32_273 = arith.constant 3 : i32
      %346 = arith.addi %208, %c3_i32_273 : i32
      %c0_274 = arith.constant 0 : index
      %347 = arith.index_cast %346 : i32 to index
      %c2_275 = arith.constant 2 : index
      %c0_276 = arith.constant 0 : index
      %348 = vector.load %arg1[%c0_274, %347, %c2_275, %c0_276] : memref<1x12x12x128xf32, #tpu.memory_space<vmem>>, vector<1x1x8x128xf32>
      %349 = vector.shape_cast %348 : vector<1x1x8x128xf32> to vector<8x128xf32>
      %c2176_277 = arith.constant 2176 : index
      %c0_278 = arith.constant 0 : index
      %350 = vector.load %arg2[%c2176_277, %c0_278] : memref<3200x128xbf16, #tpu.memory_space<vmem>>, vector<128x128xbf16>
      %351 = arith.truncf %349 : vector<8x128xf32> to vector<8x128xbf16>
      %cst_279 = arith.constant dense<0.000000e+00> : vector<8x128xf32>
      %352 = tpu.matmul %351, %350, %cst_279 {dimension_numbers = #tpu.dot_dimension_numbers<[1], [0], [0], [1], [0, 0, 1, 1], [], []>} : vector<8x128xbf16>, vector<128x128xbf16>, vector<8x128xf32> -> vector<8x128xf32>
      %353 = arith.addf %345, %352 : vector<8x128xf32>
      %c3_i32_280 = arith.constant 3 : i32
      %354 = arith.addi %208, %c3_i32_280 : i32
      %c0_281 = arith.constant 0 : index
      %355 = arith.index_cast %354 : i32 to index
      %c3_282 = arith.constant 3 : index
      %c0_283 = arith.constant 0 : index
      %356 = vector.load %arg1[%c0_281, %355, %c3_282, %c0_283] : memref<1x12x12x128xf32, #tpu.memory_space<vmem>>, vector<1x1x8x128xf32>
      %357 = vector.shape_cast %356 : vector<1x1x8x128xf32> to vector<8x128xf32>
      %c2304_284 = arith.constant 2304 : index
      %c0_285 = arith.constant 0 : index
      %358 = vector.load %arg2[%c2304_284, %c0_285] : memref<3200x128xbf16, #tpu.memory_space<vmem>>, vector<128x128xbf16>
      %359 = arith.truncf %357 : vector<8x128xf32> to vector<8x128xbf16>
      %cst_286 = arith.constant dense<0.000000e+00> : vector<8x128xf32>
      %360 = tpu.matmul %359, %358, %cst_286 {dimension_numbers = #tpu.dot_dimension_numbers<[1], [0], [0], [1], [0, 0, 1, 1], [], []>} : vector<8x128xbf16>, vector<128x128xbf16>, vector<8x128xf32> -> vector<8x128xf32>
      %361 = arith.addf %353, %360 : vector<8x128xf32>
      %c3_i32_287 = arith.constant 3 : i32
      %362 = arith.addi %208, %c3_i32_287 : i32
      %c0_288 = arith.constant 0 : index
      %363 = arith.index_cast %362 : i32 to index
      %c4_289 = arith.constant 4 : index
      %c0_290 = arith.constant 0 : index
      %364 = vector.load %arg1[%c0_288, %363, %c4_289, %c0_290] : memref<1x12x12x128xf32, #tpu.memory_space<vmem>>, vector<1x1x8x128xf32>
      %365 = vector.shape_cast %364 : vector<1x1x8x128xf32> to vector<8x128xf32>
      %c2432_291 = arith.constant 2432 : index
      %c0_292 = arith.constant 0 : index
      %366 = vector.load %arg2[%c2432_291, %c0_292] : memref<3200x128xbf16, #tpu.memory_space<vmem>>, vector<128x128xbf16>
      %367 = arith.truncf %365 : vector<8x128xf32> to vector<8x128xbf16>
      %cst_293 = arith.constant dense<0.000000e+00> : vector<8x128xf32>
      %368 = tpu.matmul %367, %366, %cst_293 {dimension_numbers = #tpu.dot_dimension_numbers<[1], [0], [0], [1], [0, 0, 1, 1], [], []>} : vector<8x128xbf16>, vector<128x128xbf16>, vector<8x128xf32> -> vector<8x128xf32>
      %369 = arith.addf %361, %368 : vector<8x128xf32>
      %c4_i32_294 = arith.constant 4 : i32
      %370 = arith.addi %208, %c4_i32_294 : i32
      %c0_295 = arith.constant 0 : index
      %371 = arith.index_cast %370 : i32 to index
      %c0_296 = arith.constant 0 : index
      %c0_297 = arith.constant 0 : index
      %372 = vector.load %arg1[%c0_295, %371, %c0_296, %c0_297] : memref<1x12x12x128xf32, #tpu.memory_space<vmem>>, vector<1x1x8x128xf32>
      %373 = vector.shape_cast %372 : vector<1x1x8x128xf32> to vector<8x128xf32>
      %c2560_298 = arith.constant 2560 : index
      %c0_299 = arith.constant 0 : index
      %374 = vector.load %arg2[%c2560_298, %c0_299] : memref<3200x128xbf16, #tpu.memory_space<vmem>>, vector<128x128xbf16>
      %375 = arith.truncf %373 : vector<8x128xf32> to vector<8x128xbf16>
      %cst_300 = arith.constant dense<0.000000e+00> : vector<8x128xf32>
      %376 = tpu.matmul %375, %374, %cst_300 {dimension_numbers = #tpu.dot_dimension_numbers<[1], [0], [0], [1], [0, 0, 1, 1], [], []>} : vector<8x128xbf16>, vector<128x128xbf16>, vector<8x128xf32> -> vector<8x128xf32>
      %377 = arith.addf %369, %376 : vector<8x128xf32>
      %c4_i32_301 = arith.constant 4 : i32
      %378 = arith.addi %208, %c4_i32_301 : i32
      %c0_302 = arith.constant 0 : index
      %379 = arith.index_cast %378 : i32 to index
      %c1_303 = arith.constant 1 : index
      %c0_304 = arith.constant 0 : index
      %380 = vector.load %arg1[%c0_302, %379, %c1_303, %c0_304] : memref<1x12x12x128xf32, #tpu.memory_space<vmem>>, vector<1x1x8x128xf32>
      %381 = vector.shape_cast %380 : vector<1x1x8x128xf32> to vector<8x128xf32>
      %c2688_305 = arith.constant 2688 : index
      %c0_306 = arith.constant 0 : index
      %382 = vector.load %arg2[%c2688_305, %c0_306] : memref<3200x128xbf16, #tpu.memory_space<vmem>>, vector<128x128xbf16>
      %383 = arith.truncf %381 : vector<8x128xf32> to vector<8x128xbf16>
      %cst_307 = arith.constant dense<0.000000e+00> : vector<8x128xf32>
      %384 = tpu.matmul %383, %382, %cst_307 {dimension_numbers = #tpu.dot_dimension_numbers<[1], [0], [0], [1], [0, 0, 1, 1], [], []>} : vector<8x128xbf16>, vector<128x128xbf16>, vector<8x128xf32> -> vector<8x128xf32>
      %385 = arith.addf %377, %384 : vector<8x128xf32>
      %c4_i32_308 = arith.constant 4 : i32
      %386 = arith.addi %208, %c4_i32_308 : i32
      %c0_309 = arith.constant 0 : index
      %387 = arith.index_cast %386 : i32 to index
      %c2_310 = arith.constant 2 : index
      %c0_311 = arith.constant 0 : index
      %388 = vector.load %arg1[%c0_309, %387, %c2_310, %c0_311] : memref<1x12x12x128xf32, #tpu.memory_space<vmem>>, vector<1x1x8x128xf32>
      %389 = vector.shape_cast %388 : vector<1x1x8x128xf32> to vector<8x128xf32>
      %c2816_312 = arith.constant 2816 : index
      %c0_313 = arith.constant 0 : index
      %390 = vector.load %arg2[%c2816_312, %c0_313] : memref<3200x128xbf16, #tpu.memory_space<vmem>>, vector<128x128xbf16>
      %391 = arith.truncf %389 : vector<8x128xf32> to vector<8x128xbf16>
      %cst_314 = arith.constant dense<0.000000e+00> : vector<8x128xf32>
      %392 = tpu.matmul %391, %390, %cst_314 {dimension_numbers = #tpu.dot_dimension_numbers<[1], [0], [0], [1], [0, 0, 1, 1], [], []>} : vector<8x128xbf16>, vector<128x128xbf16>, vector<8x128xf32> -> vector<8x128xf32>
      %393 = arith.addf %385, %392 : vector<8x128xf32>
      %c4_i32_315 = arith.constant 4 : i32
      %394 = arith.addi %208, %c4_i32_315 : i32
      %c0_316 = arith.constant 0 : index
      %395 = arith.index_cast %394 : i32 to index
      %c3_317 = arith.constant 3 : index
      %c0_318 = arith.constant 0 : index
      %396 = vector.load %arg1[%c0_316, %395, %c3_317, %c0_318] : memref<1x12x12x128xf32, #tpu.memory_space<vmem>>, vector<1x1x8x128xf32>
      %397 = vector.shape_cast %396 : vector<1x1x8x128xf32> to vector<8x128xf32>
      %c2944_319 = arith.constant 2944 : index
      %c0_320 = arith.constant 0 : index
      %398 = vector.load %arg2[%c2944_319, %c0_320] : memref<3200x128xbf16, #tpu.memory_space<vmem>>, vector<128x128xbf16>
      %399 = arith.truncf %397 : vector<8x128xf32> to vector<8x128xbf16>
      %cst_321 = arith.constant dense<0.000000e+00> : vector<8x128xf32>
      %400 = tpu.matmul %399, %398, %cst_321 {dimension_numbers = #tpu.dot_dimension_numbers<[1], [0], [0], [1], [0, 0, 1, 1], [], []>} : vector<8x128xbf16>, vector<128x128xbf16>, vector<8x128xf32> -> vector<8x128xf32>
      %401 = arith.addf %393, %400 : vector<8x128xf32>
      %c4_i32_322 = arith.constant 4 : i32
      %402 = arith.addi %208, %c4_i32_322 : i32
      %c0_323 = arith.constant 0 : index
      %403 = arith.index_cast %402 : i32 to index
      %c4_324 = arith.constant 4 : index
      %c0_325 = arith.constant 0 : index
      %404 = vector.load %arg1[%c0_323, %403, %c4_324, %c0_325] : memref<1x12x12x128xf32, #tpu.memory_space<vmem>>, vector<1x1x8x128xf32>
      %405 = vector.shape_cast %404 : vector<1x1x8x128xf32> to vector<8x128xf32>
      %c3072_326 = arith.constant 3072 : index
      %c0_327 = arith.constant 0 : index
      %406 = vector.load %arg2[%c3072_326, %c0_327] : memref<3200x128xbf16, #tpu.memory_space<vmem>>, vector<128x128xbf16>
      %407 = arith.truncf %405 : vector<8x128xf32> to vector<8x128xbf16>
      %cst_328 = arith.constant dense<0.000000e+00> : vector<8x128xf32>
      %408 = tpu.matmul %407, %406, %cst_328 {dimension_numbers = #tpu.dot_dimension_numbers<[1], [0], [0], [1], [0, 0, 1, 1], [], []>} : vector<8x128xbf16>, vector<128x128xbf16>, vector<8x128xf32> -> vector<8x128xf32>
      %409 = arith.addf %401, %408 : vector<8x128xf32>
      %410 = arith.maximumf %206, %409 : vector<8x128xf32>
      %c0_329 = arith.constant 0 : index
      %c0_330 = arith.constant 0 : index
      %411 = vector.load %arg5[%c0_329, %c0_330] : memref<8x128xf32, #tpu.memory_space<vmem>>, vector<8x128xf32>
      tpu.vector_store %arg5[%c0_329, %c0_330], %410 {strides = array<i32>} : memref<8x128xf32, #tpu.memory_space<vmem>>, vector<8x128xf32>,
      %c0_331 = arith.constant 0 : index
      %c0_332 = arith.constant 0 : index
      %412 = tpu.strided_load %arg5[%c0_331, %c0_332] {strides = array<i32: 2, 1>} : memref<8x128xf32, #tpu.memory_space<vmem>>, vector<4x128xf32>
      %c1_333 = arith.constant 1 : index
      %c0_334 = arith.constant 0 : index
      %413 = tpu.strided_load %arg5[%c1_333, %c0_334] {strides = array<i32: 2, 1>} : memref<8x128xf32, #tpu.memory_space<vmem>>, vector<4x128xf32>
      %414 = arith.maximumf %412, %413 : vector<4x128xf32>
      %415 = vector.broadcast %0 : vector<1x128xf32> to vector<4x128xf32>
      %416 = arith.addf %414, %415 : vector<4x128xf32>
      %cst_335 = arith.constant 0.000000e+00 : f32
      %417 = vector.broadcast %cst_335 : f32 to vector<4x128xf32>
      %418 = arith.maximumf %416, %417 : vector<4x128xf32>
      %c0_336 = arith.constant 0 : index
      %419 = arith.index_cast %3 : i32 to index
      %c0_337 = arith.constant 0 : index
      %c0_338 = arith.constant 0 : index
      %420 = vector.load %arg4[%c0_336, %419, %c0_337, %c0_338] : memref<1x4x4x128xf32, #tpu.memory_space<vmem>>, vector<1x1x4x128xf32>
      %421 = vector.shape_cast %420 : vector<1x1x4x128xf32> to vector<4x128xf32>
      %422 = vector.shape_cast %418 : vector<4x128xf32> to vector<1x1x4x128xf32>
      tpu.vector_store %arg4[%c0_336, %419, %c0_337, %c0_338], %422 {strides = array<i32>} : memref<1x4x4x128xf32, #tpu.memory_space<vmem>>, vector<1x1x4x128xf32>,
    }
    %c4_i32_1 = arith.constant 4 : i32
    return
  }
  func.func @transform_0(%arg0: i32) -> (i32, i32, i32, i32) {
    %c0_i32 = arith.constant 0 : i32
    %c0_i32_0 = arith.constant 0 : i32
    %c0_i32_1 = arith.constant 0 : i32
    %c0_i32_2 = arith.constant 0 : i32
    return %arg0, %c0_i32, %c0_i32_0, %c0_i32_1 : i32, i32, i32, i32
  }
  func.func @transform_1(%arg0: i32) -> (i32, i32) {
    %c0_i32 = arith.constant 0 : i32
    %c0_i32_0 = arith.constant 0 : i32
    %c0_i32_1 = arith.constant 0 : i32
    return %c0_i32, %c0_i32_0 : i32, i32
  }
  func.func @transform_2(%arg0: i32) -> (i32, i32) {
    %c0_i32 = arith.constant 0 : i32
    %c0_i32_0 = arith.constant 0 : i32
    %c0_i32_1 = arith.constant 0 : i32
    return %c0_i32, %c0_i32_0 : i32, i32
  }
  func.func @transform_3(%arg0: i32) -> (i32, i32, i32, i32) {
    %c0_i32 = arith.constant 0 : i32
    %c0_i32_0 = arith.constant 0 : i32
    %c0_i32_1 = arith.constant 0 : i32
    %c0_i32_2 = arith.constant 0 : i32
    return %arg0, %c0_i32, %c0_i32_0, %c0_i32_1 : i32, i32, i32, i32
  }
}

module attributes {stable_mosaic.version = 11 : i64} {
  func.func @mlp_head_kernel(%arg0: i32, %arg1: memref<8x2048xf32, #tpu.memory_space<vmem>>, %arg2: memref<2048x128xbf16, #tpu.memory_space<vmem>>, %arg3: memref<1x128xf32, #tpu.memory_space<vmem>>, %arg4: memref<128x128xbf16, #tpu.memory_space<vmem>>, %arg5: memref<1x128xf32, #tpu.memory_space<vmem>>, %arg6: memref<128x128xbf16, #tpu.memory_space<vmem>>, %arg7: memref<1x128xf32, #tpu.memory_space<vmem>>, %arg8: memref<8x128xf32, #tpu.memory_space<vmem>>) attributes {dimension_semantics = [#tpu.dimension_semantics<parallel>], iteration_bounds = array<i64: 1>, scalar_prefetch = 0 : i64, scratch_operands = 0 : i64, tpu.core_type = #tpu.core_type<tc>, window_params = [{transform_indices = @transform_0, window_bounds = array<i64: 8, 2048>}, {pipeline_mode = #tpu.pipeline_mode<synchronous>, transform_indices = @transform_1, window_bounds = array<i64: 2048, 128>}, {pipeline_mode = #tpu.pipeline_mode<synchronous>, transform_indices = @transform_2, window_bounds = array<i64: 1, 128>}, {pipeline_mode = #tpu.pipeline_mode<synchronous>, transform_indices = @transform_3, window_bounds = array<i64: 128, 128>}, {pipeline_mode = #tpu.pipeline_mode<synchronous>, transform_indices = @transform_4, window_bounds = array<i64: 1, 128>}, {pipeline_mode = #tpu.pipeline_mode<synchronous>, transform_indices = @transform_5, window_bounds = array<i64: 128, 128>}, {pipeline_mode = #tpu.pipeline_mode<synchronous>, transform_indices = @transform_6, window_bounds = array<i64: 1, 128>}, {transform_indices = @transform_7, window_bounds = array<i64: 8, 128>}]} {
    %c0 = arith.constant 0 : index
    %c0_0 = arith.constant 0 : index
    %0 = vector.load %arg1[%c0, %c0_0] : memref<8x2048xf32, #tpu.memory_space<vmem>>, vector<8x2048xf32>
    %1 = arith.truncf %0 : vector<8x2048xf32> to vector<8x2048xbf16>
    %c0_1 = arith.constant 0 : index
    %c0_2 = arith.constant 0 : index
    %2 = vector.load %arg2[%c0_1, %c0_2] : memref<2048x128xbf16, #tpu.memory_space<vmem>>, vector<2048x128xbf16>
    %cst = arith.constant dense<0.000000e+00> : vector<8x128xf32>
    %3 = tpu.matmul %1, %2, %cst {dimension_numbers = #tpu.dot_dimension_numbers<[1], [0], [0], [1], [0, 0, 1, 1], [], []>} : vector<8x2048xbf16>, vector<2048x128xbf16>, vector<8x128xf32> -> vector<8x128xf32>
    %c0_3 = arith.constant 0 : index
    %c0_4 = arith.constant 0 : index
    %4 = vector.load %arg3[%c0_3, %c0_4] : memref<1x128xf32, #tpu.memory_space<vmem>>, vector<1x128xf32>
    %5 = vector.broadcast %4 : vector<1x128xf32> to vector<8x128xf32>
    %6 = arith.addf %3, %5 : vector<8x128xf32>
    %cst_5 = arith.constant 0.000000e+00 : f32
    %7 = vector.broadcast %cst_5 : f32 to vector<8x128xf32>
    %8 = arith.maximumf %6, %7 : vector<8x128xf32>
    %9 = arith.truncf %8 : vector<8x128xf32> to vector<8x128xbf16>
    %c0_6 = arith.constant 0 : index
    %c0_7 = arith.constant 0 : index
    %10 = vector.load %arg4[%c0_6, %c0_7] : memref<128x128xbf16, #tpu.memory_space<vmem>>, vector<128x128xbf16>
    %cst_8 = arith.constant dense<0.000000e+00> : vector<8x128xf32>
    %11 = tpu.matmul %9, %10, %cst_8 {dimension_numbers = #tpu.dot_dimension_numbers<[1], [0], [0], [1], [0, 0, 1, 1], [], []>} : vector<8x128xbf16>, vector<128x128xbf16>, vector<8x128xf32> -> vector<8x128xf32>
    %c0_9 = arith.constant 0 : index
    %c0_10 = arith.constant 0 : index
    %12 = vector.load %arg5[%c0_9, %c0_10] : memref<1x128xf32, #tpu.memory_space<vmem>>, vector<1x128xf32>
    %13 = vector.broadcast %12 : vector<1x128xf32> to vector<8x128xf32>
    %14 = arith.addf %11, %13 : vector<8x128xf32>
    %cst_11 = arith.constant 0.000000e+00 : f32
    %15 = vector.broadcast %cst_11 : f32 to vector<8x128xf32>
    %16 = arith.maximumf %14, %15 : vector<8x128xf32>
    %17 = arith.truncf %16 : vector<8x128xf32> to vector<8x128xbf16>
    %c0_12 = arith.constant 0 : index
    %c0_13 = arith.constant 0 : index
    %18 = vector.load %arg6[%c0_12, %c0_13] : memref<128x128xbf16, #tpu.memory_space<vmem>>, vector<128x128xbf16>
    %cst_14 = arith.constant dense<0.000000e+00> : vector<8x128xf32>
    %19 = tpu.matmul %17, %18, %cst_14 {dimension_numbers = #tpu.dot_dimension_numbers<[1], [0], [0], [1], [0, 0, 1, 1], [], []>} : vector<8x128xbf16>, vector<128x128xbf16>, vector<8x128xf32> -> vector<8x128xf32>
    %c0_15 = arith.constant 0 : index
    %c0_16 = arith.constant 0 : index
    %20 = vector.load %arg7[%c0_15, %c0_16] : memref<1x128xf32, #tpu.memory_space<vmem>>, vector<1x128xf32>
    %21 = vector.broadcast %20 : vector<1x128xf32> to vector<8x128xf32>
    %22 = arith.addf %19, %21 : vector<8x128xf32>
    %c0_17 = arith.constant 0 : index
    %c0_18 = arith.constant 0 : index
    %23 = vector.load %arg8[%c0_17, %c0_18] : memref<8x128xf32, #tpu.memory_space<vmem>>, vector<8x128xf32>
    tpu.vector_store %arg8[%c0_17, %c0_18], %22 {strides = array<i32>} : memref<8x128xf32, #tpu.memory_space<vmem>>, vector<8x128xf32>,
    return
  }
  func.func @transform_0(%arg0: i32) -> (i32, i32) {
    %c0_i32 = arith.constant 0 : i32
    %c0_i32_0 = arith.constant 0 : i32
    return %arg0, %c0_i32 : i32, i32
  }
  func.func @transform_1(%arg0: i32) -> (i32, i32) {
    %c0_i32 = arith.constant 0 : i32
    %c0_i32_0 = arith.constant 0 : i32
    %c0_i32_1 = arith.constant 0 : i32
    return %c0_i32, %c0_i32_0 : i32, i32
  }
  func.func @transform_2(%arg0: i32) -> (i32, i32) {
    %c0_i32 = arith.constant 0 : i32
    %c0_i32_0 = arith.constant 0 : i32
    %c0_i32_1 = arith.constant 0 : i32
    return %c0_i32, %c0_i32_0 : i32, i32
  }
  func.func @transform_3(%arg0: i32) -> (i32, i32) {
    %c0_i32 = arith.constant 0 : i32
    %c0_i32_0 = arith.constant 0 : i32
    %c0_i32_1 = arith.constant 0 : i32
    return %c0_i32, %c0_i32_0 : i32, i32
  }
  func.func @transform_4(%arg0: i32) -> (i32, i32) {
    %c0_i32 = arith.constant 0 : i32
    %c0_i32_0 = arith.constant 0 : i32
    %c0_i32_1 = arith.constant 0 : i32
    return %c0_i32, %c0_i32_0 : i32, i32
  }
  func.func @transform_5(%arg0: i32) -> (i32, i32) {
    %c0_i32 = arith.constant 0 : i32
    %c0_i32_0 = arith.constant 0 : i32
    %c0_i32_1 = arith.constant 0 : i32
    return %c0_i32, %c0_i32_0 : i32, i32
  }
  func.func @transform_6(%arg0: i32) -> (i32, i32) {
    %c0_i32 = arith.constant 0 : i32
    %c0_i32_0 = arith.constant 0 : i32
    %c0_i32_1 = arith.constant 0 : i32
    return %c0_i32, %c0_i32_0 : i32, i32
  }
  func.func @transform_7(%arg0: i32) -> (i32, i32) {
    %c0_i32 = arith.constant 0 : i32
    %c0_i32_0 = arith.constant 0 : i32
    return %arg0, %c0_i32 : i32, i32
  }
}

</mosaic_0001>

<llo_original>
// kernel: simple_classifier_forward.3
$region0: #{simple_classifier_forward.3}
  #allocation0 [shape = 'u32[]', space=smem, size = 0x4, offset = 0x4, fixed_abs, tag = 'smem constant byte address 0x4 - core index']
  #allocation1 [shape = 'u32[144,128]{1,0:T(1,128)}', space=vmem, size = 0x12000, scoped, tag = 'internal scratch']
  #allocation2 [shape = 'f32[24,128]{1,0:T(8,128)}', space=vmem, size = 0x3000, scoped, tag = 'scratch operand']
  %s0 = inlined_call_operand.vmem [shape: f32[2,28,28,3], index: 0, kind: input, shape index: {}]
  %s1 = inlined_call_operand.vmem [shape: bf16[75,128], index: 1, kind: input, shape index: {}]
  %s2 = inlined_call_operand.vmem [shape: f32[1,128], index: 2, kind: input, shape index: {}]
  %s3 = inlined_call_operand.vmem [shape: f32[2,12,12,128], index: 3, kind: output, shape index: {}]
  %s4 = sld [smem:[#allocation0]]
  $region52: #{simple_classifier_forward.3} parent=0
    _
  %s6 = ssub.s32 1, %s4
  %s7 = scalar_select 0, %s6, %s4
  loop: start=0, step=1, limit=4
  $region2: #{simple_classifier_forward.3} parent=0 // loop_pre_header
    _
  $region3: #{simple_classifier_forward.3} parent=0 // loop_header
    %s9 = sphi 0, %s13
    %p10 = scmp.ge.s32.totalorder %s9, 4
    %s19 = sphi 0, %s21
    %s22 = sphi 0, %s19
    %s23 = sphi 0, %s22
    %s39 = sphi 0, %s23
    %s43 = sphi 0, %s43
    %s45 = sphi 0, %s43
    %s46 = sphi 0, %s45
    %s60 = sphi 0, %s46
    %s64 = sphi 0, %s64
    %s66 = sphi 0, %s64
    %s67 = sphi 0, %s66
    %s81 = sphi 0, %s67
    %s87 = sphi 0, %s89
    %s90 = sphi 0, %s87
    %s91 = sphi 0, %s90
    %s107 = sphi 0, %s91
  $region4: #{simple_classifier_forward.3} parent=0 // loop_header_branch
    %12 = sbr.rel (%p10) target = $region8
  $region5: #{simple_classifier_forward.3} parent=0 // loop_body
    %s14 = ssub.s32 %s9, 1
    %s15 = ssub.s32 %s9, 2
    %s16 = sadd.s32 %s9, 1
    %s17 = ssub.s32 %s9, %s16
    %p18 = scmp.eq.s32.totalorder %s17, 0
    %s20 = sadd.s32 %s19, 1
    %s21 = scalar_select %p18, %s19, %s20
    %p24 = pneg %p18
    %p25 = scmp.eq.s32.totalorder %s9, 1
    %p26 = por %p24, %p25
    %p27 = scmp.ne.s32.totalorder %s19, %s22
    %p28 = scmp.eq.s32.totalorder %s9, 0
    %p29 = por %p27, %p28
    %p30 = scmp.ne.s32.totalorder %s19, %s22
    %p31 = scmp.eq.s32.totalorder %s14, 1
    %p32 = por %p30, %p31
    %p33 = scmp.ne.s32.totalorder %s22, %s23
    %p34 = scmp.eq.s32.totalorder %s14, 0
    %p35 = por %p33, %p34
    %p36 = scmp.ne.s32.totalorder %s22, %s23
    %p37 = scmp.eq.s32.totalorder %s15, 1
    %p38 = por %p36, %p37
    %p40 = scmp.ne.s32.totalorder %s23, %s39
    %p41 = scmp.eq.s32.totalorder %s15, 0
    %p42 = por %p40, %p41
    %s44 = sadd.s32 %s43, 1
    %p47 = scmp.eq.s32.totalorder %s9, 1
    %p48 = scmp.ne.s32.totalorder %s43, %s45
    %p49 = scmp.eq.s32.totalorder %s9, 0
    %p50 = por %p48, %p49
    %p51 = scmp.ne.s32.totalorder %s43, %s45
    %p52 = scmp.eq.s32.totalorder %s14, 1
    %p53 = por %p51, %p52
    %p54 = scmp.ne.s32.totalorder %s45, %s46
    %p55 = scmp.eq.s32.totalorder %s14, 0
    %p56 = por %p54, %p55
    %p57 = scmp.ne.s32.totalorder %s45, %s46
    %p58 = scmp.eq.s32.totalorder %s15, 1
    %p59 = por %p57, %p58
    %p61 = scmp.ne.s32.totalorder %s46, %s60
    %p62 = scmp.eq.s32.totalorder %s15, 0
    %p63 = por %p61, %p62
    %s65 = sadd.s32 %s64, 1
    %p68 = scmp.eq.s32.totalorder %s9, 1
    %p69 = scmp.ne.s32.totalorder %s64, %s66
    %p70 = scmp.eq.s32.totalorder %s9, 0
    %p71 = por %p69, %p70
    %p72 = scmp.ne.s32.totalorder %s64, %s66
    %p73 = scmp.eq.s32.totalorder %s14, 1
    %p74 = por %p72, %p73
    %p75 = scmp.ne.s32.totalorder %s66, %s67
    %p76 = scmp.eq.s32.totalorder %s14, 0
    %p77 = por %p75, %p76
    %p78 = scmp.ne.s32.totalorder %s66, %s67
    %p79 = scmp.eq.s32.totalorder %s15, 1
    %p80 = por %p78, %p79
    %p82 = scmp.ne.s32.totalorder %s67, %s81
    %p83 = scmp.eq.s32.totalorder %s15, 0
    %p84 = por %p82, %p83
    %s85 = ssub.s32 %s9, %s16
    %p86 = scmp.eq.s32.totalorder %s85, 0
    %s88 = sadd.s32 %s87, 1
    %s89 = scalar_select %p86, %s87, %s88
    %p92 = pneg %p86
    %p93 = scmp.eq.s32.totalorder %s9, 1
    %p94 = por %p92, %p93
    %p95 = scmp.ne.s32.totalorder %s87, %s90
    %p96 = scmp.eq.s32.totalorder %s9, 0
    %p97 = por %p95, %p96
    %p98 = scmp.ne.s32.totalorder %s87, %s90
    %p99 = scmp.eq.s32.totalorder %s14, 1
    %p100 = por %p98, %p99
    %p101 = scmp.ne.s32.totalorder %s90, %s91
    %p102 = scmp.eq.s32.totalorder %s14, 0
    %p103 = por %p101, %p102
    %p104 = scmp.ne.s32.totalorder %s90, %s91
    %p105 = scmp.eq.s32.totalorder %s15, 1
    %p106 = por %p104, %p105
    %p108 = scmp.ne.s32.totalorder %s91, %s107
    %p109 = scmp.eq.s32.totalorder %s15, 0
    %p110 = por %p108, %p109
    %p111 = scmp.le.s32.totalorder 1, %s9
    %p112 = scmp.lt.s32.totalorder %s9, 3
    %p113 = pnand %p111, %p112
    %p114 = pneg %p113
    // Predicated region
    $region9: #{simple_classifier_forward.3} parent=5 // pred_check
      _
    $region10: #{simple_classifier_forward.3} parent=5 // pred_check_branch
      %116 = sbr.rel (%p113) target = $region12
    $region11: #{simple_classifier_forward.3} parent=5 // pred_region
      %s117 = ssub.s32 %s9, 1
      // Predicated region
      $region13: #{simple_classifier_forward.3} parent=11 // pred_check
        %p118 = pneg %p56
      $region14: #{simple_classifier_forward.3} parent=11 // pred_check_branch
        %120 = sbr.rel (%p118) target = $region16
      $region15: #{simple_classifier_forward.3} parent=11 // pred_region
        _
      $region16: #{simple_classifier_forward.3} parent=11 // pred_fallthru
        _
      // Predicated region
      $region17: #{simple_classifier_forward.3} parent=11 // pred_check
        %p121 = pneg %p77
      $region18: #{simple_classifier_forward.3} parent=11 // pred_check_branch
        %123 = sbr.rel (%p121) target = $region20
      $region19: #{simple_classifier_forward.3} parent=11 // pred_region
        _
      $region20: #{simple_classifier_forward.3} parent=11 // pred_fallthru
        _
    $region12: #{simple_classifier_forward.3} parent=5 // pred_fallthru
      _
    %p124 = scmp.lt.s32.totalorder %s9, 2
    // Predicated region
    $region21: #{simple_classifier_forward.3} parent=5 // pred_check
      %p125 = pneg %p124
    $region22: #{simple_classifier_forward.3} parent=5 // pred_check_branch
      %127 = sbr.rel (%p125) target = $region24
    $region23: #{simple_classifier_forward.3} parent=5 // pred_region
      // Predicated region
      $region25: #{simple_classifier_forward.3} parent=23 // pred_check
        %p128 = pneg %p29
      $region26: #{simple_classifier_forward.3} parent=23 // pred_check_branch
        %130 = sbr.rel (%p128) target = $region28
      $region27: #{simple_classifier_forward.3} parent=23 // pred_region
        %p131 = scmp.lt.s32.totalorder %s9, 1
        %s132 = scalar_select %p131, %s9, 1
        %s133 = smul.addr %s132, 112
        %s134 = smul.addr %s133, 8
        %s135 = scalar_lea.vmem %s0, %s134
      $region28: #{simple_classifier_forward.3} parent=23 // pred_fallthru
        _
    $region24: #{simple_classifier_forward.3} parent=5 // pred_fallthru
      _
    %p136 = scmp.le.s32.totalorder 1, %s9
    %p137 = scmp.lt.s32.totalorder %s9, 3
    %p138 = pnand %p136, %p137
    %p139 = pneg %p138
    // Predicated region
    $region29: #{simple_classifier_forward.3} parent=5 // pred_check
      _
    $region30: #{simple_classifier_forward.3} parent=5 // pred_check_branch
      %141 = sbr.rel (%p138) target = $region32
    $region31: #{simple_classifier_forward.3} parent=5 // pred_region
      %s142 = ssub.s32 %s9, 1
      %p143 = scmp.lt.s32.totalorder %s14, 1
      %s144 = scalar_select %p143, %s14, 1
      %s145 = smul.addr %s144, 112
      %s146 = smul.addr %s145, 8
      %s147 = scalar_lea.vmem %s0, %s146
      %p148 = pneg %p35
      %p149 = pneg %p32
      %p150 = pneg %p56
      %p151 = pneg %p53
      %p152 = pneg %p77
      %p153 = pneg %p74
      %p154 = pneg %p103
      %p155 = pneg %p100
      %p156 = scmp.lt.s32.totalorder %s14, 1
      %s157 = scalar_select %p156, %s14, 1
      %s158 = smul.addr %s157, 24
      %s159 = smul.addr %s158, 8
      %s160 = scalar_lea.vmem %s3, %s159
      %p161 = scmp.lt.s32.totalorder %s14, 1
      %s162 = scalar_select %p161, %s14, 1
      %s163 = smul.addr %s162, 112
      %s164 = smul.addr %s163, 8
      %s165 = scalar_lea.vmem %s0, %s164
      %p166 = scmp.lt.s32.totalorder %s14, 1
      %s167 = scalar_select %p166, %s14, 1
      %s168 = smul.addr %s167, 24
      %s169 = smul.addr %s168, 8
      %s170 = scalar_lea.vmem %s3, %s169
      %v172 = vld [vmem:[%s2] sm:$0x1]
      loop: start=0, step=1, limit=12
      $region33: #{simple_classifier_forward.3} parent=31 // loop_pre_header
        _
      $region34: #{simple_classifier_forward.3} parent=31 // loop_header
        %s174 = sphi 0, %s178
        %p175 = scmp.ge.s32.totalorder %s174, 12
      $region35: #{simple_classifier_forward.3} parent=31 // loop_header_branch
        %177 = sbr.rel (%p175) target = $region39
      $region36: #{simple_classifier_forward.3} parent=31 // loop_body
        %s179 = smul.u32 %s174, 2
        %s180 = smul.u32 %s179, 32
        %s181 = scalar_lea.vmem %s165, %s180
        %v182 = vld [vmem:[%s181] sm:$0xff]
        %v183 = vld [vmem:[%s181 + $0x8] sm:$0xff]
        %v184 = vld [vmem:[%s181 + $0x10] sm:$0xff]
        %v185 = vld [vmem:[%s1] sm:$0x3]
        %v186 = vpack.c.bf16 %v183, %v182
        %v187 = vpack.c.bf16 %v184, %v184
        %v188 = vld [vmem:[%s181 + $0x1] sm:$0xff]
        %v189 = vld [vmem:[%s181 + $0x9] sm:$0xff]
        %v190 = vld [vmem:[%s181 + $0x11] sm:$0xff]
        %v191 = vld [vmem:[%s1] sm:$0x6]
        %v192 = vpack.c.bf16 %v189, %v188
        %v193 = vpack.c.bf16 %v190, %v190
        %v195 = vunpack.c.l.b16 %v191
        %v196 = vpack.c.b16 %v195, %v195
        %v198 = vshrl.u32 %v196, 16
        %v200 = vrot.slane %v198, 1
        %v201 = vshll.u32 %v196, 16
        %v203 = vrot.slane %v201, 2
        %v204 = vor.u32 %v200, %v203
        %vm205 = vcmask 23552
        %v207 = vsel %vm205, %v192, 0
        %v210 = vsel %vm205, %v193, 0
        %vm212 = vcmask 1040384
        %vm213 = vcmask 1041408
        %v214 = vsel %vm212, 4294967295, 65535
        %v215 = vsel %vm213, %v214, 0
        %v217 = vand.u32 %v204, %v215
        %219 = vmatprep.subr.bf16.mxu0 0
        %220 = vmatpush1.bf16.msra.mxu0 0
        %221 = vmatprep.subr.bf16.mxu0 0
        %222 = vmatpush1.bf16.msra.mxu0 0
        %223 = vmatprep.subr.bf16.mxu0 0
        %224 = vmatpush1.bf16.msra.mxu0 0
        %225 = vmatprep.subr.bf16.mxu0 0
        %226 = vmatpush1.bf16.msra.mxu0 0
        %227 = vmatprep.subr.bf16.mxu0 0
        %228 = vmatpush1.bf16.msra.mxu0 0
        %229 = vmatprep.subr.bf16.mxu0 0
        %230 = vmatpush1.bf16.msra.mxu0 0
        %231 = vmatprep.subr.bf16.mxu0 0
        %232 = vmatpush1.bf16.msra.mxu0 0
        %233 = vmatprep.subr.bf16.mxu0 0
        %234 = vmatpush1.bf16.msra.mxu0 %v217
        %235 = vmatprep.subr.bf16.mxu0 0
        %236 = vmatpush2.bf16.msra.mxu0 0
        %237 = vmatprep.subr.bf16.mxu0 0
        %238 = vmatpush2.bf16.msra.mxu0 0
        %239 = vmatprep.subr.bf16.mxu0 0
        %240 = vmatpush2.bf16.msra.mxu0 0
        %241 = vmatprep.subr.bf16.mxu0 0
        %242 = vmatpush2.bf16.msra.mxu0 0
        %243 = vmatprep.subr.bf16.mxu0 0
        %244 = vmatpush2.bf16.msra.mxu0 0
        %245 = vmatprep.subr.bf16.mxu0 0
        %246 = vmatpush2.bf16.msra.mxu0 0
        %247 = vmatprep.subr.bf16.mxu0 0
        %248 = vmatpush2.bf16.msra.mxu0 0
        %249 = vmatprep.subr.bf16.mxu0 0
        %250 = vmatpush2.bf16.msra.mxu0 0
        %251 = vmatprep.mubr.bf16.mxu0 0
        %252 = vmatmul.mubr.bf16.gmra.mxu0 %v207
        %v253 = vpop.f32.mrf.mxu0
        %v254 = vadd.f32 0.0, %v253
        %v255 = vpop.f32.mrf.mxu0
        %v256 = vpop.f32.mrf.mxu0
        %v257 = vadd.f32 0.0, %v256
        %v258 = vpop.f32.mrf.mxu0
        %259 = vmatprep.mubr.bf16.mxu0 0
        %260 = vmatmul.mubr.bf16.gmra.mxu0 %v210
        %v261 = vpop.f32.mrf.mxu0
        %v262 = vadd.f32 0.0, %v261
        %v263 = vpop.f32.mrf.mxu0
        %v264 = vpop.f32.mrf.mxu0
        %v265 = vpop.f32.mrf.mxu0
        %266 = vdwg.mxu0
        %v268 = vsel %vm205, %v186, 0
        %v271 = vsel %vm205, %v187, 0
        %v274 = vand.u32 %v185, %v215
        %276 = vmatprep.subr.bf16.mxu0 0
        %277 = vmatpush1.bf16.msra.mxu0 0
        %278 = vmatprep.subr.bf16.mxu0 0
        %279 = vmatpush1.bf16.msra.mxu0 0
        %280 = vmatprep.subr.bf16.mxu0 0
        %281 = vmatpush1.bf16.msra.mxu0 0
        %282 = vmatprep.subr.bf16.mxu0 0
        %283 = vmatpush1.bf16.msra.mxu0 0
        %284 = vmatprep.subr.bf16.mxu0 0
        %285 = vmatpush1.bf16.msra.mxu0 0
        %286 = vmatprep.subr.bf16.mxu0 0
        %287 = vmatpush1.bf16.msra.mxu0 0
        %288 = vmatprep.subr.bf16.mxu0 0
        %289 = vmatpush1.bf16.msra.mxu0 0
        %290 = vmatprep.subr.bf16.mxu0 0
        %291 = vmatpush1.bf16.msra.mxu0 %v274
        %292 = vmatprep.subr.bf16.mxu0 0
        %293 = vmatpush2.bf16.msra.mxu0 0
        %294 = vmatprep.subr.bf16.mxu0 0
        %295 = vmatpush2.bf16.msra.mxu0 0
        %296 = vmatprep.subr.bf16.mxu0 0
        %297 = vmatpush2.bf16.msra.mxu0 0
        %298 = vmatprep.subr.bf16.mxu0 0
        %299 = vmatpush2.bf16.msra.mxu0 0
        %300 = vmatprep.subr.bf16.mxu0 0
        %301 = vmatpush2.bf16.msra.mxu0 0
        %302 = vmatprep.subr.bf16.mxu0 0
        %303 = vmatpush2.bf16.msra.mxu0 0
        %304 = vmatprep.subr.bf16.mxu0 0
        %305 = vmatpush2.bf16.msra.mxu0 0
        %306 = vmatprep.subr.bf16.mxu0 0
        %307 = vmatpush2.bf16.msra.mxu0 0
        %308 = vmatprep.mubr.bf16.mxu0 0
        %309 = vmatmul.mubr.bf16.gmra.mxu0 %v268
        %v310 = vpop.f32.mrf.mxu0
        %v311 = vadd.f32 %v254, %v310
        %v312 = vpop.f32.mrf.mxu0
        %v313 = vpop.f32.mrf.mxu0
        %v314 = vadd.f32 %v257, %v313
        %v315 = vpop.f32.mrf.mxu0
        %316 = vmatprep.mubr.bf16.mxu0 0
        %317 = vmatmul.mubr.bf16.gmra.mxu0 %v271
        %v318 = vpop.f32.mrf.mxu0
        %v319 = vadd.f32 %v262, %v318
        %v320 = vpop.f32.mrf.mxu0
        %v321 = vpop.f32.mrf.mxu0
        %v322 = vpop.f32.mrf.mxu0
        %323 = vdwg.mxu0
        %v324 = vld [vmem:[%s181 + $0x2] sm:$0xff]
        %v325 = vld [vmem:[%s181 + $0xa] sm:$0xff]
        %v326 = vld [vmem:[%s181 + $0x12] sm:$0xff]
        %v327 = vld [vmem:[%s1] sm:$0x8]
        %v328 = vld [vmem:[%s1 + $0x4] sm:$0x1]
        %v329 = vpack.c.bf16 %v325, %v324
        %v330 = vpack.c.bf16 %v326, %v326
        %v333 = vunpack.c.l.b16 %v327
        %v334 = vunpack.c.l.b16 %v328
        %v335 = vpack.c.b16 %v334, %v333
        %v336 = vrot.slane %v335, 3
        %v338 = vsel %vm205, %v329, 0
        %v341 = vsel %vm205, %v330, 0
        %v344 = vand.u32 %v336, %v215
        %346 = vmatprep.subr.bf16.mxu0 0
        %347 = vmatpush1.bf16.msra.mxu0 0
        %348 = vmatprep.subr.bf16.mxu0 0
        %349 = vmatpush1.bf16.msra.mxu0 0
        %350 = vmatprep.subr.bf16.mxu0 0
        %351 = vmatpush1.bf16.msra.mxu0 0
        %352 = vmatprep.subr.bf16.mxu0 0
        %353 = vmatpush1.bf16.msra.mxu0 0
        %354 = vmatprep.subr.bf16.mxu0 0
        %355 = vmatpush1.bf16.msra.mxu0 0
        %356 = vmatprep.subr.bf16.mxu0 0
        %357 = vmatpush1.bf16.msra.mxu0 0
        %358 = vmatprep.subr.bf16.mxu0 0
        %359 = vmatpush1.bf16.msra.mxu0 0
        %360 = vmatprep.subr.bf16.mxu0 0
        %361 = vmatpush1.bf16.msra.mxu0 %v344
        %362 = vmatprep.subr.bf16.mxu0 0
        %363 = vmatpush2.bf16.msra.mxu0 0
        %364 = vmatprep.subr.bf16.mxu0 0
        %365 = vmatpush2.bf16.msra.mxu0 0
        %366 = vmatprep.subr.bf16.mxu0 0
        %367 = vmatpush2.bf16.msra.mxu0 0
        %368 = vmatprep.subr.bf16.mxu0 0
        %369 = vmatpush2.bf16.msra.mxu0 0
        %370 = vmatprep.subr.bf16.mxu0 0
        %371 = vmatpush2.bf16.msra.mxu0 0
        %372 = vmatprep.subr.bf16.mxu0 0
        %373 = vmatpush2.bf16.msra.mxu0 0
        %374 = vmatprep.subr.bf16.mxu0 0
        %375 = vmatpush2.bf16.msra.mxu0 0
        %376 = vmatprep.subr.bf16.mxu0 0
        %377 = vmatpush2.bf16.msra.mxu0 0
        %378 = vmatprep.mubr.bf16.mxu0 0
        %379 = vmatmul.mubr.bf16.gmra.mxu0 %v338
        %v380 = vpop.f32.mrf.mxu0
        %v381 = vadd.f32 0.0, %v380
        %v382 = vpop.f32.mrf.mxu0
        %v383 = vpop.f32.mrf.mxu0
        %v384 = vadd.f32 0.0, %v383
        %v385 = vpop.f32.mrf.mxu0
        %386 = vmatprep.mubr.bf16.mxu0 0
        %387 = vmatmul.mubr.bf16.gmra.mxu0 %v341
        %v388 = vpop.f32.mrf.mxu0
        %v389 = vadd.f32 0.0, %v388
        %v390 = vpop.f32.mrf.mxu0
        %v391 = vpop.f32.mrf.mxu0
        %v392 = vpop.f32.mrf.mxu0
        %393 = vdwg.mxu0
        %v394 = vadd.f32 %v311, %v381
        %v395 = vadd.f32 %v314, %v384
        %v396 = vadd.f32 %v319, %v389
        %v397 = vld [vmem:[%s181 + $0x3] sm:$0xff]
        %v398 = vld [vmem:[%s181 + $0xb] sm:$0xff]
        %v399 = vld [vmem:[%s181 + $0x13] sm:$0xff]
        %v400 = vld [vmem:[%s1 + $0x4] sm:$0x3]
        %v401 = vpack.c.bf16 %v398, %v397
        %v402 = vpack.c.bf16 %v399, %v399
        %v404 = vunpack.c.l.b16 %v400
        %v405 = vpack.c.b16 %v404, %v404
        %v407 = vshrl.u32 %v405, 16
        %v409 = vshll.u32 %v405, 16
        %v411 = vrot.slane %v409, 1
        %v412 = vor.u32 %v407, %v411
        %v414 = vsel %vm205, %v401, 0
        %v417 = vsel %vm205, %v402, 0
        %v420 = vand.u32 %v412, %v215
        %422 = vmatprep.subr.bf16.mxu0 0
        %423 = vmatpush1.bf16.msra.mxu0 0
        %424 = vmatprep.subr.bf16.mxu0 0
        %425 = vmatpush1.bf16.msra.mxu0 0
        %426 = vmatprep.subr.bf16.mxu0 0
        %427 = vmatpush1.bf16.msra.mxu0 0
        %428 = vmatprep.subr.bf16.mxu0 0
        %429 = vmatpush1.bf16.msra.mxu0 0
        %430 = vmatprep.subr.bf16.mxu0 0
        %431 = vmatpush1.bf16.msra.mxu0 0
        %432 = vmatprep.subr.bf16.mxu0 0
        %433 = vmatpush1.bf16.msra.mxu0 0
        %434 = vmatprep.subr.bf16.mxu0 0
        %435 = vmatpush1.bf16.msra.mxu0 0
        %436 = vmatprep.subr.bf16.mxu0 0
        %437 = vmatpush1.bf16.msra.mxu0 %v420
        %438 = vmatprep.subr.bf16.mxu0 0
        %439 = vmatpush2.bf16.msra.mxu0 0
        %440 = vmatprep.subr.bf16.mxu0 0
        %441 = vmatpush2.bf16.msra.mxu0 0
        %442 = vmatprep.subr.bf16.mxu0 0
        %443 = vmatpush2.bf16.msra.mxu0 0
        %444 = vmatprep.subr.bf16.mxu0 0
        %445 = vmatpush2.bf16.msra.mxu0 0
        %446 = vmatprep.subr.bf16.mxu0 0
        %447 = vmatpush2.bf16.msra.mxu0 0
        %448 = vmatprep.subr.bf16.mxu0 0
        %449 = vmatpush2.bf16.msra.mxu0 0
        %450 = vmatprep.subr.bf16.mxu0 0
        %451 = vmatpush2.bf16.msra.mxu0 0
        %452 = vmatprep.subr.bf16.mxu0 0
        %453 = vmatpush2.bf16.msra.mxu0 0
        %454 = vmatprep.mubr.bf16.mxu0 0
        %455 = vmatmul.mubr.bf16.gmra.mxu0 %v414
        %v456 = vpop.f32.mrf.mxu0
        %v457 = vadd.f32 0.0, %v456
        %v458 = vpop.f32.mrf.mxu0
        %v459 = vpop.f32.mrf.mxu0
        %v460 = vadd.f32 0.0, %v459
        %v461 = vpop.f32.mrf.mxu0
        %462 = vmatprep.mubr.bf16.mxu0 0
        %463 = vmatmul.mubr.bf16.gmra.mxu0 %v417
        %v464 = vpop.f32.mrf.mxu0
        %v465 = vadd.f32 0.0, %v464
        %v466 = vpop.f32.mrf.mxu0
        %v467 = vpop.f32.mrf.mxu0
        %v468 = vpop.f32.mrf.mxu0
        %469 = vdwg.mxu0
        %v470 = vadd.f32 %v394, %v457
        %v471 = vadd.f32 %v395, %v460
        %v472 = vadd.f32 %v396, %v465
        %v473 = vld [vmem:[%s181 + $0x4] sm:$0xff]
        %v474 = vld [vmem:[%s181 + $0xc] sm:$0xff]
        %v475 = vld [vmem:[%s181 + $0x14] sm:$0xff]
        %v476 = vld [vmem:[%s1 + $0x4] sm:$0xc]
        %v477 = vpack.c.bf16 %v474, %v473
        %v478 = vpack.c.bf16 %v475, %v475
        %v480 = vunpack.c.l.b16 %v476
        %v481 = vpack.c.b16 %v480, %v480
        %v482 = vrot.slane %v481, 2
        %v484 = vsel %vm205, %v477, 0
        %v487 = vsel %vm205, %v478, 0
        %v490 = vand.u32 %v482, %v215
        %492 = vmatprep.subr.bf16.mxu0 0
        %493 = vmatpush1.bf16.msra.mxu0 0
        %494 = vmatprep.subr.bf16.mxu0 0
        %495 = vmatpush1.bf16.msra.mxu0 0
        %496 = vmatprep.subr.bf16.mxu0 0
        %497 = vmatpush1.bf16.msra.mxu0 0
        %498 = vmatprep.subr.bf16.mxu0 0
        %499 = vmatpush1.bf16.msra.mxu0 0
        %500 = vmatprep.subr.bf16.mxu0 0
        %501 = vmatpush1.bf16.msra.mxu0 0
        %502 = vmatprep.subr.bf16.mxu0 0
        %503 = vmatpush1.bf16.msra.mxu0 0
        %504 = vmatprep.subr.bf16.mxu0 0
        %505 = vmatpush1.bf16.msra.mxu0 0
        %506 = vmatprep.subr.bf16.mxu0 0
        %507 = vmatpush1.bf16.msra.mxu0 %v490
        %508 = vmatprep.subr.bf16.mxu0 0
        %509 = vmatpush2.bf16.msra.mxu0 0
        %510 = vmatprep.subr.bf16.mxu0 0
        %511 = vmatpush2.bf16.msra.mxu0 0
        %512 = vmatprep.subr.bf16.mxu0 0
        %513 = vmatpush2.bf16.msra.mxu0 0
        %514 = vmatprep.subr.bf16.mxu0 0
        %515 = vmatpush2.bf16.msra.mxu0 0
        %516 = vmatprep.subr.bf16.mxu0 0
        %517 = vmatpush2.bf16.msra.mxu0 0
        %518 = vmatprep.subr.bf16.mxu0 0
        %519 = vmatpush2.bf16.msra.mxu0 0
        %520 = vmatprep.subr.bf16.mxu0 0
        %521 = vmatpush2.bf16.msra.mxu0 0
        %522 = vmatprep.subr.bf16.mxu0 0
        %523 = vmatpush2.bf16.msra.mxu0 0
        %524 = vmatprep.mubr.bf16.mxu0 0
        %525 = vmatmul.mubr.bf16.gmra.mxu0 %v484
        %v526 = vpop.f32.mrf.mxu0
        %v527 = vadd.f32 0.0, %v526
        %v528 = vpop.f32.mrf.mxu0
        %v529 = vpop.f32.mrf.mxu0
        %v530 = vadd.f32 0.0, %v529
        %v531 = vpop.f32.mrf.mxu0
        %532 = vmatprep.mubr.bf16.mxu0 0
        %533 = vmatmul.mubr.bf16.gmra.mxu0 %v487
        %v534 = vpop.f32.mrf.mxu0
        %v535 = vadd.f32 0.0, %v534
        %v536 = vpop.f32.mrf.mxu0
        %v537 = vpop.f32.mrf.mxu0
        %v538 = vpop.f32.mrf.mxu0
        %539 = vdwg.mxu0
        %v540 = vadd.f32 %v470, %v527
        %v541 = vadd.f32 %v471, %v530
        %v542 = vadd.f32 %v472, %v535
        %s543 = sadd.s32 %s179, 1
        %s544 = smul.u32 %s543, 32
        %s545 = scalar_lea.vmem %s165, %s544
        %v546 = vld [vmem:[%s545] sm:$0xff]
        %v547 = vld [vmem:[%s545 + $0x8] sm:$0xff]
        %v548 = vld [vmem:[%s545 + $0x10] sm:$0xff]
        %v549 = vld [vmem:[%s1 + $0x4] sm:$0x8]
        %v550 = vld [vmem:[%s1 + $0x8] sm:$0x1]
        %v551 = vpack.c.bf16 %v547, %v546
        %v552 = vpack.c.bf16 %v548, %v548
        %v555 = vunpack.c.l.b16 %v549
        %v556 = vunpack.c.l.b16 %v550
        %v557 = vpack.c.b16 %v556, %v555
        %v559 = vshrl.u32 %v557, 16
        %v561 = vrot.slane %v559, 3
        %v562 = vshll.u32 %v557, 16
        %v564 = vrot.slane %v562, 4
        %v565 = vor.u32 %v561, %v564
        %v567 = vsel %vm205, %v551, 0
        %v570 = vsel %vm205, %v552, 0
        %v573 = vand.u32 %v565, %v215
        %575 = vmatprep.subr.bf16.mxu0 0
        %576 = vmatpush1.bf16.msra.mxu0 0
        %577 = vmatprep.subr.bf16.mxu0 0
        %578 = vmatpush1.bf16.msra.mxu0 0
        %579 = vmatprep.subr.bf16.mxu0 0
        %580 = vmatpush1.bf16.msra.mxu0 0
        %581 = vmatprep.subr.bf16.mxu0 0
        %582 = vmatpush1.bf16.msra.mxu0 0
        %583 = vmatprep.subr.bf16.mxu0 0
        %584 = vmatpush1.bf16.msra.mxu0 0
        %585 = vmatprep.subr.bf16.mxu0 0
        %586 = vmatpush1.bf16.msra.mxu0 0
        %587 = vmatprep.subr.bf16.mxu0 0
        %588 = vmatpush1.bf16.msra.mxu0 0
        %589 = vmatprep.subr.bf16.mxu0 0
        %590 = vmatpush1.bf16.msra.mxu0 %v573
        %591 = vmatprep.subr.bf16.mxu0 0
        %592 = vmatpush2.bf16.msra.mxu0 0
        %593 = vmatprep.subr.bf16.mxu0 0
        %594 = vmatpush2.bf16.msra.mxu0 0
        %595 = vmatprep.subr.bf16.mxu0 0
        %596 = vmatpush2.bf16.msra.mxu0 0
        %597 = vmatprep.subr.bf16.mxu0 0
        %598 = vmatpush2.bf16.msra.mxu0 0
        %599 = vmatprep.subr.bf16.mxu0 0
        %600 = vmatpush2.bf16.msra.mxu0 0
        %601 = vmatprep.subr.bf16.mxu0 0
        %602 = vmatpush2.bf16.msra.mxu0 0
        %603 = vmatprep.subr.bf16.mxu0 0
        %604 = vmatpush2.bf16.msra.mxu0 0
        %605 = vmatprep.subr.bf16.mxu0 0
        %606 = vmatpush2.bf16.msra.mxu0 0
        %607 = vmatprep.mubr.bf16.mxu0 0
        %608 = vmatmul.mubr.bf16.gmra.mxu0 %v567
        %v609 = vpop.f32.mrf.mxu0
        %v610 = vadd.f32 0.0, %v609
        %v611 = vpop.f32.mrf.mxu0
        %v612 = vpop.f32.mrf.mxu0
        %v613 = vadd.f32 0.0, %v612
        %v614 = vpop.f32.mrf.mxu0
        %615 = vmatprep.mubr.bf16.mxu0 0
        %616 = vmatmul.mubr.bf16.gmra.mxu0 %v570
        %v617 = vpop.f32.mrf.mxu0
        %v618 = vadd.f32 0.0, %v617
        %v619 = vpop.f32.mrf.mxu0
        %v620 = vpop.f32.mrf.mxu0
        %v621 = vpop.f32.mrf.mxu0
        %622 = vdwg.mxu0
        %v623 = vadd.f32 %v540, %v610
        %v624 = vadd.f32 %v541, %v613
        %v625 = vadd.f32 %v542, %v618
        %v626 = vld [vmem:[%s545 + $0x1] sm:$0xff]
        %v627 = vld [vmem:[%s545 + $0x9] sm:$0xff]
        %v628 = vld [vmem:[%s545 + $0x11] sm:$0xff]
        %v629 = vld [vmem:[%s1 + $0x8] sm:$0x6]
        %v630 = vpack.c.bf16 %v627, %v626
        %v631 = vpack.c.bf16 %v628, %v628
        %v633 = vunpack.c.l.b16 %v629
        %v634 = vpack.c.b16 %v633, %v633
        %v635 = vrot.slane %v634, 1
        %v637 = vsel %vm205, %v630, 0
        %v640 = vsel %vm205, %v631, 0
        %v643 = vand.u32 %v635, %v215
        %645 = vmatprep.subr.bf16.mxu0 0
        %646 = vmatpush1.bf16.msra.mxu0 0
        %647 = vmatprep.subr.bf16.mxu0 0
        %648 = vmatpush1.bf16.msra.mxu0 0
        %649 = vmatprep.subr.bf16.mxu0 0
        %650 = vmatpush1.bf16.msra.mxu0 0
        %651 = vmatprep.subr.bf16.mxu0 0
        %652 = vmatpush1.bf16.msra.mxu0 0
        %653 = vmatprep.subr.bf16.mxu0 0
        %654 = vmatpush1.bf16.msra.mxu0 0
        %655 = vmatprep.subr.bf16.mxu0 0
        %656 = vmatpush1.bf16.msra.mxu0 0
        %657 = vmatprep.subr.bf16.mxu0 0
        %658 = vmatpush1.bf16.msra.mxu0 0
        %659 = vmatprep.subr.bf16.mxu0 0
        %660 = vmatpush1.bf16.msra.mxu0 %v643
        %661 = vmatprep.subr.bf16.mxu0 0
        %662 = vmatpush2.bf16.msra.mxu0 0
        %663 = vmatprep.subr.bf16.mxu0 0
        %664 = vmatpush2.bf16.msra.mxu0 0
        %665 = vmatprep.subr.bf16.mxu0 0
        %666 = vmatpush2.bf16.msra.mxu0 0
        %667 = vmatprep.subr.bf16.mxu0 0
        %668 = vmatpush2.bf16.msra.mxu0 0
        %669 = vmatprep.subr.bf16.mxu0 0
        %670 = vmatpush2.bf16.msra.mxu0 0
        %671 = vmatprep.subr.bf16.mxu0 0
        %672 = vmatpush2.bf16.msra.mxu0 0
        %673 = vmatprep.subr.bf16.mxu0 0
        %674 = vmatpush2.bf16.msra.mxu0 0
        %675 = vmatprep.subr.bf16.mxu0 0
        %676 = vmatpush2.bf16.msra.mxu0 0
        %677 = vmatprep.mubr.bf16.mxu0 0
        %678 = vmatmul.mubr.bf16.gmra.mxu0 %v637
        %v679 = vpop.f32.mrf.mxu0
        %v680 = vadd.f32 0.0, %v679
        %v681 = vpop.f32.mrf.mxu0
        %v682 = vpop.f32.mrf.mxu0
        %v683 = vadd.f32 0.0, %v682
        %v684 = vpop.f32.mrf.mxu0
        %685 = vmatprep.mubr.bf16.mxu0 0
        %686 = vmatmul.mubr.bf16.gmra.mxu0 %v640
        %v687 = vpop.f32.mrf.mxu0
        %v688 = vadd.f32 0.0, %v687
        %v689 = vpop.f32.mrf.mxu0
        %v690 = vpop.f32.mrf.mxu0
        %v691 = vpop.f32.mrf.mxu0
        %692 = vdwg.mxu0
        %v693 = vadd.f32 %v623, %v680
        %v694 = vadd.f32 %v624, %v683
        %v695 = vadd.f32 %v625, %v688
        %v696 = vld [vmem:[%s545 + $0x2] sm:$0xff]
        %v697 = vld [vmem:[%s545 + $0xa] sm:$0xff]
        %v698 = vld [vmem:[%s545 + $0x12] sm:$0xff]
        %v699 = vld [vmem:[%s1 + $0x8] sm:$0xc]
        %v700 = vpack.c.bf16 %v697, %v696
        %v701 = vpack.c.bf16 %v698, %v698
        %v703 = vunpack.c.l.b16 %v699
        %v704 = vpack.c.b16 %v703, %v703
        %v706 = vshrl.u32 %v704, 16
        %v708 = vrot.slane %v706, 2
        %v709 = vshll.u32 %v704, 16
        %v711 = vrot.slane %v709, 3
        %v712 = vor.u32 %v708, %v711
        %v714 = vsel %vm205, %v700, 0
        %v717 = vsel %vm205, %v701, 0
        %v720 = vand.u32 %v712, %v215
        %722 = vmatprep.subr.bf16.mxu0 0
        %723 = vmatpush1.bf16.msra.mxu0 0
        %724 = vmatprep.subr.bf16.mxu0 0
        %725 = vmatpush1.bf16.msra.mxu0 0
        %726 = vmatprep.subr.bf16.mxu0 0
        %727 = vmatpush1.bf16.msra.mxu0 0
        %728 = vmatprep.subr.bf16.mxu0 0
        %729 = vmatpush1.bf16.msra.mxu0 0
        %730 = vmatprep.subr.bf16.mxu0 0
        %731 = vmatpush1.bf16.msra.mxu0 0
        %732 = vmatprep.subr.bf16.mxu0 0
        %733 = vmatpush1.bf16.msra.mxu0 0
        %734 = vmatprep.subr.bf16.mxu0 0
        %735 = vmatpush1.bf16.msra.mxu0 0
        %736 = vmatprep.subr.bf16.mxu0 0
        %737 = vmatpush1.bf16.msra.mxu0 %v720
        %738 = vmatprep.subr.bf16.mxu0 0
        %739 = vmatpush2.bf16.msra.mxu0 0
        %740 = vmatprep.subr.bf16.mxu0 0
        %741 = vmatpush2.bf16.msra.mxu0 0
        %742 = vmatprep.subr.bf16.mxu0 0
        %743 = vmatpush2.bf16.msra.mxu0 0
        %744 = vmatprep.subr.bf16.mxu0 0
        %745 = vmatpush2.bf16.msra.mxu0 0
        %746 = vmatprep.subr.bf16.mxu0 0
        %747 = vmatpush2.bf16.msra.mxu0 0
        %748 = vmatprep.subr.bf16.mxu0 0
        %749 = vmatpush2.bf16.msra.mxu0 0
        %750 = vmatprep.subr.bf16.mxu0 0
        %751 = vmatpush2.bf16.msra.mxu0 0
        %752 = vmatprep.subr.bf16.mxu0 0
        %753 = vmatpush2.bf16.msra.mxu0 0
        %754 = vmatprep.mubr.bf16.mxu0 0
        %755 = vmatmul.mubr.bf16.gmra.mxu0 %v714
        %v756 = vpop.f32.mrf.mxu0
        %v757 = vadd.f32 0.0, %v756
        %v758 = vpop.f32.mrf.mxu0
        %v759 = vpop.f32.mrf.mxu0
        %v760 = vadd.f32 0.0, %v759
        %v761 = vpop.f32.mrf.mxu0
        %762 = vmatprep.mubr.bf16.mxu0 0
        %763 = vmatmul.mubr.bf16.gmra.mxu0 %v717
        %v764 = vpop.f32.mrf.mxu0
        %v765 = vadd.f32 0.0, %v764
        %v766 = vpop.f32.mrf.mxu0
        %v767 = vpop.f32.mrf.mxu0
        %v768 = vpop.f32.mrf.mxu0
        %769 = vdwg.mxu0
        %v770 = vadd.f32 %v693, %v757
        %v771 = vadd.f32 %v694, %v760
        %v772 = vadd.f32 %v695, %v765
        %v773 = vld [vmem:[%s545 + $0x3] sm:$0xff]
        %v774 = vld [vmem:[%s545 + $0xb] sm:$0xff]
        %v775 = vld [vmem:[%s545 + $0x13] sm:$0xff]
        %v776 = vld [vmem:[%s1 + $0xc] sm:$0x3]
        %v777 = vpack.c.bf16 %v774, %v773
        %v778 = vpack.c.bf16 %v775, %v775
        %v780 = vsel %vm205, %v777, 0
        %v783 = vsel %vm205, %v778, 0
        %v786 = vand.u32 %v776, %v215
        %788 = vmatprep.subr.bf16.mxu0 0
        %789 = vmatpush1.bf16.msra.mxu0 0
        %790 = vmatprep.subr.bf16.mxu0 0
        %791 = vmatpush1.bf16.msra.mxu0 0
        %792 = vmatprep.subr.bf16.mxu0 0
        %793 = vmatpush1.bf16.msra.mxu0 0
        %794 = vmatprep.subr.bf16.mxu0 0
        %795 = vmatpush1.bf16.msra.mxu0 0
        %796 = vmatprep.subr.bf16.mxu0 0
        %797 = vmatpush1.bf16.msra.mxu0 0
        %798 = vmatprep.subr.bf16.mxu0 0
        %799 = vmatpush1.bf16.msra.mxu0 0
        %800 = vmatprep.subr.bf16.mxu0 0
        %801 = vmatpush1.bf16.msra.mxu0 0
        %802 = vmatprep.subr.bf16.mxu0 0
        %803 = vmatpush1.bf16.msra.mxu0 %v786
        %804 = vmatprep.subr.bf16.mxu0 0
        %805 = vmatpush2.bf16.msra.mxu0 0
        %806 = vmatprep.subr.bf16.mxu0 0
        %807 = vmatpush2.bf16.msra.mxu0 0
        %808 = vmatprep.subr.bf16.mxu0 0
        %809 = vmatpush2.bf16.msra.mxu0 0
        %810 = vmatprep.subr.bf16.mxu0 0
        %811 = vmatpush2.bf16.msra.mxu0 0
        %812 = vmatprep.subr.bf16.mxu0 0
        %813 = vmatpush2.bf16.msra.mxu0 0
        %814 = vmatprep.subr.bf16.mxu0 0
        %815 = vmatpush2.bf16.msra.mxu0 0
        %816 = vmatprep.subr.bf16.mxu0 0
        %817 = vmatpush2.bf16.msra.mxu0 0
        %818 = vmatprep.subr.bf16.mxu0 0
        %819 = vmatpush2.bf16.msra.mxu0 0
        %820 = vmatprep.mubr.bf16.mxu0 0
        %821 = vmatmul.mubr.bf16.gmra.mxu0 %v780
        %v822 = vpop.f32.mrf.mxu0
        %v823 = vadd.f32 0.0, %v822
        %v824 = vpop.f32.mrf.mxu0
        %v825 = vpop.f32.mrf.mxu0
        %v826 = vadd.f32 0.0, %v825
        %v827 = vpop.f32.mrf.mxu0
        %828 = vmatprep.mubr.bf16.mxu0 0
        %829 = vmatmul.mubr.bf16.gmra.mxu0 %v783
        %v830 = vpop.f32.mrf.mxu0
        %v831 = vadd.f32 0.0, %v830
        %v832 = vpop.f32.mrf.mxu0
        %v833 = vpop.f32.mrf.mxu0
        %v834 = vpop.f32.mrf.mxu0
        %835 = vdwg.mxu0
        %v836 = vadd.f32 %v770, %v823
        %v837 = vadd.f32 %v771, %v826
        %v838 = vadd.f32 %v772, %v831
        %v839 = vld [vmem:[%s545 + $0x4] sm:$0xff]
        %v840 = vld [vmem:[%s545 + $0xc] sm:$0xff]
        %v841 = vld [vmem:[%s545 + $0x14] sm:$0xff]
        %v842 = vld [vmem:[%s1 + $0xc] sm:$0x6]
        %v843 = vpack.c.bf16 %v840, %v839
        %v844 = vpack.c.bf16 %v841, %v841
        %v846 = vunpack.c.l.b16 %v842
        %v847 = vpack.c.b16 %v846, %v846
        %v849 = vshrl.u32 %v847, 16
        %v851 = vrot.slane %v849, 1
        %v852 = vshll.u32 %v847, 16
        %v854 = vrot.slane %v852, 2
        %v855 = vor.u32 %v851, %v854
        %v857 = vsel %vm205, %v843, 0
        %v860 = vsel %vm205, %v844, 0
        %v863 = vand.u32 %v855, %v215
        %865 = vmatprep.subr.bf16.mxu0 0
        %866 = vmatpush1.bf16.msra.mxu0 0
        %867 = vmatprep.subr.bf16.mxu0 0
        %868 = vmatpush1.bf16.msra.mxu0 0
        %869 = vmatprep.subr.bf16.mxu0 0
        %870 = vmatpush1.bf16.msra.mxu0 0
        %871 = vmatprep.subr.bf16.mxu0 0
        %872 = vmatpush1.bf16.msra.mxu0 0
        %873 = vmatprep.subr.bf16.mxu0 0
        %874 = vmatpush1.bf16.msra.mxu0 0
        %875 = vmatprep.subr.bf16.mxu0 0
        %876 = vmatpush1.bf16.msra.mxu0 0
        %877 = vmatprep.subr.bf16.mxu0 0
        %878 = vmatpush1.bf16.msra.mxu0 0
        %879 = vmatprep.subr.bf16.mxu0 0
        %880 = vmatpush1.bf16.msra.mxu0 %v863
        %881 = vmatprep.subr.bf16.mxu0 0
        %882 = vmatpush2.bf16.msra.mxu0 0
        %883 = vmatprep.subr.bf16.mxu0 0
        %884 = vmatpush2.bf16.msra.mxu0 0
        %885 = vmatprep.subr.bf16.mxu0 0
        %886 = vmatpush2.bf16.msra.mxu0 0
        %887 = vmatprep.subr.bf16.mxu0 0
        %888 = vmatpush2.bf16.msra.mxu0 0
        %889 = vmatprep.subr.bf16.mxu0 0
        %890 = vmatpush2.bf16.msra.mxu0 0
        %891 = vmatprep.subr.bf16.mxu0 0
        %892 = vmatpush2.bf16.msra.mxu0 0
        %893 = vmatprep.subr.bf16.mxu0 0
        %894 = vmatpush2.bf16.msra.mxu0 0
        %895 = vmatprep.subr.bf16.mxu0 0
        %896 = vmatpush2.bf16.msra.mxu0 0
        %897 = vmatprep.mubr.bf16.mxu0 0
        %898 = vmatmul.mubr.bf16.gmra.mxu0 %v857
        %v899 = vpop.f32.mrf.mxu0
        %v900 = vadd.f32 0.0, %v899
        %v901 = vpop.f32.mrf.mxu0
        %v902 = vpop.f32.mrf.mxu0
        %v903 = vadd.f32 0.0, %v902
        %v904 = vpop.f32.mrf.mxu0
        %905 = vmatprep.mubr.bf16.mxu0 0
        %906 = vmatmul.mubr.bf16.gmra.mxu0 %v860
        %v907 = vpop.f32.mrf.mxu0
        %v908 = vadd.f32 0.0, %v907
        %v909 = vpop.f32.mrf.mxu0
        %v910 = vpop.f32.mrf.mxu0
        %v911 = vpop.f32.mrf.mxu0
        %912 = vdwg.mxu0
        %v913 = vadd.f32 %v836, %v900
        %v914 = vadd.f32 %v837, %v903
        %v915 = vadd.f32 %v838, %v908
        %s916 = sadd.s32 %s179, 2
        %s917 = smul.u32 %s916, 32
        %s918 = scalar_lea.vmem %s165, %s917
        %v919 = vld [vmem:[%s918] sm:$0xff]
        %v920 = vld [vmem:[%s918 + $0x8] sm:$0xff]
        %v921 = vld [vmem:[%s918 + $0x10] sm:$0xff]
        %v922 = vld [vmem:[%s1 + $0xc] sm:$0x8]
        %v923 = vld [vmem:[%s1 + $0x10] sm:$0x1]
        %v924 = vpack.c.bf16 %v920, %v919
        %v925 = vpack.c.bf16 %v921, %v921
        %v928 = vunpack.c.l.b16 %v922
        %v929 = vunpack.c.l.b16 %v923
        %v930 = vpack.c.b16 %v929, %v928
        %v931 = vrot.slane %v930, 3
        %v933 = vsel %vm205, %v924, 0
        %v936 = vsel %vm205, %v925, 0
        %v939 = vand.u32 %v931, %v215
        %941 = vmatprep.subr.bf16.mxu0 0
        %942 = vmatpush1.bf16.msra.mxu0 0
        %943 = vmatprep.subr.bf16.mxu0 0
        %944 = vmatpush1.bf16.msra.mxu0 0
        %945 = vmatprep.subr.bf16.mxu0 0
        %946 = vmatpush1.bf16.msra.mxu0 0
        %947 = vmatprep.subr.bf16.mxu0 0
        %948 = vmatpush1.bf16.msra.mxu0 0
        %949 = vmatprep.subr.bf16.mxu0 0
        %950 = vmatpush1.bf16.msra.mxu0 0
        %951 = vmatprep.subr.bf16.mxu0 0
        %952 = vmatpush1.bf16.msra.mxu0 0
        %953 = vmatprep.subr.bf16.mxu0 0
        %954 = vmatpush1.bf16.msra.mxu0 0
        %955 = vmatprep.subr.bf16.mxu0 0
        %956 = vmatpush1.bf16.msra.mxu0 %v939
        %957 = vmatprep.subr.bf16.mxu0 0
        %958 = vmatpush2.bf16.msra.mxu0 0
        %959 = vmatprep.subr.bf16.mxu0 0
        %960 = vmatpush2.bf16.msra.mxu0 0
        %961 = vmatprep.subr.bf16.mxu0 0
        %962 = vmatpush2.bf16.msra.mxu0 0
        %963 = vmatprep.subr.bf16.mxu0 0
        %964 = vmatpush2.bf16.msra.mxu0 0
        %965 = vmatprep.subr.bf16.mxu0 0
        %966 = vmatpush2.bf16.msra.mxu0 0
        %967 = vmatprep.subr.bf16.mxu0 0
        %968 = vmatpush2.bf16.msra.mxu0 0
        %969 = vmatprep.subr.bf16.mxu0 0
        %970 = vmatpush2.bf16.msra.mxu0 0
        %971 = vmatprep.subr.bf16.mxu0 0
        %972 = vmatpush2.bf16.msra.mxu0 0
        %973 = vmatprep.mubr.bf16.mxu0 0
        %974 = vmatmul.mubr.bf16.gmra.mxu0 %v933
        %v975 = vpop.f32.mrf.mxu0
        %v976 = vadd.f32 0.0, %v975
        %v977 = vpop.f32.mrf.mxu0
        %v978 = vpop.f32.mrf.mxu0
        %v979 = vadd.f32 0.0, %v978
        %v980 = vpop.f32.mrf.mxu0
        %981 = vmatprep.mubr.bf16.mxu0 0
        %982 = vmatmul.mubr.bf16.gmra.mxu0 %v936
        %v983 = vpop.f32.mrf.mxu0
        %v984 = vadd.f32 0.0, %v983
        %v985 = vpop.f32.mrf.mxu0
        %v986 = vpop.f32.mrf.mxu0
        %v987 = vpop.f32.mrf.mxu0
        %988 = vdwg.mxu0
        %v989 = vadd.f32 %v913, %v976
        %v990 = vadd.f32 %v914, %v979
        %v991 = vadd.f32 %v915, %v984
        %v992 = vld [vmem:[%s918 + $0x1] sm:$0xff]
        %v993 = vld [vmem:[%s918 + $0x9] sm:$0xff]
        %v994 = vld [vmem:[%s918 + $0x11] sm:$0xff]
        %v995 = vld [vmem:[%s1 + $0x10] sm:$0x3]
        %v996 = vpack.c.bf16 %v993, %v992
        %v997 = vpack.c.bf16 %v994, %v994
        %v999 = vunpack.c.l.b16 %v995
        %v1000 = vpack.c.b16 %v999, %v999
        %v1002 = vshrl.u32 %v1000, 16
        %v1004 = vshll.u32 %v1000, 16
        %v1006 = vrot.slane %v1004, 1
        %v1007 = vor.u32 %v1002, %v1006
        %v1009 = vsel %vm205, %v996, 0
        %v1012 = vsel %vm205, %v997, 0
        %v1015 = vand.u32 %v1007, %v215
        %1017 = vmatprep.subr.bf16.mxu0 0
        %1018 = vmatpush1.bf16.msra.mxu0 0
        %1019 = vmatprep.subr.bf16.mxu0 0
        %1020 = vmatpush1.bf16.msra.mxu0 0
        %1021 = vmatprep.subr.bf16.mxu0 0
        %1022 = vmatpush1.bf16.msra.mxu0 0
        %1023 = vmatprep.subr.bf16.mxu0 0
        %1024 = vmatpush1.bf16.msra.mxu0 0
        %1025 = vmatprep.subr.bf16.mxu0 0
        %1026 = vmatpush1.bf16.msra.mxu0 0
        %1027 = vmatprep.subr.bf16.mxu0 0
        %1028 = vmatpush1.bf16.msra.mxu0 0
        %1029 = vmatprep.subr.bf16.mxu0 0
        %1030 = vmatpush1.bf16.msra.mxu0 0
        %1031 = vmatprep.subr.bf16.mxu0 0
        %1032 = vmatpush1.bf16.msra.mxu0 %v1015
        %1033 = vmatprep.subr.bf16.mxu0 0
        %1034 = vmatpush2.bf16.msra.mxu0 0
        %1035 = vmatprep.subr.bf16.mxu0 0
        %1036 = vmatpush2.bf16.msra.mxu0 0
        %1037 = vmatprep.subr.bf16.mxu0 0
        %1038 = vmatpush2.bf16.msra.mxu0 0
        %1039 = vmatprep.subr.bf16.mxu0 0
        %1040 = vmatpush2.bf16.msra.mxu0 0
        %1041 = vmatprep.subr.bf16.mxu0 0
        %1042 = vmatpush2.bf16.msra.mxu0 0
        %1043 = vmatprep.subr.bf16.mxu0 0
        %1044 = vmatpush2.bf16.msra.mxu0 0
        %1045 = vmatprep.subr.bf16.mxu0 0
        %1046 = vmatpush2.bf16.msra.mxu0 0
        %1047 = vmatprep.subr.bf16.mxu0 0
        %1048 = vmatpush2.bf16.msra.mxu0 0
        %1049 = vmatprep.mubr.bf16.mxu0 0
        %1050 = vmatmul.mubr.bf16.gmra.mxu0 %v1009
        %v1051 = vpop.f32.mrf.mxu0
        %v1052 = vadd.f32 0.0, %v1051
        %v1053 = vpop.f32.mrf.mxu0
        %v1054 = vpop.f32.mrf.mxu0
        %v1055 = vadd.f32 0.0, %v1054
        %v1056 = vpop.f32.mrf.mxu0
        %1057 = vmatprep.mubr.bf16.mxu0 0
        %1058 = vmatmul.mubr.bf16.gmra.mxu0 %v1012
        %v1059 = vpop.f32.mrf.mxu0
        %v1060 = vadd.f32 0.0, %v1059
        %v1061 = vpop.f32.mrf.mxu0
        %v1062 = vpop.f32.mrf.mxu0
        %v1063 = vpop.f32.mrf.mxu0
        %1064 = vdwg.mxu0
        %v1065 = vadd.f32 %v989, %v1052
        %v1066 = vadd.f32 %v990, %v1055
        %v1067 = vadd.f32 %v991, %v1060
        %v1068 = vld [vmem:[%s918 + $0x2] sm:$0xff]
        %v1069 = vld [vmem:[%s918 + $0xa] sm:$0xff]
        %v1070 = vld [vmem:[%s918 + $0x12] sm:$0xff]
        %v1071 = vld [vmem:[%s1 + $0x10] sm:$0xc]
        %v1072 = vpack.c.bf16 %v1069, %v1068
        %v1073 = vpack.c.bf16 %v1070, %v1070
        %v1075 = vunpack.c.l.b16 %v1071
        %v1076 = vpack.c.b16 %v1075, %v1075
        %v1077 = vrot.slane %v1076, 2
        %v1079 = vsel %vm205, %v1072, 0
        %v1082 = vsel %vm205, %v1073, 0
        %v1085 = vand.u32 %v1077, %v215
        %1087 = vmatprep.subr.bf16.mxu0 0
        %1088 = vmatpush1.bf16.msra.mxu0 0
        %1089 = vmatprep.subr.bf16.mxu0 0
        %1090 = vmatpush1.bf16.msra.mxu0 0
        %1091 = vmatprep.subr.bf16.mxu0 0
        %1092 = vmatpush1.bf16.msra.mxu0 0
        %1093 = vmatprep.subr.bf16.mxu0 0
        %1094 = vmatpush1.bf16.msra.mxu0 0
        %1095 = vmatprep.subr.bf16.mxu0 0
        %1096 = vmatpush1.bf16.msra.mxu0 0
        %1097 = vmatprep.subr.bf16.mxu0 0
        %1098 = vmatpush1.bf16.msra.mxu0 0
        %1099 = vmatprep.subr.bf16.mxu0 0
        %1100 = vmatpush1.bf16.msra.mxu0 0
        %1101 = vmatprep.subr.bf16.mxu0 0
        %1102 = vmatpush1.bf16.msra.mxu0 %v1085
        %1103 = vmatprep.subr.bf16.mxu0 0
        %1104 = vmatpush2.bf16.msra.mxu0 0
        %1105 = vmatprep.subr.bf16.mxu0 0
        %1106 = vmatpush2.bf16.msra.mxu0 0
        %1107 = vmatprep.subr.bf16.mxu0 0
        %1108 = vmatpush2.bf16.msra.mxu0 0
        %1109 = vmatprep.subr.bf16.mxu0 0
        %1110 = vmatpush2.bf16.msra.mxu0 0
        %1111 = vmatprep.subr.bf16.mxu0 0
        %1112 = vmatpush2.bf16.msra.mxu0 0
        %1113 = vmatprep.subr.bf16.mxu0 0
        %1114 = vmatpush2.bf16.msra.mxu0 0
        %1115 = vmatprep.subr.bf16.mxu0 0
        %1116 = vmatpush2.bf16.msra.mxu0 0
        %1117 = vmatprep.subr.bf16.mxu0 0
        %1118 = vmatpush2.bf16.msra.mxu0 0
        %1119 = vmatprep.mubr.bf16.mxu0 0
        %1120 = vmatmul.mubr.bf16.gmra.mxu0 %v1079
        %v1121 = vpop.f32.mrf.mxu0
        %v1122 = vadd.f32 0.0, %v1121
        %v1123 = vpop.f32.mrf.mxu0
        %v1124 = vpop.f32.mrf.mxu0
        %v1125 = vadd.f32 0.0, %v1124
        %v1126 = vpop.f32.mrf.mxu0
        %1127 = vmatprep.mubr.bf16.mxu0 0
        %1128 = vmatmul.mubr.bf16.gmra.mxu0 %v1082
        %v1129 = vpop.f32.mrf.mxu0
        %v1130 = vadd.f32 0.0, %v1129
        %v1131 = vpop.f32.mrf.mxu0
        %v1132 = vpop.f32.mrf.mxu0
        %v1133 = vpop.f32.mrf.mxu0
        %1134 = vdwg.mxu0
        %v1135 = vadd.f32 %v1065, %v1122
        %v1136 = vadd.f32 %v1066, %v1125
        %v1137 = vadd.f32 %v1067, %v1130
        %v1138 = vld [vmem:[%s918 + $0x3] sm:$0xff]
        %v1139 = vld [vmem:[%s918 + $0xb] sm:$0xff]
        %v1140 = vld [vmem:[%s918 + $0x13] sm:$0xff]
        %v1141 = vld [vmem:[%s1 + $0x10] sm:$0x8]
        %v1142 = vld [vmem:[%s1 + $0x14] sm:$0x1]
        %v1143 = vpack.c.bf16 %v1139, %v1138
        %v1144 = vpack.c.bf16 %v1140, %v1140
        %v1147 = vunpack.c.l.b16 %v1141
        %v1148 = vunpack.c.l.b16 %v1142
        %v1149 = vpack.c.b16 %v1148, %v1147
        %v1151 = vshrl.u32 %v1149, 16
        %v1153 = vrot.slane %v1151, 3
        %v1154 = vshll.u32 %v1149, 16
        %v1156 = vrot.slane %v1154, 4
        %v1157 = vor.u32 %v1153, %v1156
        %v1159 = vsel %vm205, %v1143, 0
        %v1162 = vsel %vm205, %v1144, 0
        %v1165 = vand.u32 %v1157, %v215
        %1167 = vmatprep.subr.bf16.mxu0 0
        %1168 = vmatpush1.bf16.msra.mxu0 0
        %1169 = vmatprep.subr.bf16.mxu0 0
        %1170 = vmatpush1.bf16.msra.mxu0 0
        %1171 = vmatprep.subr.bf16.mxu0 0
        %1172 = vmatpush1.bf16.msra.mxu0 0
        %1173 = vmatprep.subr.bf16.mxu0 0
        %1174 = vmatpush1.bf16.msra.mxu0 0
        %1175 = vmatprep.subr.bf16.mxu0 0
        %1176 = vmatpush1.bf16.msra.mxu0 0
        %1177 = vmatprep.subr.bf16.mxu0 0
        %1178 = vmatpush1.bf16.msra.mxu0 0
        %1179 = vmatprep.subr.bf16.mxu0 0
        %1180 = vmatpush1.bf16.msra.mxu0 0
        %1181 = vmatprep.subr.bf16.mxu0 0
        %1182 = vmatpush1.bf16.msra.mxu0 %v1165
        %1183 = vmatprep.subr.bf16.mxu0 0
        %1184 = vmatpush2.bf16.msra.mxu0 0
        %1185 = vmatprep.subr.bf16.mxu0 0
        %1186 = vmatpush2.bf16.msra.mxu0 0
        %1187 = vmatprep.subr.bf16.mxu0 0
        %1188 = vmatpush2.bf16.msra.mxu0 0
        %1189 = vmatprep.subr.bf16.mxu0 0
        %1190 = vmatpush2.bf16.msra.mxu0 0
        %1191 = vmatprep.subr.bf16.mxu0 0
        %1192 = vmatpush2.bf16.msra.mxu0 0
        %1193 = vmatprep.subr.bf16.mxu0 0
        %1194 = vmatpush2.bf16.msra.mxu0 0
        %1195 = vmatprep.subr.bf16.mxu0 0
        %1196 = vmatpush2.bf16.msra.mxu0 0
        %1197 = vmatprep.subr.bf16.mxu0 0
        %1198 = vmatpush2.bf16.msra.mxu0 0
        %1199 = vmatprep.mubr.bf16.mxu0 0
        %1200 = vmatmul.mubr.bf16.gmra.mxu0 %v1159
        %v1201 = vpop.f32.mrf.mxu0
        %v1202 = vadd.f32 0.0, %v1201
        %v1203 = vpop.f32.mrf.mxu0
        %v1204 = vpop.f32.mrf.mxu0
        %v1205 = vadd.f32 0.0, %v1204
        %v1206 = vpop.f32.mrf.mxu0
        %1207 = vmatprep.mubr.bf16.mxu0 0
        %1208 = vmatmul.mubr.bf16.gmra.mxu0 %v1162
        %v1209 = vpop.f32.mrf.mxu0
        %v1210 = vadd.f32 0.0, %v1209
        %v1211 = vpop.f32.mrf.mxu0
        %v1212 = vpop.f32.mrf.mxu0
        %v1213 = vpop.f32.mrf.mxu0
        %1214 = vdwg.mxu0
        %v1215 = vadd.f32 %v1135, %v1202
        %v1216 = vadd.f32 %v1136, %v1205
        %v1217 = vadd.f32 %v1137, %v1210
        %v1218 = vld [vmem:[%s918 + $0x4] sm:$0xff]
        %v1219 = vld [vmem:[%s918 + $0xc] sm:$0xff]
        %v1220 = vld [vmem:[%s918 + $0x14] sm:$0xff]
        %v1221 = vld [vmem:[%s1 + $0x14] sm:$0x6]
        %v1222 = vpack.c.bf16 %v1219, %v1218
        %v1223 = vpack.c.bf16 %v1220, %v1220
        %v1225 = vunpack.c.l.b16 %v1221
        %v1226 = vpack.c.b16 %v1225, %v1225
        %v1227 = vrot.slane %v1226, 1
        %v1229 = vsel %vm205, %v1222, 0
        %v1232 = vsel %vm205, %v1223, 0
        %v1235 = vand.u32 %v1227, %v215
        %1237 = vmatprep.subr.bf16.mxu0 0
        %1238 = vmatpush1.bf16.msra.mxu0 0
        %1239 = vmatprep.subr.bf16.mxu0 0
        %1240 = vmatpush1.bf16.msra.mxu0 0
        %1241 = vmatprep.subr.bf16.mxu0 0
        %1242 = vmatpush1.bf16.msra.mxu0 0
        %1243 = vmatprep.subr.bf16.mxu0 0
        %1244 = vmatpush1.bf16.msra.mxu0 0
        %1245 = vmatprep.subr.bf16.mxu0 0
        %1246 = vmatpush1.bf16.msra.mxu0 0
        %1247 = vmatprep.subr.bf16.mxu0 0
        %1248 = vmatpush1.bf16.msra.mxu0 0
        %1249 = vmatprep.subr.bf16.mxu0 0
        %1250 = vmatpush1.bf16.msra.mxu0 0
        %1251 = vmatprep.subr.bf16.mxu0 0
        %1252 = vmatpush1.bf16.msra.mxu0 %v1235
        %1253 = vmatprep.subr.bf16.mxu0 0
        %1254 = vmatpush2.bf16.msra.mxu0 0
        %1255 = vmatprep.subr.bf16.mxu0 0
        %1256 = vmatpush2.bf16.msra.mxu0 0
        %1257 = vmatprep.subr.bf16.mxu0 0
        %1258 = vmatpush2.bf16.msra.mxu0 0
        %1259 = vmatprep.subr.bf16.mxu0 0
        %1260 = vmatpush2.bf16.msra.mxu0 0
        %1261 = vmatprep.subr.bf16.mxu0 0
        %1262 = vmatpush2.bf16.msra.mxu0 0
        %1263 = vmatprep.subr.bf16.mxu0 0
        %1264 = vmatpush2.bf16.msra.mxu0 0
        %1265 = vmatprep.subr.bf16.mxu0 0
        %1266 = vmatpush2.bf16.msra.mxu0 0
        %1267 = vmatprep.subr.bf16.mxu0 0
        %1268 = vmatpush2.bf16.msra.mxu0 0
        %1269 = vmatprep.mubr.bf16.mxu0 0
        %1270 = vmatmul.mubr.bf16.gmra.mxu0 %v1229
        %v1271 = vpop.f32.mrf.mxu0
        %v1272 = vadd.f32 0.0, %v1271
        %v1273 = vpop.f32.mrf.mxu0
        %v1274 = vpop.f32.mrf.mxu0
        %v1275 = vadd.f32 0.0, %v1274
        %v1276 = vpop.f32.mrf.mxu0
        %1277 = vmatprep.mubr.bf16.mxu0 0
        %1278 = vmatmul.mubr.bf16.gmra.mxu0 %v1232
        %v1279 = vpop.f32.mrf.mxu0
        %v1280 = vadd.f32 0.0, %v1279
        %v1281 = vpop.f32.mrf.mxu0
        %v1282 = vpop.f32.mrf.mxu0
        %v1283 = vpop.f32.mrf.mxu0
        %1284 = vdwg.mxu0
        %v1285 = vadd.f32 %v1215, %v1272
        %v1286 = vadd.f32 %v1216, %v1275
        %v1287 = vadd.f32 %v1217, %v1280
        %s1288 = sadd.s32 %s179, 3
        %s1289 = smul.u32 %s1288, 32
        %s1290 = scalar_lea.vmem %s165, %s1289
        %v1291 = vld [vmem:[%s1290] sm:$0xff]
        %v1292 = vld [vmem:[%s1290 + $0x8] sm:$0xff]
        %v1293 = vld [vmem:[%s1290 + $0x10] sm:$0xff]
        %v1294 = vld [vmem:[%s1 + $0x14] sm:$0xc]
        %v1295 = vpack.c.bf16 %v1292, %v1291
        %v1296 = vpack.c.bf16 %v1293, %v1293
        %v1298 = vunpack.c.l.b16 %v1294
        %v1299 = vpack.c.b16 %v1298, %v1298
        %v1301 = vshrl.u32 %v1299, 16
        %v1303 = vrot.slane %v1301, 2
        %v1304 = vshll.u32 %v1299, 16
        %v1306 = vrot.slane %v1304, 3
        %v1307 = vor.u32 %v1303, %v1306
        %v1309 = vsel %vm205, %v1295, 0
        %v1312 = vsel %vm205, %v1296, 0
        %v1315 = vand.u32 %v1307, %v215
        %1317 = vmatprep.subr.bf16.mxu0 0
        %1318 = vmatpush1.bf16.msra.mxu0 0
        %1319 = vmatprep.subr.bf16.mxu0 0
        %1320 = vmatpush1.bf16.msra.mxu0 0
        %1321 = vmatprep.subr.bf16.mxu0 0
        %1322 = vmatpush1.bf16.msra.mxu0 0
        %1323 = vmatprep.subr.bf16.mxu0 0
        %1324 = vmatpush1.bf16.msra.mxu0 0
        %1325 = vmatprep.subr.bf16.mxu0 0
        %1326 = vmatpush1.bf16.msra.mxu0 0
        %1327 = vmatprep.subr.bf16.mxu0 0
        %1328 = vmatpush1.bf16.msra.mxu0 0
        %1329 = vmatprep.subr.bf16.mxu0 0
        %1330 = vmatpush1.bf16.msra.mxu0 0
        %1331 = vmatprep.subr.bf16.mxu0 0
        %1332 = vmatpush1.bf16.msra.mxu0 %v1315
        %1333 = vmatprep.subr.bf16.mxu0 0
        %1334 = vmatpush2.bf16.msra.mxu0 0
        %1335 = vmatprep.subr.bf16.mxu0 0
        %1336 = vmatpush2.bf16.msra.mxu0 0
        %1337 = vmatprep.subr.bf16.mxu0 0
        %1338 = vmatpush2.bf16.msra.mxu0 0
        %1339 = vmatprep.subr.bf16.mxu0 0
        %1340 = vmatpush2.bf16.msra.mxu0 0
        %1341 = vmatprep.subr.bf16.mxu0 0
        %1342 = vmatpush2.bf16.msra.mxu0 0
        %1343 = vmatprep.subr.bf16.mxu0 0
        %1344 = vmatpush2.bf16.msra.mxu0 0
        %1345 = vmatprep.subr.bf16.mxu0 0
        %1346 = vmatpush2.bf16.msra.mxu0 0
        %1347 = vmatprep.subr.bf16.mxu0 0
        %1348 = vmatpush2.bf16.msra.mxu0 0
        %1349 = vmatprep.mubr.bf16.mxu0 0
        %1350 = vmatmul.mubr.bf16.gmra.mxu0 %v1309
        %v1351 = vpop.f32.mrf.mxu0
        %v1352 = vadd.f32 0.0, %v1351
        %v1353 = vpop.f32.mrf.mxu0
        %v1354 = vpop.f32.mrf.mxu0
        %v1355 = vadd.f32 0.0, %v1354
        %v1356 = vpop.f32.mrf.mxu0
        %1357 = vmatprep.mubr.bf16.mxu0 0
        %1358 = vmatmul.mubr.bf16.gmra.mxu0 %v1312
        %v1359 = vpop.f32.mrf.mxu0
        %v1360 = vadd.f32 0.0, %v1359
        %v1361 = vpop.f32.mrf.mxu0
        %v1362 = vpop.f32.mrf.mxu0
        %v1363 = vpop.f32.mrf.mxu0
        %1364 = vdwg.mxu0
        %v1365 = vadd.f32 %v1285, %v1352
        %v1366 = vadd.f32 %v1286, %v1355
        %v1367 = vadd.f32 %v1287, %v1360
        %v1368 = vld [vmem:[%s1290 + $0x1] sm:$0xff]
        %v1369 = vld [vmem:[%s1290 + $0x9] sm:$0xff]
        %v1370 = vld [vmem:[%s1290 + $0x11] sm:$0xff]
        %v1371 = vld [vmem:[%s1 + $0x18] sm:$0x3]
        %v1372 = vpack.c.bf16 %v1369, %v1368
        %v1373 = vpack.c.bf16 %v1370, %v1370
        %v1375 = vsel %vm205, %v1372, 0
        %v1378 = vsel %vm205, %v1373, 0
        %v1381 = vand.u32 %v1371, %v215
        %1383 = vmatprep.subr.bf16.mxu0 0
        %1384 = vmatpush1.bf16.msra.mxu0 0
        %1385 = vmatprep.subr.bf16.mxu0 0
        %1386 = vmatpush1.bf16.msra.mxu0 0
        %1387 = vmatprep.subr.bf16.mxu0 0
        %1388 = vmatpush1.bf16.msra.mxu0 0
        %1389 = vmatprep.subr.bf16.mxu0 0
        %1390 = vmatpush1.bf16.msra.mxu0 0
        %1391 = vmatprep.subr.bf16.mxu0 0
        %1392 = vmatpush1.bf16.msra.mxu0 0
        %1393 = vmatprep.subr.bf16.mxu0 0
        %1394 = vmatpush1.bf16.msra.mxu0 0
        %1395 = vmatprep.subr.bf16.mxu0 0
        %1396 = vmatpush1.bf16.msra.mxu0 0
        %1397 = vmatprep.subr.bf16.mxu0 0
        %1398 = vmatpush1.bf16.msra.mxu0 %v1381
        %1399 = vmatprep.subr.bf16.mxu0 0
        %1400 = vmatpush2.bf16.msra.mxu0 0
        %1401 = vmatprep.subr.bf16.mxu0 0
        %1402 = vmatpush2.bf16.msra.mxu0 0
        %1403 = vmatprep.subr.bf16.mxu0 0
        %1404 = vmatpush2.bf16.msra.mxu0 0
        %1405 = vmatprep.subr.bf16.mxu0 0
        %1406 = vmatpush2.bf16.msra.mxu0 0
        %1407 = vmatprep.subr.bf16.mxu0 0
        %1408 = vmatpush2.bf16.msra.mxu0 0
        %1409 = vmatprep.subr.bf16.mxu0 0
        %1410 = vmatpush2.bf16.msra.mxu0 0
        %1411 = vmatprep.subr.bf16.mxu0 0
        %1412 = vmatpush2.bf16.msra.mxu0 0
        %1413 = vmatprep.subr.bf16.mxu0 0
        %1414 = vmatpush2.bf16.msra.mxu0 0
        %1415 = vmatprep.mubr.bf16.mxu0 0
        %1416 = vmatmul.mubr.bf16.gmra.mxu0 %v1375
        %v1417 = vpop.f32.mrf.mxu0
        %v1418 = vadd.f32 0.0, %v1417
        %v1419 = vpop.f32.mrf.mxu0
        %v1420 = vpop.f32.mrf.mxu0
        %v1421 = vadd.f32 0.0, %v1420
        %v1422 = vpop.f32.mrf.mxu0
        %1423 = vmatprep.mubr.bf16.mxu0 0
        %1424 = vmatmul.mubr.bf16.gmra.mxu0 %v1378
        %v1425 = vpop.f32.mrf.mxu0
        %v1426 = vadd.f32 0.0, %v1425
        %v1427 = vpop.f32.mrf.mxu0
        %v1428 = vpop.f32.mrf.mxu0
        %v1429 = vpop.f32.mrf.mxu0
        %1430 = vdwg.mxu0
        %v1431 = vadd.f32 %v1365, %v1418
        %v1432 = vadd.f32 %v1366, %v1421
        %v1433 = vadd.f32 %v1367, %v1426
        %v1434 = vld [vmem:[%s1290 + $0x2] sm:$0xff]
        %v1435 = vld [vmem:[%s1290 + $0xa] sm:$0xff]
        %v1436 = vld [vmem:[%s1290 + $0x12] sm:$0xff]
        %v1437 = vld [vmem:[%s1 + $0x18] sm:$0x6]
        %v1438 = vpack.c.bf16 %v1435, %v1434
        %v1439 = vpack.c.bf16 %v1436, %v1436
        %v1441 = vunpack.c.l.b16 %v1437
        %v1442 = vpack.c.b16 %v1441, %v1441
        %v1444 = vshrl.u32 %v1442, 16
        %v1446 = vrot.slane %v1444, 1
        %v1447 = vshll.u32 %v1442, 16
        %v1449 = vrot.slane %v1447, 2
        %v1450 = vor.u32 %v1446, %v1449
        %v1452 = vsel %vm205, %v1438, 0
        %v1455 = vsel %vm205, %v1439, 0
        %v1458 = vand.u32 %v1450, %v215
        %1460 = vmatprep.subr.bf16.mxu0 0
        %1461 = vmatpush1.bf16.msra.mxu0 0
        %1462 = vmatprep.subr.bf16.mxu0 0
        %1463 = vmatpush1.bf16.msra.mxu0 0
        %1464 = vmatprep.subr.bf16.mxu0 0
        %1465 = vmatpush1.bf16.msra.mxu0 0
        %1466 = vmatprep.subr.bf16.mxu0 0
        %1467 = vmatpush1.bf16.msra.mxu0 0
        %1468 = vmatprep.subr.bf16.mxu0 0
        %1469 = vmatpush1.bf16.msra.mxu0 0
        %1470 = vmatprep.subr.bf16.mxu0 0
        %1471 = vmatpush1.bf16.msra.mxu0 0
        %1472 = vmatprep.subr.bf16.mxu0 0
        %1473 = vmatpush1.bf16.msra.mxu0 0
        %1474 = vmatprep.subr.bf16.mxu0 0
        %1475 = vmatpush1.bf16.msra.mxu0 %v1458
        %1476 = vmatprep.subr.bf16.mxu0 0
        %1477 = vmatpush2.bf16.msra.mxu0 0
        %1478 = vmatprep.subr.bf16.mxu0 0
        %1479 = vmatpush2.bf16.msra.mxu0 0
        %1480 = vmatprep.subr.bf16.mxu0 0
        %1481 = vmatpush2.bf16.msra.mxu0 0
        %1482 = vmatprep.subr.bf16.mxu0 0
        %1483 = vmatpush2.bf16.msra.mxu0 0
        %1484 = vmatprep.subr.bf16.mxu0 0
        %1485 = vmatpush2.bf16.msra.mxu0 0
        %1486 = vmatprep.subr.bf16.mxu0 0
        %1487 = vmatpush2.bf16.msra.mxu0 0
        %1488 = vmatprep.subr.bf16.mxu0 0
        %1489 = vmatpush2.bf16.msra.mxu0 0
        %1490 = vmatprep.subr.bf16.mxu0 0
        %1491 = vmatpush2.bf16.msra.mxu0 0
        %1492 = vmatprep.mubr.bf16.mxu0 0
        %1493 = vmatmul.mubr.bf16.gmra.mxu0 %v1452
        %v1494 = vpop.f32.mrf.mxu0
        %v1495 = vadd.f32 0.0, %v1494
        %v1496 = vpop.f32.mrf.mxu0
        %v1497 = vpop.f32.mrf.mxu0
        %v1498 = vadd.f32 0.0, %v1497
        %v1499 = vpop.f32.mrf.mxu0
        %1500 = vmatprep.mubr.bf16.mxu0 0
        %1501 = vmatmul.mubr.bf16.gmra.mxu0 %v1455
        %v1502 = vpop.f32.mrf.mxu0
        %v1503 = vadd.f32 0.0, %v1502
        %v1504 = vpop.f32.mrf.mxu0
        %v1505 = vpop.f32.mrf.mxu0
        %v1506 = vpop.f32.mrf.mxu0
        %1507 = vdwg.mxu0
        %v1508 = vadd.f32 %v1431, %v1495
        %v1509 = vadd.f32 %v1432, %v1498
        %v1510 = vadd.f32 %v1433, %v1503
        %v1511 = vld [vmem:[%s1290 + $0x3] sm:$0xff]
        %v1512 = vld [vmem:[%s1290 + $0xb] sm:$0xff]
        %v1513 = vld [vmem:[%s1290 + $0x13] sm:$0xff]
        %v1514 = vld [vmem:[%s1 + $0x18] sm:$0x8]
        %v1515 = vld [vmem:[%s1 + $0x1c] sm:$0x1]
        %v1516 = vpack.c.bf16 %v1512, %v1511
        %v1517 = vpack.c.bf16 %v1513, %v1513
        %v1520 = vunpack.c.l.b16 %v1514
        %v1521 = vunpack.c.l.b16 %v1515
        %v1522 = vpack.c.b16 %v1521, %v1520
        %v1523 = vrot.slane %v1522, 3
        %v1525 = vsel %vm205, %v1516, 0
        %v1528 = vsel %vm205, %v1517, 0
        %v1531 = vand.u32 %v1523, %v215
        %1533 = vmatprep.subr.bf16.mxu0 0
        %1534 = vmatpush1.bf16.msra.mxu0 0
        %1535 = vmatprep.subr.bf16.mxu0 0
        %1536 = vmatpush1.bf16.msra.mxu0 0
        %1537 = vmatprep.subr.bf16.mxu0 0
        %1538 = vmatpush1.bf16.msra.mxu0 0
        %1539 = vmatprep.subr.bf16.mxu0 0
        %1540 = vmatpush1.bf16.msra.mxu0 0
        %1541 = vmatprep.subr.bf16.mxu0 0
        %1542 = vmatpush1.bf16.msra.mxu0 0
        %1543 = vmatprep.subr.bf16.mxu0 0
        %1544 = vmatpush1.bf16.msra.mxu0 0
        %1545 = vmatprep.subr.bf16.mxu0 0
        %1546 = vmatpush1.bf16.msra.mxu0 0
        %1547 = vmatprep.subr.bf16.mxu0 0
        %1548 = vmatpush1.bf16.msra.mxu0 %v1531
        %1549 = vmatprep.subr.bf16.mxu0 0
        %1550 = vmatpush2.bf16.msra.mxu0 0
        %1551 = vmatprep.subr.bf16.mxu0 0
        %1552 = vmatpush2.bf16.msra.mxu0 0
        %1553 = vmatprep.subr.bf16.mxu0 0
        %1554 = vmatpush2.bf16.msra.mxu0 0
        %1555 = vmatprep.subr.bf16.mxu0 0
        %1556 = vmatpush2.bf16.msra.mxu0 0
        %1557 = vmatprep.subr.bf16.mxu0 0
        %1558 = vmatpush2.bf16.msra.mxu0 0
        %1559 = vmatprep.subr.bf16.mxu0 0
        %1560 = vmatpush2.bf16.msra.mxu0 0
        %1561 = vmatprep.subr.bf16.mxu0 0
        %1562 = vmatpush2.bf16.msra.mxu0 0
        %1563 = vmatprep.subr.bf16.mxu0 0
        %1564 = vmatpush2.bf16.msra.mxu0 0
        %1565 = vmatprep.mubr.bf16.mxu0 0
        %1566 = vmatmul.mubr.bf16.gmra.mxu0 %v1525
        %v1567 = vpop.f32.mrf.mxu0
        %v1568 = vadd.f32 0.0, %v1567
        %v1569 = vpop.f32.mrf.mxu0
        %v1570 = vpop.f32.mrf.mxu0
        %v1571 = vadd.f32 0.0, %v1570
        %v1572 = vpop.f32.mrf.mxu0
        %1573 = vmatprep.mubr.bf16.mxu0 0
        %1574 = vmatmul.mubr.bf16.gmra.mxu0 %v1528
        %v1575 = vpop.f32.mrf.mxu0
        %v1576 = vadd.f32 0.0, %v1575
        %v1577 = vpop.f32.mrf.mxu0
        %v1578 = vpop.f32.mrf.mxu0
        %v1579 = vpop.f32.mrf.mxu0
        %1580 = vdwg.mxu0
        %v1581 = vadd.f32 %v1508, %v1568
        %v1582 = vadd.f32 %v1509, %v1571
        %v1583 = vadd.f32 %v1510, %v1576
        %v1584 = vld [vmem:[%s1290 + $0x4] sm:$0xff]
        %v1585 = vld [vmem:[%s1290 + $0xc] sm:$0xff]
        %v1586 = vld [vmem:[%s1290 + $0x14] sm:$0xff]
        %v1587 = vld [vmem:[%s1 + $0x1c] sm:$0x3]
        %v1588 = vpack.c.bf16 %v1585, %v1584
        %v1589 = vpack.c.bf16 %v1586, %v1586
        %v1591 = vunpack.c.l.b16 %v1587
        %v1592 = vpack.c.b16 %v1591, %v1591
        %v1594 = vshrl.u32 %v1592, 16
        %v1596 = vshll.u32 %v1592, 16
        %v1598 = vrot.slane %v1596, 1
        %v1599 = vor.u32 %v1594, %v1598
        %v1601 = vsel %vm205, %v1588, 0
        %v1604 = vsel %vm205, %v1589, 0
        %v1607 = vand.u32 %v1599, %v215
        %1609 = vmatprep.subr.bf16.mxu0 0
        %1610 = vmatpush1.bf16.msra.mxu0 0
        %1611 = vmatprep.subr.bf16.mxu0 0
        %1612 = vmatpush1.bf16.msra.mxu0 0
        %1613 = vmatprep.subr.bf16.mxu0 0
        %1614 = vmatpush1.bf16.msra.mxu0 0
        %1615 = vmatprep.subr.bf16.mxu0 0
        %1616 = vmatpush1.bf16.msra.mxu0 0
        %1617 = vmatprep.subr.bf16.mxu0 0
        %1618 = vmatpush1.bf16.msra.mxu0 0
        %1619 = vmatprep.subr.bf16.mxu0 0
        %1620 = vmatpush1.bf16.msra.mxu0 0
        %1621 = vmatprep.subr.bf16.mxu0 0
        %1622 = vmatpush1.bf16.msra.mxu0 0
        %1623 = vmatprep.subr.bf16.mxu0 0
        %1624 = vmatpush1.bf16.msra.mxu0 %v1607
        %1625 = vmatprep.subr.bf16.mxu0 0
        %1626 = vmatpush2.bf16.msra.mxu0 0
        %1627 = vmatprep.subr.bf16.mxu0 0
        %1628 = vmatpush2.bf16.msra.mxu0 0
        %1629 = vmatprep.subr.bf16.mxu0 0
        %1630 = vmatpush2.bf16.msra.mxu0 0
        %1631 = vmatprep.subr.bf16.mxu0 0
        %1632 = vmatpush2.bf16.msra.mxu0 0
        %1633 = vmatprep.subr.bf16.mxu0 0
        %1634 = vmatpush2.bf16.msra.mxu0 0
        %1635 = vmatprep.subr.bf16.mxu0 0
        %1636 = vmatpush2.bf16.msra.mxu0 0
        %1637 = vmatprep.subr.bf16.mxu0 0
        %1638 = vmatpush2.bf16.msra.mxu0 0
        %1639 = vmatprep.subr.bf16.mxu0 0
        %1640 = vmatpush2.bf16.msra.mxu0 0
        %1641 = vmatprep.mubr.bf16.mxu0 0
        %1642 = vmatmul.mubr.bf16.gmra.mxu0 %v1601
        %v1643 = vpop.f32.mrf.mxu0
        %v1644 = vadd.f32 0.0, %v1643
        %v1645 = vpop.f32.mrf.mxu0
        %v1646 = vpop.f32.mrf.mxu0
        %v1647 = vadd.f32 0.0, %v1646
        %v1648 = vpop.f32.mrf.mxu0
        %1649 = vmatprep.mubr.bf16.mxu0 0
        %1650 = vmatmul.mubr.bf16.gmra.mxu0 %v1604
        %v1651 = vpop.f32.mrf.mxu0
        %v1652 = vadd.f32 0.0, %v1651
        %v1653 = vpop.f32.mrf.mxu0
        %v1654 = vpop.f32.mrf.mxu0
        %v1655 = vpop.f32.mrf.mxu0
        %1656 = vdwg.mxu0
        %v1657 = vadd.f32 %v1581, %v1644
        %v1658 = vadd.f32 %v1582, %v1647
        %v1659 = vadd.f32 %v1583, %v1652
        %s1660 = sadd.s32 %s179, 4
        %s1661 = smul.u32 %s1660, 32
        %s1662 = scalar_lea.vmem %s165, %s1661
        %v1663 = vld [vmem:[%s1662] sm:$0xff]
        %v1664 = vld [vmem:[%s1662 + $0x8] sm:$0xff]
        %v1665 = vld [vmem:[%s1662 + $0x10] sm:$0xff]
        %v1666 = vld [vmem:[%s1 + $0x1c] sm:$0xc]
        %v1667 = vpack.c.bf16 %v1664, %v1663
        %v1668 = vpack.c.bf16 %v1665, %v1665
        %v1670 = vunpack.c.l.b16 %v1666
        %v1671 = vpack.c.b16 %v1670, %v1670
        %v1672 = vrot.slane %v1671, 2
        %v1674 = vsel %vm205, %v1667, 0
        %v1677 = vsel %vm205, %v1668, 0
        %v1680 = vand.u32 %v1672, %v215
        %1682 = vmatprep.subr.bf16.mxu0 0
        %1683 = vmatpush1.bf16.msra.mxu0 0
        %1684 = vmatprep.subr.bf16.mxu0 0
        %1685 = vmatpush1.bf16.msra.mxu0 0
        %1686 = vmatprep.subr.bf16.mxu0 0
        %1687 = vmatpush1.bf16.msra.mxu0 0
        %1688 = vmatprep.subr.bf16.mxu0 0
        %1689 = vmatpush1.bf16.msra.mxu0 0
        %1690 = vmatprep.subr.bf16.mxu0 0
        %1691 = vmatpush1.bf16.msra.mxu0 0
        %1692 = vmatprep.subr.bf16.mxu0 0
        %1693 = vmatpush1.bf16.msra.mxu0 0
        %1694 = vmatprep.subr.bf16.mxu0 0
        %1695 = vmatpush1.bf16.msra.mxu0 0
        %1696 = vmatprep.subr.bf16.mxu0 0
        %1697 = vmatpush1.bf16.msra.mxu0 %v1680
        %1698 = vmatprep.subr.bf16.mxu0 0
        %1699 = vmatpush2.bf16.msra.mxu0 0
        %1700 = vmatprep.subr.bf16.mxu0 0
        %1701 = vmatpush2.bf16.msra.mxu0 0
        %1702 = vmatprep.subr.bf16.mxu0 0
        %1703 = vmatpush2.bf16.msra.mxu0 0
        %1704 = vmatprep.subr.bf16.mxu0 0
        %1705 = vmatpush2.bf16.msra.mxu0 0
        %1706 = vmatprep.subr.bf16.mxu0 0
        %1707 = vmatpush2.bf16.msra.mxu0 0
        %1708 = vmatprep.subr.bf16.mxu0 0
        %1709 = vmatpush2.bf16.msra.mxu0 0
        %1710 = vmatprep.subr.bf16.mxu0 0
        %1711 = vmatpush2.bf16.msra.mxu0 0
        %1712 = vmatprep.subr.bf16.mxu0 0
        %1713 = vmatpush2.bf16.msra.mxu0 0
        %1714 = vmatprep.mubr.bf16.mxu0 0
        %1715 = vmatmul.mubr.bf16.gmra.mxu0 %v1674
        %v1716 = vpop.f32.mrf.mxu0
        %v1717 = vadd.f32 0.0, %v1716
        %v1718 = vpop.f32.mrf.mxu0
        %v1719 = vpop.f32.mrf.mxu0
        %v1720 = vadd.f32 0.0, %v1719
        %v1721 = vpop.f32.mrf.mxu0
        %1722 = vmatprep.mubr.bf16.mxu0 0
        %1723 = vmatmul.mubr.bf16.gmra.mxu0 %v1677
        %v1724 = vpop.f32.mrf.mxu0
        %v1725 = vadd.f32 0.0, %v1724
        %v1726 = vpop.f32.mrf.mxu0
        %v1727 = vpop.f32.mrf.mxu0
        %v1728 = vpop.f32.mrf.mxu0
        %1729 = vdwg.mxu0
        %v1730 = vadd.f32 %v1657, %v1717
        %v1731 = vadd.f32 %v1658, %v1720
        %v1732 = vadd.f32 %v1659, %v1725
        %v1733 = vld [vmem:[%s1662 + $0x1] sm:$0xff]
        %v1734 = vld [vmem:[%s1662 + $0x9] sm:$0xff]
        %v1735 = vld [vmem:[%s1662 + $0x11] sm:$0xff]
        %v1736 = vld [vmem:[%s1 + $0x1c] sm:$0x8]
        %v1737 = vld [vmem:[%s1 + $0x20] sm:$0x1]
        %v1738 = vpack.c.bf16 %v1734, %v1733
        %v1739 = vpack.c.bf16 %v1735, %v1735
        %v1742 = vunpack.c.l.b16 %v1736
        %v1743 = vunpack.c.l.b16 %v1737
        %v1744 = vpack.c.b16 %v1743, %v1742
        %v1746 = vshrl.u32 %v1744, 16
        %v1748 = vrot.slane %v1746, 3
        %v1749 = vshll.u32 %v1744, 16
        %v1751 = vrot.slane %v1749, 4
        %v1752 = vor.u32 %v1748, %v1751
        %v1754 = vsel %vm205, %v1738, 0
        %v1757 = vsel %vm205, %v1739, 0
        %v1760 = vand.u32 %v1752, %v215
        %1762 = vmatprep.subr.bf16.mxu0 0
        %1763 = vmatpush1.bf16.msra.mxu0 0
        %1764 = vmatprep.subr.bf16.mxu0 0
        %1765 = vmatpush1.bf16.msra.mxu0 0
        %1766 = vmatprep.subr.bf16.mxu0 0
        %1767 = vmatpush1.bf16.msra.mxu0 0
        %1768 = vmatprep.subr.bf16.mxu0 0
        %1769 = vmatpush1.bf16.msra.mxu0 0
        %1770 = vmatprep.subr.bf16.mxu0 0
        %1771 = vmatpush1.bf16.msra.mxu0 0
        %1772 = vmatprep.subr.bf16.mxu0 0
        %1773 = vmatpush1.bf16.msra.mxu0 0
        %1774 = vmatprep.subr.bf16.mxu0 0
        %1775 = vmatpush1.bf16.msra.mxu0 0
        %1776 = vmatprep.subr.bf16.mxu0 0
        %1777 = vmatpush1.bf16.msra.mxu0 %v1760
        %1778 = vmatprep.subr.bf16.mxu0 0
        %1779 = vmatpush2.bf16.msra.mxu0 0
        %1780 = vmatprep.subr.bf16.mxu0 0
        %1781 = vmatpush2.bf16.msra.mxu0 0
        %1782 = vmatprep.subr.bf16.mxu0 0
        %1783 = vmatpush2.bf16.msra.mxu0 0
        %1784 = vmatprep.subr.bf16.mxu0 0
        %1785 = vmatpush2.bf16.msra.mxu0 0
        %1786 = vmatprep.subr.bf16.mxu0 0
        %1787 = vmatpush2.bf16.msra.mxu0 0
        %1788 = vmatprep.subr.bf16.mxu0 0
        %1789 = vmatpush2.bf16.msra.mxu0 0
        %1790 = vmatprep.subr.bf16.mxu0 0
        %1791 = vmatpush2.bf16.msra.mxu0 0
        %1792 = vmatprep.subr.bf16.mxu0 0
        %1793 = vmatpush2.bf16.msra.mxu0 0
        %1794 = vmatprep.mubr.bf16.mxu0 0
        %1795 = vmatmul.mubr.bf16.gmra.mxu0 %v1754
        %v1796 = vpop.f32.mrf.mxu0
        %v1797 = vadd.f32 0.0, %v1796
        %v1798 = vpop.f32.mrf.mxu0
        %v1799 = vpop.f32.mrf.mxu0
        %v1800 = vadd.f32 0.0, %v1799
        %v1801 = vpop.f32.mrf.mxu0
        %1802 = vmatprep.mubr.bf16.mxu0 0
        %1803 = vmatmul.mubr.bf16.gmra.mxu0 %v1757
        %v1804 = vpop.f32.mrf.mxu0
        %v1805 = vadd.f32 0.0, %v1804
        %v1806 = vpop.f32.mrf.mxu0
        %v1807 = vpop.f32.mrf.mxu0
        %v1808 = vpop.f32.mrf.mxu0
        %1809 = vdwg.mxu0
        %v1810 = vadd.f32 %v1730, %v1797
        %v1811 = vadd.f32 %v1731, %v1800
        %v1812 = vadd.f32 %v1732, %v1805
        %v1813 = vld [vmem:[%s1662 + $0x2] sm:$0xff]
        %v1814 = vld [vmem:[%s1662 + $0xa] sm:$0xff]
        %v1815 = vld [vmem:[%s1662 + $0x12] sm:$0xff]
        %v1816 = vld [vmem:[%s1 + $0x20] sm:$0x6]
        %v1817 = vpack.c.bf16 %v1814, %v1813
        %v1818 = vpack.c.bf16 %v1815, %v1815
        %v1820 = vunpack.c.l.b16 %v1816
        %v1821 = vpack.c.b16 %v1820, %v1820
        %v1822 = vrot.slane %v1821, 1
        %v1824 = vsel %vm205, %v1817, 0
        %v1827 = vsel %vm205, %v1818, 0
        %v1830 = vand.u32 %v1822, %v215
        %1832 = vmatprep.subr.bf16.mxu0 0
        %1833 = vmatpush1.bf16.msra.mxu0 0
        %1834 = vmatprep.subr.bf16.mxu0 0
        %1835 = vmatpush1.bf16.msra.mxu0 0
        %1836 = vmatprep.subr.bf16.mxu0 0
        %1837 = vmatpush1.bf16.msra.mxu0 0
        %1838 = vmatprep.subr.bf16.mxu0 0
        %1839 = vmatpush1.bf16.msra.mxu0 0
        %1840 = vmatprep.subr.bf16.mxu0 0
        %1841 = vmatpush1.bf16.msra.mxu0 0
        %1842 = vmatprep.subr.bf16.mxu0 0
        %1843 = vmatpush1.bf16.msra.mxu0 0
        %1844 = vmatprep.subr.bf16.mxu0 0
        %1845 = vmatpush1.bf16.msra.mxu0 0
        %1846 = vmatprep.subr.bf16.mxu0 0
        %1847 = vmatpush1.bf16.msra.mxu0 %v1830
        %1848 = vmatprep.subr.bf16.mxu0 0
        %1849 = vmatpush2.bf16.msra.mxu0 0
        %1850 = vmatprep.subr.bf16.mxu0 0
        %1851 = vmatpush2.bf16.msra.mxu0 0
        %1852 = vmatprep.subr.bf16.mxu0 0
        %1853 = vmatpush2.bf16.msra.mxu0 0
        %1854 = vmatprep.subr.bf16.mxu0 0
        %1855 = vmatpush2.bf16.msra.mxu0 0
        %1856 = vmatprep.subr.bf16.mxu0 0
        %1857 = vmatpush2.bf16.msra.mxu0 0
        %1858 = vmatprep.subr.bf16.mxu0 0
        %1859 = vmatpush2.bf16.msra.mxu0 0
        %1860 = vmatprep.subr.bf16.mxu0 0
        %1861 = vmatpush2.bf16.msra.mxu0 0
        %1862 = vmatprep.subr.bf16.mxu0 0
        %1863 = vmatpush2.bf16.msra.mxu0 0
        %1864 = vmatprep.mubr.bf16.mxu0 0
        %1865 = vmatmul.mubr.bf16.gmra.mxu0 %v1824
        %v1866 = vpop.f32.mrf.mxu0
        %v1867 = vadd.f32 0.0, %v1866
        %v1868 = vpop.f32.mrf.mxu0
        %v1869 = vpop.f32.mrf.mxu0
        %v1870 = vadd.f32 0.0, %v1869
        %v1871 = vpop.f32.mrf.mxu0
        %1872 = vmatprep.mubr.bf16.mxu0 0
        %1873 = vmatmul.mubr.bf16.gmra.mxu0 %v1827
        %v1874 = vpop.f32.mrf.mxu0
        %v1875 = vadd.f32 0.0, %v1874
        %v1876 = vpop.f32.mrf.mxu0
        %v1877 = vpop.f32.mrf.mxu0
        %v1878 = vpop.f32.mrf.mxu0
        %1879 = vdwg.mxu0
        %v1880 = vadd.f32 %v1810, %v1867
        %v1881 = vadd.f32 %v1811, %v1870
        %v1882 = vadd.f32 %v1812, %v1875
        %v1883 = vld [vmem:[%s1662 + $0x3] sm:$0xff]
        %v1884 = vld [vmem:[%s1662 + $0xb] sm:$0xff]
        %v1885 = vld [vmem:[%s1662 + $0x13] sm:$0xff]
        %v1886 = vld [vmem:[%s1 + $0x20] sm:$0xc]
        %v1887 = vpack.c.bf16 %v1884, %v1883
        %v1888 = vpack.c.bf16 %v1885, %v1885
        %v1890 = vunpack.c.l.b16 %v1886
        %v1891 = vpack.c.b16 %v1890, %v1890
        %v1893 = vshrl.u32 %v1891, 16
        %v1895 = vrot.slane %v1893, 2
        %v1896 = vshll.u32 %v1891, 16
        %v1898 = vrot.slane %v1896, 3
        %v1899 = vor.u32 %v1895, %v1898
        %v1901 = vsel %vm205, %v1887, 0
        %v1904 = vsel %vm205, %v1888, 0
        %v1907 = vand.u32 %v1899, %v215
        %1909 = vmatprep.subr.bf16.mxu0 0
        %1910 = vmatpush1.bf16.msra.mxu0 0
        %1911 = vmatprep.subr.bf16.mxu0 0
        %1912 = vmatpush1.bf16.msra.mxu0 0
        %1913 = vmatprep.subr.bf16.mxu0 0
        %1914 = vmatpush1.bf16.msra.mxu0 0
        %1915 = vmatprep.subr.bf16.mxu0 0
        %1916 = vmatpush1.bf16.msra.mxu0 0
        %1917 = vmatprep.subr.bf16.mxu0 0
        %1918 = vmatpush1.bf16.msra.mxu0 0
        %1919 = vmatprep.subr.bf16.mxu0 0
        %1920 = vmatpush1.bf16.msra.mxu0 0
        %1921 = vmatprep.subr.bf16.mxu0 0
        %1922 = vmatpush1.bf16.msra.mxu0 0
        %1923 = vmatprep.subr.bf16.mxu0 0
        %1924 = vmatpush1.bf16.msra.mxu0 %v1907
        %1925 = vmatprep.subr.bf16.mxu0 0
        %1926 = vmatpush2.bf16.msra.mxu0 0
        %1927 = vmatprep.subr.bf16.mxu0 0
        %1928 = vmatpush2.bf16.msra.mxu0 0
        %1929 = vmatprep.subr.bf16.mxu0 0
        %1930 = vmatpush2.bf16.msra.mxu0 0
        %1931 = vmatprep.subr.bf16.mxu0 0
        %1932 = vmatpush2.bf16.msra.mxu0 0
        %1933 = vmatprep.subr.bf16.mxu0 0
        %1934 = vmatpush2.bf16.msra.mxu0 0
        %1935 = vmatprep.subr.bf16.mxu0 0
        %1936 = vmatpush2.bf16.msra.mxu0 0
        %1937 = vmatprep.subr.bf16.mxu0 0
        %1938 = vmatpush2.bf16.msra.mxu0 0
        %1939 = vmatprep.subr.bf16.mxu0 0
        %1940 = vmatpush2.bf16.msra.mxu0 0
        %1941 = vmatprep.mubr.bf16.mxu0 0
        %1942 = vmatmul.mubr.bf16.gmra.mxu0 %v1901
        %v1943 = vpop.f32.mrf.mxu0
        %v1944 = vadd.f32 0.0, %v1943
        %v1945 = vpop.f32.mrf.mxu0
        %v1946 = vpop.f32.mrf.mxu0
        %v1947 = vadd.f32 0.0, %v1946
        %v1948 = vpop.f32.mrf.mxu0
        %1949 = vmatprep.mubr.bf16.mxu0 0
        %1950 = vmatmul.mubr.bf16.gmra.mxu0 %v1904
        %v1951 = vpop.f32.mrf.mxu0
        %v1952 = vadd.f32 0.0, %v1951
        %v1953 = vpop.f32.mrf.mxu0
        %v1954 = vpop.f32.mrf.mxu0
        %v1955 = vpop.f32.mrf.mxu0
        %1956 = vdwg.mxu0
        %v1957 = vadd.f32 %v1880, %v1944
        %v1958 = vadd.f32 %v1881, %v1947
        %v1959 = vadd.f32 %v1882, %v1952
        %v1960 = vld [vmem:[%s1662 + $0x4] sm:$0xff]
        %v1961 = vld [vmem:[%s1662 + $0xc] sm:$0xff]
        %v1962 = vld [vmem:[%s1662 + $0x14] sm:$0xff]
        %v1963 = vld [vmem:[%s1 + $0x24] sm:$0x3]
        %v1964 = vpack.c.bf16 %v1961, %v1960
        %v1965 = vpack.c.bf16 %v1962, %v1962
        %v1967 = vsel %vm205, %v1964, 0
        %v1970 = vsel %vm205, %v1965, 0
        %v1973 = vand.u32 %v1963, %v215
        %1975 = vmatprep.subr.bf16.mxu0 0
        %1976 = vmatpush1.bf16.msra.mxu0 0
        %1977 = vmatprep.subr.bf16.mxu0 0
        %1978 = vmatpush1.bf16.msra.mxu0 0
        %1979 = vmatprep.subr.bf16.mxu0 0
        %1980 = vmatpush1.bf16.msra.mxu0 0
        %1981 = vmatprep.subr.bf16.mxu0 0
        %1982 = vmatpush1.bf16.msra.mxu0 0
        %1983 = vmatprep.subr.bf16.mxu0 0
        %1984 = vmatpush1.bf16.msra.mxu0 0
        %1985 = vmatprep.subr.bf16.mxu0 0
        %1986 = vmatpush1.bf16.msra.mxu0 0
        %1987 = vmatprep.subr.bf16.mxu0 0
        %1988 = vmatpush1.bf16.msra.mxu0 0
        %1989 = vmatprep.subr.bf16.mxu0 0
        %1990 = vmatpush1.bf16.msra.mxu0 %v1973
        %1991 = vmatprep.subr.bf16.mxu0 0
        %1992 = vmatpush2.bf16.msra.mxu0 0
        %1993 = vmatprep.subr.bf16.mxu0 0
        %1994 = vmatpush2.bf16.msra.mxu0 0
        %1995 = vmatprep.subr.bf16.mxu0 0
        %1996 = vmatpush2.bf16.msra.mxu0 0
        %1997 = vmatprep.subr.bf16.mxu0 0
        %1998 = vmatpush2.bf16.msra.mxu0 0
        %1999 = vmatprep.subr.bf16.mxu0 0
        %2000 = vmatpush2.bf16.msra.mxu0 0
        %2001 = vmatprep.subr.bf16.mxu0 0
        %2002 = vmatpush2.bf16.msra.mxu0 0
        %2003 = vmatprep.subr.bf16.mxu0 0
        %2004 = vmatpush2.bf16.msra.mxu0 0
        %2005 = vmatprep.subr.bf16.mxu0 0
        %2006 = vmatpush2.bf16.msra.mxu0 0
        %2007 = vmatprep.mubr.bf16.mxu0 0
        %2008 = vmatmul.mubr.bf16.gmra.mxu0 %v1967
        %v2009 = vpop.f32.mrf.mxu0
        %v2010 = vadd.f32 0.0, %v2009
        %v2011 = vpop.f32.mrf.mxu0
        %v2012 = vpop.f32.mrf.mxu0
        %v2013 = vadd.f32 0.0, %v2012
        %v2014 = vpop.f32.mrf.mxu0
        %2015 = vmatprep.mubr.bf16.mxu0 0
        %2016 = vmatmul.mubr.bf16.gmra.mxu0 %v1970
        %v2017 = vpop.f32.mrf.mxu0
        %v2018 = vadd.f32 0.0, %v2017
        %v2019 = vpop.f32.mrf.mxu0
        %v2020 = vpop.f32.mrf.mxu0
        %v2021 = vpop.f32.mrf.mxu0
        %2022 = vdwg.mxu0
        %v2023 = vadd.f32 %v1957, %v2010
        %v2024 = vadd.f32 %v1958, %v2013
        %v2025 = vadd.f32 %v1959, %v2018
        %2026 = vmatprep.subr.bf16.mxu0 0
        %2027 = vmatpush1.bf16.msra.mxu0 0
        %2028 = vmatprep.subr.bf16.mxu0 0
        %2029 = vmatpush1.bf16.msra.mxu0 0
        %2030 = vmatprep.subr.bf16.mxu0 0
        %2031 = vmatpush1.bf16.msra.mxu0 0
        %2032 = vmatprep.subr.bf16.mxu0 0
        %2033 = vmatpush1.bf16.msra.mxu0 0
        %2034 = vmatprep.subr.bf16.mxu0 0
        %2035 = vmatpush1.bf16.msra.mxu0 0
        %2036 = vmatprep.subr.bf16.mxu0 0
        %2037 = vmatpush1.bf16.msra.mxu0 0
        %2038 = vmatprep.subr.bf16.mxu0 0
        %2039 = vmatpush1.bf16.msra.mxu0 0
        %2040 = vmatprep.subr.bf16.mxu0 0
        %2041 = vmatpush1.bf16.msra.mxu0 %v217
        %2042 = vmatprep.subr.bf16.mxu0 0
        %2043 = vmatpush2.bf16.msra.mxu0 0
        %2044 = vmatprep.subr.bf16.mxu0 0
        %2045 = vmatpush2.bf16.msra.mxu0 0
        %2046 = vmatprep.subr.bf16.mxu0 0
        %2047 = vmatpush2.bf16.msra.mxu0 0
        %2048 = vmatprep.subr.bf16.mxu0 0
        %2049 = vmatpush2.bf16.msra.mxu0 0
        %2050 = vmatprep.subr.bf16.mxu0 0
        %2051 = vmatpush2.bf16.msra.mxu0 0
        %2052 = vmatprep.subr.bf16.mxu0 0
        %2053 = vmatpush2.bf16.msra.mxu0 0
        %2054 = vmatprep.subr.bf16.mxu0 0
        %2055 = vmatpush2.bf16.msra.mxu0 0
        %2056 = vmatprep.subr.bf16.mxu0 0
        %2057 = vmatpush2.bf16.msra.mxu0 0
        %2058 = vmatprep.mubr.bf16.mxu0 0
        %2059 = vmatmul.mubr.bf16.gmra.mxu0 %v637
        %v2060 = vpop.f32.mrf.mxu0
        %v2061 = vadd.f32 0.0, %v2060
        %v2062 = vpop.f32.mrf.mxu0
        %v2063 = vpop.f32.mrf.mxu0
        %v2064 = vadd.f32 0.0, %v2063
        %v2065 = vpop.f32.mrf.mxu0
        %2066 = vmatprep.mubr.bf16.mxu0 0
        %2067 = vmatmul.mubr.bf16.gmra.mxu0 %v640
        %v2068 = vpop.f32.mrf.mxu0
        %v2069 = vadd.f32 0.0, %v2068
        %v2070 = vpop.f32.mrf.mxu0
        %v2071 = vpop.f32.mrf.mxu0
        %v2072 = vpop.f32.mrf.mxu0
        %2073 = vdwg.mxu0
        %2074 = vmatprep.subr.bf16.mxu0 0
        %2075 = vmatpush1.bf16.msra.mxu0 0
        %2076 = vmatprep.subr.bf16.mxu0 0
        %2077 = vmatpush1.bf16.msra.mxu0 0
        %2078 = vmatprep.subr.bf16.mxu0 0
        %2079 = vmatpush1.bf16.msra.mxu0 0
        %2080 = vmatprep.subr.bf16.mxu0 0
        %2081 = vmatpush1.bf16.msra.mxu0 0
        %2082 = vmatprep.subr.bf16.mxu0 0
        %2083 = vmatpush1.bf16.msra.mxu0 0
        %2084 = vmatprep.subr.bf16.mxu0 0
        %2085 = vmatpush1.bf16.msra.mxu0 0
        %2086 = vmatprep.subr.bf16.mxu0 0
        %2087 = vmatpush1.bf16.msra.mxu0 0
        %2088 = vmatprep.subr.bf16.mxu0 0
        %2089 = vmatpush1.bf16.msra.mxu0 %v274
        %2090 = vmatprep.subr.bf16.mxu0 0
        %2091 = vmatpush2.bf16.msra.mxu0 0
        %2092 = vmatprep.subr.bf16.mxu0 0
        %2093 = vmatpush2.bf16.msra.mxu0 0
        %2094 = vmatprep.subr.bf16.mxu0 0
        %2095 = vmatpush2.bf16.msra.mxu0 0
        %2096 = vmatprep.subr.bf16.mxu0 0
        %2097 = vmatpush2.bf16.msra.mxu0 0
        %2098 = vmatprep.subr.bf16.mxu0 0
        %2099 = vmatpush2.bf16.msra.mxu0 0
        %2100 = vmatprep.subr.bf16.mxu0 0
        %2101 = vmatpush2.bf16.msra.mxu0 0
        %2102 = vmatprep.subr.bf16.mxu0 0
        %2103 = vmatpush2.bf16.msra.mxu0 0
        %2104 = vmatprep.subr.bf16.mxu0 0
        %2105 = vmatpush2.bf16.msra.mxu0 0
        %2106 = vmatprep.mubr.bf16.mxu0 0
        %2107 = vmatmul.mubr.bf16.gmra.mxu0 %v567
        %v2108 = vpop.f32.mrf.mxu0
        %v2109 = vadd.f32 %v2061, %v2108
        %v2110 = vpop.f32.mrf.mxu0
        %v2111 = vpop.f32.mrf.mxu0
        %v2112 = vadd.f32 %v2064, %v2111
        %v2113 = vpop.f32.mrf.mxu0
        %2114 = vmatprep.mubr.bf16.mxu0 0
        %2115 = vmatmul.mubr.bf16.gmra.mxu0 %v570
        %v2116 = vpop.f32.mrf.mxu0
        %v2117 = vadd.f32 %v2069, %v2116
        %v2118 = vpop.f32.mrf.mxu0
        %v2119 = vpop.f32.mrf.mxu0
        %v2120 = vpop.f32.mrf.mxu0
        %2121 = vdwg.mxu0
        %2122 = vmatprep.subr.bf16.mxu0 0
        %2123 = vmatpush1.bf16.msra.mxu0 0
        %2124 = vmatprep.subr.bf16.mxu0 0
        %2125 = vmatpush1.bf16.msra.mxu0 0
        %2126 = vmatprep.subr.bf16.mxu0 0
        %2127 = vmatpush1.bf16.msra.mxu0 0
        %2128 = vmatprep.subr.bf16.mxu0 0
        %2129 = vmatpush1.bf16.msra.mxu0 0
        %2130 = vmatprep.subr.bf16.mxu0 0
        %2131 = vmatpush1.bf16.msra.mxu0 0
        %2132 = vmatprep.subr.bf16.mxu0 0
        %2133 = vmatpush1.bf16.msra.mxu0 0
        %2134 = vmatprep.subr.bf16.mxu0 0
        %2135 = vmatpush1.bf16.msra.mxu0 0
        %2136 = vmatprep.subr.bf16.mxu0 0
        %2137 = vmatpush1.bf16.msra.mxu0 %v344
        %2138 = vmatprep.subr.bf16.mxu0 0
        %2139 = vmatpush2.bf16.msra.mxu0 0
        %2140 = vmatprep.subr.bf16.mxu0 0
        %2141 = vmatpush2.bf16.msra.mxu0 0
        %2142 = vmatprep.subr.bf16.mxu0 0
        %2143 = vmatpush2.bf16.msra.mxu0 0
        %2144 = vmatprep.subr.bf16.mxu0 0
        %2145 = vmatpush2.bf16.msra.mxu0 0
        %2146 = vmatprep.subr.bf16.mxu0 0
        %2147 = vmatpush2.bf16.msra.mxu0 0
        %2148 = vmatprep.subr.bf16.mxu0 0
        %2149 = vmatpush2.bf16.msra.mxu0 0
        %2150 = vmatprep.subr.bf16.mxu0 0
        %2151 = vmatpush2.bf16.msra.mxu0 0
        %2152 = vmatprep.subr.bf16.mxu0 0
        %2153 = vmatpush2.bf16.msra.mxu0 0
        %2154 = vmatprep.mubr.bf16.mxu0 0
        %2155 = vmatmul.mubr.bf16.gmra.mxu0 %v714
        %v2156 = vpop.f32.mrf.mxu0
        %v2157 = vadd.f32 0.0, %v2156
        %v2158 = vpop.f32.mrf.mxu0
        %v2159 = vpop.f32.mrf.mxu0
        %v2160 = vadd.f32 0.0, %v2159
        %v2161 = vpop.f32.mrf.mxu0
        %2162 = vmatprep.mubr.bf16.mxu0 0
        %2163 = vmatmul.mubr.bf16.gmra.mxu0 %v717
        %v2164 = vpop.f32.mrf.mxu0
        %v2165 = vadd.f32 0.0, %v2164
        %v2166 = vpop.f32.mrf.mxu0
        %v2167 = vpop.f32.mrf.mxu0
        %v2168 = vpop.f32.mrf.mxu0
        %2169 = vdwg.mxu0
        %v2170 = vadd.f32 %v2109, %v2157
        %v2171 = vadd.f32 %v2112, %v2160
        %v2172 = vadd.f32 %v2117, %v2165
        %2173 = vmatprep.subr.bf16.mxu0 0
        %2174 = vmatpush1.bf16.msra.mxu0 0
        %2175 = vmatprep.subr.bf16.mxu0 0
        %2176 = vmatpush1.bf16.msra.mxu0 0
        %2177 = vmatprep.subr.bf16.mxu0 0
        %2178 = vmatpush1.bf16.msra.mxu0 0
        %2179 = vmatprep.subr.bf16.mxu0 0
        %2180 = vmatpush1.bf16.msra.mxu0 0
        %2181 = vmatprep.subr.bf16.mxu0 0
        %2182 = vmatpush1.bf16.msra.mxu0 0
        %2183 = vmatprep.subr.bf16.mxu0 0
        %2184 = vmatpush1.bf16.msra.mxu0 0
        %2185 = vmatprep.subr.bf16.mxu0 0
        %2186 = vmatpush1.bf16.msra.mxu0 0
        %2187 = vmatprep.subr.bf16.mxu0 0
        %2188 = vmatpush1.bf16.msra.mxu0 %v420
        %2189 = vmatprep.subr.bf16.mxu0 0
        %2190 = vmatpush2.bf16.msra.mxu0 0
        %2191 = vmatprep.subr.bf16.mxu0 0
        %2192 = vmatpush2.bf16.msra.mxu0 0
        %2193 = vmatprep.subr.bf16.mxu0 0
        %2194 = vmatpush2.bf16.msra.mxu0 0
        %2195 = vmatprep.subr.bf16.mxu0 0
        %2196 = vmatpush2.bf16.msra.mxu0 0
        %2197 = vmatprep.subr.bf16.mxu0 0
        %2198 = vmatpush2.bf16.msra.mxu0 0
        %2199 = vmatprep.subr.bf16.mxu0 0
        %2200 = vmatpush2.bf16.msra.mxu0 0
        %2201 = vmatprep.subr.bf16.mxu0 0
        %2202 = vmatpush2.bf16.msra.mxu0 0
        %2203 = vmatprep.subr.bf16.mxu0 0
        %2204 = vmatpush2.bf16.msra.mxu0 0
        %2205 = vmatprep.mubr.bf16.mxu0 0
        %2206 = vmatmul.mubr.bf16.gmra.mxu0 %v780
        %v2207 = vpop.f32.mrf.mxu0
        %v2208 = vadd.f32 0.0, %v2207
        %v2209 = vpop.f32.mrf.mxu0
        %v2210 = vpop.f32.mrf.mxu0
        %v2211 = vadd.f32 0.0, %v2210
        %v2212 = vpop.f32.mrf.mxu0
        %2213 = vmatprep.mubr.bf16.mxu0 0
        %2214 = vmatmul.mubr.bf16.gmra.mxu0 %v783
        %v2215 = vpop.f32.mrf.mxu0
        %v2216 = vadd.f32 0.0, %v2215
        %v2217 = vpop.f32.mrf.mxu0
        %v2218 = vpop.f32.mrf.mxu0
        %v2219 = vpop.f32.mrf.mxu0
        %2220 = vdwg.mxu0
        %v2221 = vadd.f32 %v2170, %v2208
        %v2222 = vadd.f32 %v2171, %v2211
        %v2223 = vadd.f32 %v2172, %v2216
        %2224 = vmatprep.subr.bf16.mxu0 0
        %2225 = vmatpush1.bf16.msra.mxu0 0
        %2226 = vmatprep.subr.bf16.mxu0 0
        %2227 = vmatpush1.bf16.msra.mxu0 0
        %2228 = vmatprep.subr.bf16.mxu0 0
        %2229 = vmatpush1.bf16.msra.mxu0 0
        %2230 = vmatprep.subr.bf16.mxu0 0
        %2231 = vmatpush1.bf16.msra.mxu0 0
        %2232 = vmatprep.subr.bf16.mxu0 0
        %2233 = vmatpush1.bf16.msra.mxu0 0
        %2234 = vmatprep.subr.bf16.mxu0 0
        %2235 = vmatpush1.bf16.msra.mxu0 0
        %2236 = vmatprep.subr.bf16.mxu0 0
        %2237 = vmatpush1.bf16.msra.mxu0 0
        %2238 = vmatprep.subr.bf16.mxu0 0
        %2239 = vmatpush1.bf16.msra.mxu0 %v490
        %2240 = vmatprep.subr.bf16.mxu0 0
        %2241 = vmatpush2.bf16.msra.mxu0 0
        %2242 = vmatprep.subr.bf16.mxu0 0
        %2243 = vmatpush2.bf16.msra.mxu0 0
        %2244 = vmatprep.subr.bf16.mxu0 0
        %2245 = vmatpush2.bf16.msra.mxu0 0
        %2246 = vmatprep.subr.bf16.mxu0 0
        %2247 = vmatpush2.bf16.msra.mxu0 0
        %2248 = vmatprep.subr.bf16.mxu0 0
        %2249 = vmatpush2.bf16.msra.mxu0 0
        %2250 = vmatprep.subr.bf16.mxu0 0
        %2251 = vmatpush2.bf16.msra.mxu0 0
        %2252 = vmatprep.subr.bf16.mxu0 0
        %2253 = vmatpush2.bf16.msra.mxu0 0
        %2254 = vmatprep.subr.bf16.mxu0 0
        %2255 = vmatpush2.bf16.msra.mxu0 0
        %2256 = vmatprep.mubr.bf16.mxu0 0
        %2257 = vmatmul.mubr.bf16.gmra.mxu0 %v857
        %v2258 = vpop.f32.mrf.mxu0
        %v2259 = vadd.f32 0.0, %v2258
        %v2260 = vpop.f32.mrf.mxu0
        %v2261 = vpop.f32.mrf.mxu0
        %v2262 = vadd.f32 0.0, %v2261
        %v2263 = vpop.f32.mrf.mxu0
        %2264 = vmatprep.mubr.bf16.mxu0 0
        %2265 = vmatmul.mubr.bf16.gmra.mxu0 %v860
        %v2266 = vpop.f32.mrf.mxu0
        %v2267 = vadd.f32 0.0, %v2266
        %v2268 = vpop.f32.mrf.mxu0
        %v2269 = vpop.f32.mrf.mxu0
        %v2270 = vpop.f32.mrf.mxu0
        %2271 = vdwg.mxu0
        %v2272 = vadd.f32 %v2221, %v2259
        %v2273 = vadd.f32 %v2222, %v2262
        %v2274 = vadd.f32 %v2223, %v2267
        %2275 = vmatprep.subr.bf16.mxu0 0
        %2276 = vmatpush1.bf16.msra.mxu0 0
        %2277 = vmatprep.subr.bf16.mxu0 0
        %2278 = vmatpush1.bf16.msra.mxu0 0
        %2279 = vmatprep.subr.bf16.mxu0 0
        %2280 = vmatpush1.bf16.msra.mxu0 0
        %2281 = vmatprep.subr.bf16.mxu0 0
        %2282 = vmatpush1.bf16.msra.mxu0 0
        %2283 = vmatprep.subr.bf16.mxu0 0
        %2284 = vmatpush1.bf16.msra.mxu0 0
        %2285 = vmatprep.subr.bf16.mxu0 0
        %2286 = vmatpush1.bf16.msra.mxu0 0
        %2287 = vmatprep.subr.bf16.mxu0 0
        %2288 = vmatpush1.bf16.msra.mxu0 0
        %2289 = vmatprep.subr.bf16.mxu0 0
        %2290 = vmatpush1.bf16.msra.mxu0 %v573
        %2291 = vmatprep.subr.bf16.mxu0 0
        %2292 = vmatpush2.bf16.msra.mxu0 0
        %2293 = vmatprep.subr.bf16.mxu0 0
        %2294 = vmatpush2.bf16.msra.mxu0 0
        %2295 = vmatprep.subr.bf16.mxu0 0
        %2296 = vmatpush2.bf16.msra.mxu0 0
        %2297 = vmatprep.subr.bf16.mxu0 0
        %2298 = vmatpush2.bf16.msra.mxu0 0
        %2299 = vmatprep.subr.bf16.mxu0 0
        %2300 = vmatpush2.bf16.msra.mxu0 0
        %2301 = vmatprep.subr.bf16.mxu0 0
        %2302 = vmatpush2.bf16.msra.mxu0 0
        %2303 = vmatprep.subr.bf16.mxu0 0
        %2304 = vmatpush2.bf16.msra.mxu0 0
        %2305 = vmatprep.subr.bf16.mxu0 0
        %2306 = vmatpush2.bf16.msra.mxu0 0
        %2307 = vmatprep.mubr.bf16.mxu0 0
        %2308 = vmatmul.mubr.bf16.gmra.mxu0 %v933
        %v2309 = vpop.f32.mrf.mxu0
        %v2310 = vadd.f32 0.0, %v2309
        %v2311 = vpop.f32.mrf.mxu0
        %v2312 = vpop.f32.mrf.mxu0
        %v2313 = vadd.f32 0.0, %v2312
        %v2314 = vpop.f32.mrf.mxu0
        %2315 = vmatprep.mubr.bf16.mxu0 0
        %2316 = vmatmul.mubr.bf16.gmra.mxu0 %v936
        %v2317 = vpop.f32.mrf.mxu0
        %v2318 = vadd.f32 0.0, %v2317
        %v2319 = vpop.f32.mrf.mxu0
        %v2320 = vpop.f32.mrf.mxu0
        %v2321 = vpop.f32.mrf.mxu0
        %2322 = vdwg.mxu0
        %v2323 = vadd.f32 %v2272, %v2310
        %v2324 = vadd.f32 %v2273, %v2313
        %v2325 = vadd.f32 %v2274, %v2318
        %2326 = vmatprep.subr.bf16.mxu0 0
        %2327 = vmatpush1.bf16.msra.mxu0 0
        %2328 = vmatprep.subr.bf16.mxu0 0
        %2329 = vmatpush1.bf16.msra.mxu0 0
        %2330 = vmatprep.subr.bf16.mxu0 0
        %2331 = vmatpush1.bf16.msra.mxu0 0
        %2332 = vmatprep.subr.bf16.mxu0 0
        %2333 = vmatpush1.bf16.msra.mxu0 0
        %2334 = vmatprep.subr.bf16.mxu0 0
        %2335 = vmatpush1.bf16.msra.mxu0 0
        %2336 = vmatprep.subr.bf16.mxu0 0
        %2337 = vmatpush1.bf16.msra.mxu0 0
        %2338 = vmatprep.subr.bf16.mxu0 0
        %2339 = vmatpush1.bf16.msra.mxu0 0
        %2340 = vmatprep.subr.bf16.mxu0 0
        %2341 = vmatpush1.bf16.msra.mxu0 %v643
        %2342 = vmatprep.subr.bf16.mxu0 0
        %2343 = vmatpush2.bf16.msra.mxu0 0
        %2344 = vmatprep.subr.bf16.mxu0 0
        %2345 = vmatpush2.bf16.msra.mxu0 0
        %2346 = vmatprep.subr.bf16.mxu0 0
        %2347 = vmatpush2.bf16.msra.mxu0 0
        %2348 = vmatprep.subr.bf16.mxu0 0
        %2349 = vmatpush2.bf16.msra.mxu0 0
        %2350 = vmatprep.subr.bf16.mxu0 0
        %2351 = vmatpush2.bf16.msra.mxu0 0
        %2352 = vmatprep.subr.bf16.mxu0 0
        %2353 = vmatpush2.bf16.msra.mxu0 0
        %2354 = vmatprep.subr.bf16.mxu0 0
        %2355 = vmatpush2.bf16.msra.mxu0 0
        %2356 = vmatprep.subr.bf16.mxu0 0
        %2357 = vmatpush2.bf16.msra.mxu0 0
        %2358 = vmatprep.mubr.bf16.mxu0 0
        %2359 = vmatmul.mubr.bf16.gmra.mxu0 %v1009
        %v2360 = vpop.f32.mrf.mxu0
        %v2361 = vadd.f32 0.0, %v2360
        %v2362 = vpop.f32.mrf.mxu0
        %v2363 = vpop.f32.mrf.mxu0
        %v2364 = vadd.f32 0.0, %v2363
        %v2365 = vpop.f32.mrf.mxu0
        %2366 = vmatprep.mubr.bf16.mxu0 0
        %2367 = vmatmul.mubr.bf16.gmra.mxu0 %v1012
        %v2368 = vpop.f32.mrf.mxu0
        %v2369 = vadd.f32 0.0, %v2368
        %v2370 = vpop.f32.mrf.mxu0
        %v2371 = vpop.f32.mrf.mxu0
        %v2372 = vpop.f32.mrf.mxu0
        %2373 = vdwg.mxu0
        %v2374 = vadd.f32 %v2323, %v2361
        %v2375 = vadd.f32 %v2324, %v2364
        %v2376 = vadd.f32 %v2325, %v2369
        %2377 = vmatprep.subr.bf16.mxu0 0
        %2378 = vmatpush1.bf16.msra.mxu0 0
        %2379 = vmatprep.subr.bf16.mxu0 0
        %2380 = vmatpush1.bf16.msra.mxu0 0
        %2381 = vmatprep.subr.bf16.mxu0 0
        %2382 = vmatpush1.bf16.msra.mxu0 0
        %2383 = vmatprep.subr.bf16.mxu0 0
        %2384 = vmatpush1.bf16.msra.mxu0 0
        %2385 = vmatprep.subr.bf16.mxu0 0
        %2386 = vmatpush1.bf16.msra.mxu0 0
        %2387 = vmatprep.subr.bf16.mxu0 0
        %2388 = vmatpush1.bf16.msra.mxu0 0
        %2389 = vmatprep.subr.bf16.mxu0 0
        %2390 = vmatpush1.bf16.msra.mxu0 0
        %2391 = vmatprep.subr.bf16.mxu0 0
        %2392 = vmatpush1.bf16.msra.mxu0 %v720
        %2393 = vmatprep.subr.bf16.mxu0 0
        %2394 = vmatpush2.bf16.msra.mxu0 0
        %2395 = vmatprep.subr.bf16.mxu0 0
        %2396 = vmatpush2.bf16.msra.mxu0 0
        %2397 = vmatprep.subr.bf16.mxu0 0
        %2398 = vmatpush2.bf16.msra.mxu0 0
        %2399 = vmatprep.subr.bf16.mxu0 0
        %2400 = vmatpush2.bf16.msra.mxu0 0
        %2401 = vmatprep.subr.bf16.mxu0 0
        %2402 = vmatpush2.bf16.msra.mxu0 0
        %2403 = vmatprep.subr.bf16.mxu0 0
        %2404 = vmatpush2.bf16.msra.mxu0 0
        %2405 = vmatprep.subr.bf16.mxu0 0
        %2406 = vmatpush2.bf16.msra.mxu0 0
        %2407 = vmatprep.subr.bf16.mxu0 0
        %2408 = vmatpush2.bf16.msra.mxu0 0
        %2409 = vmatprep.mubr.bf16.mxu0 0
        %2410 = vmatmul.mubr.bf16.gmra.mxu0 %v1079
        %v2411 = vpop.f32.mrf.mxu0
        %v2412 = vadd.f32 0.0, %v2411
        %v2413 = vpop.f32.mrf.mxu0
        %v2414 = vpop.f32.mrf.mxu0
        %v2415 = vadd.f32 0.0, %v2414
        %v2416 = vpop.f32.mrf.mxu0
        %2417 = vmatprep.mubr.bf16.mxu0 0
        %2418 = vmatmul.mubr.bf16.gmra.mxu0 %v1082
        %v2419 = vpop.f32.mrf.mxu0
        %v2420 = vadd.f32 0.0, %v2419
        %v2421 = vpop.f32.mrf.mxu0
        %v2422 = vpop.f32.mrf.mxu0
        %v2423 = vpop.f32.mrf.mxu0
        %2424 = vdwg.mxu0
        %v2425 = vadd.f32 %v2374, %v2412
        %v2426 = vadd.f32 %v2375, %v2415
        %v2427 = vadd.f32 %v2376, %v2420
        %2428 = vmatprep.subr.bf16.mxu0 0
        %2429 = vmatpush1.bf16.msra.mxu0 0
        %2430 = vmatprep.subr.bf16.mxu0 0
        %2431 = vmatpush1.bf16.msra.mxu0 0
        %2432 = vmatprep.subr.bf16.mxu0 0
        %2433 = vmatpush1.bf16.msra.mxu0 0
        %2434 = vmatprep.subr.bf16.mxu0 0
        %2435 = vmatpush1.bf16.msra.mxu0 0
        %2436 = vmatprep.subr.bf16.mxu0 0
        %2437 = vmatpush1.bf16.msra.mxu0 0
        %2438 = vmatprep.subr.bf16.mxu0 0
        %2439 = vmatpush1.bf16.msra.mxu0 0
        %2440 = vmatprep.subr.bf16.mxu0 0
        %2441 = vmatpush1.bf16.msra.mxu0 0
        %2442 = vmatprep.subr.bf16.mxu0 0
        %2443 = vmatpush1.bf16.msra.mxu0 %v786
        %2444 = vmatprep.subr.bf16.mxu0 0
        %2445 = vmatpush2.bf16.msra.mxu0 0
        %2446 = vmatprep.subr.bf16.mxu0 0
        %2447 = vmatpush2.bf16.msra.mxu0 0
        %2448 = vmatprep.subr.bf16.mxu0 0
        %2449 = vmatpush2.bf16.msra.mxu0 0
        %2450 = vmatprep.subr.bf16.mxu0 0
        %2451 = vmatpush2.bf16.msra.mxu0 0
        %2452 = vmatprep.subr.bf16.mxu0 0
        %2453 = vmatpush2.bf16.msra.mxu0 0
        %2454 = vmatprep.subr.bf16.mxu0 0
        %2455 = vmatpush2.bf16.msra.mxu0 0
        %2456 = vmatprep.subr.bf16.mxu0 0
        %2457 = vmatpush2.bf16.msra.mxu0 0
        %2458 = vmatprep.subr.bf16.mxu0 0
        %2459 = vmatpush2.bf16.msra.mxu0 0
        %2460 = vmatprep.mubr.bf16.mxu0 0
        %2461 = vmatmul.mubr.bf16.gmra.mxu0 %v1159
        %v2462 = vpop.f32.mrf.mxu0
        %v2463 = vadd.f32 0.0, %v2462
        %v2464 = vpop.f32.mrf.mxu0
        %v2465 = vpop.f32.mrf.mxu0
        %v2466 = vadd.f32 0.0, %v2465
        %v2467 = vpop.f32.mrf.mxu0
        %2468 = vmatprep.mubr.bf16.mxu0 0
        %2469 = vmatmul.mubr.bf16.gmra.mxu0 %v1162
        %v2470 = vpop.f32.mrf.mxu0
        %v2471 = vadd.f32 0.0, %v2470
        %v2472 = vpop.f32.mrf.mxu0
        %v2473 = vpop.f32.mrf.mxu0
        %v2474 = vpop.f32.mrf.mxu0
        %2475 = vdwg.mxu0
        %v2476 = vadd.f32 %v2425, %v2463
        %v2477 = vadd.f32 %v2426, %v2466
        %v2478 = vadd.f32 %v2427, %v2471
        %2479 = vmatprep.subr.bf16.mxu0 0
        %2480 = vmatpush1.bf16.msra.mxu0 0
        %2481 = vmatprep.subr.bf16.mxu0 0
        %2482 = vmatpush1.bf16.msra.mxu0 0
        %2483 = vmatprep.subr.bf16.mxu0 0
        %2484 = vmatpush1.bf16.msra.mxu0 0
        %2485 = vmatprep.subr.bf16.mxu0 0
        %2486 = vmatpush1.bf16.msra.mxu0 0
        %2487 = vmatprep.subr.bf16.mxu0 0
        %2488 = vmatpush1.bf16.msra.mxu0 0
        %2489 = vmatprep.subr.bf16.mxu0 0
        %2490 = vmatpush1.bf16.msra.mxu0 0
        %2491 = vmatprep.subr.bf16.mxu0 0
        %2492 = vmatpush1.bf16.msra.mxu0 0
        %2493 = vmatprep.subr.bf16.mxu0 0
        %2494 = vmatpush1.bf16.msra.mxu0 %v863
        %2495 = vmatprep.subr.bf16.mxu0 0
        %2496 = vmatpush2.bf16.msra.mxu0 0
        %2497 = vmatprep.subr.bf16.mxu0 0
        %2498 = vmatpush2.bf16.msra.mxu0 0
        %2499 = vmatprep.subr.bf16.mxu0 0
        %2500 = vmatpush2.bf16.msra.mxu0 0
        %2501 = vmatprep.subr.bf16.mxu0 0
        %2502 = vmatpush2.bf16.msra.mxu0 0
        %2503 = vmatprep.subr.bf16.mxu0 0
        %2504 = vmatpush2.bf16.msra.mxu0 0
        %2505 = vmatprep.subr.bf16.mxu0 0
        %2506 = vmatpush2.bf16.msra.mxu0 0
        %2507 = vmatprep.subr.bf16.mxu0 0
        %2508 = vmatpush2.bf16.msra.mxu0 0
        %2509 = vmatprep.subr.bf16.mxu0 0
        %2510 = vmatpush2.bf16.msra.mxu0 0
        %2511 = vmatprep.mubr.bf16.mxu0 0
        %2512 = vmatmul.mubr.bf16.gmra.mxu0 %v1229
        %v2513 = vpop.f32.mrf.mxu0
        %v2514 = vadd.f32 0.0, %v2513
        %v2515 = vpop.f32.mrf.mxu0
        %v2516 = vpop.f32.mrf.mxu0
        %v2517 = vadd.f32 0.0, %v2516
        %v2518 = vpop.f32.mrf.mxu0
        %2519 = vmatprep.mubr.bf16.mxu0 0
        %2520 = vmatmul.mubr.bf16.gmra.mxu0 %v1232
        %v2521 = vpop.f32.mrf.mxu0
        %v2522 = vadd.f32 0.0, %v2521
        %v2523 = vpop.f32.mrf.mxu0
        %v2524 = vpop.f32.mrf.mxu0
        %v2525 = vpop.f32.mrf.mxu0
        %2526 = vdwg.mxu0
        %v2527 = vadd.f32 %v2476, %v2514
        %v2528 = vadd.f32 %v2477, %v2517
        %v2529 = vadd.f32 %v2478, %v2522
        %2530 = vmatprep.subr.bf16.mxu0 0
        %2531 = vmatpush1.bf16.msra.mxu0 0
        %2532 = vmatprep.subr.bf16.mxu0 0
        %2533 = vmatpush1.bf16.msra.mxu0 0
        %2534 = vmatprep.subr.bf16.mxu0 0
        %2535 = vmatpush1.bf16.msra.mxu0 0
        %2536 = vmatprep.subr.bf16.mxu0 0
        %2537 = vmatpush1.bf16.msra.mxu0 0
        %2538 = vmatprep.subr.bf16.mxu0 0
        %2539 = vmatpush1.bf16.msra.mxu0 0
        %2540 = vmatprep.subr.bf16.mxu0 0
        %2541 = vmatpush1.bf16.msra.mxu0 0
        %2542 = vmatprep.subr.bf16.mxu0 0
        %2543 = vmatpush1.bf16.msra.mxu0 0
        %2544 = vmatprep.subr.bf16.mxu0 0
        %2545 = vmatpush1.bf16.msra.mxu0 %v939
        %2546 = vmatprep.subr.bf16.mxu0 0
        %2547 = vmatpush2.bf16.msra.mxu0 0
        %2548 = vmatprep.subr.bf16.mxu0 0
        %2549 = vmatpush2.bf16.msra.mxu0 0
        %2550 = vmatprep.subr.bf16.mxu0 0
        %2551 = vmatpush2.bf16.msra.mxu0 0
        %2552 = vmatprep.subr.bf16.mxu0 0
        %2553 = vmatpush2.bf16.msra.mxu0 0
        %2554 = vmatprep.subr.bf16.mxu0 0
        %2555 = vmatpush2.bf16.msra.mxu0 0
        %2556 = vmatprep.subr.bf16.mxu0 0
        %2557 = vmatpush2.bf16.msra.mxu0 0
        %2558 = vmatprep.subr.bf16.mxu0 0
        %2559 = vmatpush2.bf16.msra.mxu0 0
        %2560 = vmatprep.subr.bf16.mxu0 0
        %2561 = vmatpush2.bf16.msra.mxu0 0
        %2562 = vmatprep.mubr.bf16.mxu0 0
        %2563 = vmatmul.mubr.bf16.gmra.mxu0 %v1309
        %v2564 = vpop.f32.mrf.mxu0
        %v2565 = vadd.f32 0.0, %v2564
        %v2566 = vpop.f32.mrf.mxu0
        %v2567 = vpop.f32.mrf.mxu0
        %v2568 = vadd.f32 0.0, %v2567
        %v2569 = vpop.f32.mrf.mxu0
        %2570 = vmatprep.mubr.bf16.mxu0 0
        %2571 = vmatmul.mubr.bf16.gmra.mxu0 %v1312
        %v2572 = vpop.f32.mrf.mxu0
        %v2573 = vadd.f32 0.0, %v2572
        %v2574 = vpop.f32.mrf.mxu0
        %v2575 = vpop.f32.mrf.mxu0
        %v2576 = vpop.f32.mrf.mxu0
        %2577 = vdwg.mxu0
        %v2578 = vadd.f32 %v2527, %v2565
        %v2579 = vadd.f32 %v2528, %v2568
        %v2580 = vadd.f32 %v2529, %v2573
        %2581 = vmatprep.subr.bf16.mxu0 0
        %2582 = vmatpush1.bf16.msra.mxu0 0
        %2583 = vmatprep.subr.bf16.mxu0 0
        %2584 = vmatpush1.bf16.msra.mxu0 0
        %2585 = vmatprep.subr.bf16.mxu0 0
        %2586 = vmatpush1.bf16.msra.mxu0 0
        %2587 = vmatprep.subr.bf16.mxu0 0
        %2588 = vmatpush1.bf16.msra.mxu0 0
        %2589 = vmatprep.subr.bf16.mxu0 0
        %2590 = vmatpush1.bf16.msra.mxu0 0
        %2591 = vmatprep.subr.bf16.mxu0 0
        %2592 = vmatpush1.bf16.msra.mxu0 0
        %2593 = vmatprep.subr.bf16.mxu0 0
        %2594 = vmatpush1.bf16.msra.mxu0 0
        %2595 = vmatprep.subr.bf16.mxu0 0
        %2596 = vmatpush1.bf16.msra.mxu0 %v1015
        %2597 = vmatprep.subr.bf16.mxu0 0
        %2598 = vmatpush2.bf16.msra.mxu0 0
        %2599 = vmatprep.subr.bf16.mxu0 0
        %2600 = vmatpush2.bf16.msra.mxu0 0
        %2601 = vmatprep.subr.bf16.mxu0 0
        %2602 = vmatpush2.bf16.msra.mxu0 0
        %2603 = vmatprep.subr.bf16.mxu0 0
        %2604 = vmatpush2.bf16.msra.mxu0 0
        %2605 = vmatprep.subr.bf16.mxu0 0
        %2606 = vmatpush2.bf16.msra.mxu0 0
        %2607 = vmatprep.subr.bf16.mxu0 0
        %2608 = vmatpush2.bf16.msra.mxu0 0
        %2609 = vmatprep.subr.bf16.mxu0 0
        %2610 = vmatpush2.bf16.msra.mxu0 0
        %2611 = vmatprep.subr.bf16.mxu0 0
        %2612 = vmatpush2.bf16.msra.mxu0 0
        %2613 = vmatprep.mubr.bf16.mxu0 0
        %2614 = vmatmul.mubr.bf16.gmra.mxu0 %v1375
        %v2615 = vpop.f32.mrf.mxu0
        %v2616 = vadd.f32 0.0, %v2615
        %v2617 = vpop.f32.mrf.mxu0
        %v2618 = vpop.f32.mrf.mxu0
        %v2619 = vadd.f32 0.0, %v2618
        %v2620 = vpop.f32.mrf.mxu0
        %2621 = vmatprep.mubr.bf16.mxu0 0
        %2622 = vmatmul.mubr.bf16.gmra.mxu0 %v1378
        %v2623 = vpop.f32.mrf.mxu0
        %v2624 = vadd.f32 0.0, %v2623
        %v2625 = vpop.f32.mrf.mxu0
        %v2626 = vpop.f32.mrf.mxu0
        %v2627 = vpop.f32.mrf.mxu0
        %2628 = vdwg.mxu0
        %v2629 = vadd.f32 %v2578, %v2616
        %v2630 = vadd.f32 %v2579, %v2619
        %v2631 = vadd.f32 %v2580, %v2624
        %2632 = vmatprep.subr.bf16.mxu0 0
        %2633 = vmatpush1.bf16.msra.mxu0 0
        %2634 = vmatprep.subr.bf16.mxu0 0
        %2635 = vmatpush1.bf16.msra.mxu0 0
        %2636 = vmatprep.subr.bf16.mxu0 0
        %2637 = vmatpush1.bf16.msra.mxu0 0
        %2638 = vmatprep.subr.bf16.mxu0 0
        %2639 = vmatpush1.bf16.msra.mxu0 0
        %2640 = vmatprep.subr.bf16.mxu0 0
        %2641 = vmatpush1.bf16.msra.mxu0 0
        %2642 = vmatprep.subr.bf16.mxu0 0
        %2643 = vmatpush1.bf16.msra.mxu0 0
        %2644 = vmatprep.subr.bf16.mxu0 0
        %2645 = vmatpush1.bf16.msra.mxu0 0
        %2646 = vmatprep.subr.bf16.mxu0 0
        %2647 = vmatpush1.bf16.msra.mxu0 %v1085
        %2648 = vmatprep.subr.bf16.mxu0 0
        %2649 = vmatpush2.bf16.msra.mxu0 0
        %2650 = vmatprep.subr.bf16.mxu0 0
        %2651 = vmatpush2.bf16.msra.mxu0 0
        %2652 = vmatprep.subr.bf16.mxu0 0
        %2653 = vmatpush2.bf16.msra.mxu0 0
        %2654 = vmatprep.subr.bf16.mxu0 0
        %2655 = vmatpush2.bf16.msra.mxu0 0
        %2656 = vmatprep.subr.bf16.mxu0 0
        %2657 = vmatpush2.bf16.msra.mxu0 0
        %2658 = vmatprep.subr.bf16.mxu0 0
        %2659 = vmatpush2.bf16.msra.mxu0 0
        %2660 = vmatprep.subr.bf16.mxu0 0
        %2661 = vmatpush2.bf16.msra.mxu0 0
        %2662 = vmatprep.subr.bf16.mxu0 0
        %2663 = vmatpush2.bf16.msra.mxu0 0
        %2664 = vmatprep.mubr.bf16.mxu0 0
        %2665 = vmatmul.mubr.bf16.gmra.mxu0 %v1452
        %v2666 = vpop.f32.mrf.mxu0
        %v2667 = vadd.f32 0.0, %v2666
        %v2668 = vpop.f32.mrf.mxu0
        %v2669 = vpop.f32.mrf.mxu0
        %v2670 = vadd.f32 0.0, %v2669
        %v2671 = vpop.f32.mrf.mxu0
        %2672 = vmatprep.mubr.bf16.mxu0 0
        %2673 = vmatmul.mubr.bf16.gmra.mxu0 %v1455
        %v2674 = vpop.f32.mrf.mxu0
        %v2675 = vadd.f32 0.0, %v2674
        %v2676 = vpop.f32.mrf.mxu0
        %v2677 = vpop.f32.mrf.mxu0
        %v2678 = vpop.f32.mrf.mxu0
        %2679 = vdwg.mxu0
        %v2680 = vadd.f32 %v2629, %v2667
        %v2681 = vadd.f32 %v2630, %v2670
        %v2682 = vadd.f32 %v2631, %v2675
        %2683 = vmatprep.subr.bf16.mxu0 0
        %2684 = vmatpush1.bf16.msra.mxu0 0
        %2685 = vmatprep.subr.bf16.mxu0 0
        %2686 = vmatpush1.bf16.msra.mxu0 0
        %2687 = vmatprep.subr.bf16.mxu0 0
        %2688 = vmatpush1.bf16.msra.mxu0 0
        %2689 = vmatprep.subr.bf16.mxu0 0
        %2690 = vmatpush1.bf16.msra.mxu0 0
        %2691 = vmatprep.subr.bf16.mxu0 0
        %2692 = vmatpush1.bf16.msra.mxu0 0
        %2693 = vmatprep.subr.bf16.mxu0 0
        %2694 = vmatpush1.bf16.msra.mxu0 0
        %2695 = vmatprep.subr.bf16.mxu0 0
        %2696 = vmatpush1.bf16.msra.mxu0 0
        %2697 = vmatprep.subr.bf16.mxu0 0
        %2698 = vmatpush1.bf16.msra.mxu0 %v1165
        %2699 = vmatprep.subr.bf16.mxu0 0
        %2700 = vmatpush2.bf16.msra.mxu0 0
        %2701 = vmatprep.subr.bf16.mxu0 0
        %2702 = vmatpush2.bf16.msra.mxu0 0
        %2703 = vmatprep.subr.bf16.mxu0 0
        %2704 = vmatpush2.bf16.msra.mxu0 0
        %2705 = vmatprep.subr.bf16.mxu0 0
        %2706 = vmatpush2.bf16.msra.mxu0 0
        %2707 = vmatprep.subr.bf16.mxu0 0
        %2708 = vmatpush2.bf16.msra.mxu0 0
        %2709 = vmatprep.subr.bf16.mxu0 0
        %2710 = vmatpush2.bf16.msra.mxu0 0
        %2711 = vmatprep.subr.bf16.mxu0 0
        %2712 = vmatpush2.bf16.msra.mxu0 0
        %2713 = vmatprep.subr.bf16.mxu0 0
        %2714 = vmatpush2.bf16.msra.mxu0 0
        %2715 = vmatprep.mubr.bf16.mxu0 0
        %2716 = vmatmul.mubr.bf16.gmra.mxu0 %v1525
        %v2717 = vpop.f32.mrf.mxu0
        %v2718 = vadd.f32 0.0, %v2717
        %v2719 = vpop.f32.mrf.mxu0
        %v2720 = vpop.f32.mrf.mxu0
        %v2721 = vadd.f32 0.0, %v2720
        %v2722 = vpop.f32.mrf.mxu0
        %2723 = vmatprep.mubr.bf16.mxu0 0
        %2724 = vmatmul.mubr.bf16.gmra.mxu0 %v1528
        %v2725 = vpop.f32.mrf.mxu0
        %v2726 = vadd.f32 0.0, %v2725
        %v2727 = vpop.f32.mrf.mxu0
        %v2728 = vpop.f32.mrf.mxu0
        %v2729 = vpop.f32.mrf.mxu0
        %2730 = vdwg.mxu0
        %v2731 = vadd.f32 %v2680, %v2718
        %v2732 = vadd.f32 %v2681, %v2721
        %v2733 = vadd.f32 %v2682, %v2726
        %2734 = vmatprep.subr.bf16.mxu0 0
        %2735 = vmatpush1.bf16.msra.mxu0 0
        %2736 = vmatprep.subr.bf16.mxu0 0
        %2737 = vmatpush1.bf16.msra.mxu0 0
        %2738 = vmatprep.subr.bf16.mxu0 0
        %2739 = vmatpush1.bf16.msra.mxu0 0
        %2740 = vmatprep.subr.bf16.mxu0 0
        %2741 = vmatpush1.bf16.msra.mxu0 0
        %2742 = vmatprep.subr.bf16.mxu0 0
        %2743 = vmatpush1.bf16.msra.mxu0 0
        %2744 = vmatprep.subr.bf16.mxu0 0
        %2745 = vmatpush1.bf16.msra.mxu0 0
        %2746 = vmatprep.subr.bf16.mxu0 0
        %2747 = vmatpush1.bf16.msra.mxu0 0
        %2748 = vmatprep.subr.bf16.mxu0 0
        %2749 = vmatpush1.bf16.msra.mxu0 %v1235
        %2750 = vmatprep.subr.bf16.mxu0 0
        %2751 = vmatpush2.bf16.msra.mxu0 0
        %2752 = vmatprep.subr.bf16.mxu0 0
        %2753 = vmatpush2.bf16.msra.mxu0 0
        %2754 = vmatprep.subr.bf16.mxu0 0
        %2755 = vmatpush2.bf16.msra.mxu0 0
        %2756 = vmatprep.subr.bf16.mxu0 0
        %2757 = vmatpush2.bf16.msra.mxu0 0
        %2758 = vmatprep.subr.bf16.mxu0 0
        %2759 = vmatpush2.bf16.msra.mxu0 0
        %2760 = vmatprep.subr.bf16.mxu0 0
        %2761 = vmatpush2.bf16.msra.mxu0 0
        %2762 = vmatprep.subr.bf16.mxu0 0
        %2763 = vmatpush2.bf16.msra.mxu0 0
        %2764 = vmatprep.subr.bf16.mxu0 0
        %2765 = vmatpush2.bf16.msra.mxu0 0
        %2766 = vmatprep.mubr.bf16.mxu0 0
        %2767 = vmatmul.mubr.bf16.gmra.mxu0 %v1601
        %v2768 = vpop.f32.mrf.mxu0
        %v2769 = vadd.f32 0.0, %v2768
        %v2770 = vpop.f32.mrf.mxu0
        %v2771 = vpop.f32.mrf.mxu0
        %v2772 = vadd.f32 0.0, %v2771
        %v2773 = vpop.f32.mrf.mxu0
        %2774 = vmatprep.mubr.bf16.mxu0 0
        %2775 = vmatmul.mubr.bf16.gmra.mxu0 %v1604
        %v2776 = vpop.f32.mrf.mxu0
        %v2777 = vadd.f32 0.0, %v2776
        %v2778 = vpop.f32.mrf.mxu0
        %v2779 = vpop.f32.mrf.mxu0
        %v2780 = vpop.f32.mrf.mxu0
        %2781 = vdwg.mxu0
        %v2782 = vadd.f32 %v2731, %v2769
        %v2783 = vadd.f32 %v2732, %v2772
        %v2784 = vadd.f32 %v2733, %v2777
        %2785 = vmatprep.subr.bf16.mxu0 0
        %2786 = vmatpush1.bf16.msra.mxu0 0
        %2787 = vmatprep.subr.bf16.mxu0 0
        %2788 = vmatpush1.bf16.msra.mxu0 0
        %2789 = vmatprep.subr.bf16.mxu0 0
        %2790 = vmatpush1.bf16.msra.mxu0 0
        %2791 = vmatprep.subr.bf16.mxu0 0
        %2792 = vmatpush1.bf16.msra.mxu0 0
        %2793 = vmatprep.subr.bf16.mxu0 0
        %2794 = vmatpush1.bf16.msra.mxu0 0
        %2795 = vmatprep.subr.bf16.mxu0 0
        %2796 = vmatpush1.bf16.msra.mxu0 0
        %2797 = vmatprep.subr.bf16.mxu0 0
        %2798 = vmatpush1.bf16.msra.mxu0 0
        %2799 = vmatprep.subr.bf16.mxu0 0
        %2800 = vmatpush1.bf16.msra.mxu0 %v1315
        %2801 = vmatprep.subr.bf16.mxu0 0
        %2802 = vmatpush2.bf16.msra.mxu0 0
        %2803 = vmatprep.subr.bf16.mxu0 0
        %2804 = vmatpush2.bf16.msra.mxu0 0
        %2805 = vmatprep.subr.bf16.mxu0 0
        %2806 = vmatpush2.bf16.msra.mxu0 0
        %2807 = vmatprep.subr.bf16.mxu0 0
        %2808 = vmatpush2.bf16.msra.mxu0 0
        %2809 = vmatprep.subr.bf16.mxu0 0
        %2810 = vmatpush2.bf16.msra.mxu0 0
        %2811 = vmatprep.subr.bf16.mxu0 0
        %2812 = vmatpush2.bf16.msra.mxu0 0
        %2813 = vmatprep.subr.bf16.mxu0 0
        %2814 = vmatpush2.bf16.msra.mxu0 0
        %2815 = vmatprep.subr.bf16.mxu0 0
        %2816 = vmatpush2.bf16.msra.mxu0 0
        %2817 = vmatprep.mubr.bf16.mxu0 0
        %2818 = vmatmul.mubr.bf16.gmra.mxu0 %v1674
        %v2819 = vpop.f32.mrf.mxu0
        %v2820 = vadd.f32 0.0, %v2819
        %v2821 = vpop.f32.mrf.mxu0
        %v2822 = vpop.f32.mrf.mxu0
        %v2823 = vadd.f32 0.0, %v2822
        %v2824 = vpop.f32.mrf.mxu0
        %2825 = vmatprep.mubr.bf16.mxu0 0
        %2826 = vmatmul.mubr.bf16.gmra.mxu0 %v1677
        %v2827 = vpop.f32.mrf.mxu0
        %v2828 = vadd.f32 0.0, %v2827
        %v2829 = vpop.f32.mrf.mxu0
        %v2830 = vpop.f32.mrf.mxu0
        %v2831 = vpop.f32.mrf.mxu0
        %2832 = vdwg.mxu0
        %v2833 = vadd.f32 %v2782, %v2820
        %v2834 = vadd.f32 %v2783, %v2823
        %v2835 = vadd.f32 %v2784, %v2828
        %2836 = vmatprep.subr.bf16.mxu0 0
        %2837 = vmatpush1.bf16.msra.mxu0 0
        %2838 = vmatprep.subr.bf16.mxu0 0
        %2839 = vmatpush1.bf16.msra.mxu0 0
        %2840 = vmatprep.subr.bf16.mxu0 0
        %2841 = vmatpush1.bf16.msra.mxu0 0
        %2842 = vmatprep.subr.bf16.mxu0 0
        %2843 = vmatpush1.bf16.msra.mxu0 0
        %2844 = vmatprep.subr.bf16.mxu0 0
        %2845 = vmatpush1.bf16.msra.mxu0 0
        %2846 = vmatprep.subr.bf16.mxu0 0
        %2847 = vmatpush1.bf16.msra.mxu0 0
        %2848 = vmatprep.subr.bf16.mxu0 0
        %2849 = vmatpush1.bf16.msra.mxu0 0
        %2850 = vmatprep.subr.bf16.mxu0 0
        %2851 = vmatpush1.bf16.msra.mxu0 %v1381
        %2852 = vmatprep.subr.bf16.mxu0 0
        %2853 = vmatpush2.bf16.msra.mxu0 0
        %2854 = vmatprep.subr.bf16.mxu0 0
        %2855 = vmatpush2.bf16.msra.mxu0 0
        %2856 = vmatprep.subr.bf16.mxu0 0
        %2857 = vmatpush2.bf16.msra.mxu0 0
        %2858 = vmatprep.subr.bf16.mxu0 0
        %2859 = vmatpush2.bf16.msra.mxu0 0
        %2860 = vmatprep.subr.bf16.mxu0 0
        %2861 = vmatpush2.bf16.msra.mxu0 0
        %2862 = vmatprep.subr.bf16.mxu0 0
        %2863 = vmatpush2.bf16.msra.mxu0 0
        %2864 = vmatprep.subr.bf16.mxu0 0
        %2865 = vmatpush2.bf16.msra.mxu0 0
        %2866 = vmatprep.subr.bf16.mxu0 0
        %2867 = vmatpush2.bf16.msra.mxu0 0
        %2868 = vmatprep.mubr.bf16.mxu0 0
        %2869 = vmatmul.mubr.bf16.gmra.mxu0 %v1754
        %v2870 = vpop.f32.mrf.mxu0
        %v2871 = vadd.f32 0.0, %v2870
        %v2872 = vpop.f32.mrf.mxu0
        %v2873 = vpop.f32.mrf.mxu0
        %v2874 = vadd.f32 0.0, %v2873
        %v2875 = vpop.f32.mrf.mxu0
        %2876 = vmatprep.mubr.bf16.mxu0 0
        %2877 = vmatmul.mubr.bf16.gmra.mxu0 %v1757
        %v2878 = vpop.f32.mrf.mxu0
        %v2879 = vadd.f32 0.0, %v2878
        %v2880 = vpop.f32.mrf.mxu0
        %v2881 = vpop.f32.mrf.mxu0
        %v2882 = vpop.f32.mrf.mxu0
        %2883 = vdwg.mxu0
        %v2884 = vadd.f32 %v2833, %v2871
        %v2885 = vadd.f32 %v2834, %v2874
        %v2886 = vadd.f32 %v2835, %v2879
        %2887 = vmatprep.subr.bf16.mxu0 0
        %2888 = vmatpush1.bf16.msra.mxu0 0
        %2889 = vmatprep.subr.bf16.mxu0 0
        %2890 = vmatpush1.bf16.msra.mxu0 0
        %2891 = vmatprep.subr.bf16.mxu0 0
        %2892 = vmatpush1.bf16.msra.mxu0 0
        %2893 = vmatprep.subr.bf16.mxu0 0
        %2894 = vmatpush1.bf16.msra.mxu0 0
        %2895 = vmatprep.subr.bf16.mxu0 0
        %2896 = vmatpush1.bf16.msra.mxu0 0
        %2897 = vmatprep.subr.bf16.mxu0 0
        %2898 = vmatpush1.bf16.msra.mxu0 0
        %2899 = vmatprep.subr.bf16.mxu0 0
        %2900 = vmatpush1.bf16.msra.mxu0 0
        %2901 = vmatprep.subr.bf16.mxu0 0
        %2902 = vmatpush1.bf16.msra.mxu0 %v1458
        %2903 = vmatprep.subr.bf16.mxu0 0
        %2904 = vmatpush2.bf16.msra.mxu0 0
        %2905 = vmatprep.subr.bf16.mxu0 0
        %2906 = vmatpush2.bf16.msra.mxu0 0
        %2907 = vmatprep.subr.bf16.mxu0 0
        %2908 = vmatpush2.bf16.msra.mxu0 0
        %2909 = vmatprep.subr.bf16.mxu0 0
        %2910 = vmatpush2.bf16.msra.mxu0 0
        %2911 = vmatprep.subr.bf16.mxu0 0
        %2912 = vmatpush2.bf16.msra.mxu0 0
        %2913 = vmatprep.subr.bf16.mxu0 0
        %2914 = vmatpush2.bf16.msra.mxu0 0
        %2915 = vmatprep.subr.bf16.mxu0 0
        %2916 = vmatpush2.bf16.msra.mxu0 0
        %2917 = vmatprep.subr.bf16.mxu0 0
        %2918 = vmatpush2.bf16.msra.mxu0 0
        %2919 = vmatprep.mubr.bf16.mxu0 0
        %2920 = vmatmul.mubr.bf16.gmra.mxu0 %v1824
        %v2921 = vpop.f32.mrf.mxu0
        %v2922 = vadd.f32 0.0, %v2921
        %v2923 = vpop.f32.mrf.mxu0
        %v2924 = vpop.f32.mrf.mxu0
        %v2925 = vadd.f32 0.0, %v2924
        %v2926 = vpop.f32.mrf.mxu0
        %2927 = vmatprep.mubr.bf16.mxu0 0
        %2928 = vmatmul.mubr.bf16.gmra.mxu0 %v1827
        %v2929 = vpop.f32.mrf.mxu0
        %v2930 = vadd.f32 0.0, %v2929
        %v2931 = vpop.f32.mrf.mxu0
        %v2932 = vpop.f32.mrf.mxu0
        %v2933 = vpop.f32.mrf.mxu0
        %2934 = vdwg.mxu0
        %v2935 = vadd.f32 %v2884, %v2922
        %v2936 = vadd.f32 %v2885, %v2925
        %v2937 = vadd.f32 %v2886, %v2930
        %2938 = vmatprep.subr.bf16.mxu0 0
        %2939 = vmatpush1.bf16.msra.mxu0 0
        %2940 = vmatprep.subr.bf16.mxu0 0
        %2941 = vmatpush1.bf16.msra.mxu0 0
        %2942 = vmatprep.subr.bf16.mxu0 0
        %2943 = vmatpush1.bf16.msra.mxu0 0
        %2944 = vmatprep.subr.bf16.mxu0 0
        %2945 = vmatpush1.bf16.msra.mxu0 0
        %2946 = vmatprep.subr.bf16.mxu0 0
        %2947 = vmatpush1.bf16.msra.mxu0 0
        %2948 = vmatprep.subr.bf16.mxu0 0
        %2949 = vmatpush1.bf16.msra.mxu0 0
        %2950 = vmatprep.subr.bf16.mxu0 0
        %2951 = vmatpush1.bf16.msra.mxu0 0
        %2952 = vmatprep.subr.bf16.mxu0 0
        %2953 = vmatpush1.bf16.msra.mxu0 %v1531
        %2954 = vmatprep.subr.bf16.mxu0 0
        %2955 = vmatpush2.bf16.msra.mxu0 0
        %2956 = vmatprep.subr.bf16.mxu0 0
        %2957 = vmatpush2.bf16.msra.mxu0 0
        %2958 = vmatprep.subr.bf16.mxu0 0
        %2959 = vmatpush2.bf16.msra.mxu0 0
        %2960 = vmatprep.subr.bf16.mxu0 0
        %2961 = vmatpush2.bf16.msra.mxu0 0
        %2962 = vmatprep.subr.bf16.mxu0 0
        %2963 = vmatpush2.bf16.msra.mxu0 0
        %2964 = vmatprep.subr.bf16.mxu0 0
        %2965 = vmatpush2.bf16.msra.mxu0 0
        %2966 = vmatprep.subr.bf16.mxu0 0
        %2967 = vmatpush2.bf16.msra.mxu0 0
        %2968 = vmatprep.subr.bf16.mxu0 0
        %2969 = vmatpush2.bf16.msra.mxu0 0
        %2970 = vmatprep.mubr.bf16.mxu0 0
        %2971 = vmatmul.mubr.bf16.gmra.mxu0 %v1901
        %v2972 = vpop.f32.mrf.mxu0
        %v2973 = vadd.f32 0.0, %v2972
        %v2974 = vpop.f32.mrf.mxu0
        %v2975 = vpop.f32.mrf.mxu0
        %v2976 = vadd.f32 0.0, %v2975
        %v2977 = vpop.f32.mrf.mxu0
        %2978 = vmatprep.mubr.bf16.mxu0 0
        %2979 = vmatmul.mubr.bf16.gmra.mxu0 %v1904
        %v2980 = vpop.f32.mrf.mxu0
        %v2981 = vadd.f32 0.0, %v2980
        %v2982 = vpop.f32.mrf.mxu0
        %v2983 = vpop.f32.mrf.mxu0
        %v2984 = vpop.f32.mrf.mxu0
        %2985 = vdwg.mxu0
        %v2986 = vadd.f32 %v2935, %v2973
        %v2987 = vadd.f32 %v2936, %v2976
        %v2988 = vadd.f32 %v2937, %v2981
        %2989 = vmatprep.subr.bf16.mxu0 0
        %2990 = vmatpush1.bf16.msra.mxu0 0
        %2991 = vmatprep.subr.bf16.mxu0 0
        %2992 = vmatpush1.bf16.msra.mxu0 0
        %2993 = vmatprep.subr.bf16.mxu0 0
        %2994 = vmatpush1.bf16.msra.mxu0 0
        %2995 = vmatprep.subr.bf16.mxu0 0
        %2996 = vmatpush1.bf16.msra.mxu0 0
        %2997 = vmatprep.subr.bf16.mxu0 0
        %2998 = vmatpush1.bf16.msra.mxu0 0
        %2999 = vmatprep.subr.bf16.mxu0 0
        %3000 = vmatpush1.bf16.msra.mxu0 0
        %3001 = vmatprep.subr.bf16.mxu0 0
        %3002 = vmatpush1.bf16.msra.mxu0 0
        %3003 = vmatprep.subr.bf16.mxu0 0
        %3004 = vmatpush1.bf16.msra.mxu0 %v1607
        %3005 = vmatprep.subr.bf16.mxu0 0
        %3006 = vmatpush2.bf16.msra.mxu0 0
        %3007 = vmatprep.subr.bf16.mxu0 0
        %3008 = vmatpush2.bf16.msra.mxu0 0
        %3009 = vmatprep.subr.bf16.mxu0 0
        %3010 = vmatpush2.bf16.msra.mxu0 0
        %3011 = vmatprep.subr.bf16.mxu0 0
        %3012 = vmatpush2.bf16.msra.mxu0 0
        %3013 = vmatprep.subr.bf16.mxu0 0
        %3014 = vmatpush2.bf16.msra.mxu0 0
        %3015 = vmatprep.subr.bf16.mxu0 0
        %3016 = vmatpush2.bf16.msra.mxu0 0
        %3017 = vmatprep.subr.bf16.mxu0 0
        %3018 = vmatpush2.bf16.msra.mxu0 0
        %3019 = vmatprep.subr.bf16.mxu0 0
        %3020 = vmatpush2.bf16.msra.mxu0 0
        %3021 = vmatprep.mubr.bf16.mxu0 0
        %3022 = vmatmul.mubr.bf16.gmra.mxu0 %v1967
        %v3023 = vpop.f32.mrf.mxu0
        %v3024 = vadd.f32 0.0, %v3023
        %v3025 = vpop.f32.mrf.mxu0
        %v3026 = vpop.f32.mrf.mxu0
        %v3027 = vadd.f32 0.0, %v3026
        %v3028 = vpop.f32.mrf.mxu0
        %3029 = vmatprep.mubr.bf16.mxu0 0
        %3030 = vmatmul.mubr.bf16.gmra.mxu0 %v1970
        %v3031 = vpop.f32.mrf.mxu0
        %v3032 = vadd.f32 0.0, %v3031
        %v3033 = vpop.f32.mrf.mxu0
        %v3034 = vpop.f32.mrf.mxu0
        %v3035 = vpop.f32.mrf.mxu0
        %3036 = vdwg.mxu0
        %v3037 = vadd.f32 %v2986, %v3024
        %v3038 = vadd.f32 %v2987, %v3027
        %v3039 = vadd.f32 %v2988, %v3032
        %s3040 = sadd.s32 %s179, 5
        %s3041 = smul.u32 %s3040, 32
        %s3042 = scalar_lea.vmem %s165, %s3041
        %v3043 = vld [vmem:[%s3042] sm:$0xff]
        %v3044 = vld [vmem:[%s3042 + $0x8] sm:$0xff]
        %v3045 = vld [vmem:[%s3042 + $0x10] sm:$0xff]
        %v3046 = vpack.c.bf16 %v3044, %v3043
        %v3047 = vpack.c.bf16 %v3045, %v3045
        %v3049 = vsel %vm205, %v3046, 0
        %v3052 = vsel %vm205, %v3047, 0
        %3054 = vmatprep.subr.bf16.mxu0 0
        %3055 = vmatpush1.bf16.msra.mxu0 0
        %3056 = vmatprep.subr.bf16.mxu0 0
        %3057 = vmatpush1.bf16.msra.mxu0 0
        %3058 = vmatprep.subr.bf16.mxu0 0
        %3059 = vmatpush1.bf16.msra.mxu0 0
        %3060 = vmatprep.subr.bf16.mxu0 0
        %3061 = vmatpush1.bf16.msra.mxu0 0
        %3062 = vmatprep.subr.bf16.mxu0 0
        %3063 = vmatpush1.bf16.msra.mxu0 0
        %3064 = vmatprep.subr.bf16.mxu0 0
        %3065 = vmatpush1.bf16.msra.mxu0 0
        %3066 = vmatprep.subr.bf16.mxu0 0
        %3067 = vmatpush1.bf16.msra.mxu0 0
        %3068 = vmatprep.subr.bf16.mxu0 0
        %3069 = vmatpush1.bf16.msra.mxu0 %v1680
        %3070 = vmatprep.subr.bf16.mxu0 0
        %3071 = vmatpush2.bf16.msra.mxu0 0
        %3072 = vmatprep.subr.bf16.mxu0 0
        %3073 = vmatpush2.bf16.msra.mxu0 0
        %3074 = vmatprep.subr.bf16.mxu0 0
        %3075 = vmatpush2.bf16.msra.mxu0 0
        %3076 = vmatprep.subr.bf16.mxu0 0
        %3077 = vmatpush2.bf16.msra.mxu0 0
        %3078 = vmatprep.subr.bf16.mxu0 0
        %3079 = vmatpush2.bf16.msra.mxu0 0
        %3080 = vmatprep.subr.bf16.mxu0 0
        %3081 = vmatpush2.bf16.msra.mxu0 0
        %3082 = vmatprep.subr.bf16.mxu0 0
        %3083 = vmatpush2.bf16.msra.mxu0 0
        %3084 = vmatprep.subr.bf16.mxu0 0
        %3085 = vmatpush2.bf16.msra.mxu0 0
        %3086 = vmatprep.mubr.bf16.mxu0 0
        %3087 = vmatmul.mubr.bf16.gmra.mxu0 %v3049
        %v3088 = vpop.f32.mrf.mxu0
        %v3089 = vadd.f32 0.0, %v3088
        %v3090 = vpop.f32.mrf.mxu0
        %v3091 = vpop.f32.mrf.mxu0
        %v3092 = vadd.f32 0.0, %v3091
        %v3093 = vpop.f32.mrf.mxu0
        %3094 = vmatprep.mubr.bf16.mxu0 0
        %3095 = vmatmul.mubr.bf16.gmra.mxu0 %v3052
        %v3096 = vpop.f32.mrf.mxu0
        %v3097 = vadd.f32 0.0, %v3096
        %v3098 = vpop.f32.mrf.mxu0
        %v3099 = vpop.f32.mrf.mxu0
        %v3100 = vpop.f32.mrf.mxu0
        %3101 = vdwg.mxu0
        %v3102 = vadd.f32 %v3037, %v3089
        %v3103 = vadd.f32 %v3038, %v3092
        %v3104 = vadd.f32 %v3039, %v3097
        %v3105 = vld [vmem:[%s3042 + $0x1] sm:$0xff]
        %v3106 = vld [vmem:[%s3042 + $0x9] sm:$0xff]
        %v3107 = vld [vmem:[%s3042 + $0x11] sm:$0xff]
        %v3108 = vpack.c.bf16 %v3106, %v3105
        %v3109 = vpack.c.bf16 %v3107, %v3107
        %v3111 = vsel %vm205, %v3108, 0
        %v3114 = vsel %vm205, %v3109, 0
        %3116 = vmatprep.subr.bf16.mxu0 0
        %3117 = vmatpush1.bf16.msra.mxu0 0
        %3118 = vmatprep.subr.bf16.mxu0 0
        %3119 = vmatpush1.bf16.msra.mxu0 0
        %3120 = vmatprep.subr.bf16.mxu0 0
        %3121 = vmatpush1.bf16.msra.mxu0 0
        %3122 = vmatprep.subr.bf16.mxu0 0
        %3123 = vmatpush1.bf16.msra.mxu0 0
        %3124 = vmatprep.subr.bf16.mxu0 0
        %3125 = vmatpush1.bf16.msra.mxu0 0
        %3126 = vmatprep.subr.bf16.mxu0 0
        %3127 = vmatpush1.bf16.msra.mxu0 0
        %3128 = vmatprep.subr.bf16.mxu0 0
        %3129 = vmatpush1.bf16.msra.mxu0 0
        %3130 = vmatprep.subr.bf16.mxu0 0
        %3131 = vmatpush1.bf16.msra.mxu0 %v1760
        %3132 = vmatprep.subr.bf16.mxu0 0
        %3133 = vmatpush2.bf16.msra.mxu0 0
        %3134 = vmatprep.subr.bf16.mxu0 0
        %3135 = vmatpush2.bf16.msra.mxu0 0
        %3136 = vmatprep.subr.bf16.mxu0 0
        %3137 = vmatpush2.bf16.msra.mxu0 0
        %3138 = vmatprep.subr.bf16.mxu0 0
        %3139 = vmatpush2.bf16.msra.mxu0 0
        %3140 = vmatprep.subr.bf16.mxu0 0
        %3141 = vmatpush2.bf16.msra.mxu0 0
        %3142 = vmatprep.subr.bf16.mxu0 0
        %3143 = vmatpush2.bf16.msra.mxu0 0
        %3144 = vmatprep.subr.bf16.mxu0 0
        %3145 = vmatpush2.bf16.msra.mxu0 0
        %3146 = vmatprep.subr.bf16.mxu0 0
        %3147 = vmatpush2.bf16.msra.mxu0 0
        %3148 = vmatprep.mubr.bf16.mxu0 0
        %3149 = vmatmul.mubr.bf16.gmra.mxu0 %v3111
        %v3150 = vpop.f32.mrf.mxu0
        %v3151 = vadd.f32 0.0, %v3150
        %v3152 = vpop.f32.mrf.mxu0
        %v3153 = vpop.f32.mrf.mxu0
        %v3154 = vadd.f32 0.0, %v3153
        %v3155 = vpop.f32.mrf.mxu0
        %3156 = vmatprep.mubr.bf16.mxu0 0
        %3157 = vmatmul.mubr.bf16.gmra.mxu0 %v3114
        %v3158 = vpop.f32.mrf.mxu0
        %v3159 = vadd.f32 0.0, %v3158
        %v3160 = vpop.f32.mrf.mxu0
        %v3161 = vpop.f32.mrf.mxu0
        %v3162 = vpop.f32.mrf.mxu0
        %3163 = vdwg.mxu0
        %v3164 = vadd.f32 %v3102, %v3151
        %v3165 = vadd.f32 %v3103, %v3154
        %v3166 = vadd.f32 %v3104, %v3159
        %v3167 = vld [vmem:[%s3042 + $0x2] sm:$0xff]
        %v3168 = vld [vmem:[%s3042 + $0xa] sm:$0xff]
        %v3169 = vld [vmem:[%s3042 + $0x12] sm:$0xff]
        %v3170 = vpack.c.bf16 %v3168, %v3167
        %v3171 = vpack.c.bf16 %v3169, %v3169
        %v3173 = vsel %vm205, %v3170, 0
        %v3176 = vsel %vm205, %v3171, 0
        %3178 = vmatprep.subr.bf16.mxu0 0
        %3179 = vmatpush1.bf16.msra.mxu0 0
        %3180 = vmatprep.subr.bf16.mxu0 0
        %3181 = vmatpush1.bf16.msra.mxu0 0
        %3182 = vmatprep.subr.bf16.mxu0 0
        %3183 = vmatpush1.bf16.msra.mxu0 0
        %3184 = vmatprep.subr.bf16.mxu0 0
        %3185 = vmatpush1.bf16.msra.mxu0 0
        %3186 = vmatprep.subr.bf16.mxu0 0
        %3187 = vmatpush1.bf16.msra.mxu0 0
        %3188 = vmatprep.subr.bf16.mxu0 0
        %3189 = vmatpush1.bf16.msra.mxu0 0
        %3190 = vmatprep.subr.bf16.mxu0 0
        %3191 = vmatpush1.bf16.msra.mxu0 0
        %3192 = vmatprep.subr.bf16.mxu0 0
        %3193 = vmatpush1.bf16.msra.mxu0 %v1830
        %3194 = vmatprep.subr.bf16.mxu0 0
        %3195 = vmatpush2.bf16.msra.mxu0 0
        %3196 = vmatprep.subr.bf16.mxu0 0
        %3197 = vmatpush2.bf16.msra.mxu0 0
        %3198 = vmatprep.subr.bf16.mxu0 0
        %3199 = vmatpush2.bf16.msra.mxu0 0
        %3200 = vmatprep.subr.bf16.mxu0 0
        %3201 = vmatpush2.bf16.msra.mxu0 0
        %3202 = vmatprep.subr.bf16.mxu0 0
        %3203 = vmatpush2.bf16.msra.mxu0 0
        %3204 = vmatprep.subr.bf16.mxu0 0
        %3205 = vmatpush2.bf16.msra.mxu0 0
        %3206 = vmatprep.subr.bf16.mxu0 0
        %3207 = vmatpush2.bf16.msra.mxu0 0
        %3208 = vmatprep.subr.bf16.mxu0 0
        %3209 = vmatpush2.bf16.msra.mxu0 0
        %3210 = vmatprep.mubr.bf16.mxu0 0
        %3211 = vmatmul.mubr.bf16.gmra.mxu0 %v3173
        %v3212 = vpop.f32.mrf.mxu0
        %v3213 = vadd.f32 0.0, %v3212
        %v3214 = vpop.f32.mrf.mxu0
        %v3215 = vpop.f32.mrf.mxu0
        %v3216 = vadd.f32 0.0, %v3215
        %v3217 = vpop.f32.mrf.mxu0
        %3218 = vmatprep.mubr.bf16.mxu0 0
        %3219 = vmatmul.mubr.bf16.gmra.mxu0 %v3176
        %v3220 = vpop.f32.mrf.mxu0
        %v3221 = vadd.f32 0.0, %v3220
        %v3222 = vpop.f32.mrf.mxu0
        %v3223 = vpop.f32.mrf.mxu0
        %v3224 = vpop.f32.mrf.mxu0
        %3225 = vdwg.mxu0
        %v3226 = vadd.f32 %v3164, %v3213
        %v3227 = vadd.f32 %v3165, %v3216
        %v3228 = vadd.f32 %v3166, %v3221
        %v3229 = vld [vmem:[%s3042 + $0x3] sm:$0xff]
        %v3230 = vld [vmem:[%s3042 + $0xb] sm:$0xff]
        %v3231 = vld [vmem:[%s3042 + $0x13] sm:$0xff]
        %v3232 = vpack.c.bf16 %v3230, %v3229
        %v3233 = vpack.c.bf16 %v3231, %v3231
        %v3235 = vsel %vm205, %v3232, 0
        %v3238 = vsel %vm205, %v3233, 0
        %3240 = vmatprep.subr.bf16.mxu0 0
        %3241 = vmatpush1.bf16.msra.mxu0 0
        %3242 = vmatprep.subr.bf16.mxu0 0
        %3243 = vmatpush1.bf16.msra.mxu0 0
        %3244 = vmatprep.subr.bf16.mxu0 0
        %3245 = vmatpush1.bf16.msra.mxu0 0
        %3246 = vmatprep.subr.bf16.mxu0 0
        %3247 = vmatpush1.bf16.msra.mxu0 0
        %3248 = vmatprep.subr.bf16.mxu0 0
        %3249 = vmatpush1.bf16.msra.mxu0 0
        %3250 = vmatprep.subr.bf16.mxu0 0
        %3251 = vmatpush1.bf16.msra.mxu0 0
        %3252 = vmatprep.subr.bf16.mxu0 0
        %3253 = vmatpush1.bf16.msra.mxu0 0
        %3254 = vmatprep.subr.bf16.mxu0 0
        %3255 = vmatpush1.bf16.msra.mxu0 %v1907
        %3256 = vmatprep.subr.bf16.mxu0 0
        %3257 = vmatpush2.bf16.msra.mxu0 0
        %3258 = vmatprep.subr.bf16.mxu0 0
        %3259 = vmatpush2.bf16.msra.mxu0 0
        %3260 = vmatprep.subr.bf16.mxu0 0
        %3261 = vmatpush2.bf16.msra.mxu0 0
        %3262 = vmatprep.subr.bf16.mxu0 0
        %3263 = vmatpush2.bf16.msra.mxu0 0
        %3264 = vmatprep.subr.bf16.mxu0 0
        %3265 = vmatpush2.bf16.msra.mxu0 0
        %3266 = vmatprep.subr.bf16.mxu0 0
        %3267 = vmatpush2.bf16.msra.mxu0 0
        %3268 = vmatprep.subr.bf16.mxu0 0
        %3269 = vmatpush2.bf16.msra.mxu0 0
        %3270 = vmatprep.subr.bf16.mxu0 0
        %3271 = vmatpush2.bf16.msra.mxu0 0
        %3272 = vmatprep.mubr.bf16.mxu0 0
        %3273 = vmatmul.mubr.bf16.gmra.mxu0 %v3235
        %v3274 = vpop.f32.mrf.mxu0
        %v3275 = vadd.f32 0.0, %v3274
        %v3276 = vpop.f32.mrf.mxu0
        %v3277 = vpop.f32.mrf.mxu0
        %v3278 = vadd.f32 0.0, %v3277
        %v3279 = vpop.f32.mrf.mxu0
        %3280 = vmatprep.mubr.bf16.mxu0 0
        %3281 = vmatmul.mubr.bf16.gmra.mxu0 %v3238
        %v3282 = vpop.f32.mrf.mxu0
        %v3283 = vadd.f32 0.0, %v3282
        %v3284 = vpop.f32.mrf.mxu0
        %v3285 = vpop.f32.mrf.mxu0
        %v3286 = vpop.f32.mrf.mxu0
        %3287 = vdwg.mxu0
        %v3288 = vadd.f32 %v3226, %v3275
        %v3289 = vadd.f32 %v3227, %v3278
        %v3290 = vadd.f32 %v3228, %v3283
        %v3291 = vld [vmem:[%s3042 + $0x4] sm:$0xff]
        %v3292 = vld [vmem:[%s3042 + $0xc] sm:$0xff]
        %v3293 = vld [vmem:[%s3042 + $0x14] sm:$0xff]
        %v3294 = vpack.c.bf16 %v3292, %v3291
        %v3295 = vpack.c.bf16 %v3293, %v3293
        %v3297 = vsel %vm205, %v3294, 0
        %v3300 = vsel %vm205, %v3295, 0
        %3302 = vmatprep.subr.bf16.mxu0 0
        %3303 = vmatpush1.bf16.msra.mxu0 0
        %3304 = vmatprep.subr.bf16.mxu0 0
        %3305 = vmatpush1.bf16.msra.mxu0 0
        %3306 = vmatprep.subr.bf16.mxu0 0
        %3307 = vmatpush1.bf16.msra.mxu0 0
        %3308 = vmatprep.subr.bf16.mxu0 0
        %3309 = vmatpush1.bf16.msra.mxu0 0
        %3310 = vmatprep.subr.bf16.mxu0 0
        %3311 = vmatpush1.bf16.msra.mxu0 0
        %3312 = vmatprep.subr.bf16.mxu0 0
        %3313 = vmatpush1.bf16.msra.mxu0 0
        %3314 = vmatprep.subr.bf16.mxu0 0
        %3315 = vmatpush1.bf16.msra.mxu0 0
        %3316 = vmatprep.subr.bf16.mxu0 0
        %3317 = vmatpush1.bf16.msra.mxu0 %v1973
        %3318 = vmatprep.subr.bf16.mxu0 0
        %3319 = vmatpush2.bf16.msra.mxu0 0
        %3320 = vmatprep.subr.bf16.mxu0 0
        %3321 = vmatpush2.bf16.msra.mxu0 0
        %3322 = vmatprep.subr.bf16.mxu0 0
        %3323 = vmatpush2.bf16.msra.mxu0 0
        %3324 = vmatprep.subr.bf16.mxu0 0
        %3325 = vmatpush2.bf16.msra.mxu0 0
        %3326 = vmatprep.subr.bf16.mxu0 0
        %3327 = vmatpush2.bf16.msra.mxu0 0
        %3328 = vmatprep.subr.bf16.mxu0 0
        %3329 = vmatpush2.bf16.msra.mxu0 0
        %3330 = vmatprep.subr.bf16.mxu0 0
        %3331 = vmatpush2.bf16.msra.mxu0 0
        %3332 = vmatprep.subr.bf16.mxu0 0
        %3333 = vmatpush2.bf16.msra.mxu0 0
        %3334 = vmatprep.mubr.bf16.mxu0 0
        %3335 = vmatmul.mubr.bf16.gmra.mxu0 %v3297
        %v3336 = vpop.f32.mrf.mxu0
        %v3337 = vadd.f32 0.0, %v3336
        %v3338 = vpop.f32.mrf.mxu0
        %v3339 = vpop.f32.mrf.mxu0
        %v3340 = vadd.f32 0.0, %v3339
        %v3341 = vpop.f32.mrf.mxu0
        %3342 = vmatprep.mubr.bf16.mxu0 0
        %3343 = vmatmul.mubr.bf16.gmra.mxu0 %v3300
        %v3344 = vpop.f32.mrf.mxu0
        %v3345 = vadd.f32 0.0, %v3344
        %v3346 = vpop.f32.mrf.mxu0
        %v3347 = vpop.f32.mrf.mxu0
        %v3348 = vpop.f32.mrf.mxu0
        %3349 = vdwg.mxu0
        %v3350 = vadd.f32 %v3288, %v3337
        %v3351 = vadd.f32 %v3289, %v3340
        %v3352 = vadd.f32 %v3290, %v3345
        %v3353 = vmax.f32 %v2023, %v3350
        %v3354 = vmax.f32 %v2024, %v3351
        %v3355 = vmax.f32 %v2025, %v3352
        %3356 = vst [vmem:[#allocation2] sm:$0xff] %v3353
        %3357 = vst [vmem:[#allocation2 + $0x8] sm:$0xff] %v3354
        %3358 = vst [vmem:[#allocation2 + $0x10] sm:$0xff] %v3355
        %v3359 = vld [vmem:[#allocation2] ss:$2 sm:$0xff]
        %s3360 = scalar_lea.vmem [#allocation2], 16
        %v3361 = vld [vmem:[%s3360] ss:$2 sm:$0xf]
        %s3362 = scalar_lea.vmem [#allocation2], 1
        %v3363 = vld [vmem:[%s3362] ss:$2 sm:$0xff]
        %s3364 = scalar_lea.vmem [#allocation2], 17
        %v3365 = vld [vmem:[%s3364] ss:$2 sm:$0xf]
        %v3366 = vmax.f32 %v3359, %v3363
        %v3367 = vmax.f32 %v3361, %v3365
        %v3369 = vlaneseq
        %v3370 = vshrl.u32 %v3369, 7
        %v3371 = vsub.s32 0, %v3370
        %v3372 = vrot.slane %v172, %v3371
        %v3374 = vadd.f32 %v3366, %v3372
        %v3375 = vadd.f32 %v3367, %v3372
        %v3376 = vmax.f32 %v3374, 0.0
        %v3377 = vmax.f32 %v3375, 0.0
        %s3378 = smul.u32 %s174, 16
        %s3379 = scalar_lea.vmem %s170, %s3378
        %3380 = vst [vmem:[%s3379] sm:$0xff] %v3376
        %3381 = vst [vmem:[%s3379 + $0x8] sm:$0xf] %v3377
      $region37: #{simple_classifier_forward.3} parent=31 // loop_footer
        %s178 = sadd.s32 1, %s174
      $region38: #{simple_classifier_forward.3} parent=31 // loop_footer_branch
        %173 = sbr.rel target = $region34
      $region39: #{simple_classifier_forward.3} parent=31 // loop_exit
        _
      %p3382 = scmp.lt.s32.totalorder %s14, 1
      %s3383 = scalar_select %p3382, %s14, 1
      %s3384 = smul.addr %s3383, 24
      %s3385 = smul.addr %s3384, 8
      %s3386 = scalar_lea.vmem %s3, %s3385
      // Predicated region
      $region40: #{simple_classifier_forward.3} parent=31 // pred_check
        %p3387 = pneg %p100
      $region41: #{simple_classifier_forward.3} parent=31 // pred_check_branch
        %3389 = sbr.rel (%p3387) target = $region43
      $region42: #{simple_classifier_forward.3} parent=31 // pred_region
        _
      $region43: #{simple_classifier_forward.3} parent=31 // pred_fallthru
        _
    $region32: #{simple_classifier_forward.3} parent=5 // pred_fallthru
      _
    %p3390 = scmp.le.s32.totalorder 2, %s9
    // Predicated region
    $region44: #{simple_classifier_forward.3} parent=5 // pred_check
      %p3391 = pneg %p3390
    $region45: #{simple_classifier_forward.3} parent=5 // pred_check_branch
      %3393 = sbr.rel (%p3391) target = $region47
    $region46: #{simple_classifier_forward.3} parent=5 // pred_region
      %s3394 = ssub.s32 %s9, 2
      // Predicated region
      $region48: #{simple_classifier_forward.3} parent=46 // pred_check
        %p3395 = pneg %p106
      $region49: #{simple_classifier_forward.3} parent=46 // pred_check_branch
        %3397 = sbr.rel (%p3395) target = $region51
      $region50: #{simple_classifier_forward.3} parent=46 // pred_region
        %p3398 = scmp.lt.s32.totalorder %s15, 1
        %s3399 = scalar_select %p3398, %s15, 1
        %s3400 = smul.addr %s3399, 24
        %s3401 = smul.addr %s3400, 8
        %s3402 = scalar_lea.vmem %s3, %s3401
      $region51: #{simple_classifier_forward.3} parent=46 // pred_fallthru
        _
    $region47: #{simple_classifier_forward.3} parent=5 // pred_fallthru
      _
  $region6: #{simple_classifier_forward.3} parent=0 // loop_footer
    %s13 = sadd.s32 1, %s9
  $region7: #{simple_classifier_forward.3} parent=0 // loop_footer_branch
    %8 = sbr.rel target = $region3
  $region8: #{simple_classifier_forward.3} parent=0 // loop_exit
    _

// kernel: simple_classifier_forward.5
$region0: #{simple_classifier_forward.5}
  #allocation0 [shape = 'u32[]', space=smem, size = 0x4, offset = 0x4, fixed_abs, tag = 'smem constant byte address 0x4 - core index']
  #allocation1 [shape = 'u32[144,128]{1,0:T(1,128)}', space=vmem, size = 0x12000, scoped, tag = 'internal scratch']
  %s0 = inlined_call_operand.vmem [shape: f32[8,2048], index: 0, kind: input, shape index: {}]
  %s1 = inlined_call_operand.vmem [shape: bf16[2048,128], index: 1, kind: input, shape index: {}]
  %s2 = inlined_call_operand.vmem [shape: f32[1,128], index: 2, kind: input, shape index: {}]
  %s3 = inlined_call_operand.vmem [shape: bf16[128,128], index: 3, kind: input, shape index: {}]
  %s4 = inlined_call_operand.vmem [shape: f32[1,128], index: 4, kind: input, shape index: {}]
  %s5 = inlined_call_operand.vmem [shape: bf16[128,128], index: 5, kind: input, shape index: {}]
  %s6 = inlined_call_operand.vmem [shape: f32[1,128], index: 6, kind: input, shape index: {}]
  %s7 = inlined_call_operand.vmem [shape: f32[8,128], index: 7, kind: output, shape index: {}]
  %s8 = sld [smem:[#allocation0]]
  $region38: #{simple_classifier_forward.5} parent=0
    _
  %s10 = ssub.s32 1, %s8
  %s11 = scalar_select 0, %s10, %s8
  // Predicated region
  $region2: #{simple_classifier_forward.5} parent=0 // pred_check
    _
  $region3: #{simple_classifier_forward.5} parent=0 // pred_check_branch
    %13 = sbr.rel (0) target = $region5
  $region4: #{simple_classifier_forward.5} parent=0 // pred_region
    _
  $region5: #{simple_classifier_forward.5} parent=0 // pred_fallthru
    _
  // Predicated region
  $region6: #{simple_classifier_forward.5} parent=0 // pred_check
    _
  $region7: #{simple_classifier_forward.5} parent=0 // pred_check_branch
    %15 = sbr.rel (0) target = $region9
  $region8: #{simple_classifier_forward.5} parent=0 // pred_region
    _
  $region9: #{simple_classifier_forward.5} parent=0 // pred_fallthru
    _
  // Predicated region
  $region10: #{simple_classifier_forward.5} parent=0 // pred_check
    _
  $region11: #{simple_classifier_forward.5} parent=0 // pred_check_branch
    %17 = sbr.rel (0) target = $region13
  $region12: #{simple_classifier_forward.5} parent=0 // pred_region
    _
  $region13: #{simple_classifier_forward.5} parent=0 // pred_fallthru
    _
  // Predicated region
  $region14: #{simple_classifier_forward.5} parent=0 // pred_check
    _
  $region15: #{simple_classifier_forward.5} parent=0 // pred_check_branch
    %19 = sbr.rel (0) target = $region17
  $region16: #{simple_classifier_forward.5} parent=0 // pred_region
    _
  $region17: #{simple_classifier_forward.5} parent=0 // pred_fallthru
    _
  // Predicated region
  $region18: #{simple_classifier_forward.5} parent=0 // pred_check
    _
  $region19: #{simple_classifier_forward.5} parent=0 // pred_check_branch
    %21 = sbr.rel (0) target = $region21
  $region20: #{simple_classifier_forward.5} parent=0 // pred_region
    _
  $region21: #{simple_classifier_forward.5} parent=0 // pred_fallthru
    _
  // Predicated region
  $region22: #{simple_classifier_forward.5} parent=0 // pred_check
    _
  $region23: #{simple_classifier_forward.5} parent=0 // pred_check_branch
    %23 = sbr.rel (0) target = $region25
  $region24: #{simple_classifier_forward.5} parent=0 // pred_region
    _
  $region25: #{simple_classifier_forward.5} parent=0 // pred_fallthru
    _
  // Predicated region
  $region26: #{simple_classifier_forward.5} parent=0 // pred_check
    _
  $region27: #{simple_classifier_forward.5} parent=0 // pred_check_branch
    %25 = sbr.rel (0) target = $region29
  $region28: #{simple_classifier_forward.5} parent=0 // pred_region
    _
  $region29: #{simple_classifier_forward.5} parent=0 // pred_fallthru
    _
  %v27 = vld [vmem:[%s0] sm:$0xff]
  %v28 = vld [vmem:[%s0 + $0x8] sm:$0xff]
  %v29 = vld [vmem:[%s0 + $0x10] sm:$0xff]
  %v30 = vld [vmem:[%s0 + $0x18] sm:$0xff]
  %v31 = vld [vmem:[%s0 + $0x20] sm:$0xff]
  %v32 = vld [vmem:[%s0 + $0x28] sm:$0xff]
  %v33 = vld [vmem:[%s0 + $0x30] sm:$0xff]
  %v34 = vld [vmem:[%s0 + $0x38] sm:$0xff]
  %v35 = vld [vmem:[%s0 + $0x40] sm:$0xff]
  %v36 = vld [vmem:[%s0 + $0x48] sm:$0xff]
  %v37 = vld [vmem:[%s0 + $0x50] sm:$0xff]
  %v38 = vld [vmem:[%s0 + $0x58] sm:$0xff]
  %v39 = vld [vmem:[%s0 + $0x60] sm:$0xff]
  %v40 = vld [vmem:[%s0 + $0x68] sm:$0xff]
  %v41 = vld [vmem:[%s0 + $0x70] sm:$0xff]
  %v42 = vld [vmem:[%s0 + $0x78] sm:$0xff]
  %v43 = vpack.c.bf16 %v27, %v27
  %v44 = vpack.c.bf16 %v28, %v28
  %v45 = vpack.c.bf16 %v29, %v29
  %v46 = vpack.c.bf16 %v30, %v30
  %v47 = vpack.c.bf16 %v31, %v31
  %v48 = vpack.c.bf16 %v32, %v32
  %v49 = vpack.c.bf16 %v33, %v33
  %v50 = vpack.c.bf16 %v34, %v34
  %v51 = vpack.c.bf16 %v35, %v35
  %v52 = vpack.c.bf16 %v36, %v36
  %v53 = vpack.c.bf16 %v37, %v37
  %v54 = vpack.c.bf16 %v38, %v38
  %v55 = vpack.c.bf16 %v39, %v39
  %v56 = vpack.c.bf16 %v40, %v40
  %v57 = vpack.c.bf16 %v41, %v41
  %v58 = vpack.c.bf16 %v42, %v42
  %v59 = vld [vmem:[%s1] sm:$0xf]
  %v60 = vld [vmem:[%s1 + $0x4] sm:$0xf]
  %v61 = vld [vmem:[%s1 + $0x8] sm:$0xf]
  %v62 = vld [vmem:[%s1 + $0xc] sm:$0xf]
  %v63 = vld [vmem:[%s1 + $0x10] sm:$0xf]
  %v64 = vld [vmem:[%s1 + $0x14] sm:$0xf]
  %v65 = vld [vmem:[%s1 + $0x18] sm:$0xf]
  %v66 = vld [vmem:[%s1 + $0x1c] sm:$0xf]
  %v67 = vld [vmem:[%s1 + $0x20] sm:$0xf]
  %v68 = vld [vmem:[%s1 + $0x24] sm:$0xf]
  %v69 = vld [vmem:[%s1 + $0x28] sm:$0xf]
  %v70 = vld [vmem:[%s1 + $0x2c] sm:$0xf]
  %v71 = vld [vmem:[%s1 + $0x30] sm:$0xf]
  %v72 = vld [vmem:[%s1 + $0x34] sm:$0xf]
  %v73 = vld [vmem:[%s1 + $0x38] sm:$0xf]
  %v74 = vld [vmem:[%s1 + $0x3c] sm:$0xf]
  %v75 = vld [vmem:[%s1 + $0x40] sm:$0xf]
  %v76 = vld [vmem:[%s1 + $0x44] sm:$0xf]
  %v77 = vld [vmem:[%s1 + $0x48] sm:$0xf]
  %v78 = vld [vmem:[%s1 + $0x4c] sm:$0xf]
  %v79 = vld [vmem:[%s1 + $0x50] sm:$0xf]
  %v80 = vld [vmem:[%s1 + $0x54] sm:$0xf]
  %v81 = vld [vmem:[%s1 + $0x58] sm:$0xf]
  %v82 = vld [vmem:[%s1 + $0x5c] sm:$0xf]
  %v83 = vld [vmem:[%s1 + $0x60] sm:$0xf]
  %v84 = vld [vmem:[%s1 + $0x64] sm:$0xf]
  %v85 = vld [vmem:[%s1 + $0x68] sm:$0xf]
  %v86 = vld [vmem:[%s1 + $0x6c] sm:$0xf]
  %v87 = vld [vmem:[%s1 + $0x70] sm:$0xf]
  %v88 = vld [vmem:[%s1 + $0x74] sm:$0xf]
  %v89 = vld [vmem:[%s1 + $0x78] sm:$0xf]
  %v90 = vld [vmem:[%s1 + $0x7c] sm:$0xf]
  %v91 = vld [vmem:[%s1 + $0x80] sm:$0xf]
  %v92 = vld [vmem:[%s1 + $0x84] sm:$0xf]
  %v93 = vld [vmem:[%s1 + $0x88] sm:$0xf]
  %v94 = vld [vmem:[%s1 + $0x8c] sm:$0xf]
  %v95 = vld [vmem:[%s1 + $0x90] sm:$0xf]
  %v96 = vld [vmem:[%s1 + $0x94] sm:$0xf]
  %v97 = vld [vmem:[%s1 + $0x98] sm:$0xf]
  %v98 = vld [vmem:[%s1 + $0x9c] sm:$0xf]
  %v99 = vld [vmem:[%s1 + $0xa0] sm:$0xf]
  %v100 = vld [vmem:[%s1 + $0xa4] sm:$0xf]
  %v101 = vld [vmem:[%s1 + $0xa8] sm:$0xf]
  %v102 = vld [vmem:[%s1 + $0xac] sm:$0xf]
  %v103 = vld [vmem:[%s1 + $0xb0] sm:$0xf]
  %v104 = vld [vmem:[%s1 + $0xb4] sm:$0xf]
  %v105 = vld [vmem:[%s1 + $0xb8] sm:$0xf]
  %v106 = vld [vmem:[%s1 + $0xbc] sm:$0xf]
  %v107 = vld [vmem:[%s1 + $0xc0] sm:$0xf]
  %v108 = vld [vmem:[%s1 + $0xc4] sm:$0xf]
  %v109 = vld [vmem:[%s1 + $0xc8] sm:$0xf]
  %v110 = vld [vmem:[%s1 + $0xcc] sm:$0xf]
  %v111 = vld [vmem:[%s1 + $0xd0] sm:$0xf]
  %v112 = vld [vmem:[%s1 + $0xd4] sm:$0xf]
  %v113 = vld [vmem:[%s1 + $0xd8] sm:$0xf]
  %v114 = vld [vmem:[%s1 + $0xdc] sm:$0xf]
  %v115 = vld [vmem:[%s1 + $0xe0] sm:$0xf]
  %v116 = vld [vmem:[%s1 + $0xe4] sm:$0xf]
  %v117 = vld [vmem:[%s1 + $0xe8] sm:$0xf]
  %v118 = vld [vmem:[%s1 + $0xec] sm:$0xf]
  %v119 = vld [vmem:[%s1 + $0xf0] sm:$0xf]
  %v120 = vld [vmem:[%s1 + $0xf4] sm:$0xf]
  %v121 = vld [vmem:[%s1 + $0xf8] sm:$0xf]
  %v122 = vld [vmem:[%s1 + $0xfc] sm:$0xf]
  %v123 = vld [vmem:[%s1 + $0x100] sm:$0xf]
  %v124 = vld [vmem:[%s1 + $0x104] sm:$0xf]
  %v125 = vld [vmem:[%s1 + $0x108] sm:$0xf]
  %v126 = vld [vmem:[%s1 + $0x10c] sm:$0xf]
  %v127 = vld [vmem:[%s1 + $0x110] sm:$0xf]
  %v128 = vld [vmem:[%s1 + $0x114] sm:$0xf]
  %v129 = vld [vmem:[%s1 + $0x118] sm:$0xf]
  %v130 = vld [vmem:[%s1 + $0x11c] sm:$0xf]
  %v131 = vld [vmem:[%s1 + $0x120] sm:$0xf]
  %v132 = vld [vmem:[%s1 + $0x124] sm:$0xf]
  %v133 = vld [vmem:[%s1 + $0x128] sm:$0xf]
  %v134 = vld [vmem:[%s1 + $0x12c] sm:$0xf]
  %v135 = vld [vmem:[%s1 + $0x130] sm:$0xf]
  %v136 = vld [vmem:[%s1 + $0x134] sm:$0xf]
  %v137 = vld [vmem:[%s1 + $0x138] sm:$0xf]
  %v138 = vld [vmem:[%s1 + $0x13c] sm:$0xf]
  %v139 = vld [vmem:[%s1 + $0x140] sm:$0xf]
  %v140 = vld [vmem:[%s1 + $0x144] sm:$0xf]
  %v141 = vld [vmem:[%s1 + $0x148] sm:$0xf]
  %v142 = vld [vmem:[%s1 + $0x14c] sm:$0xf]
  %v143 = vld [vmem:[%s1 + $0x150] sm:$0xf]
  %v144 = vld [vmem:[%s1 + $0x154] sm:$0xf]
  %v145 = vld [vmem:[%s1 + $0x158] sm:$0xf]
  %v146 = vld [vmem:[%s1 + $0x15c] sm:$0xf]
  %v147 = vld [vmem:[%s1 + $0x160] sm:$0xf]
  %v148 = vld [vmem:[%s1 + $0x164] sm:$0xf]
  %v149 = vld [vmem:[%s1 + $0x168] sm:$0xf]
  %v150 = vld [vmem:[%s1 + $0x16c] sm:$0xf]
  %v151 = vld [vmem:[%s1 + $0x170] sm:$0xf]
  %v152 = vld [vmem:[%s1 + $0x174] sm:$0xf]
  %v153 = vld [vmem:[%s1 + $0x178] sm:$0xf]
  %v154 = vld [vmem:[%s1 + $0x17c] sm:$0xf]
  %v155 = vld [vmem:[%s1 + $0x180] sm:$0xf]
  %v156 = vld [vmem:[%s1 + $0x184] sm:$0xf]
  %v157 = vld [vmem:[%s1 + $0x188] sm:$0xf]
  %v158 = vld [vmem:[%s1 + $0x18c] sm:$0xf]
  %v159 = vld [vmem:[%s1 + $0x190] sm:$0xf]
  %v160 = vld [vmem:[%s1 + $0x194] sm:$0xf]
  %v161 = vld [vmem:[%s1 + $0x198] sm:$0xf]
  %v162 = vld [vmem:[%s1 + $0x19c] sm:$0xf]
  %v163 = vld [vmem:[%s1 + $0x1a0] sm:$0xf]
  %v164 = vld [vmem:[%s1 + $0x1a4] sm:$0xf]
  %v165 = vld [vmem:[%s1 + $0x1a8] sm:$0xf]
  %v166 = vld [vmem:[%s1 + $0x1ac] sm:$0xf]
  %v167 = vld [vmem:[%s1 + $0x1b0] sm:$0xf]
  %v168 = vld [vmem:[%s1 + $0x1b4] sm:$0xf]
  %v169 = vld [vmem:[%s1 + $0x1b8] sm:$0xf]
  %v170 = vld [vmem:[%s1 + $0x1bc] sm:$0xf]
  %v171 = vld [vmem:[%s1 + $0x1c0] sm:$0xf]
  %v172 = vld [vmem:[%s1 + $0x1c4] sm:$0xf]
  %v173 = vld [vmem:[%s1 + $0x1c8] sm:$0xf]
  %v174 = vld [vmem:[%s1 + $0x1cc] sm:$0xf]
  %v175 = vld [vmem:[%s1 + $0x1d0] sm:$0xf]
  %v176 = vld [vmem:[%s1 + $0x1d4] sm:$0xf]
  %v177 = vld [vmem:[%s1 + $0x1d8] sm:$0xf]
  %v178 = vld [vmem:[%s1 + $0x1dc] sm:$0xf]
  %v179 = vld [vmem:[%s1 + $0x1e0] sm:$0xf]
  %v180 = vld [vmem:[%s1 + $0x1e4] sm:$0xf]
  %v181 = vld [vmem:[%s1 + $0x1e8] sm:$0xf]
  %v182 = vld [vmem:[%s1 + $0x1ec] sm:$0xf]
  %v183 = vld [vmem:[%s1 + $0x1f0] sm:$0xf]
  %v184 = vld [vmem:[%s1 + $0x1f4] sm:$0xf]
  %v185 = vld [vmem:[%s1 + $0x1f8] sm:$0xf]
  %v186 = vld [vmem:[%s1 + $0x1fc] sm:$0xf]
  %v187 = vld [vmem:[%s1 + $0x200] sm:$0xf]
  %v188 = vld [vmem:[%s1 + $0x204] sm:$0xf]
  %v189 = vld [vmem:[%s1 + $0x208] sm:$0xf]
  %v190 = vld [vmem:[%s1 + $0x20c] sm:$0xf]
  %v191 = vld [vmem:[%s1 + $0x210] sm:$0xf]
  %v192 = vld [vmem:[%s1 + $0x214] sm:$0xf]
  %v193 = vld [vmem:[%s1 + $0x218] sm:$0xf]
  %v194 = vld [vmem:[%s1 + $0x21c] sm:$0xf]
  %v195 = vld [vmem:[%s1 + $0x220] sm:$0xf]
  %v196 = vld [vmem:[%s1 + $0x224] sm:$0xf]
  %v197 = vld [vmem:[%s1 + $0x228] sm:$0xf]
  %v198 = vld [vmem:[%s1 + $0x22c] sm:$0xf]
  %v199 = vld [vmem:[%s1 + $0x230] sm:$0xf]
  %v200 = vld [vmem:[%s1 + $0x234] sm:$0xf]
  %v201 = vld [vmem:[%s1 + $0x238] sm:$0xf]
  %v202 = vld [vmem:[%s1 + $0x23c] sm:$0xf]
  %v203 = vld [vmem:[%s1 + $0x240] sm:$0xf]
  %v204 = vld [vmem:[%s1 + $0x244] sm:$0xf]
  %v205 = vld [vmem:[%s1 + $0x248] sm:$0xf]
  %v206 = vld [vmem:[%s1 + $0x24c] sm:$0xf]
  %v207 = vld [vmem:[%s1 + $0x250] sm:$0xf]
  %v208 = vld [vmem:[%s1 + $0x254] sm:$0xf]
  %v209 = vld [vmem:[%s1 + $0x258] sm:$0xf]
  %v210 = vld [vmem:[%s1 + $0x25c] sm:$0xf]
  %v211 = vld [vmem:[%s1 + $0x260] sm:$0xf]
  %v212 = vld [vmem:[%s1 + $0x264] sm:$0xf]
  %v213 = vld [vmem:[%s1 + $0x268] sm:$0xf]
  %v214 = vld [vmem:[%s1 + $0x26c] sm:$0xf]
  %v215 = vld [vmem:[%s1 + $0x270] sm:$0xf]
  %v216 = vld [vmem:[%s1 + $0x274] sm:$0xf]
  %v217 = vld [vmem:[%s1 + $0x278] sm:$0xf]
  %v218 = vld [vmem:[%s1 + $0x27c] sm:$0xf]
  %v219 = vld [vmem:[%s1 + $0x280] sm:$0xf]
  %v220 = vld [vmem:[%s1 + $0x284] sm:$0xf]
  %v221 = vld [vmem:[%s1 + $0x288] sm:$0xf]
  %v222 = vld [vmem:[%s1 + $0x28c] sm:$0xf]
  %v223 = vld [vmem:[%s1 + $0x290] sm:$0xf]
  %v224 = vld [vmem:[%s1 + $0x294] sm:$0xf]
  %v225 = vld [vmem:[%s1 + $0x298] sm:$0xf]
  %v226 = vld [vmem:[%s1 + $0x29c] sm:$0xf]
  %v227 = vld [vmem:[%s1 + $0x2a0] sm:$0xf]
  %v228 = vld [vmem:[%s1 + $0x2a4] sm:$0xf]
  %v229 = vld [vmem:[%s1 + $0x2a8] sm:$0xf]
  %v230 = vld [vmem:[%s1 + $0x2ac] sm:$0xf]
  %v231 = vld [vmem:[%s1 + $0x2b0] sm:$0xf]
  %v232 = vld [vmem:[%s1 + $0x2b4] sm:$0xf]
  %v233 = vld [vmem:[%s1 + $0x2b8] sm:$0xf]
  %v234 = vld [vmem:[%s1 + $0x2bc] sm:$0xf]
  %v235 = vld [vmem:[%s1 + $0x2c0] sm:$0xf]
  %v236 = vld [vmem:[%s1 + $0x2c4] sm:$0xf]
  %v237 = vld [vmem:[%s1 + $0x2c8] sm:$0xf]
  %v238 = vld [vmem:[%s1 + $0x2cc] sm:$0xf]
  %v239 = vld [vmem:[%s1 + $0x2d0] sm:$0xf]
  %v240 = vld [vmem:[%s1 + $0x2d4] sm:$0xf]
  %v241 = vld [vmem:[%s1 + $0x2d8] sm:$0xf]
  %v242 = vld [vmem:[%s1 + $0x2dc] sm:$0xf]
  %v243 = vld [vmem:[%s1 + $0x2e0] sm:$0xf]
  %v244 = vld [vmem:[%s1 + $0x2e4] sm:$0xf]
  %v245 = vld [vmem:[%s1 + $0x2e8] sm:$0xf]
  %v246 = vld [vmem:[%s1 + $0x2ec] sm:$0xf]
  %v247 = vld [vmem:[%s1 + $0x2f0] sm:$0xf]
  %v248 = vld [vmem:[%s1 + $0x2f4] sm:$0xf]
  %v249 = vld [vmem:[%s1 + $0x2f8] sm:$0xf]
  %v250 = vld [vmem:[%s1 + $0x2fc] sm:$0xf]
  %v251 = vld [vmem:[%s1 + $0x300] sm:$0xf]
  %v252 = vld [vmem:[%s1 + $0x304] sm:$0xf]
  %v253 = vld [vmem:[%s1 + $0x308] sm:$0xf]
  %v254 = vld [vmem:[%s1 + $0x30c] sm:$0xf]
  %v255 = vld [vmem:[%s1 + $0x310] sm:$0xf]
  %v256 = vld [vmem:[%s1 + $0x314] sm:$0xf]
  %v257 = vld [vmem:[%s1 + $0x318] sm:$0xf]
  %v258 = vld [vmem:[%s1 + $0x31c] sm:$0xf]
  %v259 = vld [vmem:[%s1 + $0x320] sm:$0xf]
  %v260 = vld [vmem:[%s1 + $0x324] sm:$0xf]
  %v261 = vld [vmem:[%s1 + $0x328] sm:$0xf]
  %v262 = vld [vmem:[%s1 + $0x32c] sm:$0xf]
  %v263 = vld [vmem:[%s1 + $0x330] sm:$0xf]
  %v264 = vld [vmem:[%s1 + $0x334] sm:$0xf]
  %v265 = vld [vmem:[%s1 + $0x338] sm:$0xf]
  %v266 = vld [vmem:[%s1 + $0x33c] sm:$0xf]
  %v267 = vld [vmem:[%s1 + $0x340] sm:$0xf]
  %v268 = vld [vmem:[%s1 + $0x344] sm:$0xf]
  %v269 = vld [vmem:[%s1 + $0x348] sm:$0xf]
  %v270 = vld [vmem:[%s1 + $0x34c] sm:$0xf]
  %v271 = vld [vmem:[%s1 + $0x350] sm:$0xf]
  %v272 = vld [vmem:[%s1 + $0x354] sm:$0xf]
  %v273 = vld [vmem:[%s1 + $0x358] sm:$0xf]
  %v274 = vld [vmem:[%s1 + $0x35c] sm:$0xf]
  %v275 = vld [vmem:[%s1 + $0x360] sm:$0xf]
  %v276 = vld [vmem:[%s1 + $0x364] sm:$0xf]
  %v277 = vld [vmem:[%s1 + $0x368] sm:$0xf]
  %v278 = vld [vmem:[%s1 + $0x36c] sm:$0xf]
  %v279 = vld [vmem:[%s1 + $0x370] sm:$0xf]
  %v280 = vld [vmem:[%s1 + $0x374] sm:$0xf]
  %v281 = vld [vmem:[%s1 + $0x378] sm:$0xf]
  %v282 = vld [vmem:[%s1 + $0x37c] sm:$0xf]
  %v283 = vld [vmem:[%s1 + $0x380] sm:$0xf]
  %v284 = vld [vmem:[%s1 + $0x384] sm:$0xf]
  %v285 = vld [vmem:[%s1 + $0x388] sm:$0xf]
  %v286 = vld [vmem:[%s1 + $0x38c] sm:$0xf]
  %v287 = vld [vmem:[%s1 + $0x390] sm:$0xf]
  %v288 = vld [vmem:[%s1 + $0x394] sm:$0xf]
  %v289 = vld [vmem:[%s1 + $0x398] sm:$0xf]
  %v290 = vld [vmem:[%s1 + $0x39c] sm:$0xf]
  %v291 = vld [vmem:[%s1 + $0x3a0] sm:$0xf]
  %v292 = vld [vmem:[%s1 + $0x3a4] sm:$0xf]
  %v293 = vld [vmem:[%s1 + $0x3a8] sm:$0xf]
  %v294 = vld [vmem:[%s1 + $0x3ac] sm:$0xf]
  %v295 = vld [vmem:[%s1 + $0x3b0] sm:$0xf]
  %v296 = vld [vmem:[%s1 + $0x3b4] sm:$0xf]
  %v297 = vld [vmem:[%s1 + $0x3b8] sm:$0xf]
  %v298 = vld [vmem:[%s1 + $0x3bc] sm:$0xf]
  %v299 = vld [vmem:[%s1 + $0x3c0] sm:$0xf]
  %v300 = vld [vmem:[%s1 + $0x3c4] sm:$0xf]
  %v301 = vld [vmem:[%s1 + $0x3c8] sm:$0xf]
  %v302 = vld [vmem:[%s1 + $0x3cc] sm:$0xf]
  %v303 = vld [vmem:[%s1 + $0x3d0] sm:$0xf]
  %v304 = vld [vmem:[%s1 + $0x3d4] sm:$0xf]
  %v305 = vld [vmem:[%s1 + $0x3d8] sm:$0xf]
  %v306 = vld [vmem:[%s1 + $0x3dc] sm:$0xf]
  %v307 = vld [vmem:[%s1 + $0x3e0] sm:$0xf]
  %v308 = vld [vmem:[%s1 + $0x3e4] sm:$0xf]
  %v309 = vld [vmem:[%s1 + $0x3e8] sm:$0xf]
  %v310 = vld [vmem:[%s1 + $0x3ec] sm:$0xf]
  %v311 = vld [vmem:[%s1 + $0x3f0] sm:$0xf]
  %v312 = vld [vmem:[%s1 + $0x3f4] sm:$0xf]
  %v313 = vld [vmem:[%s1 + $0x3f8] sm:$0xf]
  %v314 = vld [vmem:[%s1 + $0x3fc] sm:$0xf]
  %v315 = vld [vmem:[%s2] sm:$0x1]
  %v317 = vlaneseq
  %v318 = vshrl.u32 %v317, 7
  %v319 = vsub.s32 0, %v318
  %v320 = vrot.slane %v315, %v319
  %v578 = vunpack.c.l.b16 %v59
  %v579 = vunpack.c.l.b16 %v60
  %v580 = vunpack.c.l.b16 %v61
  %v581 = vunpack.c.l.b16 %v62
  %v582 = vunpack.c.l.b16 %v63
  %v583 = vunpack.c.l.b16 %v64
  %v584 = vunpack.c.l.b16 %v65
  %v585 = vunpack.c.l.b16 %v66
  %v586 = vunpack.c.l.b16 %v67
  %v587 = vunpack.c.l.b16 %v68
  %v588 = vunpack.c.l.b16 %v69
  %v589 = vunpack.c.l.b16 %v70
  %v590 = vunpack.c.l.b16 %v71
  %v591 = vunpack.c.l.b16 %v72
  %v592 = vunpack.c.l.b16 %v73
  %v593 = vunpack.c.l.b16 %v74
  %v594 = vunpack.c.l.b16 %v75
  %v595 = vunpack.c.l.b16 %v76
  %v596 = vunpack.c.l.b16 %v77
  %v597 = vunpack.c.l.b16 %v78
  %v598 = vunpack.c.l.b16 %v79
  %v599 = vunpack.c.l.b16 %v80
  %v600 = vunpack.c.l.b16 %v81
  %v601 = vunpack.c.l.b16 %v82
  %v602 = vunpack.c.l.b16 %v83
  %v603 = vunpack.c.l.b16 %v84
  %v604 = vunpack.c.l.b16 %v85
  %v605 = vunpack.c.l.b16 %v86
  %v606 = vunpack.c.l.b16 %v87
  %v607 = vunpack.c.l.b16 %v88
  %v608 = vunpack.c.l.b16 %v89
  %v609 = vunpack.c.l.b16 %v90
  %v610 = vunpack.c.l.b16 %v91
  %v611 = vunpack.c.l.b16 %v92
  %v612 = vunpack.c.l.b16 %v93
  %v613 = vunpack.c.l.b16 %v94
  %v614 = vunpack.c.l.b16 %v95
  %v615 = vunpack.c.l.b16 %v96
  %v616 = vunpack.c.l.b16 %v97
  %v617 = vunpack.c.l.b16 %v98
  %v618 = vunpack.c.l.b16 %v99
  %v619 = vunpack.c.l.b16 %v100
  %v620 = vunpack.c.l.b16 %v101
  %v621 = vunpack.c.l.b16 %v102
  %v622 = vunpack.c.l.b16 %v103
  %v623 = vunpack.c.l.b16 %v104
  %v624 = vunpack.c.l.b16 %v105
  %v625 = vunpack.c.l.b16 %v106
  %v626 = vunpack.c.l.b16 %v107
  %v627 = vunpack.c.l.b16 %v108
  %v628 = vunpack.c.l.b16 %v109
  %v629 = vunpack.c.l.b16 %v110
  %v630 = vunpack.c.l.b16 %v111
  %v631 = vunpack.c.l.b16 %v112
  %v632 = vunpack.c.l.b16 %v113
  %v633 = vunpack.c.l.b16 %v114
  %v634 = vunpack.c.l.b16 %v115
  %v635 = vunpack.c.l.b16 %v116
  %v636 = vunpack.c.l.b16 %v117
  %v637 = vunpack.c.l.b16 %v118
  %v638 = vunpack.c.l.b16 %v119
  %v639 = vunpack.c.l.b16 %v120
  %v640 = vunpack.c.l.b16 %v121
  %v641 = vunpack.c.l.b16 %v122
  %v642 = vunpack.c.l.b16 %v123
  %v643 = vunpack.c.l.b16 %v124
  %v644 = vunpack.c.l.b16 %v125
  %v645 = vunpack.c.l.b16 %v126
  %v646 = vunpack.c.l.b16 %v127
  %v647 = vunpack.c.l.b16 %v128
  %v648 = vunpack.c.l.b16 %v129
  %v649 = vunpack.c.l.b16 %v130
  %v650 = vunpack.c.l.b16 %v131
  %v651 = vunpack.c.l.b16 %v132
  %v652 = vunpack.c.l.b16 %v133
  %v653 = vunpack.c.l.b16 %v134
  %v654 = vunpack.c.l.b16 %v135
  %v655 = vunpack.c.l.b16 %v136
  %v656 = vunpack.c.l.b16 %v137
  %v657 = vunpack.c.l.b16 %v138
  %v658 = vunpack.c.l.b16 %v139
  %v659 = vunpack.c.l.b16 %v140
  %v660 = vunpack.c.l.b16 %v141
  %v661 = vunpack.c.l.b16 %v142
  %v662 = vunpack.c.l.b16 %v143
  %v663 = vunpack.c.l.b16 %v144
  %v664 = vunpack.c.l.b16 %v145
  %v665 = vunpack.c.l.b16 %v146
  %v666 = vunpack.c.l.b16 %v147
  %v667 = vunpack.c.l.b16 %v148
  %v668 = vunpack.c.l.b16 %v149
  %v669 = vunpack.c.l.b16 %v150
  %v670 = vunpack.c.l.b16 %v151
  %v671 = vunpack.c.l.b16 %v152
  %v672 = vunpack.c.l.b16 %v153
  %v673 = vunpack.c.l.b16 %v154
  %v674 = vunpack.c.l.b16 %v155
  %v675 = vunpack.c.l.b16 %v156
  %v676 = vunpack.c.l.b16 %v157
  %v677 = vunpack.c.l.b16 %v158
  %v678 = vunpack.c.l.b16 %v159
  %v679 = vunpack.c.l.b16 %v160
  %v680 = vunpack.c.l.b16 %v161
  %v681 = vunpack.c.l.b16 %v162
  %v682 = vunpack.c.l.b16 %v163
  %v683 = vunpack.c.l.b16 %v164
  %v684 = vunpack.c.l.b16 %v165
  %v685 = vunpack.c.l.b16 %v166
  %v686 = vunpack.c.l.b16 %v167
  %v687 = vunpack.c.l.b16 %v168
  %v688 = vunpack.c.l.b16 %v169
  %v689 = vunpack.c.l.b16 %v170
  %v690 = vunpack.c.l.b16 %v171
  %v691 = vunpack.c.l.b16 %v172
  %v692 = vunpack.c.l.b16 %v173
  %v693 = vunpack.c.l.b16 %v174
  %v694 = vunpack.c.l.b16 %v175
  %v695 = vunpack.c.l.b16 %v176
  %v696 = vunpack.c.l.b16 %v177
  %v697 = vunpack.c.l.b16 %v178
  %v698 = vunpack.c.l.b16 %v179
  %v699 = vunpack.c.l.b16 %v180
  %v700 = vunpack.c.l.b16 %v181
  %v701 = vunpack.c.l.b16 %v182
  %v702 = vunpack.c.l.b16 %v183
  %v703 = vunpack.c.l.b16 %v184
  %v704 = vunpack.c.l.b16 %v185
  %v705 = vunpack.c.l.b16 %v186
  %v706 = vunpack.c.l.b16 %v187
  %v707 = vunpack.c.l.b16 %v188
  %v708 = vunpack.c.l.b16 %v189
  %v709 = vunpack.c.l.b16 %v190
  %v710 = vunpack.c.l.b16 %v191
  %v711 = vunpack.c.l.b16 %v192
  %v712 = vunpack.c.l.b16 %v193
  %v713 = vunpack.c.l.b16 %v194
  %v714 = vunpack.c.l.b16 %v195
  %v715 = vunpack.c.l.b16 %v196
  %v716 = vunpack.c.l.b16 %v197
  %v717 = vunpack.c.l.b16 %v198
  %v718 = vunpack.c.l.b16 %v199
  %v719 = vunpack.c.l.b16 %v200
  %v720 = vunpack.c.l.b16 %v201
  %v721 = vunpack.c.l.b16 %v202
  %v722 = vunpack.c.l.b16 %v203
  %v723 = vunpack.c.l.b16 %v204
  %v724 = vunpack.c.l.b16 %v205
  %v725 = vunpack.c.l.b16 %v206
  %v726 = vunpack.c.l.b16 %v207
  %v727 = vunpack.c.l.b16 %v208
  %v728 = vunpack.c.l.b16 %v209
  %v729 = vunpack.c.l.b16 %v210
  %v730 = vunpack.c.l.b16 %v211
  %v731 = vunpack.c.l.b16 %v212
  %v732 = vunpack.c.l.b16 %v213
  %v733 = vunpack.c.l.b16 %v214
  %v734 = vunpack.c.l.b16 %v215
  %v735 = vunpack.c.l.b16 %v216
  %v736 = vunpack.c.l.b16 %v217
  %v737 = vunpack.c.l.b16 %v218
  %v738 = vunpack.c.l.b16 %v219
  %v739 = vunpack.c.l.b16 %v220
  %v740 = vunpack.c.l.b16 %v221
  %v741 = vunpack.c.l.b16 %v222
  %v742 = vunpack.c.l.b16 %v223
  %v743 = vunpack.c.l.b16 %v224
  %v744 = vunpack.c.l.b16 %v225
  %v745 = vunpack.c.l.b16 %v226
  %v746 = vunpack.c.l.b16 %v227
  %v747 = vunpack.c.l.b16 %v228
  %v748 = vunpack.c.l.b16 %v229
  %v749 = vunpack.c.l.b16 %v230
  %v750 = vunpack.c.l.b16 %v231
  %v751 = vunpack.c.l.b16 %v232
  %v752 = vunpack.c.l.b16 %v233
  %v753 = vunpack.c.l.b16 %v234
  %v754 = vunpack.c.l.b16 %v235
  %v755 = vunpack.c.l.b16 %v236
  %v756 = vunpack.c.l.b16 %v237
  %v757 = vunpack.c.l.b16 %v238
  %v758 = vunpack.c.l.b16 %v239
  %v759 = vunpack.c.l.b16 %v240
  %v760 = vunpack.c.l.b16 %v241
  %v761 = vunpack.c.l.b16 %v242
  %v762 = vunpack.c.l.b16 %v243
  %v763 = vunpack.c.l.b16 %v244
  %v764 = vunpack.c.l.b16 %v245
  %v765 = vunpack.c.l.b16 %v246
  %v766 = vunpack.c.l.b16 %v247
  %v767 = vunpack.c.l.b16 %v248
  %v768 = vunpack.c.l.b16 %v249
  %v769 = vunpack.c.l.b16 %v250
  %v770 = vunpack.c.l.b16 %v251
  %v771 = vunpack.c.l.b16 %v252
  %v772 = vunpack.c.l.b16 %v253
  %v773 = vunpack.c.l.b16 %v254
  %v774 = vunpack.c.l.b16 %v255
  %v775 = vunpack.c.l.b16 %v256
  %v776 = vunpack.c.l.b16 %v257
  %v777 = vunpack.c.l.b16 %v258
  %v778 = vunpack.c.l.b16 %v259
  %v779 = vunpack.c.l.b16 %v260
  %v780 = vunpack.c.l.b16 %v261
  %v781 = vunpack.c.l.b16 %v262
  %v782 = vunpack.c.l.b16 %v263
  %v783 = vunpack.c.l.b16 %v264
  %v784 = vunpack.c.l.b16 %v265
  %v785 = vunpack.c.l.b16 %v266
  %v786 = vunpack.c.l.b16 %v267
  %v787 = vunpack.c.l.b16 %v268
  %v788 = vunpack.c.l.b16 %v269
  %v789 = vunpack.c.l.b16 %v270
  %v790 = vunpack.c.l.b16 %v271
  %v791 = vunpack.c.l.b16 %v272
  %v792 = vunpack.c.l.b16 %v273
  %v793 = vunpack.c.l.b16 %v274
  %v794 = vunpack.c.l.b16 %v275
  %v795 = vunpack.c.l.b16 %v276
  %v796 = vunpack.c.l.b16 %v277
  %v797 = vunpack.c.l.b16 %v278
  %v798 = vunpack.c.l.b16 %v279
  %v799 = vunpack.c.l.b16 %v280
  %v800 = vunpack.c.l.b16 %v281
  %v801 = vunpack.c.l.b16 %v282
  %v802 = vunpack.c.l.b16 %v283
  %v803 = vunpack.c.l.b16 %v284
  %v804 = vunpack.c.l.b16 %v285
  %v805 = vunpack.c.l.b16 %v286
  %v806 = vunpack.c.l.b16 %v287
  %v807 = vunpack.c.l.b16 %v288
  %v808 = vunpack.c.l.b16 %v289
  %v809 = vunpack.c.l.b16 %v290
  %v810 = vunpack.c.l.b16 %v291
  %v811 = vunpack.c.l.b16 %v292
  %v812 = vunpack.c.l.b16 %v293
  %v813 = vunpack.c.l.b16 %v294
  %v814 = vunpack.c.l.b16 %v295
  %v815 = vunpack.c.l.b16 %v296
  %v816 = vunpack.c.l.b16 %v297
  %v817 = vunpack.c.l.b16 %v298
  %v818 = vunpack.c.l.b16 %v299
  %v819 = vunpack.c.l.b16 %v300
  %v820 = vunpack.c.l.b16 %v301
  %v821 = vunpack.c.l.b16 %v302
  %v822 = vunpack.c.l.b16 %v303
  %v823 = vunpack.c.l.b16 %v304
  %v824 = vunpack.c.l.b16 %v305
  %v825 = vunpack.c.l.b16 %v306
  %v826 = vunpack.c.l.b16 %v307
  %v827 = vunpack.c.l.b16 %v308
  %v828 = vunpack.c.l.b16 %v309
  %v829 = vunpack.c.l.b16 %v310
  %v830 = vunpack.c.l.b16 %v311
  %v831 = vunpack.c.l.b16 %v312
  %v832 = vunpack.c.l.b16 %v313
  %v833 = vunpack.c.l.b16 %v314
  %v834 = vpack.c.b16 %v579, %v578
  %v835 = vpack.c.b16 %v581, %v580
  %v836 = vpack.c.b16 %v583, %v582
  %v837 = vpack.c.b16 %v585, %v584
  %v838 = vpack.c.b16 %v587, %v586
  %v839 = vpack.c.b16 %v589, %v588
  %v840 = vpack.c.b16 %v591, %v590
  %v841 = vpack.c.b16 %v593, %v592
  %v842 = vpack.c.b16 %v595, %v594
  %v843 = vpack.c.b16 %v597, %v596
  %v844 = vpack.c.b16 %v599, %v598
  %v845 = vpack.c.b16 %v601, %v600
  %v846 = vpack.c.b16 %v603, %v602
  %v847 = vpack.c.b16 %v605, %v604
  %v848 = vpack.c.b16 %v607, %v606
  %v849 = vpack.c.b16 %v609, %v608
  %v850 = vpack.c.b16 %v611, %v610
  %v851 = vpack.c.b16 %v613, %v612
  %v852 = vpack.c.b16 %v615, %v614
  %v853 = vpack.c.b16 %v617, %v616
  %v854 = vpack.c.b16 %v619, %v618
  %v855 = vpack.c.b16 %v621, %v620
  %v856 = vpack.c.b16 %v623, %v622
  %v857 = vpack.c.b16 %v625, %v624
  %v858 = vpack.c.b16 %v627, %v626
  %v859 = vpack.c.b16 %v629, %v628
  %v860 = vpack.c.b16 %v631, %v630
  %v861 = vpack.c.b16 %v633, %v632
  %v862 = vpack.c.b16 %v635, %v634
  %v863 = vpack.c.b16 %v637, %v636
  %v864 = vpack.c.b16 %v639, %v638
  %v865 = vpack.c.b16 %v641, %v640
  %v866 = vpack.c.b16 %v643, %v642
  %v867 = vpack.c.b16 %v645, %v644
  %v868 = vpack.c.b16 %v647, %v646
  %v869 = vpack.c.b16 %v649, %v648
  %v870 = vpack.c.b16 %v651, %v650
  %v871 = vpack.c.b16 %v653, %v652
  %v872 = vpack.c.b16 %v655, %v654
  %v873 = vpack.c.b16 %v657, %v656
  %v874 = vpack.c.b16 %v659, %v658
  %v875 = vpack.c.b16 %v661, %v660
  %v876 = vpack.c.b16 %v663, %v662
  %v877 = vpack.c.b16 %v665, %v664
  %v878 = vpack.c.b16 %v667, %v666
  %v879 = vpack.c.b16 %v669, %v668
  %v880 = vpack.c.b16 %v671, %v670
  %v881 = vpack.c.b16 %v673, %v672
  %v882 = vpack.c.b16 %v675, %v674
  %v883 = vpack.c.b16 %v677, %v676
  %v884 = vpack.c.b16 %v679, %v678
  %v885 = vpack.c.b16 %v681, %v680
  %v886 = vpack.c.b16 %v683, %v682
  %v887 = vpack.c.b16 %v685, %v684
  %v888 = vpack.c.b16 %v687, %v686
  %v889 = vpack.c.b16 %v689, %v688
  %v890 = vpack.c.b16 %v691, %v690
  %v891 = vpack.c.b16 %v693, %v692
  %v892 = vpack.c.b16 %v695, %v694
  %v893 = vpack.c.b16 %v697, %v696
  %v894 = vpack.c.b16 %v699, %v698
  %v895 = vpack.c.b16 %v701, %v700
  %v896 = vpack.c.b16 %v703, %v702
  %v897 = vpack.c.b16 %v705, %v704
  %v898 = vpack.c.b16 %v707, %v706
  %v899 = vpack.c.b16 %v709, %v708
  %v900 = vpack.c.b16 %v711, %v710
  %v901 = vpack.c.b16 %v713, %v712
  %v902 = vpack.c.b16 %v715, %v714
  %v903 = vpack.c.b16 %v717, %v716
  %v904 = vpack.c.b16 %v719, %v718
  %v905 = vpack.c.b16 %v721, %v720
  %v906 = vpack.c.b16 %v723, %v722
  %v907 = vpack.c.b16 %v725, %v724
  %v908 = vpack.c.b16 %v727, %v726
  %v909 = vpack.c.b16 %v729, %v728
  %v910 = vpack.c.b16 %v731, %v730
  %v911 = vpack.c.b16 %v733, %v732
  %v912 = vpack.c.b16 %v735, %v734
  %v913 = vpack.c.b16 %v737, %v736
  %v914 = vpack.c.b16 %v739, %v738
  %v915 = vpack.c.b16 %v741, %v740
  %v916 = vpack.c.b16 %v743, %v742
  %v917 = vpack.c.b16 %v745, %v744
  %v918 = vpack.c.b16 %v747, %v746
  %v919 = vpack.c.b16 %v749, %v748
  %v920 = vpack.c.b16 %v751, %v750
  %v921 = vpack.c.b16 %v753, %v752
  %v922 = vpack.c.b16 %v755, %v754
  %v923 = vpack.c.b16 %v757, %v756
  %v924 = vpack.c.b16 %v759, %v758
  %v925 = vpack.c.b16 %v761, %v760
  %v926 = vpack.c.b16 %v763, %v762
  %v927 = vpack.c.b16 %v765, %v764
  %v928 = vpack.c.b16 %v767, %v766
  %v929 = vpack.c.b16 %v769, %v768
  %v930 = vpack.c.b16 %v771, %v770
  %v931 = vpack.c.b16 %v773, %v772
  %v932 = vpack.c.b16 %v775, %v774
  %v933 = vpack.c.b16 %v777, %v776
  %v934 = vpack.c.b16 %v779, %v778
  %v935 = vpack.c.b16 %v781, %v780
  %v936 = vpack.c.b16 %v783, %v782
  %v937 = vpack.c.b16 %v785, %v784
  %v938 = vpack.c.b16 %v787, %v786
  %v939 = vpack.c.b16 %v789, %v788
  %v940 = vpack.c.b16 %v791, %v790
  %v941 = vpack.c.b16 %v793, %v792
  %v942 = vpack.c.b16 %v795, %v794
  %v943 = vpack.c.b16 %v797, %v796
  %v944 = vpack.c.b16 %v799, %v798
  %v945 = vpack.c.b16 %v801, %v800
  %v946 = vpack.c.b16 %v803, %v802
  %v947 = vpack.c.b16 %v805, %v804
  %v948 = vpack.c.b16 %v807, %v806
  %v949 = vpack.c.b16 %v809, %v808
  %v950 = vpack.c.b16 %v811, %v810
  %v951 = vpack.c.b16 %v813, %v812
  %v952 = vpack.c.b16 %v815, %v814
  %v953 = vpack.c.b16 %v817, %v816
  %v954 = vpack.c.b16 %v819, %v818
  %v955 = vpack.c.b16 %v821, %v820
  %v956 = vpack.c.b16 %v823, %v822
  %v957 = vpack.c.b16 %v825, %v824
  %v958 = vpack.c.b16 %v827, %v826
  %v959 = vpack.c.b16 %v829, %v828
  %v960 = vpack.c.b16 %v831, %v830
  %v961 = vpack.c.b16 %v833, %v832
  %1090 = vmatprep.subr.bf16.mxu0 0
  %1091 = vmatpush1.bf16.msra.mxu0 %v841
  %1092 = vmatprep.subr.bf16.mxu0 0
  %1093 = vmatpush1.bf16.msra.mxu0 %v840
  %1094 = vmatprep.subr.bf16.mxu0 0
  %1095 = vmatpush1.bf16.msra.mxu0 %v839
  %1096 = vmatprep.subr.bf16.mxu0 0
  %1097 = vmatpush1.bf16.msra.mxu0 %v838
  %1098 = vmatprep.subr.bf16.mxu0 0
  %1099 = vmatpush1.bf16.msra.mxu0 %v837
  %1100 = vmatprep.subr.bf16.mxu0 0
  %1101 = vmatpush1.bf16.msra.mxu0 %v836
  %1102 = vmatprep.subr.bf16.mxu0 0
  %1103 = vmatpush1.bf16.msra.mxu0 %v835
  %1104 = vmatprep.subr.bf16.mxu0 0
  %1105 = vmatpush1.bf16.msra.mxu0 %v834
  %1106 = vmatprep.subr.bf16.mxu0 0
  %1107 = vmatpush2.bf16.msra.mxu0 %v849
  %1108 = vmatprep.subr.bf16.mxu0 0
  %1109 = vmatpush2.bf16.msra.mxu0 %v848
  %1110 = vmatprep.subr.bf16.mxu0 0
  %1111 = vmatpush2.bf16.msra.mxu0 %v847
  %1112 = vmatprep.subr.bf16.mxu0 0
  %1113 = vmatpush2.bf16.msra.mxu0 %v846
  %1114 = vmatprep.subr.bf16.mxu0 0
  %1115 = vmatpush2.bf16.msra.mxu0 %v845
  %1116 = vmatprep.subr.bf16.mxu0 0
  %1117 = vmatpush2.bf16.msra.mxu0 %v844
  %1118 = vmatprep.subr.bf16.mxu0 0
  %1119 = vmatpush2.bf16.msra.mxu0 %v843
  %1120 = vmatprep.subr.bf16.mxu0 0
  %1121 = vmatpush2.bf16.msra.mxu0 %v842
  %1122 = vmatprep.mubr.bf16.mxu0 %v44
  %1123 = vmatmul.mubr.bf16.gmra.mxu0 %v43
  %v1124 = vpop.f32.mrf.mxu0
  %v1125 = vadd.f32 %v320, %v1124
  %v1126 = vpop.f32.mrf.mxu0
  %v1127 = vpop.f32.mrf.mxu0
  %v1128 = vpop.f32.mrf.mxu0
  %1129 = vdwg.mxu0
  %1130 = vmatprep.subr.bf16.mxu0 0
  %1131 = vmatpush1.bf16.msra.mxu0 %v857
  %1132 = vmatprep.subr.bf16.mxu0 0
  %1133 = vmatpush1.bf16.msra.mxu0 %v856
  %1134 = vmatprep.subr.bf16.mxu0 0
  %1135 = vmatpush1.bf16.msra.mxu0 %v855
  %1136 = vmatprep.subr.bf16.mxu0 0
  %1137 = vmatpush1.bf16.msra.mxu0 %v854
  %1138 = vmatprep.subr.bf16.mxu0 0
  %1139 = vmatpush1.bf16.msra.mxu0 %v853
  %1140 = vmatprep.subr.bf16.mxu0 0
  %1141 = vmatpush1.bf16.msra.mxu0 %v852
  %1142 = vmatprep.subr.bf16.mxu0 0
  %1143 = vmatpush1.bf16.msra.mxu0 %v851
  %1144 = vmatprep.subr.bf16.mxu0 0
  %1145 = vmatpush1.bf16.msra.mxu0 %v850
  %1146 = vmatprep.subr.bf16.mxu0 0
  %1147 = vmatpush2.bf16.msra.mxu0 %v865
  %1148 = vmatprep.subr.bf16.mxu0 0
  %1149 = vmatpush2.bf16.msra.mxu0 %v864
  %1150 = vmatprep.subr.bf16.mxu0 0
  %1151 = vmatpush2.bf16.msra.mxu0 %v863
  %1152 = vmatprep.subr.bf16.mxu0 0
  %1153 = vmatpush2.bf16.msra.mxu0 %v862
  %1154 = vmatprep.subr.bf16.mxu0 0
  %1155 = vmatpush2.bf16.msra.mxu0 %v861
  %1156 = vmatprep.subr.bf16.mxu0 0
  %1157 = vmatpush2.bf16.msra.mxu0 %v860
  %1158 = vmatprep.subr.bf16.mxu0 0
  %1159 = vmatpush2.bf16.msra.mxu0 %v859
  %1160 = vmatprep.subr.bf16.mxu0 0
  %1161 = vmatpush2.bf16.msra.mxu0 %v858
  %1162 = vmatprep.mubr.bf16.mxu0 %v46
  %1163 = vmatmul.mubr.bf16.gmra.mxu0 %v45
  %v1164 = vpop.f32.mrf.mxu0
  %v1165 = vadd.f32 %v1125, %v1164
  %v1166 = vpop.f32.mrf.mxu0
  %v1167 = vpop.f32.mrf.mxu0
  %v1168 = vpop.f32.mrf.mxu0
  %1169 = vdwg.mxu0
  %1170 = vmatprep.subr.bf16.mxu0 0
  %1171 = vmatpush1.bf16.msra.mxu0 %v873
  %1172 = vmatprep.subr.bf16.mxu0 0
  %1173 = vmatpush1.bf16.msra.mxu0 %v872
  %1174 = vmatprep.subr.bf16.mxu0 0
  %1175 = vmatpush1.bf16.msra.mxu0 %v871
  %1176 = vmatprep.subr.bf16.mxu0 0
  %1177 = vmatpush1.bf16.msra.mxu0 %v870
  %1178 = vmatprep.subr.bf16.mxu0 0
  %1179 = vmatpush1.bf16.msra.mxu0 %v869
  %1180 = vmatprep.subr.bf16.mxu0 0
  %1181 = vmatpush1.bf16.msra.mxu0 %v868
  %1182 = vmatprep.subr.bf16.mxu0 0
  %1183 = vmatpush1.bf16.msra.mxu0 %v867
  %1184 = vmatprep.subr.bf16.mxu0 0
  %1185 = vmatpush1.bf16.msra.mxu0 %v866
  %1186 = vmatprep.subr.bf16.mxu0 0
  %1187 = vmatpush2.bf16.msra.mxu0 %v881
  %1188 = vmatprep.subr.bf16.mxu0 0
  %1189 = vmatpush2.bf16.msra.mxu0 %v880
  %1190 = vmatprep.subr.bf16.mxu0 0
  %1191 = vmatpush2.bf16.msra.mxu0 %v879
  %1192 = vmatprep.subr.bf16.mxu0 0
  %1193 = vmatpush2.bf16.msra.mxu0 %v878
  %1194 = vmatprep.subr.bf16.mxu0 0
  %1195 = vmatpush2.bf16.msra.mxu0 %v877
  %1196 = vmatprep.subr.bf16.mxu0 0
  %1197 = vmatpush2.bf16.msra.mxu0 %v876
  %1198 = vmatprep.subr.bf16.mxu0 0
  %1199 = vmatpush2.bf16.msra.mxu0 %v875
  %1200 = vmatprep.subr.bf16.mxu0 0
  %1201 = vmatpush2.bf16.msra.mxu0 %v874
  %1202 = vmatprep.mubr.bf16.mxu0 %v48
  %1203 = vmatmul.mubr.bf16.gmra.mxu0 %v47
  %v1204 = vpop.f32.mrf.mxu0
  %v1205 = vadd.f32 %v1165, %v1204
  %v1206 = vpop.f32.mrf.mxu0
  %v1207 = vpop.f32.mrf.mxu0
  %v1208 = vpop.f32.mrf.mxu0
  %1209 = vdwg.mxu0
  %1210 = vmatprep.subr.bf16.mxu0 0
  %1211 = vmatpush1.bf16.msra.mxu0 %v889
  %1212 = vmatprep.subr.bf16.mxu0 0
  %1213 = vmatpush1.bf16.msra.mxu0 %v888
  %1214 = vmatprep.subr.bf16.mxu0 0
  %1215 = vmatpush1.bf16.msra.mxu0 %v887
  %1216 = vmatprep.subr.bf16.mxu0 0
  %1217 = vmatpush1.bf16.msra.mxu0 %v886
  %1218 = vmatprep.subr.bf16.mxu0 0
  %1219 = vmatpush1.bf16.msra.mxu0 %v885
  %1220 = vmatprep.subr.bf16.mxu0 0
  %1221 = vmatpush1.bf16.msra.mxu0 %v884
  %1222 = vmatprep.subr.bf16.mxu0 0
  %1223 = vmatpush1.bf16.msra.mxu0 %v883
  %1224 = vmatprep.subr.bf16.mxu0 0
  %1225 = vmatpush1.bf16.msra.mxu0 %v882
  %1226 = vmatprep.subr.bf16.mxu0 0
  %1227 = vmatpush2.bf16.msra.mxu0 %v897
  %1228 = vmatprep.subr.bf16.mxu0 0
  %1229 = vmatpush2.bf16.msra.mxu0 %v896
  %1230 = vmatprep.subr.bf16.mxu0 0
  %1231 = vmatpush2.bf16.msra.mxu0 %v895
  %1232 = vmatprep.subr.bf16.mxu0 0
  %1233 = vmatpush2.bf16.msra.mxu0 %v894
  %1234 = vmatprep.subr.bf16.mxu0 0
  %1235 = vmatpush2.bf16.msra.mxu0 %v893
  %1236 = vmatprep.subr.bf16.mxu0 0
  %1237 = vmatpush2.bf16.msra.mxu0 %v892
  %1238 = vmatprep.subr.bf16.mxu0 0
  %1239 = vmatpush2.bf16.msra.mxu0 %v891
  %1240 = vmatprep.subr.bf16.mxu0 0
  %1241 = vmatpush2.bf16.msra.mxu0 %v890
  %1242 = vmatprep.mubr.bf16.mxu0 %v50
  %1243 = vmatmul.mubr.bf16.gmra.mxu0 %v49
  %v1244 = vpop.f32.mrf.mxu0
  %v1245 = vadd.f32 %v1205, %v1244
  %v1246 = vpop.f32.mrf.mxu0
  %v1247 = vpop.f32.mrf.mxu0
  %v1248 = vpop.f32.mrf.mxu0
  %1249 = vdwg.mxu0
  %1250 = vmatprep.subr.bf16.mxu0 0
  %1251 = vmatpush1.bf16.msra.mxu0 %v905
  %1252 = vmatprep.subr.bf16.mxu0 0
  %1253 = vmatpush1.bf16.msra.mxu0 %v904
  %1254 = vmatprep.subr.bf16.mxu0 0
  %1255 = vmatpush1.bf16.msra.mxu0 %v903
  %1256 = vmatprep.subr.bf16.mxu0 0
  %1257 = vmatpush1.bf16.msra.mxu0 %v902
  %1258 = vmatprep.subr.bf16.mxu0 0
  %1259 = vmatpush1.bf16.msra.mxu0 %v901
  %1260 = vmatprep.subr.bf16.mxu0 0
  %1261 = vmatpush1.bf16.msra.mxu0 %v900
  %1262 = vmatprep.subr.bf16.mxu0 0
  %1263 = vmatpush1.bf16.msra.mxu0 %v899
  %1264 = vmatprep.subr.bf16.mxu0 0
  %1265 = vmatpush1.bf16.msra.mxu0 %v898
  %1266 = vmatprep.subr.bf16.mxu0 0
  %1267 = vmatpush2.bf16.msra.mxu0 %v913
  %1268 = vmatprep.subr.bf16.mxu0 0
  %1269 = vmatpush2.bf16.msra.mxu0 %v912
  %1270 = vmatprep.subr.bf16.mxu0 0
  %1271 = vmatpush2.bf16.msra.mxu0 %v911
  %1272 = vmatprep.subr.bf16.mxu0 0
  %1273 = vmatpush2.bf16.msra.mxu0 %v910
  %1274 = vmatprep.subr.bf16.mxu0 0
  %1275 = vmatpush2.bf16.msra.mxu0 %v909
  %1276 = vmatprep.subr.bf16.mxu0 0
  %1277 = vmatpush2.bf16.msra.mxu0 %v908
  %1278 = vmatprep.subr.bf16.mxu0 0
  %1279 = vmatpush2.bf16.msra.mxu0 %v907
  %1280 = vmatprep.subr.bf16.mxu0 0
  %1281 = vmatpush2.bf16.msra.mxu0 %v906
  %1282 = vmatprep.mubr.bf16.mxu0 %v52
  %1283 = vmatmul.mubr.bf16.gmra.mxu0 %v51
  %v1284 = vpop.f32.mrf.mxu0
  %v1285 = vadd.f32 %v1245, %v1284
  %v1286 = vpop.f32.mrf.mxu0
  %v1287 = vpop.f32.mrf.mxu0
  %v1288 = vpop.f32.mrf.mxu0
  %1289 = vdwg.mxu0
  %1290 = vmatprep.subr.bf16.mxu0 0
  %1291 = vmatpush1.bf16.msra.mxu0 %v921
  %1292 = vmatprep.subr.bf16.mxu0 0
  %1293 = vmatpush1.bf16.msra.mxu0 %v920
  %1294 = vmatprep.subr.bf16.mxu0 0
  %1295 = vmatpush1.bf16.msra.mxu0 %v919
  %1296 = vmatprep.subr.bf16.mxu0 0
  %1297 = vmatpush1.bf16.msra.mxu0 %v918
  %1298 = vmatprep.subr.bf16.mxu0 0
  %1299 = vmatpush1.bf16.msra.mxu0 %v917
  %1300 = vmatprep.subr.bf16.mxu0 0
  %1301 = vmatpush1.bf16.msra.mxu0 %v916
  %1302 = vmatprep.subr.bf16.mxu0 0
  %1303 = vmatpush1.bf16.msra.mxu0 %v915
  %1304 = vmatprep.subr.bf16.mxu0 0
  %1305 = vmatpush1.bf16.msra.mxu0 %v914
  %1306 = vmatprep.subr.bf16.mxu0 0
  %1307 = vmatpush2.bf16.msra.mxu0 %v929
  %1308 = vmatprep.subr.bf16.mxu0 0
  %1309 = vmatpush2.bf16.msra.mxu0 %v928
  %1310 = vmatprep.subr.bf16.mxu0 0
  %1311 = vmatpush2.bf16.msra.mxu0 %v927
  %1312 = vmatprep.subr.bf16.mxu0 0
  %1313 = vmatpush2.bf16.msra.mxu0 %v926
  %1314 = vmatprep.subr.bf16.mxu0 0
  %1315 = vmatpush2.bf16.msra.mxu0 %v925
  %1316 = vmatprep.subr.bf16.mxu0 0
  %1317 = vmatpush2.bf16.msra.mxu0 %v924
  %1318 = vmatprep.subr.bf16.mxu0 0
  %1319 = vmatpush2.bf16.msra.mxu0 %v923
  %1320 = vmatprep.subr.bf16.mxu0 0
  %1321 = vmatpush2.bf16.msra.mxu0 %v922
  %1322 = vmatprep.mubr.bf16.mxu0 %v54
  %1323 = vmatmul.mubr.bf16.gmra.mxu0 %v53
  %v1324 = vpop.f32.mrf.mxu0
  %v1325 = vadd.f32 %v1285, %v1324
  %v1326 = vpop.f32.mrf.mxu0
  %v1327 = vpop.f32.mrf.mxu0
  %v1328 = vpop.f32.mrf.mxu0
  %1329 = vdwg.mxu0
  %1330 = vmatprep.subr.bf16.mxu0 0
  %1331 = vmatpush1.bf16.msra.mxu0 %v937
  %1332 = vmatprep.subr.bf16.mxu0 0
  %1333 = vmatpush1.bf16.msra.mxu0 %v936
  %1334 = vmatprep.subr.bf16.mxu0 0
  %1335 = vmatpush1.bf16.msra.mxu0 %v935
  %1336 = vmatprep.subr.bf16.mxu0 0
  %1337 = vmatpush1.bf16.msra.mxu0 %v934
  %1338 = vmatprep.subr.bf16.mxu0 0
  %1339 = vmatpush1.bf16.msra.mxu0 %v933
  %1340 = vmatprep.subr.bf16.mxu0 0
  %1341 = vmatpush1.bf16.msra.mxu0 %v932
  %1342 = vmatprep.subr.bf16.mxu0 0
  %1343 = vmatpush1.bf16.msra.mxu0 %v931
  %1344 = vmatprep.subr.bf16.mxu0 0
  %1345 = vmatpush1.bf16.msra.mxu0 %v930
  %1346 = vmatprep.subr.bf16.mxu0 0
  %1347 = vmatpush2.bf16.msra.mxu0 %v945
  %1348 = vmatprep.subr.bf16.mxu0 0
  %1349 = vmatpush2.bf16.msra.mxu0 %v944
  %1350 = vmatprep.subr.bf16.mxu0 0
  %1351 = vmatpush2.bf16.msra.mxu0 %v943
  %1352 = vmatprep.subr.bf16.mxu0 0
  %1353 = vmatpush2.bf16.msra.mxu0 %v942
  %1354 = vmatprep.subr.bf16.mxu0 0
  %1355 = vmatpush2.bf16.msra.mxu0 %v941
  %1356 = vmatprep.subr.bf16.mxu0 0
  %1357 = vmatpush2.bf16.msra.mxu0 %v940
  %1358 = vmatprep.subr.bf16.mxu0 0
  %1359 = vmatpush2.bf16.msra.mxu0 %v939
  %1360 = vmatprep.subr.bf16.mxu0 0
  %1361 = vmatpush2.bf16.msra.mxu0 %v938
  %1362 = vmatprep.mubr.bf16.mxu0 %v56
  %1363 = vmatmul.mubr.bf16.gmra.mxu0 %v55
  %v1364 = vpop.f32.mrf.mxu0
  %v1365 = vadd.f32 %v1325, %v1364
  %v1366 = vpop.f32.mrf.mxu0
  %v1367 = vpop.f32.mrf.mxu0
  %v1368 = vpop.f32.mrf.mxu0
  %1369 = vdwg.mxu0
  %1370 = vmatprep.subr.bf16.mxu0 0
  %1371 = vmatpush1.bf16.msra.mxu0 %v953
  %1372 = vmatprep.subr.bf16.mxu0 0
  %1373 = vmatpush1.bf16.msra.mxu0 %v952
  %1374 = vmatprep.subr.bf16.mxu0 0
  %1375 = vmatpush1.bf16.msra.mxu0 %v951
  %1376 = vmatprep.subr.bf16.mxu0 0
  %1377 = vmatpush1.bf16.msra.mxu0 %v950
  %1378 = vmatprep.subr.bf16.mxu0 0
  %1379 = vmatpush1.bf16.msra.mxu0 %v949
  %1380 = vmatprep.subr.bf16.mxu0 0
  %1381 = vmatpush1.bf16.msra.mxu0 %v948
  %1382 = vmatprep.subr.bf16.mxu0 0
  %1383 = vmatpush1.bf16.msra.mxu0 %v947
  %1384 = vmatprep.subr.bf16.mxu0 0
  %1385 = vmatpush1.bf16.msra.mxu0 %v946
  %1386 = vmatprep.subr.bf16.mxu0 0
  %1387 = vmatpush2.bf16.msra.mxu0 %v961
  %1388 = vmatprep.subr.bf16.mxu0 0
  %1389 = vmatpush2.bf16.msra.mxu0 %v960
  %1390 = vmatprep.subr.bf16.mxu0 0
  %1391 = vmatpush2.bf16.msra.mxu0 %v959
  %1392 = vmatprep.subr.bf16.mxu0 0
  %1393 = vmatpush2.bf16.msra.mxu0 %v958
  %1394 = vmatprep.subr.bf16.mxu0 0
  %1395 = vmatpush2.bf16.msra.mxu0 %v957
  %1396 = vmatprep.subr.bf16.mxu0 0
  %1397 = vmatpush2.bf16.msra.mxu0 %v956
  %1398 = vmatprep.subr.bf16.mxu0 0
  %1399 = vmatpush2.bf16.msra.mxu0 %v955
  %1400 = vmatprep.subr.bf16.mxu0 0
  %1401 = vmatpush2.bf16.msra.mxu0 %v954
  %1402 = vmatprep.mubr.bf16.mxu0 %v58
  %1403 = vmatmul.mubr.bf16.gmra.mxu0 %v57
  %v1404 = vpop.f32.mrf.mxu0
  %v1405 = vadd.f32 %v1365, %v1404
  %v1406 = vpop.f32.mrf.mxu0
  %v1407 = vpop.f32.mrf.mxu0
  %v1408 = vpop.f32.mrf.mxu0
  %1409 = vdwg.mxu0
  %v1410 = vmax.f32 %v1405, 0.0
  %v1411 = vpack.c.bf16 %v1410, %v1410
  %v1412 = vld [vmem:[%s3] sm:$0xf]
  %v1413 = vld [vmem:[%s3 + $0x4] sm:$0xf]
  %v1414 = vld [vmem:[%s3 + $0x8] sm:$0xf]
  %v1415 = vld [vmem:[%s3 + $0xc] sm:$0xf]
  %v1416 = vld [vmem:[%s3 + $0x10] sm:$0xf]
  %v1417 = vld [vmem:[%s3 + $0x14] sm:$0xf]
  %v1418 = vld [vmem:[%s3 + $0x18] sm:$0xf]
  %v1419 = vld [vmem:[%s3 + $0x1c] sm:$0xf]
  %v1420 = vld [vmem:[%s3 + $0x20] sm:$0xf]
  %v1421 = vld [vmem:[%s3 + $0x24] sm:$0xf]
  %v1422 = vld [vmem:[%s3 + $0x28] sm:$0xf]
  %v1423 = vld [vmem:[%s3 + $0x2c] sm:$0xf]
  %v1424 = vld [vmem:[%s3 + $0x30] sm:$0xf]
  %v1425 = vld [vmem:[%s3 + $0x34] sm:$0xf]
  %v1426 = vld [vmem:[%s3 + $0x38] sm:$0xf]
  %v1427 = vld [vmem:[%s3 + $0x3c] sm:$0xf]
  %v1428 = vld [vmem:[%s4] sm:$0x1]
  %v1430 = vlaneseq
  %v1431 = vshrl.u32 %v1430, 7
  %v1432 = vsub.s32 0, %v1431
  %v1433 = vrot.slane %v1428, %v1432
  %v1451 = vunpack.c.l.b16 %v1412
  %v1452 = vunpack.c.l.b16 %v1413
  %v1453 = vunpack.c.l.b16 %v1414
  %v1454 = vunpack.c.l.b16 %v1415
  %v1455 = vunpack.c.l.b16 %v1416
  %v1456 = vunpack.c.l.b16 %v1417
  %v1457 = vunpack.c.l.b16 %v1418
  %v1458 = vunpack.c.l.b16 %v1419
  %v1459 = vunpack.c.l.b16 %v1420
  %v1460 = vunpack.c.l.b16 %v1421
  %v1461 = vunpack.c.l.b16 %v1422
  %v1462 = vunpack.c.l.b16 %v1423
  %v1463 = vunpack.c.l.b16 %v1424
  %v1464 = vunpack.c.l.b16 %v1425
  %v1465 = vunpack.c.l.b16 %v1426
  %v1466 = vunpack.c.l.b16 %v1427
  %v1467 = vpack.c.b16 %v1452, %v1451
  %v1468 = vpack.c.b16 %v1454, %v1453
  %v1469 = vpack.c.b16 %v1456, %v1455
  %v1470 = vpack.c.b16 %v1458, %v1457
  %v1471 = vpack.c.b16 %v1460, %v1459
  %v1472 = vpack.c.b16 %v1462, %v1461
  %v1473 = vpack.c.b16 %v1464, %v1463
  %v1474 = vpack.c.b16 %v1466, %v1465
  %1483 = vmatprep.subr.bf16.mxu0 0
  %1484 = vmatpush1.bf16.msra.mxu0 %v1474
  %1485 = vmatprep.subr.bf16.mxu0 0
  %1486 = vmatpush1.bf16.msra.mxu0 %v1473
  %1487 = vmatprep.subr.bf16.mxu0 0
  %1488 = vmatpush1.bf16.msra.mxu0 %v1472
  %1489 = vmatprep.subr.bf16.mxu0 0
  %1490 = vmatpush1.bf16.msra.mxu0 %v1471
  %1491 = vmatprep.subr.bf16.mxu0 0
  %1492 = vmatpush1.bf16.msra.mxu0 %v1470
  %1493 = vmatprep.subr.bf16.mxu0 0
  %1494 = vmatpush1.bf16.msra.mxu0 %v1469
  %1495 = vmatprep.subr.bf16.mxu0 0
  %1496 = vmatpush1.bf16.msra.mxu0 %v1468
  %1497 = vmatprep.subr.bf16.mxu0 0
  %1498 = vmatpush1.bf16.msra.mxu0 %v1467
  %1499 = vmatprep.subr.bf16.mxu0 0
  %1500 = vmatpush2.bf16.msra.mxu0 0
  %1501 = vmatprep.subr.bf16.mxu0 0
  %1502 = vmatpush2.bf16.msra.mxu0 0
  %1503 = vmatprep.subr.bf16.mxu0 0
  %1504 = vmatpush2.bf16.msra.mxu0 0
  %1505 = vmatprep.subr.bf16.mxu0 0
  %1506 = vmatpush2.bf16.msra.mxu0 0
  %1507 = vmatprep.subr.bf16.mxu0 0
  %1508 = vmatpush2.bf16.msra.mxu0 0
  %1509 = vmatprep.subr.bf16.mxu0 0
  %1510 = vmatpush2.bf16.msra.mxu0 0
  %1511 = vmatprep.subr.bf16.mxu0 0
  %1512 = vmatpush2.bf16.msra.mxu0 0
  %1513 = vmatprep.subr.bf16.mxu0 0
  %1514 = vmatpush2.bf16.msra.mxu0 0
  %1515 = vmatprep.mubr.bf16.mxu0 0
  %1516 = vmatmul.mubr.bf16.gmra.mxu0 %v1411
  %v1517 = vpop.f32.mrf.mxu0
  %v1518 = vadd.f32 %v1433, %v1517
  %v1519 = vpop.f32.mrf.mxu0
  %v1520 = vpop.f32.mrf.mxu0
  %v1521 = vpop.f32.mrf.mxu0
  %1522 = vdwg.mxu0
  %v1523 = vmax.f32 %v1518, 0.0
  %v1524 = vpack.c.bf16 %v1523, %v1523
  %v1525 = vld [vmem:[%s5] sm:$0xf]
  %v1526 = vld [vmem:[%s5 + $0x4] sm:$0xf]
  %v1527 = vld [vmem:[%s5 + $0x8] sm:$0xf]
  %v1528 = vld [vmem:[%s5 + $0xc] sm:$0xf]
  %v1529 = vld [vmem:[%s5 + $0x10] sm:$0xf]
  %v1530 = vld [vmem:[%s5 + $0x14] sm:$0xf]
  %v1531 = vld [vmem:[%s5 + $0x18] sm:$0xf]
  %v1532 = vld [vmem:[%s5 + $0x1c] sm:$0xf]
  %v1533 = vld [vmem:[%s5 + $0x20] sm:$0xf]
  %v1534 = vld [vmem:[%s5 + $0x24] sm:$0xf]
  %v1535 = vld [vmem:[%s5 + $0x28] sm:$0xf]
  %v1536 = vld [vmem:[%s5 + $0x2c] sm:$0xf]
  %v1537 = vld [vmem:[%s5 + $0x30] sm:$0xf]
  %v1538 = vld [vmem:[%s5 + $0x34] sm:$0xf]
  %v1539 = vld [vmem:[%s5 + $0x38] sm:$0xf]
  %v1540 = vld [vmem:[%s5 + $0x3c] sm:$0xf]
  %v1541 = vld [vmem:[%s6] sm:$0x1]
  %v1543 = vlaneseq
  %v1544 = vshrl.u32 %v1543, 7
  %v1545 = vsub.s32 0, %v1544
  %v1546 = vrot.slane %v1541, %v1545
  %v1564 = vunpack.c.l.b16 %v1525
  %v1565 = vunpack.c.l.b16 %v1526
  %v1566 = vunpack.c.l.b16 %v1527
  %v1567 = vunpack.c.l.b16 %v1528
  %v1568 = vunpack.c.l.b16 %v1529
  %v1569 = vunpack.c.l.b16 %v1530
  %v1570 = vunpack.c.l.b16 %v1531
  %v1571 = vunpack.c.l.b16 %v1532
  %v1572 = vunpack.c.l.b16 %v1533
  %v1573 = vunpack.c.l.b16 %v1534
  %v1574 = vunpack.c.l.b16 %v1535
  %v1575 = vunpack.c.l.b16 %v1536
  %v1576 = vunpack.c.l.b16 %v1537
  %v1577 = vunpack.c.l.b16 %v1538
  %v1578 = vunpack.c.l.b16 %v1539
  %v1579 = vunpack.c.l.b16 %v1540
  %v1580 = vpack.c.b16 %v1565, %v1564
  %v1581 = vpack.c.b16 %v1567, %v1566
  %v1582 = vpack.c.b16 %v1569, %v1568
  %v1583 = vpack.c.b16 %v1571, %v1570
  %v1584 = vpack.c.b16 %v1573, %v1572
  %v1585 = vpack.c.b16 %v1575, %v1574
  %v1586 = vpack.c.b16 %v1577, %v1576
  %v1587 = vpack.c.b16 %v1579, %v1578
  %1596 = vmatprep.subr.bf16.mxu0 0
  %1597 = vmatpush1.bf16.msra.mxu0 %v1587
  %1598 = vmatprep.subr.bf16.mxu0 0
  %1599 = vmatpush1.bf16.msra.mxu0 %v1586
  %1600 = vmatprep.subr.bf16.mxu0 0
  %1601 = vmatpush1.bf16.msra.mxu0 %v1585
  %1602 = vmatprep.subr.bf16.mxu0 0
  %1603 = vmatpush1.bf16.msra.mxu0 %v1584
  %1604 = vmatprep.subr.bf16.mxu0 0
  %1605 = vmatpush1.bf16.msra.mxu0 %v1583
  %1606 = vmatprep.subr.bf16.mxu0 0
  %1607 = vmatpush1.bf16.msra.mxu0 %v1582
  %1608 = vmatprep.subr.bf16.mxu0 0
  %1609 = vmatpush1.bf16.msra.mxu0 %v1581
  %1610 = vmatprep.subr.bf16.mxu0 0
  %1611 = vmatpush1.bf16.msra.mxu0 %v1580
  %1612 = vmatprep.subr.bf16.mxu0 0
  %1613 = vmatpush2.bf16.msra.mxu0 0
  %1614 = vmatprep.subr.bf16.mxu0 0
  %1615 = vmatpush2.bf16.msra.mxu0 0
  %1616 = vmatprep.subr.bf16.mxu0 0
  %1617 = vmatpush2.bf16.msra.mxu0 0
  %1618 = vmatprep.subr.bf16.mxu0 0
  %1619 = vmatpush2.bf16.msra.mxu0 0
  %1620 = vmatprep.subr.bf16.mxu0 0
  %1621 = vmatpush2.bf16.msra.mxu0 0
  %1622 = vmatprep.subr.bf16.mxu0 0
  %1623 = vmatpush2.bf16.msra.mxu0 0
  %1624 = vmatprep.subr.bf16.mxu0 0
  %1625 = vmatpush2.bf16.msra.mxu0 0
  %1626 = vmatprep.subr.bf16.mxu0 0
  %1627 = vmatpush2.bf16.msra.mxu0 0
  %1628 = vmatprep.mubr.bf16.mxu0 0
  %1629 = vmatmul.mubr.bf16.gmra.mxu0 %v1524
  %v1630 = vpop.f32.mrf.mxu0
  %v1631 = vadd.f32 %v1546, %v1630
  %v1632 = vpop.f32.mrf.mxu0
  %v1633 = vpop.f32.mrf.mxu0
  %v1634 = vpop.f32.mrf.mxu0
  %1635 = vdwg.mxu0
  %1636 = vst [vmem:[%s7] sm:$0xff] %v1631
  // Predicated region
  $region30: #{simple_classifier_forward.5} parent=0 // pred_check
    _
  $region31: #{simple_classifier_forward.5} parent=0 // pred_check_branch
    %1638 = sbr.rel (0) target = $region33
  $region32: #{simple_classifier_forward.5} parent=0 // pred_region
    _
  $region33: #{simple_classifier_forward.5} parent=0 // pred_fallthru
    _
  // Predicated region
  $region34: #{simple_classifier_forward.5} parent=0 // pred_check
    _
  $region35: #{simple_classifier_forward.5} parent=0 // pred_check_branch
    %1640 = sbr.rel (0) target = $region37
  $region36: #{simple_classifier_forward.5} parent=0 // pred_region
    _
  $region37: #{simple_classifier_forward.5} parent=0 // pred_fallthru
    _

// kernel: simple_classifier_forward.4
$region0: #{simple_classifier_forward.4}
  #allocation0 [shape = 'u32[]', space=smem, size = 0x4, offset = 0x4, fixed_abs, tag = 'smem constant byte address 0x4 - core index']
  #allocation1 [shape = 'u32[144,128]{1,0:T(1,128)}', space=vmem, size = 0x12000, scoped, tag = 'internal scratch']
  #allocation2 [shape = 'f32[8,128]{1,0:T(8,128)}', space=vmem, size = 0x1000, scoped, tag = 'scratch operand']
  %s0 = inlined_call_operand.vmem [shape: f32[2,12,12,128], index: 0, kind: input, shape index: {}]
  %s1 = inlined_call_operand.vmem [shape: bf16[3200,128], index: 1, kind: input, shape index: {}]
  %s2 = inlined_call_operand.vmem [shape: f32[1,128], index: 2, kind: input, shape index: {}]
  %s3 = inlined_call_operand.vmem [shape: f32[2,4,4,128], index: 3, kind: output, shape index: {}]
  %s4 = sld [smem:[#allocation0]]
  $region52: #{simple_classifier_forward.4} parent=0
    _
  %s6 = ssub.s32 1, %s4
  %s7 = scalar_select 0, %s6, %s4
  loop: start=0, step=1, limit=4
  $region2: #{simple_classifier_forward.4} parent=0 // loop_pre_header
    _
  $region3: #{simple_classifier_forward.4} parent=0 // loop_header
    %s9 = sphi 0, %s13
    %p10 = scmp.ge.s32.totalorder %s9, 4
    %s19 = sphi 0, %s21
    %s22 = sphi 0, %s19
    %s23 = sphi 0, %s22
    %s39 = sphi 0, %s23
    %s43 = sphi 0, %s43
    %s45 = sphi 0, %s43
    %s46 = sphi 0, %s45
    %s60 = sphi 0, %s46
    %s64 = sphi 0, %s64
    %s66 = sphi 0, %s64
    %s67 = sphi 0, %s66
    %s81 = sphi 0, %s67
    %s87 = sphi 0, %s89
    %s90 = sphi 0, %s87
    %s91 = sphi 0, %s90
    %s107 = sphi 0, %s91
  $region4: #{simple_classifier_forward.4} parent=0 // loop_header_branch
    %12 = sbr.rel (%p10) target = $region8
  $region5: #{simple_classifier_forward.4} parent=0 // loop_body
    %s14 = ssub.s32 %s9, 1
    %s15 = ssub.s32 %s9, 2
    %s16 = sadd.s32 %s9, 1
    %s17 = ssub.s32 %s9, %s16
    %p18 = scmp.eq.s32.totalorder %s17, 0
    %s20 = sadd.s32 %s19, 1
    %s21 = scalar_select %p18, %s19, %s20
    %p24 = pneg %p18
    %p25 = scmp.eq.s32.totalorder %s9, 1
    %p26 = por %p24, %p25
    %p27 = scmp.ne.s32.totalorder %s19, %s22
    %p28 = scmp.eq.s32.totalorder %s9, 0
    %p29 = por %p27, %p28
    %p30 = scmp.ne.s32.totalorder %s19, %s22
    %p31 = scmp.eq.s32.totalorder %s14, 1
    %p32 = por %p30, %p31
    %p33 = scmp.ne.s32.totalorder %s22, %s23
    %p34 = scmp.eq.s32.totalorder %s14, 0
    %p35 = por %p33, %p34
    %p36 = scmp.ne.s32.totalorder %s22, %s23
    %p37 = scmp.eq.s32.totalorder %s15, 1
    %p38 = por %p36, %p37
    %p40 = scmp.ne.s32.totalorder %s23, %s39
    %p41 = scmp.eq.s32.totalorder %s15, 0
    %p42 = por %p40, %p41
    %s44 = sadd.s32 %s43, 1
    %p47 = scmp.eq.s32.totalorder %s9, 1
    %p48 = scmp.ne.s32.totalorder %s43, %s45
    %p49 = scmp.eq.s32.totalorder %s9, 0
    %p50 = por %p48, %p49
    %p51 = scmp.ne.s32.totalorder %s43, %s45
    %p52 = scmp.eq.s32.totalorder %s14, 1
    %p53 = por %p51, %p52
    %p54 = scmp.ne.s32.totalorder %s45, %s46
    %p55 = scmp.eq.s32.totalorder %s14, 0
    %p56 = por %p54, %p55
    %p57 = scmp.ne.s32.totalorder %s45, %s46
    %p58 = scmp.eq.s32.totalorder %s15, 1
    %p59 = por %p57, %p58
    %p61 = scmp.ne.s32.totalorder %s46, %s60
    %p62 = scmp.eq.s32.totalorder %s15, 0
    %p63 = por %p61, %p62
    %s65 = sadd.s32 %s64, 1
    %p68 = scmp.eq.s32.totalorder %s9, 1
    %p69 = scmp.ne.s32.totalorder %s64, %s66
    %p70 = scmp.eq.s32.totalorder %s9, 0
    %p71 = por %p69, %p70
    %p72 = scmp.ne.s32.totalorder %s64, %s66
    %p73 = scmp.eq.s32.totalorder %s14, 1
    %p74 = por %p72, %p73
    %p75 = scmp.ne.s32.totalorder %s66, %s67
    %p76 = scmp.eq.s32.totalorder %s14, 0
    %p77 = por %p75, %p76
    %p78 = scmp.ne.s32.totalorder %s66, %s67
    %p79 = scmp.eq.s32.totalorder %s15, 1
    %p80 = por %p78, %p79
    %p82 = scmp.ne.s32.totalorder %s67, %s81
    %p83 = scmp.eq.s32.totalorder %s15, 0
    %p84 = por %p82, %p83
    %s85 = ssub.s32 %s9, %s16
    %p86 = scmp.eq.s32.totalorder %s85, 0
    %s88 = sadd.s32 %s87, 1
    %s89 = scalar_select %p86, %s87, %s88
    %p92 = pneg %p86
    %p93 = scmp.eq.s32.totalorder %s9, 1
    %p94 = por %p92, %p93
    %p95 = scmp.ne.s32.totalorder %s87, %s90
    %p96 = scmp.eq.s32.totalorder %s9, 0
    %p97 = por %p95, %p96
    %p98 = scmp.ne.s32.totalorder %s87, %s90
    %p99 = scmp.eq.s32.totalorder %s14, 1
    %p100 = por %p98, %p99
    %p101 = scmp.ne.s32.totalorder %s90, %s91
    %p102 = scmp.eq.s32.totalorder %s14, 0
    %p103 = por %p101, %p102
    %p104 = scmp.ne.s32.totalorder %s90, %s91
    %p105 = scmp.eq.s32.totalorder %s15, 1
    %p106 = por %p104, %p105
    %p108 = scmp.ne.s32.totalorder %s91, %s107
    %p109 = scmp.eq.s32.totalorder %s15, 0
    %p110 = por %p108, %p109
    %p111 = scmp.le.s32.totalorder 1, %s9
    %p112 = scmp.lt.s32.totalorder %s9, 3
    %p113 = pnand %p111, %p112
    %p114 = pneg %p113
    // Predicated region
    $region9: #{simple_classifier_forward.4} parent=5 // pred_check
      _
    $region10: #{simple_classifier_forward.4} parent=5 // pred_check_branch
      %116 = sbr.rel (%p113) target = $region12
    $region11: #{simple_classifier_forward.4} parent=5 // pred_region
      %s117 = ssub.s32 %s9, 1
      // Predicated region
      $region13: #{simple_classifier_forward.4} parent=11 // pred_check
        %p118 = pneg %p56
      $region14: #{simple_classifier_forward.4} parent=11 // pred_check_branch
        %120 = sbr.rel (%p118) target = $region16
      $region15: #{simple_classifier_forward.4} parent=11 // pred_region
        _
      $region16: #{simple_classifier_forward.4} parent=11 // pred_fallthru
        _
      // Predicated region
      $region17: #{simple_classifier_forward.4} parent=11 // pred_check
        %p121 = pneg %p77
      $region18: #{simple_classifier_forward.4} parent=11 // pred_check_branch
        %123 = sbr.rel (%p121) target = $region20
      $region19: #{simple_classifier_forward.4} parent=11 // pred_region
        _
      $region20: #{simple_classifier_forward.4} parent=11 // pred_fallthru
        _
    $region12: #{simple_classifier_forward.4} parent=5 // pred_fallthru
      _
    %p124 = scmp.lt.s32.totalorder %s9, 2
    // Predicated region
    $region21: #{simple_classifier_forward.4} parent=5 // pred_check
      %p125 = pneg %p124
    $region22: #{simple_classifier_forward.4} parent=5 // pred_check_branch
      %127 = sbr.rel (%p125) target = $region24
    $region23: #{simple_classifier_forward.4} parent=5 // pred_region
      // Predicated region
      $region25: #{simple_classifier_forward.4} parent=23 // pred_check
        %p128 = pneg %p29
      $region26: #{simple_classifier_forward.4} parent=23 // pred_check_branch
        %130 = sbr.rel (%p128) target = $region28
      $region27: #{simple_classifier_forward.4} parent=23 // pred_region
        %p131 = scmp.lt.s32.totalorder %s9, 1
        %s132 = scalar_select %p131, %s9, 1
        %s133 = smul.addr %s132, 24
        %s134 = smul.addr %s133, 8
        %s135 = scalar_lea.vmem %s0, %s134
      $region28: #{simple_classifier_forward.4} parent=23 // pred_fallthru
        _
    $region24: #{simple_classifier_forward.4} parent=5 // pred_fallthru
      _
    %p136 = scmp.le.s32.totalorder 1, %s9
    %p137 = scmp.lt.s32.totalorder %s9, 3
    %p138 = pnand %p136, %p137
    %p139 = pneg %p138
    // Predicated region
    $region29: #{simple_classifier_forward.4} parent=5 // pred_check
      _
    $region30: #{simple_classifier_forward.4} parent=5 // pred_check_branch
      %141 = sbr.rel (%p138) target = $region32
    $region31: #{simple_classifier_forward.4} parent=5 // pred_region
      %s142 = ssub.s32 %s9, 1
      %p143 = scmp.lt.s32.totalorder %s14, 1
      %s144 = scalar_select %p143, %s14, 1
      %s145 = smul.addr %s144, 24
      %s146 = smul.addr %s145, 8
      %s147 = scalar_lea.vmem %s0, %s146
      %p148 = pneg %p35
      %p149 = pneg %p32
      %p150 = pneg %p56
      %p151 = pneg %p53
      %p152 = pneg %p77
      %p153 = pneg %p74
      %p154 = pneg %p103
      %p155 = pneg %p100
      %p156 = scmp.lt.s32.totalorder %s14, 1
      %s157 = scalar_select %p156, %s14, 1
      %s158 = smul.addr %s157, 4
      %s159 = smul.addr %s158, 4
      %s160 = scalar_lea.vmem %s3, %s159
      %p161 = scmp.lt.s32.totalorder %s14, 1
      %s162 = scalar_select %p161, %s14, 1
      %s163 = smul.addr %s162, 24
      %s164 = smul.addr %s163, 8
      %s165 = scalar_lea.vmem %s0, %s164
      %p166 = scmp.lt.s32.totalorder %s14, 1
      %s167 = scalar_select %p166, %s14, 1
      %s168 = smul.addr %s167, 4
      %s169 = smul.addr %s168, 4
      %s170 = scalar_lea.vmem %s3, %s169
      %v172 = vld [vmem:[%s2] sm:$0x1]
      loop: start=0, step=1, limit=4
      $region33: #{simple_classifier_forward.4} parent=31 // loop_pre_header
        _
      $region34: #{simple_classifier_forward.4} parent=31 // loop_header
        %s174 = sphi 0, %s178
        %p175 = scmp.ge.s32.totalorder %s174, 4
      $region35: #{simple_classifier_forward.4} parent=31 // loop_header_branch
        %177 = sbr.rel (%p175) target = $region39
      $region36: #{simple_classifier_forward.4} parent=31 // loop_body
        %s179 = smul.u32 %s174, 2
        %s180 = smul.u32 %s179, 16
        %s181 = scalar_lea.vmem %s165, %s180
        %v182 = vld [vmem:[%s181] sm:$0xff]
        %v183 = vld [vmem:[%s1] sm:$0xf]
        %v184 = vld [vmem:[%s1 + $0x4] sm:$0xf]
        %v185 = vld [vmem:[%s1 + $0x8] sm:$0xf]
        %v186 = vld [vmem:[%s1 + $0xc] sm:$0xf]
        %v187 = vld [vmem:[%s1 + $0x10] sm:$0xf]
        %v188 = vld [vmem:[%s1 + $0x14] sm:$0xf]
        %v189 = vld [vmem:[%s1 + $0x18] sm:$0xf]
        %v190 = vld [vmem:[%s1 + $0x1c] sm:$0xf]
        %v191 = vld [vmem:[%s1 + $0x20] sm:$0xf]
        %v192 = vld [vmem:[%s1 + $0x24] sm:$0xf]
        %v193 = vld [vmem:[%s1 + $0x28] sm:$0xf]
        %v194 = vld [vmem:[%s1 + $0x2c] sm:$0xf]
        %v195 = vld [vmem:[%s1 + $0x30] sm:$0xf]
        %v196 = vld [vmem:[%s1 + $0x34] sm:$0xf]
        %v197 = vld [vmem:[%s1 + $0x38] sm:$0xf]
        %v198 = vld [vmem:[%s1 + $0x3c] sm:$0xf]
        %v199 = vpack.c.bf16 %v182, %v182
        %v200 = vld [vmem:[%s181 + $0x1] sm:$0xff]
        %v201 = vld [vmem:[%s1 + $0x40] sm:$0xf]
        %v202 = vld [vmem:[%s1 + $0x44] sm:$0xf]
        %v203 = vld [vmem:[%s1 + $0x48] sm:$0xf]
        %v204 = vld [vmem:[%s1 + $0x4c] sm:$0xf]
        %v205 = vld [vmem:[%s1 + $0x50] sm:$0xf]
        %v206 = vld [vmem:[%s1 + $0x54] sm:$0xf]
        %v207 = vld [vmem:[%s1 + $0x58] sm:$0xf]
        %v208 = vld [vmem:[%s1 + $0x5c] sm:$0xf]
        %v209 = vld [vmem:[%s1 + $0x60] sm:$0xf]
        %v210 = vld [vmem:[%s1 + $0x64] sm:$0xf]
        %v211 = vld [vmem:[%s1 + $0x68] sm:$0xf]
        %v212 = vld [vmem:[%s1 + $0x6c] sm:$0xf]
        %v213 = vld [vmem:[%s1 + $0x70] sm:$0xf]
        %v214 = vld [vmem:[%s1 + $0x74] sm:$0xf]
        %v215 = vld [vmem:[%s1 + $0x78] sm:$0xf]
        %v216 = vld [vmem:[%s1 + $0x7c] sm:$0xf]
        %v217 = vpack.c.bf16 %v200, %v200
        %v234 = vunpack.c.l.b16 %v201
        %v235 = vunpack.c.l.b16 %v202
        %v236 = vunpack.c.l.b16 %v203
        %v237 = vunpack.c.l.b16 %v204
        %v238 = vunpack.c.l.b16 %v205
        %v239 = vunpack.c.l.b16 %v206
        %v240 = vunpack.c.l.b16 %v207
        %v241 = vunpack.c.l.b16 %v208
        %v242 = vunpack.c.l.b16 %v209
        %v243 = vunpack.c.l.b16 %v210
        %v244 = vunpack.c.l.b16 %v211
        %v245 = vunpack.c.l.b16 %v212
        %v246 = vunpack.c.l.b16 %v213
        %v247 = vunpack.c.l.b16 %v214
        %v248 = vunpack.c.l.b16 %v215
        %v249 = vunpack.c.l.b16 %v216
        %v250 = vpack.c.b16 %v235, %v234
        %v251 = vpack.c.b16 %v237, %v236
        %v252 = vpack.c.b16 %v239, %v238
        %v253 = vpack.c.b16 %v241, %v240
        %v254 = vpack.c.b16 %v243, %v242
        %v255 = vpack.c.b16 %v245, %v244
        %v256 = vpack.c.b16 %v247, %v246
        %v257 = vpack.c.b16 %v249, %v248
        %266 = vmatprep.subr.bf16.mxu0 0
        %267 = vmatpush1.bf16.msra.mxu0 %v257
        %268 = vmatprep.subr.bf16.mxu0 0
        %269 = vmatpush1.bf16.msra.mxu0 %v256
        %270 = vmatprep.subr.bf16.mxu0 0
        %271 = vmatpush1.bf16.msra.mxu0 %v255
        %272 = vmatprep.subr.bf16.mxu0 0
        %273 = vmatpush1.bf16.msra.mxu0 %v254
        %274 = vmatprep.subr.bf16.mxu0 0
        %275 = vmatpush1.bf16.msra.mxu0 %v253
        %276 = vmatprep.subr.bf16.mxu0 0
        %277 = vmatpush1.bf16.msra.mxu0 %v252
        %278 = vmatprep.subr.bf16.mxu0 0
        %279 = vmatpush1.bf16.msra.mxu0 %v251
        %280 = vmatprep.subr.bf16.mxu0 0
        %281 = vmatpush1.bf16.msra.mxu0 %v250
        %282 = vmatprep.subr.bf16.mxu0 0
        %283 = vmatpush2.bf16.msra.mxu0 0
        %284 = vmatprep.subr.bf16.mxu0 0
        %285 = vmatpush2.bf16.msra.mxu0 0
        %286 = vmatprep.subr.bf16.mxu0 0
        %287 = vmatpush2.bf16.msra.mxu0 0
        %288 = vmatprep.subr.bf16.mxu0 0
        %289 = vmatpush2.bf16.msra.mxu0 0
        %290 = vmatprep.subr.bf16.mxu0 0
        %291 = vmatpush2.bf16.msra.mxu0 0
        %292 = vmatprep.subr.bf16.mxu0 0
        %293 = vmatpush2.bf16.msra.mxu0 0
        %294 = vmatprep.subr.bf16.mxu0 0
        %295 = vmatpush2.bf16.msra.mxu0 0
        %296 = vmatprep.subr.bf16.mxu0 0
        %297 = vmatpush2.bf16.msra.mxu0 0
        %298 = vmatprep.mubr.bf16.mxu0 0
        %299 = vmatmul.mubr.bf16.gmra.mxu0 %v217
        %v300 = vpop.f32.mrf.mxu0
        %v301 = vadd.f32 0.0, %v300
        %v302 = vpop.f32.mrf.mxu0
        %v303 = vpop.f32.mrf.mxu0
        %v304 = vpop.f32.mrf.mxu0
        %305 = vdwg.mxu0
        %v322 = vunpack.c.l.b16 %v183
        %v323 = vunpack.c.l.b16 %v184
        %v324 = vunpack.c.l.b16 %v185
        %v325 = vunpack.c.l.b16 %v186
        %v326 = vunpack.c.l.b16 %v187
        %v327 = vunpack.c.l.b16 %v188
        %v328 = vunpack.c.l.b16 %v189
        %v329 = vunpack.c.l.b16 %v190
        %v330 = vunpack.c.l.b16 %v191
        %v331 = vunpack.c.l.b16 %v192
        %v332 = vunpack.c.l.b16 %v193
        %v333 = vunpack.c.l.b16 %v194
        %v334 = vunpack.c.l.b16 %v195
        %v335 = vunpack.c.l.b16 %v196
        %v336 = vunpack.c.l.b16 %v197
        %v337 = vunpack.c.l.b16 %v198
        %v338 = vpack.c.b16 %v323, %v322
        %v339 = vpack.c.b16 %v325, %v324
        %v340 = vpack.c.b16 %v327, %v326
        %v341 = vpack.c.b16 %v329, %v328
        %v342 = vpack.c.b16 %v331, %v330
        %v343 = vpack.c.b16 %v333, %v332
        %v344 = vpack.c.b16 %v335, %v334
        %v345 = vpack.c.b16 %v337, %v336
        %354 = vmatprep.subr.bf16.mxu0 0
        %355 = vmatpush1.bf16.msra.mxu0 %v345
        %356 = vmatprep.subr.bf16.mxu0 0
        %357 = vmatpush1.bf16.msra.mxu0 %v344
        %358 = vmatprep.subr.bf16.mxu0 0
        %359 = vmatpush1.bf16.msra.mxu0 %v343
        %360 = vmatprep.subr.bf16.mxu0 0
        %361 = vmatpush1.bf16.msra.mxu0 %v342
        %362 = vmatprep.subr.bf16.mxu0 0
        %363 = vmatpush1.bf16.msra.mxu0 %v341
        %364 = vmatprep.subr.bf16.mxu0 0
        %365 = vmatpush1.bf16.msra.mxu0 %v340
        %366 = vmatprep.subr.bf16.mxu0 0
        %367 = vmatpush1.bf16.msra.mxu0 %v339
        %368 = vmatprep.subr.bf16.mxu0 0
        %369 = vmatpush1.bf16.msra.mxu0 %v338
        %370 = vmatprep.subr.bf16.mxu0 0
        %371 = vmatpush2.bf16.msra.mxu0 0
        %372 = vmatprep.subr.bf16.mxu0 0
        %373 = vmatpush2.bf16.msra.mxu0 0
        %374 = vmatprep.subr.bf16.mxu0 0
        %375 = vmatpush2.bf16.msra.mxu0 0
        %376 = vmatprep.subr.bf16.mxu0 0
        %377 = vmatpush2.bf16.msra.mxu0 0
        %378 = vmatprep.subr.bf16.mxu0 0
        %379 = vmatpush2.bf16.msra.mxu0 0
        %380 = vmatprep.subr.bf16.mxu0 0
        %381 = vmatpush2.bf16.msra.mxu0 0
        %382 = vmatprep.subr.bf16.mxu0 0
        %383 = vmatpush2.bf16.msra.mxu0 0
        %384 = vmatprep.subr.bf16.mxu0 0
        %385 = vmatpush2.bf16.msra.mxu0 0
        %386 = vmatprep.mubr.bf16.mxu0 0
        %387 = vmatmul.mubr.bf16.gmra.mxu0 %v199
        %v388 = vpop.f32.mrf.mxu0
        %v389 = vadd.f32 %v301, %v388
        %v390 = vpop.f32.mrf.mxu0
        %v391 = vpop.f32.mrf.mxu0
        %v392 = vpop.f32.mrf.mxu0
        %393 = vdwg.mxu0
        %v394 = vld [vmem:[%s181 + $0x2] sm:$0xff]
        %v395 = vld [vmem:[%s1 + $0x80] sm:$0xf]
        %v396 = vld [vmem:[%s1 + $0x84] sm:$0xf]
        %v397 = vld [vmem:[%s1 + $0x88] sm:$0xf]
        %v398 = vld [vmem:[%s1 + $0x8c] sm:$0xf]
        %v399 = vld [vmem:[%s1 + $0x90] sm:$0xf]
        %v400 = vld [vmem:[%s1 + $0x94] sm:$0xf]
        %v401 = vld [vmem:[%s1 + $0x98] sm:$0xf]
        %v402 = vld [vmem:[%s1 + $0x9c] sm:$0xf]
        %v403 = vld [vmem:[%s1 + $0xa0] sm:$0xf]
        %v404 = vld [vmem:[%s1 + $0xa4] sm:$0xf]
        %v405 = vld [vmem:[%s1 + $0xa8] sm:$0xf]
        %v406 = vld [vmem:[%s1 + $0xac] sm:$0xf]
        %v407 = vld [vmem:[%s1 + $0xb0] sm:$0xf]
        %v408 = vld [vmem:[%s1 + $0xb4] sm:$0xf]
        %v409 = vld [vmem:[%s1 + $0xb8] sm:$0xf]
        %v410 = vld [vmem:[%s1 + $0xbc] sm:$0xf]
        %v411 = vpack.c.bf16 %v394, %v394
        %v428 = vunpack.c.l.b16 %v395
        %v429 = vunpack.c.l.b16 %v396
        %v430 = vunpack.c.l.b16 %v397
        %v431 = vunpack.c.l.b16 %v398
        %v432 = vunpack.c.l.b16 %v399
        %v433 = vunpack.c.l.b16 %v400
        %v434 = vunpack.c.l.b16 %v401
        %v435 = vunpack.c.l.b16 %v402
        %v436 = vunpack.c.l.b16 %v403
        %v437 = vunpack.c.l.b16 %v404
        %v438 = vunpack.c.l.b16 %v405
        %v439 = vunpack.c.l.b16 %v406
        %v440 = vunpack.c.l.b16 %v407
        %v441 = vunpack.c.l.b16 %v408
        %v442 = vunpack.c.l.b16 %v409
        %v443 = vunpack.c.l.b16 %v410
        %v444 = vpack.c.b16 %v429, %v428
        %v445 = vpack.c.b16 %v431, %v430
        %v446 = vpack.c.b16 %v433, %v432
        %v447 = vpack.c.b16 %v435, %v434
        %v448 = vpack.c.b16 %v437, %v436
        %v449 = vpack.c.b16 %v439, %v438
        %v450 = vpack.c.b16 %v441, %v440
        %v451 = vpack.c.b16 %v443, %v442
        %460 = vmatprep.subr.bf16.mxu0 0
        %461 = vmatpush1.bf16.msra.mxu0 %v451
        %462 = vmatprep.subr.bf16.mxu0 0
        %463 = vmatpush1.bf16.msra.mxu0 %v450
        %464 = vmatprep.subr.bf16.mxu0 0
        %465 = vmatpush1.bf16.msra.mxu0 %v449
        %466 = vmatprep.subr.bf16.mxu0 0
        %467 = vmatpush1.bf16.msra.mxu0 %v448
        %468 = vmatprep.subr.bf16.mxu0 0
        %469 = vmatpush1.bf16.msra.mxu0 %v447
        %470 = vmatprep.subr.bf16.mxu0 0
        %471 = vmatpush1.bf16.msra.mxu0 %v446
        %472 = vmatprep.subr.bf16.mxu0 0
        %473 = vmatpush1.bf16.msra.mxu0 %v445
        %474 = vmatprep.subr.bf16.mxu0 0
        %475 = vmatpush1.bf16.msra.mxu0 %v444
        %476 = vmatprep.subr.bf16.mxu0 0
        %477 = vmatpush2.bf16.msra.mxu0 0
        %478 = vmatprep.subr.bf16.mxu0 0
        %479 = vmatpush2.bf16.msra.mxu0 0
        %480 = vmatprep.subr.bf16.mxu0 0
        %481 = vmatpush2.bf16.msra.mxu0 0
        %482 = vmatprep.subr.bf16.mxu0 0
        %483 = vmatpush2.bf16.msra.mxu0 0
        %484 = vmatprep.subr.bf16.mxu0 0
        %485 = vmatpush2.bf16.msra.mxu0 0
        %486 = vmatprep.subr.bf16.mxu0 0
        %487 = vmatpush2.bf16.msra.mxu0 0
        %488 = vmatprep.subr.bf16.mxu0 0
        %489 = vmatpush2.bf16.msra.mxu0 0
        %490 = vmatprep.subr.bf16.mxu0 0
        %491 = vmatpush2.bf16.msra.mxu0 0
        %492 = vmatprep.mubr.bf16.mxu0 0
        %493 = vmatmul.mubr.bf16.gmra.mxu0 %v411
        %v494 = vpop.f32.mrf.mxu0
        %v495 = vadd.f32 0.0, %v494
        %v496 = vpop.f32.mrf.mxu0
        %v497 = vpop.f32.mrf.mxu0
        %v498 = vpop.f32.mrf.mxu0
        %499 = vdwg.mxu0
        %v500 = vadd.f32 %v389, %v495
        %v501 = vld [vmem:[%s181 + $0x3] sm:$0xff]
        %v502 = vld [vmem:[%s1 + $0xc0] sm:$0xf]
        %v503 = vld [vmem:[%s1 + $0xc4] sm:$0xf]
        %v504 = vld [vmem:[%s1 + $0xc8] sm:$0xf]
        %v505 = vld [vmem:[%s1 + $0xcc] sm:$0xf]
        %v506 = vld [vmem:[%s1 + $0xd0] sm:$0xf]
        %v507 = vld [vmem:[%s1 + $0xd4] sm:$0xf]
        %v508 = vld [vmem:[%s1 + $0xd8] sm:$0xf]
        %v509 = vld [vmem:[%s1 + $0xdc] sm:$0xf]
        %v510 = vld [vmem:[%s1 + $0xe0] sm:$0xf]
        %v511 = vld [vmem:[%s1 + $0xe4] sm:$0xf]
        %v512 = vld [vmem:[%s1 + $0xe8] sm:$0xf]
        %v513 = vld [vmem:[%s1 + $0xec] sm:$0xf]
        %v514 = vld [vmem:[%s1 + $0xf0] sm:$0xf]
        %v515 = vld [vmem:[%s1 + $0xf4] sm:$0xf]
        %v516 = vld [vmem:[%s1 + $0xf8] sm:$0xf]
        %v517 = vld [vmem:[%s1 + $0xfc] sm:$0xf]
        %v518 = vpack.c.bf16 %v501, %v501
        %v535 = vunpack.c.l.b16 %v502
        %v536 = vunpack.c.l.b16 %v503
        %v537 = vunpack.c.l.b16 %v504
        %v538 = vunpack.c.l.b16 %v505
        %v539 = vunpack.c.l.b16 %v506
        %v540 = vunpack.c.l.b16 %v507
        %v541 = vunpack.c.l.b16 %v508
        %v542 = vunpack.c.l.b16 %v509
        %v543 = vunpack.c.l.b16 %v510
        %v544 = vunpack.c.l.b16 %v511
        %v545 = vunpack.c.l.b16 %v512
        %v546 = vunpack.c.l.b16 %v513
        %v547 = vunpack.c.l.b16 %v514
        %v548 = vunpack.c.l.b16 %v515
        %v549 = vunpack.c.l.b16 %v516
        %v550 = vunpack.c.l.b16 %v517
        %v551 = vpack.c.b16 %v536, %v535
        %v552 = vpack.c.b16 %v538, %v537
        %v553 = vpack.c.b16 %v540, %v539
        %v554 = vpack.c.b16 %v542, %v541
        %v555 = vpack.c.b16 %v544, %v543
        %v556 = vpack.c.b16 %v546, %v545
        %v557 = vpack.c.b16 %v548, %v547
        %v558 = vpack.c.b16 %v550, %v549
        %567 = vmatprep.subr.bf16.mxu0 0
        %568 = vmatpush1.bf16.msra.mxu0 %v558
        %569 = vmatprep.subr.bf16.mxu0 0
        %570 = vmatpush1.bf16.msra.mxu0 %v557
        %571 = vmatprep.subr.bf16.mxu0 0
        %572 = vmatpush1.bf16.msra.mxu0 %v556
        %573 = vmatprep.subr.bf16.mxu0 0
        %574 = vmatpush1.bf16.msra.mxu0 %v555
        %575 = vmatprep.subr.bf16.mxu0 0
        %576 = vmatpush1.bf16.msra.mxu0 %v554
        %577 = vmatprep.subr.bf16.mxu0 0
        %578 = vmatpush1.bf16.msra.mxu0 %v553
        %579 = vmatprep.subr.bf16.mxu0 0
        %580 = vmatpush1.bf16.msra.mxu0 %v552
        %581 = vmatprep.subr.bf16.mxu0 0
        %582 = vmatpush1.bf16.msra.mxu0 %v551
        %583 = vmatprep.subr.bf16.mxu0 0
        %584 = vmatpush2.bf16.msra.mxu0 0
        %585 = vmatprep.subr.bf16.mxu0 0
        %586 = vmatpush2.bf16.msra.mxu0 0
        %587 = vmatprep.subr.bf16.mxu0 0
        %588 = vmatpush2.bf16.msra.mxu0 0
        %589 = vmatprep.subr.bf16.mxu0 0
        %590 = vmatpush2.bf16.msra.mxu0 0
        %591 = vmatprep.subr.bf16.mxu0 0
        %592 = vmatpush2.bf16.msra.mxu0 0
        %593 = vmatprep.subr.bf16.mxu0 0
        %594 = vmatpush2.bf16.msra.mxu0 0
        %595 = vmatprep.subr.bf16.mxu0 0
        %596 = vmatpush2.bf16.msra.mxu0 0
        %597 = vmatprep.subr.bf16.mxu0 0
        %598 = vmatpush2.bf16.msra.mxu0 0
        %599 = vmatprep.mubr.bf16.mxu0 0
        %600 = vmatmul.mubr.bf16.gmra.mxu0 %v518
        %v601 = vpop.f32.mrf.mxu0
        %v602 = vadd.f32 0.0, %v601
        %v603 = vpop.f32.mrf.mxu0
        %v604 = vpop.f32.mrf.mxu0
        %v605 = vpop.f32.mrf.mxu0
        %606 = vdwg.mxu0
        %v607 = vadd.f32 %v500, %v602
        %v608 = vld [vmem:[%s181 + $0x4] sm:$0xff]
        %v609 = vld [vmem:[%s1 + $0x100] sm:$0xf]
        %v610 = vld [vmem:[%s1 + $0x104] sm:$0xf]
        %v611 = vld [vmem:[%s1 + $0x108] sm:$0xf]
        %v612 = vld [vmem:[%s1 + $0x10c] sm:$0xf]
        %v613 = vld [vmem:[%s1 + $0x110] sm:$0xf]
        %v614 = vld [vmem:[%s1 + $0x114] sm:$0xf]
        %v615 = vld [vmem:[%s1 + $0x118] sm:$0xf]
        %v616 = vld [vmem:[%s1 + $0x11c] sm:$0xf]
        %v617 = vld [vmem:[%s1 + $0x120] sm:$0xf]
        %v618 = vld [vmem:[%s1 + $0x124] sm:$0xf]
        %v619 = vld [vmem:[%s1 + $0x128] sm:$0xf]
        %v620 = vld [vmem:[%s1 + $0x12c] sm:$0xf]
        %v621 = vld [vmem:[%s1 + $0x130] sm:$0xf]
        %v622 = vld [vmem:[%s1 + $0x134] sm:$0xf]
        %v623 = vld [vmem:[%s1 + $0x138] sm:$0xf]
        %v624 = vld [vmem:[%s1 + $0x13c] sm:$0xf]
        %v625 = vpack.c.bf16 %v608, %v608
        %v642 = vunpack.c.l.b16 %v609
        %v643 = vunpack.c.l.b16 %v610
        %v644 = vunpack.c.l.b16 %v611
        %v645 = vunpack.c.l.b16 %v612
        %v646 = vunpack.c.l.b16 %v613
        %v647 = vunpack.c.l.b16 %v614
        %v648 = vunpack.c.l.b16 %v615
        %v649 = vunpack.c.l.b16 %v616
        %v650 = vunpack.c.l.b16 %v617
        %v651 = vunpack.c.l.b16 %v618
        %v652 = vunpack.c.l.b16 %v619
        %v653 = vunpack.c.l.b16 %v620
        %v654 = vunpack.c.l.b16 %v621
        %v655 = vunpack.c.l.b16 %v622
        %v656 = vunpack.c.l.b16 %v623
        %v657 = vunpack.c.l.b16 %v624
        %v658 = vpack.c.b16 %v643, %v642
        %v659 = vpack.c.b16 %v645, %v644
        %v660 = vpack.c.b16 %v647, %v646
        %v661 = vpack.c.b16 %v649, %v648
        %v662 = vpack.c.b16 %v651, %v650
        %v663 = vpack.c.b16 %v653, %v652
        %v664 = vpack.c.b16 %v655, %v654
        %v665 = vpack.c.b16 %v657, %v656
        %674 = vmatprep.subr.bf16.mxu0 0
        %675 = vmatpush1.bf16.msra.mxu0 %v665
        %676 = vmatprep.subr.bf16.mxu0 0
        %677 = vmatpush1.bf16.msra.mxu0 %v664
        %678 = vmatprep.subr.bf16.mxu0 0
        %679 = vmatpush1.bf16.msra.mxu0 %v663
        %680 = vmatprep.subr.bf16.mxu0 0
        %681 = vmatpush1.bf16.msra.mxu0 %v662
        %682 = vmatprep.subr.bf16.mxu0 0
        %683 = vmatpush1.bf16.msra.mxu0 %v661
        %684 = vmatprep.subr.bf16.mxu0 0
        %685 = vmatpush1.bf16.msra.mxu0 %v660
        %686 = vmatprep.subr.bf16.mxu0 0
        %687 = vmatpush1.bf16.msra.mxu0 %v659
        %688 = vmatprep.subr.bf16.mxu0 0
        %689 = vmatpush1.bf16.msra.mxu0 %v658
        %690 = vmatprep.subr.bf16.mxu0 0
        %691 = vmatpush2.bf16.msra.mxu0 0
        %692 = vmatprep.subr.bf16.mxu0 0
        %693 = vmatpush2.bf16.msra.mxu0 0
        %694 = vmatprep.subr.bf16.mxu0 0
        %695 = vmatpush2.bf16.msra.mxu0 0
        %696 = vmatprep.subr.bf16.mxu0 0
        %697 = vmatpush2.bf16.msra.mxu0 0
        %698 = vmatprep.subr.bf16.mxu0 0
        %699 = vmatpush2.bf16.msra.mxu0 0
        %700 = vmatprep.subr.bf16.mxu0 0
        %701 = vmatpush2.bf16.msra.mxu0 0
        %702 = vmatprep.subr.bf16.mxu0 0
        %703 = vmatpush2.bf16.msra.mxu0 0
        %704 = vmatprep.subr.bf16.mxu0 0
        %705 = vmatpush2.bf16.msra.mxu0 0
        %706 = vmatprep.mubr.bf16.mxu0 0
        %707 = vmatmul.mubr.bf16.gmra.mxu0 %v625
        %v708 = vpop.f32.mrf.mxu0
        %v709 = vadd.f32 0.0, %v708
        %v710 = vpop.f32.mrf.mxu0
        %v711 = vpop.f32.mrf.mxu0
        %v712 = vpop.f32.mrf.mxu0
        %713 = vdwg.mxu0
        %v714 = vadd.f32 %v607, %v709
        %s715 = sadd.s32 %s179, 1
        %s716 = smul.u32 %s715, 16
        %s717 = scalar_lea.vmem %s165, %s716
        %v718 = vld [vmem:[%s717] sm:$0xff]
        %v719 = vld [vmem:[%s1 + $0x140] sm:$0xf]
        %v720 = vld [vmem:[%s1 + $0x144] sm:$0xf]
        %v721 = vld [vmem:[%s1 + $0x148] sm:$0xf]
        %v722 = vld [vmem:[%s1 + $0x14c] sm:$0xf]
        %v723 = vld [vmem:[%s1 + $0x150] sm:$0xf]
        %v724 = vld [vmem:[%s1 + $0x154] sm:$0xf]
        %v725 = vld [vmem:[%s1 + $0x158] sm:$0xf]
        %v726 = vld [vmem:[%s1 + $0x15c] sm:$0xf]
        %v727 = vld [vmem:[%s1 + $0x160] sm:$0xf]
        %v728 = vld [vmem:[%s1 + $0x164] sm:$0xf]
        %v729 = vld [vmem:[%s1 + $0x168] sm:$0xf]
        %v730 = vld [vmem:[%s1 + $0x16c] sm:$0xf]
        %v731 = vld [vmem:[%s1 + $0x170] sm:$0xf]
        %v732 = vld [vmem:[%s1 + $0x174] sm:$0xf]
        %v733 = vld [vmem:[%s1 + $0x178] sm:$0xf]
        %v734 = vld [vmem:[%s1 + $0x17c] sm:$0xf]
        %v735 = vpack.c.bf16 %v718, %v718
        %v752 = vunpack.c.l.b16 %v719
        %v753 = vunpack.c.l.b16 %v720
        %v754 = vunpack.c.l.b16 %v721
        %v755 = vunpack.c.l.b16 %v722
        %v756 = vunpack.c.l.b16 %v723
        %v757 = vunpack.c.l.b16 %v724
        %v758 = vunpack.c.l.b16 %v725
        %v759 = vunpack.c.l.b16 %v726
        %v760 = vunpack.c.l.b16 %v727
        %v761 = vunpack.c.l.b16 %v728
        %v762 = vunpack.c.l.b16 %v729
        %v763 = vunpack.c.l.b16 %v730
        %v764 = vunpack.c.l.b16 %v731
        %v765 = vunpack.c.l.b16 %v732
        %v766 = vunpack.c.l.b16 %v733
        %v767 = vunpack.c.l.b16 %v734
        %v768 = vpack.c.b16 %v753, %v752
        %v769 = vpack.c.b16 %v755, %v754
        %v770 = vpack.c.b16 %v757, %v756
        %v771 = vpack.c.b16 %v759, %v758
        %v772 = vpack.c.b16 %v761, %v760
        %v773 = vpack.c.b16 %v763, %v762
        %v774 = vpack.c.b16 %v765, %v764
        %v775 = vpack.c.b16 %v767, %v766
        %784 = vmatprep.subr.bf16.mxu0 0
        %785 = vmatpush1.bf16.msra.mxu0 %v775
        %786 = vmatprep.subr.bf16.mxu0 0
        %787 = vmatpush1.bf16.msra.mxu0 %v774
        %788 = vmatprep.subr.bf16.mxu0 0
        %789 = vmatpush1.bf16.msra.mxu0 %v773
        %790 = vmatprep.subr.bf16.mxu0 0
        %791 = vmatpush1.bf16.msra.mxu0 %v772
        %792 = vmatprep.subr.bf16.mxu0 0
        %793 = vmatpush1.bf16.msra.mxu0 %v771
        %794 = vmatprep.subr.bf16.mxu0 0
        %795 = vmatpush1.bf16.msra.mxu0 %v770
        %796 = vmatprep.subr.bf16.mxu0 0
        %797 = vmatpush1.bf16.msra.mxu0 %v769
        %798 = vmatprep.subr.bf16.mxu0 0
        %799 = vmatpush1.bf16.msra.mxu0 %v768
        %800 = vmatprep.subr.bf16.mxu0 0
        %801 = vmatpush2.bf16.msra.mxu0 0
        %802 = vmatprep.subr.bf16.mxu0 0
        %803 = vmatpush2.bf16.msra.mxu0 0
        %804 = vmatprep.subr.bf16.mxu0 0
        %805 = vmatpush2.bf16.msra.mxu0 0
        %806 = vmatprep.subr.bf16.mxu0 0
        %807 = vmatpush2.bf16.msra.mxu0 0
        %808 = vmatprep.subr.bf16.mxu0 0
        %809 = vmatpush2.bf16.msra.mxu0 0
        %810 = vmatprep.subr.bf16.mxu0 0
        %811 = vmatpush2.bf16.msra.mxu0 0
        %812 = vmatprep.subr.bf16.mxu0 0
        %813 = vmatpush2.bf16.msra.mxu0 0
        %814 = vmatprep.subr.bf16.mxu0 0
        %815 = vmatpush2.bf16.msra.mxu0 0
        %816 = vmatprep.mubr.bf16.mxu0 0
        %817 = vmatmul.mubr.bf16.gmra.mxu0 %v735
        %v818 = vpop.f32.mrf.mxu0
        %v819 = vadd.f32 0.0, %v818
        %v820 = vpop.f32.mrf.mxu0
        %v821 = vpop.f32.mrf.mxu0
        %v822 = vpop.f32.mrf.mxu0
        %823 = vdwg.mxu0
        %v824 = vadd.f32 %v714, %v819
        %v825 = vld [vmem:[%s717 + $0x1] sm:$0xff]
        %v826 = vld [vmem:[%s1 + $0x180] sm:$0xf]
        %v827 = vld [vmem:[%s1 + $0x184] sm:$0xf]
        %v828 = vld [vmem:[%s1 + $0x188] sm:$0xf]
        %v829 = vld [vmem:[%s1 + $0x18c] sm:$0xf]
        %v830 = vld [vmem:[%s1 + $0x190] sm:$0xf]
        %v831 = vld [vmem:[%s1 + $0x194] sm:$0xf]
        %v832 = vld [vmem:[%s1 + $0x198] sm:$0xf]
        %v833 = vld [vmem:[%s1 + $0x19c] sm:$0xf]
        %v834 = vld [vmem:[%s1 + $0x1a0] sm:$0xf]
        %v835 = vld [vmem:[%s1 + $0x1a4] sm:$0xf]
        %v836 = vld [vmem:[%s1 + $0x1a8] sm:$0xf]
        %v837 = vld [vmem:[%s1 + $0x1ac] sm:$0xf]
        %v838 = vld [vmem:[%s1 + $0x1b0] sm:$0xf]
        %v839 = vld [vmem:[%s1 + $0x1b4] sm:$0xf]
        %v840 = vld [vmem:[%s1 + $0x1b8] sm:$0xf]
        %v841 = vld [vmem:[%s1 + $0x1bc] sm:$0xf]
        %v842 = vpack.c.bf16 %v825, %v825
        %v859 = vunpack.c.l.b16 %v826
        %v860 = vunpack.c.l.b16 %v827
        %v861 = vunpack.c.l.b16 %v828
        %v862 = vunpack.c.l.b16 %v829
        %v863 = vunpack.c.l.b16 %v830
        %v864 = vunpack.c.l.b16 %v831
        %v865 = vunpack.c.l.b16 %v832
        %v866 = vunpack.c.l.b16 %v833
        %v867 = vunpack.c.l.b16 %v834
        %v868 = vunpack.c.l.b16 %v835
        %v869 = vunpack.c.l.b16 %v836
        %v870 = vunpack.c.l.b16 %v837
        %v871 = vunpack.c.l.b16 %v838
        %v872 = vunpack.c.l.b16 %v839
        %v873 = vunpack.c.l.b16 %v840
        %v874 = vunpack.c.l.b16 %v841
        %v875 = vpack.c.b16 %v860, %v859
        %v876 = vpack.c.b16 %v862, %v861
        %v877 = vpack.c.b16 %v864, %v863
        %v878 = vpack.c.b16 %v866, %v865
        %v879 = vpack.c.b16 %v868, %v867
        %v880 = vpack.c.b16 %v870, %v869
        %v881 = vpack.c.b16 %v872, %v871
        %v882 = vpack.c.b16 %v874, %v873
        %891 = vmatprep.subr.bf16.mxu0 0
        %892 = vmatpush1.bf16.msra.mxu0 %v882
        %893 = vmatprep.subr.bf16.mxu0 0
        %894 = vmatpush1.bf16.msra.mxu0 %v881
        %895 = vmatprep.subr.bf16.mxu0 0
        %896 = vmatpush1.bf16.msra.mxu0 %v880
        %897 = vmatprep.subr.bf16.mxu0 0
        %898 = vmatpush1.bf16.msra.mxu0 %v879
        %899 = vmatprep.subr.bf16.mxu0 0
        %900 = vmatpush1.bf16.msra.mxu0 %v878
        %901 = vmatprep.subr.bf16.mxu0 0
        %902 = vmatpush1.bf16.msra.mxu0 %v877
        %903 = vmatprep.subr.bf16.mxu0 0
        %904 = vmatpush1.bf16.msra.mxu0 %v876
        %905 = vmatprep.subr.bf16.mxu0 0
        %906 = vmatpush1.bf16.msra.mxu0 %v875
        %907 = vmatprep.subr.bf16.mxu0 0
        %908 = vmatpush2.bf16.msra.mxu0 0
        %909 = vmatprep.subr.bf16.mxu0 0
        %910 = vmatpush2.bf16.msra.mxu0 0
        %911 = vmatprep.subr.bf16.mxu0 0
        %912 = vmatpush2.bf16.msra.mxu0 0
        %913 = vmatprep.subr.bf16.mxu0 0
        %914 = vmatpush2.bf16.msra.mxu0 0
        %915 = vmatprep.subr.bf16.mxu0 0
        %916 = vmatpush2.bf16.msra.mxu0 0
        %917 = vmatprep.subr.bf16.mxu0 0
        %918 = vmatpush2.bf16.msra.mxu0 0
        %919 = vmatprep.subr.bf16.mxu0 0
        %920 = vmatpush2.bf16.msra.mxu0 0
        %921 = vmatprep.subr.bf16.mxu0 0
        %922 = vmatpush2.bf16.msra.mxu0 0
        %923 = vmatprep.mubr.bf16.mxu0 0
        %924 = vmatmul.mubr.bf16.gmra.mxu0 %v842
        %v925 = vpop.f32.mrf.mxu0
        %v926 = vadd.f32 0.0, %v925
        %v927 = vpop.f32.mrf.mxu0
        %v928 = vpop.f32.mrf.mxu0
        %v929 = vpop.f32.mrf.mxu0
        %930 = vdwg.mxu0
        %v931 = vadd.f32 %v824, %v926
        %v932 = vld [vmem:[%s717 + $0x2] sm:$0xff]
        %v933 = vld [vmem:[%s1 + $0x1c0] sm:$0xf]
        %v934 = vld [vmem:[%s1 + $0x1c4] sm:$0xf]
        %v935 = vld [vmem:[%s1 + $0x1c8] sm:$0xf]
        %v936 = vld [vmem:[%s1 + $0x1cc] sm:$0xf]
        %v937 = vld [vmem:[%s1 + $0x1d0] sm:$0xf]
        %v938 = vld [vmem:[%s1 + $0x1d4] sm:$0xf]
        %v939 = vld [vmem:[%s1 + $0x1d8] sm:$0xf]
        %v940 = vld [vmem:[%s1 + $0x1dc] sm:$0xf]
        %v941 = vld [vmem:[%s1 + $0x1e0] sm:$0xf]
        %v942 = vld [vmem:[%s1 + $0x1e4] sm:$0xf]
        %v943 = vld [vmem:[%s1 + $0x1e8] sm:$0xf]
        %v944 = vld [vmem:[%s1 + $0x1ec] sm:$0xf]
        %v945 = vld [vmem:[%s1 + $0x1f0] sm:$0xf]
        %v946 = vld [vmem:[%s1 + $0x1f4] sm:$0xf]
        %v947 = vld [vmem:[%s1 + $0x1f8] sm:$0xf]
        %v948 = vld [vmem:[%s1 + $0x1fc] sm:$0xf]
        %v949 = vpack.c.bf16 %v932, %v932
        %v966 = vunpack.c.l.b16 %v933
        %v967 = vunpack.c.l.b16 %v934
        %v968 = vunpack.c.l.b16 %v935
        %v969 = vunpack.c.l.b16 %v936
        %v970 = vunpack.c.l.b16 %v937
        %v971 = vunpack.c.l.b16 %v938
        %v972 = vunpack.c.l.b16 %v939
        %v973 = vunpack.c.l.b16 %v940
        %v974 = vunpack.c.l.b16 %v941
        %v975 = vunpack.c.l.b16 %v942
        %v976 = vunpack.c.l.b16 %v943
        %v977 = vunpack.c.l.b16 %v944
        %v978 = vunpack.c.l.b16 %v945
        %v979 = vunpack.c.l.b16 %v946
        %v980 = vunpack.c.l.b16 %v947
        %v981 = vunpack.c.l.b16 %v948
        %v982 = vpack.c.b16 %v967, %v966
        %v983 = vpack.c.b16 %v969, %v968
        %v984 = vpack.c.b16 %v971, %v970
        %v985 = vpack.c.b16 %v973, %v972
        %v986 = vpack.c.b16 %v975, %v974
        %v987 = vpack.c.b16 %v977, %v976
        %v988 = vpack.c.b16 %v979, %v978
        %v989 = vpack.c.b16 %v981, %v980
        %998 = vmatprep.subr.bf16.mxu0 0
        %999 = vmatpush1.bf16.msra.mxu0 %v989
        %1000 = vmatprep.subr.bf16.mxu0 0
        %1001 = vmatpush1.bf16.msra.mxu0 %v988
        %1002 = vmatprep.subr.bf16.mxu0 0
        %1003 = vmatpush1.bf16.msra.mxu0 %v987
        %1004 = vmatprep.subr.bf16.mxu0 0
        %1005 = vmatpush1.bf16.msra.mxu0 %v986
        %1006 = vmatprep.subr.bf16.mxu0 0
        %1007 = vmatpush1.bf16.msra.mxu0 %v985
        %1008 = vmatprep.subr.bf16.mxu0 0
        %1009 = vmatpush1.bf16.msra.mxu0 %v984
        %1010 = vmatprep.subr.bf16.mxu0 0
        %1011 = vmatpush1.bf16.msra.mxu0 %v983
        %1012 = vmatprep.subr.bf16.mxu0 0
        %1013 = vmatpush1.bf16.msra.mxu0 %v982
        %1014 = vmatprep.subr.bf16.mxu0 0
        %1015 = vmatpush2.bf16.msra.mxu0 0
        %1016 = vmatprep.subr.bf16.mxu0 0
        %1017 = vmatpush2.bf16.msra.mxu0 0
        %1018 = vmatprep.subr.bf16.mxu0 0
        %1019 = vmatpush2.bf16.msra.mxu0 0
        %1020 = vmatprep.subr.bf16.mxu0 0
        %1021 = vmatpush2.bf16.msra.mxu0 0
        %1022 = vmatprep.subr.bf16.mxu0 0
        %1023 = vmatpush2.bf16.msra.mxu0 0
        %1024 = vmatprep.subr.bf16.mxu0 0
        %1025 = vmatpush2.bf16.msra.mxu0 0
        %1026 = vmatprep.subr.bf16.mxu0 0
        %1027 = vmatpush2.bf16.msra.mxu0 0
        %1028 = vmatprep.subr.bf16.mxu0 0
        %1029 = vmatpush2.bf16.msra.mxu0 0
        %1030 = vmatprep.mubr.bf16.mxu0 0
        %1031 = vmatmul.mubr.bf16.gmra.mxu0 %v949
        %v1032 = vpop.f32.mrf.mxu0
        %v1033 = vadd.f32 0.0, %v1032
        %v1034 = vpop.f32.mrf.mxu0
        %v1035 = vpop.f32.mrf.mxu0
        %v1036 = vpop.f32.mrf.mxu0
        %1037 = vdwg.mxu0
        %v1038 = vadd.f32 %v931, %v1033
        %v1039 = vld [vmem:[%s717 + $0x3] sm:$0xff]
        %v1040 = vld [vmem:[%s1 + $0x200] sm:$0xf]
        %v1041 = vld [vmem:[%s1 + $0x204] sm:$0xf]
        %v1042 = vld [vmem:[%s1 + $0x208] sm:$0xf]
        %v1043 = vld [vmem:[%s1 + $0x20c] sm:$0xf]
        %v1044 = vld [vmem:[%s1 + $0x210] sm:$0xf]
        %v1045 = vld [vmem:[%s1 + $0x214] sm:$0xf]
        %v1046 = vld [vmem:[%s1 + $0x218] sm:$0xf]
        %v1047 = vld [vmem:[%s1 + $0x21c] sm:$0xf]
        %v1048 = vld [vmem:[%s1 + $0x220] sm:$0xf]
        %v1049 = vld [vmem:[%s1 + $0x224] sm:$0xf]
        %v1050 = vld [vmem:[%s1 + $0x228] sm:$0xf]
        %v1051 = vld [vmem:[%s1 + $0x22c] sm:$0xf]
        %v1052 = vld [vmem:[%s1 + $0x230] sm:$0xf]
        %v1053 = vld [vmem:[%s1 + $0x234] sm:$0xf]
        %v1054 = vld [vmem:[%s1 + $0x238] sm:$0xf]
        %v1055 = vld [vmem:[%s1 + $0x23c] sm:$0xf]
        %v1056 = vpack.c.bf16 %v1039, %v1039
        %v1073 = vunpack.c.l.b16 %v1040
        %v1074 = vunpack.c.l.b16 %v1041
        %v1075 = vunpack.c.l.b16 %v1042
        %v1076 = vunpack.c.l.b16 %v1043
        %v1077 = vunpack.c.l.b16 %v1044
        %v1078 = vunpack.c.l.b16 %v1045
        %v1079 = vunpack.c.l.b16 %v1046
        %v1080 = vunpack.c.l.b16 %v1047
        %v1081 = vunpack.c.l.b16 %v1048
        %v1082 = vunpack.c.l.b16 %v1049
        %v1083 = vunpack.c.l.b16 %v1050
        %v1084 = vunpack.c.l.b16 %v1051
        %v1085 = vunpack.c.l.b16 %v1052
        %v1086 = vunpack.c.l.b16 %v1053
        %v1087 = vunpack.c.l.b16 %v1054
        %v1088 = vunpack.c.l.b16 %v1055
        %v1089 = vpack.c.b16 %v1074, %v1073
        %v1090 = vpack.c.b16 %v1076, %v1075
        %v1091 = vpack.c.b16 %v1078, %v1077
        %v1092 = vpack.c.b16 %v1080, %v1079
        %v1093 = vpack.c.b16 %v1082, %v1081
        %v1094 = vpack.c.b16 %v1084, %v1083
        %v1095 = vpack.c.b16 %v1086, %v1085
        %v1096 = vpack.c.b16 %v1088, %v1087
        %1105 = vmatprep.subr.bf16.mxu0 0
        %1106 = vmatpush1.bf16.msra.mxu0 %v1096
        %1107 = vmatprep.subr.bf16.mxu0 0
        %1108 = vmatpush1.bf16.msra.mxu0 %v1095
        %1109 = vmatprep.subr.bf16.mxu0 0
        %1110 = vmatpush1.bf16.msra.mxu0 %v1094
        %1111 = vmatprep.subr.bf16.mxu0 0
        %1112 = vmatpush1.bf16.msra.mxu0 %v1093
        %1113 = vmatprep.subr.bf16.mxu0 0
        %1114 = vmatpush1.bf16.msra.mxu0 %v1092
        %1115 = vmatprep.subr.bf16.mxu0 0
        %1116 = vmatpush1.bf16.msra.mxu0 %v1091
        %1117 = vmatprep.subr.bf16.mxu0 0
        %1118 = vmatpush1.bf16.msra.mxu0 %v1090
        %1119 = vmatprep.subr.bf16.mxu0 0
        %1120 = vmatpush1.bf16.msra.mxu0 %v1089
        %1121 = vmatprep.subr.bf16.mxu0 0
        %1122 = vmatpush2.bf16.msra.mxu0 0
        %1123 = vmatprep.subr.bf16.mxu0 0
        %1124 = vmatpush2.bf16.msra.mxu0 0
        %1125 = vmatprep.subr.bf16.mxu0 0
        %1126 = vmatpush2.bf16.msra.mxu0 0
        %1127 = vmatprep.subr.bf16.mxu0 0
        %1128 = vmatpush2.bf16.msra.mxu0 0
        %1129 = vmatprep.subr.bf16.mxu0 0
        %1130 = vmatpush2.bf16.msra.mxu0 0
        %1131 = vmatprep.subr.bf16.mxu0 0
        %1132 = vmatpush2.bf16.msra.mxu0 0
        %1133 = vmatprep.subr.bf16.mxu0 0
        %1134 = vmatpush2.bf16.msra.mxu0 0
        %1135 = vmatprep.subr.bf16.mxu0 0
        %1136 = vmatpush2.bf16.msra.mxu0 0
        %1137 = vmatprep.mubr.bf16.mxu0 0
        %1138 = vmatmul.mubr.bf16.gmra.mxu0 %v1056
        %v1139 = vpop.f32.mrf.mxu0
        %v1140 = vadd.f32 0.0, %v1139
        %v1141 = vpop.f32.mrf.mxu0
        %v1142 = vpop.f32.mrf.mxu0
        %v1143 = vpop.f32.mrf.mxu0
        %1144 = vdwg.mxu0
        %v1145 = vadd.f32 %v1038, %v1140
        %v1146 = vld [vmem:[%s717 + $0x4] sm:$0xff]
        %v1147 = vld [vmem:[%s1 + $0x240] sm:$0xf]
        %v1148 = vld [vmem:[%s1 + $0x244] sm:$0xf]
        %v1149 = vld [vmem:[%s1 + $0x248] sm:$0xf]
        %v1150 = vld [vmem:[%s1 + $0x24c] sm:$0xf]
        %v1151 = vld [vmem:[%s1 + $0x250] sm:$0xf]
        %v1152 = vld [vmem:[%s1 + $0x254] sm:$0xf]
        %v1153 = vld [vmem:[%s1 + $0x258] sm:$0xf]
        %v1154 = vld [vmem:[%s1 + $0x25c] sm:$0xf]
        %v1155 = vld [vmem:[%s1 + $0x260] sm:$0xf]
        %v1156 = vld [vmem:[%s1 + $0x264] sm:$0xf]
        %v1157 = vld [vmem:[%s1 + $0x268] sm:$0xf]
        %v1158 = vld [vmem:[%s1 + $0x26c] sm:$0xf]
        %v1159 = vld [vmem:[%s1 + $0x270] sm:$0xf]
        %v1160 = vld [vmem:[%s1 + $0x274] sm:$0xf]
        %v1161 = vld [vmem:[%s1 + $0x278] sm:$0xf]
        %v1162 = vld [vmem:[%s1 + $0x27c] sm:$0xf]
        %v1163 = vpack.c.bf16 %v1146, %v1146
        %v1180 = vunpack.c.l.b16 %v1147
        %v1181 = vunpack.c.l.b16 %v1148
        %v1182 = vunpack.c.l.b16 %v1149
        %v1183 = vunpack.c.l.b16 %v1150
        %v1184 = vunpack.c.l.b16 %v1151
        %v1185 = vunpack.c.l.b16 %v1152
        %v1186 = vunpack.c.l.b16 %v1153
        %v1187 = vunpack.c.l.b16 %v1154
        %v1188 = vunpack.c.l.b16 %v1155
        %v1189 = vunpack.c.l.b16 %v1156
        %v1190 = vunpack.c.l.b16 %v1157
        %v1191 = vunpack.c.l.b16 %v1158
        %v1192 = vunpack.c.l.b16 %v1159
        %v1193 = vunpack.c.l.b16 %v1160
        %v1194 = vunpack.c.l.b16 %v1161
        %v1195 = vunpack.c.l.b16 %v1162
        %v1196 = vpack.c.b16 %v1181, %v1180
        %v1197 = vpack.c.b16 %v1183, %v1182
        %v1198 = vpack.c.b16 %v1185, %v1184
        %v1199 = vpack.c.b16 %v1187, %v1186
        %v1200 = vpack.c.b16 %v1189, %v1188
        %v1201 = vpack.c.b16 %v1191, %v1190
        %v1202 = vpack.c.b16 %v1193, %v1192
        %v1203 = vpack.c.b16 %v1195, %v1194
        %1212 = vmatprep.subr.bf16.mxu0 0
        %1213 = vmatpush1.bf16.msra.mxu0 %v1203
        %1214 = vmatprep.subr.bf16.mxu0 0
        %1215 = vmatpush1.bf16.msra.mxu0 %v1202
        %1216 = vmatprep.subr.bf16.mxu0 0
        %1217 = vmatpush1.bf16.msra.mxu0 %v1201
        %1218 = vmatprep.subr.bf16.mxu0 0
        %1219 = vmatpush1.bf16.msra.mxu0 %v1200
        %1220 = vmatprep.subr.bf16.mxu0 0
        %1221 = vmatpush1.bf16.msra.mxu0 %v1199
        %1222 = vmatprep.subr.bf16.mxu0 0
        %1223 = vmatpush1.bf16.msra.mxu0 %v1198
        %1224 = vmatprep.subr.bf16.mxu0 0
        %1225 = vmatpush1.bf16.msra.mxu0 %v1197
        %1226 = vmatprep.subr.bf16.mxu0 0
        %1227 = vmatpush1.bf16.msra.mxu0 %v1196
        %1228 = vmatprep.subr.bf16.mxu0 0
        %1229 = vmatpush2.bf16.msra.mxu0 0
        %1230 = vmatprep.subr.bf16.mxu0 0
        %1231 = vmatpush2.bf16.msra.mxu0 0
        %1232 = vmatprep.subr.bf16.mxu0 0
        %1233 = vmatpush2.bf16.msra.mxu0 0
        %1234 = vmatprep.subr.bf16.mxu0 0
        %1235 = vmatpush2.bf16.msra.mxu0 0
        %1236 = vmatprep.subr.bf16.mxu0 0
        %1237 = vmatpush2.bf16.msra.mxu0 0
        %1238 = vmatprep.subr.bf16.mxu0 0
        %1239 = vmatpush2.bf16.msra.mxu0 0
        %1240 = vmatprep.subr.bf16.mxu0 0
        %1241 = vmatpush2.bf16.msra.mxu0 0
        %1242 = vmatprep.subr.bf16.mxu0 0
        %1243 = vmatpush2.bf16.msra.mxu0 0
        %1244 = vmatprep.mubr.bf16.mxu0 0
        %1245 = vmatmul.mubr.bf16.gmra.mxu0 %v1163
        %v1246 = vpop.f32.mrf.mxu0
        %v1247 = vadd.f32 0.0, %v1246
        %v1248 = vpop.f32.mrf.mxu0
        %v1249 = vpop.f32.mrf.mxu0
        %v1250 = vpop.f32.mrf.mxu0
        %1251 = vdwg.mxu0
        %v1252 = vadd.f32 %v1145, %v1247
        %s1253 = sadd.s32 %s179, 2
        %s1254 = smul.u32 %s1253, 16
        %s1255 = scalar_lea.vmem %s165, %s1254
        %v1256 = vld [vmem:[%s1255] sm:$0xff]
        %v1257 = vld [vmem:[%s1 + $0x280] sm:$0xf]
        %v1258 = vld [vmem:[%s1 + $0x284] sm:$0xf]
        %v1259 = vld [vmem:[%s1 + $0x288] sm:$0xf]
        %v1260 = vld [vmem:[%s1 + $0x28c] sm:$0xf]
        %v1261 = vld [vmem:[%s1 + $0x290] sm:$0xf]
        %v1262 = vld [vmem:[%s1 + $0x294] sm:$0xf]
        %v1263 = vld [vmem:[%s1 + $0x298] sm:$0xf]
        %v1264 = vld [vmem:[%s1 + $0x29c] sm:$0xf]
        %v1265 = vld [vmem:[%s1 + $0x2a0] sm:$0xf]
        %v1266 = vld [vmem:[%s1 + $0x2a4] sm:$0xf]
        %v1267 = vld [vmem:[%s1 + $0x2a8] sm:$0xf]
        %v1268 = vld [vmem:[%s1 + $0x2ac] sm:$0xf]
        %v1269 = vld [vmem:[%s1 + $0x2b0] sm:$0xf]
        %v1270 = vld [vmem:[%s1 + $0x2b4] sm:$0xf]
        %v1271 = vld [vmem:[%s1 + $0x2b8] sm:$0xf]
        %v1272 = vld [vmem:[%s1 + $0x2bc] sm:$0xf]
        %v1273 = vpack.c.bf16 %v1256, %v1256
        %v1290 = vunpack.c.l.b16 %v1257
        %v1291 = vunpack.c.l.b16 %v1258
        %v1292 = vunpack.c.l.b16 %v1259
        %v1293 = vunpack.c.l.b16 %v1260
        %v1294 = vunpack.c.l.b16 %v1261
        %v1295 = vunpack.c.l.b16 %v1262
        %v1296 = vunpack.c.l.b16 %v1263
        %v1297 = vunpack.c.l.b16 %v1264
        %v1298 = vunpack.c.l.b16 %v1265
        %v1299 = vunpack.c.l.b16 %v1266
        %v1300 = vunpack.c.l.b16 %v1267
        %v1301 = vunpack.c.l.b16 %v1268
        %v1302 = vunpack.c.l.b16 %v1269
        %v1303 = vunpack.c.l.b16 %v1270
        %v1304 = vunpack.c.l.b16 %v1271
        %v1305 = vunpack.c.l.b16 %v1272
        %v1306 = vpack.c.b16 %v1291, %v1290
        %v1307 = vpack.c.b16 %v1293, %v1292
        %v1308 = vpack.c.b16 %v1295, %v1294
        %v1309 = vpack.c.b16 %v1297, %v1296
        %v1310 = vpack.c.b16 %v1299, %v1298
        %v1311 = vpack.c.b16 %v1301, %v1300
        %v1312 = vpack.c.b16 %v1303, %v1302
        %v1313 = vpack.c.b16 %v1305, %v1304
        %1322 = vmatprep.subr.bf16.mxu0 0
        %1323 = vmatpush1.bf16.msra.mxu0 %v1313
        %1324 = vmatprep.subr.bf16.mxu0 0
        %1325 = vmatpush1.bf16.msra.mxu0 %v1312
        %1326 = vmatprep.subr.bf16.mxu0 0
        %1327 = vmatpush1.bf16.msra.mxu0 %v1311
        %1328 = vmatprep.subr.bf16.mxu0 0
        %1329 = vmatpush1.bf16.msra.mxu0 %v1310
        %1330 = vmatprep.subr.bf16.mxu0 0
        %1331 = vmatpush1.bf16.msra.mxu0 %v1309
        %1332 = vmatprep.subr.bf16.mxu0 0
        %1333 = vmatpush1.bf16.msra.mxu0 %v1308
        %1334 = vmatprep.subr.bf16.mxu0 0
        %1335 = vmatpush1.bf16.msra.mxu0 %v1307
        %1336 = vmatprep.subr.bf16.mxu0 0
        %1337 = vmatpush1.bf16.msra.mxu0 %v1306
        %1338 = vmatprep.subr.bf16.mxu0 0
        %1339 = vmatpush2.bf16.msra.mxu0 0
        %1340 = vmatprep.subr.bf16.mxu0 0
        %1341 = vmatpush2.bf16.msra.mxu0 0
        %1342 = vmatprep.subr.bf16.mxu0 0
        %1343 = vmatpush2.bf16.msra.mxu0 0
        %1344 = vmatprep.subr.bf16.mxu0 0
        %1345 = vmatpush2.bf16.msra.mxu0 0
        %1346 = vmatprep.subr.bf16.mxu0 0
        %1347 = vmatpush2.bf16.msra.mxu0 0
        %1348 = vmatprep.subr.bf16.mxu0 0
        %1349 = vmatpush2.bf16.msra.mxu0 0
        %1350 = vmatprep.subr.bf16.mxu0 0
        %1351 = vmatpush2.bf16.msra.mxu0 0
        %1352 = vmatprep.subr.bf16.mxu0 0
        %1353 = vmatpush2.bf16.msra.mxu0 0
        %1354 = vmatprep.mubr.bf16.mxu0 0
        %1355 = vmatmul.mubr.bf16.gmra.mxu0 %v1273
        %v1356 = vpop.f32.mrf.mxu0
        %v1357 = vadd.f32 0.0, %v1356
        %v1358 = vpop.f32.mrf.mxu0
        %v1359 = vpop.f32.mrf.mxu0
        %v1360 = vpop.f32.mrf.mxu0
        %1361 = vdwg.mxu0
        %v1362 = vadd.f32 %v1252, %v1357
        %v1363 = vld [vmem:[%s1255 + $0x1] sm:$0xff]
        %v1364 = vld [vmem:[%s1 + $0x2c0] sm:$0xf]
        %v1365 = vld [vmem:[%s1 + $0x2c4] sm:$0xf]
        %v1366 = vld [vmem:[%s1 + $0x2c8] sm:$0xf]
        %v1367 = vld [vmem:[%s1 + $0x2cc] sm:$0xf]
        %v1368 = vld [vmem:[%s1 + $0x2d0] sm:$0xf]
        %v1369 = vld [vmem:[%s1 + $0x2d4] sm:$0xf]
        %v1370 = vld [vmem:[%s1 + $0x2d8] sm:$0xf]
        %v1371 = vld [vmem:[%s1 + $0x2dc] sm:$0xf]
        %v1372 = vld [vmem:[%s1 + $0x2e0] sm:$0xf]
        %v1373 = vld [vmem:[%s1 + $0x2e4] sm:$0xf]
        %v1374 = vld [vmem:[%s1 + $0x2e8] sm:$0xf]
        %v1375 = vld [vmem:[%s1 + $0x2ec] sm:$0xf]
        %v1376 = vld [vmem:[%s1 + $0x2f0] sm:$0xf]
        %v1377 = vld [vmem:[%s1 + $0x2f4] sm:$0xf]
        %v1378 = vld [vmem:[%s1 + $0x2f8] sm:$0xf]
        %v1379 = vld [vmem:[%s1 + $0x2fc] sm:$0xf]
        %v1380 = vpack.c.bf16 %v1363, %v1363
        %v1397 = vunpack.c.l.b16 %v1364
        %v1398 = vunpack.c.l.b16 %v1365
        %v1399 = vunpack.c.l.b16 %v1366
        %v1400 = vunpack.c.l.b16 %v1367
        %v1401 = vunpack.c.l.b16 %v1368
        %v1402 = vunpack.c.l.b16 %v1369
        %v1403 = vunpack.c.l.b16 %v1370
        %v1404 = vunpack.c.l.b16 %v1371
        %v1405 = vunpack.c.l.b16 %v1372
        %v1406 = vunpack.c.l.b16 %v1373
        %v1407 = vunpack.c.l.b16 %v1374
        %v1408 = vunpack.c.l.b16 %v1375
        %v1409 = vunpack.c.l.b16 %v1376
        %v1410 = vunpack.c.l.b16 %v1377
        %v1411 = vunpack.c.l.b16 %v1378
        %v1412 = vunpack.c.l.b16 %v1379
        %v1413 = vpack.c.b16 %v1398, %v1397
        %v1414 = vpack.c.b16 %v1400, %v1399
        %v1415 = vpack.c.b16 %v1402, %v1401
        %v1416 = vpack.c.b16 %v1404, %v1403
        %v1417 = vpack.c.b16 %v1406, %v1405
        %v1418 = vpack.c.b16 %v1408, %v1407
        %v1419 = vpack.c.b16 %v1410, %v1409
        %v1420 = vpack.c.b16 %v1412, %v1411
        %1429 = vmatprep.subr.bf16.mxu0 0
        %1430 = vmatpush1.bf16.msra.mxu0 %v1420
        %1431 = vmatprep.subr.bf16.mxu0 0
        %1432 = vmatpush1.bf16.msra.mxu0 %v1419
        %1433 = vmatprep.subr.bf16.mxu0 0
        %1434 = vmatpush1.bf16.msra.mxu0 %v1418
        %1435 = vmatprep.subr.bf16.mxu0 0
        %1436 = vmatpush1.bf16.msra.mxu0 %v1417
        %1437 = vmatprep.subr.bf16.mxu0 0
        %1438 = vmatpush1.bf16.msra.mxu0 %v1416
        %1439 = vmatprep.subr.bf16.mxu0 0
        %1440 = vmatpush1.bf16.msra.mxu0 %v1415
        %1441 = vmatprep.subr.bf16.mxu0 0
        %1442 = vmatpush1.bf16.msra.mxu0 %v1414
        %1443 = vmatprep.subr.bf16.mxu0 0
        %1444 = vmatpush1.bf16.msra.mxu0 %v1413
        %1445 = vmatprep.subr.bf16.mxu0 0
        %1446 = vmatpush2.bf16.msra.mxu0 0
        %1447 = vmatprep.subr.bf16.mxu0 0
        %1448 = vmatpush2.bf16.msra.mxu0 0
        %1449 = vmatprep.subr.bf16.mxu0 0
        %1450 = vmatpush2.bf16.msra.mxu0 0
        %1451 = vmatprep.subr.bf16.mxu0 0
        %1452 = vmatpush2.bf16.msra.mxu0 0
        %1453 = vmatprep.subr.bf16.mxu0 0
        %1454 = vmatpush2.bf16.msra.mxu0 0
        %1455 = vmatprep.subr.bf16.mxu0 0
        %1456 = vmatpush2.bf16.msra.mxu0 0
        %1457 = vmatprep.subr.bf16.mxu0 0
        %1458 = vmatpush2.bf16.msra.mxu0 0
        %1459 = vmatprep.subr.bf16.mxu0 0
        %1460 = vmatpush2.bf16.msra.mxu0 0
        %1461 = vmatprep.mubr.bf16.mxu0 0
        %1462 = vmatmul.mubr.bf16.gmra.mxu0 %v1380
        %v1463 = vpop.f32.mrf.mxu0
        %v1464 = vadd.f32 0.0, %v1463
        %v1465 = vpop.f32.mrf.mxu0
        %v1466 = vpop.f32.mrf.mxu0
        %v1467 = vpop.f32.mrf.mxu0
        %1468 = vdwg.mxu0
        %v1469 = vadd.f32 %v1362, %v1464
        %v1470 = vld [vmem:[%s1255 + $0x2] sm:$0xff]
        %v1471 = vld [vmem:[%s1 + $0x300] sm:$0xf]
        %v1472 = vld [vmem:[%s1 + $0x304] sm:$0xf]
        %v1473 = vld [vmem:[%s1 + $0x308] sm:$0xf]
        %v1474 = vld [vmem:[%s1 + $0x30c] sm:$0xf]
        %v1475 = vld [vmem:[%s1 + $0x310] sm:$0xf]
        %v1476 = vld [vmem:[%s1 + $0x314] sm:$0xf]
        %v1477 = vld [vmem:[%s1 + $0x318] sm:$0xf]
        %v1478 = vld [vmem:[%s1 + $0x31c] sm:$0xf]
        %v1479 = vld [vmem:[%s1 + $0x320] sm:$0xf]
        %v1480 = vld [vmem:[%s1 + $0x324] sm:$0xf]
        %v1481 = vld [vmem:[%s1 + $0x328] sm:$0xf]
        %v1482 = vld [vmem:[%s1 + $0x32c] sm:$0xf]
        %v1483 = vld [vmem:[%s1 + $0x330] sm:$0xf]
        %v1484 = vld [vmem:[%s1 + $0x334] sm:$0xf]
        %v1485 = vld [vmem:[%s1 + $0x338] sm:$0xf]
        %v1486 = vld [vmem:[%s1 + $0x33c] sm:$0xf]
        %v1487 = vpack.c.bf16 %v1470, %v1470
        %v1504 = vunpack.c.l.b16 %v1471
        %v1505 = vunpack.c.l.b16 %v1472
        %v1506 = vunpack.c.l.b16 %v1473
        %v1507 = vunpack.c.l.b16 %v1474
        %v1508 = vunpack.c.l.b16 %v1475
        %v1509 = vunpack.c.l.b16 %v1476
        %v1510 = vunpack.c.l.b16 %v1477
        %v1511 = vunpack.c.l.b16 %v1478
        %v1512 = vunpack.c.l.b16 %v1479
        %v1513 = vunpack.c.l.b16 %v1480
        %v1514 = vunpack.c.l.b16 %v1481
        %v1515 = vunpack.c.l.b16 %v1482
        %v1516 = vunpack.c.l.b16 %v1483
        %v1517 = vunpack.c.l.b16 %v1484
        %v1518 = vunpack.c.l.b16 %v1485
        %v1519 = vunpack.c.l.b16 %v1486
        %v1520 = vpack.c.b16 %v1505, %v1504
        %v1521 = vpack.c.b16 %v1507, %v1506
        %v1522 = vpack.c.b16 %v1509, %v1508
        %v1523 = vpack.c.b16 %v1511, %v1510
        %v1524 = vpack.c.b16 %v1513, %v1512
        %v1525 = vpack.c.b16 %v1515, %v1514
        %v1526 = vpack.c.b16 %v1517, %v1516
        %v1527 = vpack.c.b16 %v1519, %v1518
        %1536 = vmatprep.subr.bf16.mxu0 0
        %1537 = vmatpush1.bf16.msra.mxu0 %v1527
        %1538 = vmatprep.subr.bf16.mxu0 0
        %1539 = vmatpush1.bf16.msra.mxu0 %v1526
        %1540 = vmatprep.subr.bf16.mxu0 0
        %1541 = vmatpush1.bf16.msra.mxu0 %v1525
        %1542 = vmatprep.subr.bf16.mxu0 0
        %1543 = vmatpush1.bf16.msra.mxu0 %v1524
        %1544 = vmatprep.subr.bf16.mxu0 0
        %1545 = vmatpush1.bf16.msra.mxu0 %v1523
        %1546 = vmatprep.subr.bf16.mxu0 0
        %1547 = vmatpush1.bf16.msra.mxu0 %v1522
        %1548 = vmatprep.subr.bf16.mxu0 0
        %1549 = vmatpush1.bf16.msra.mxu0 %v1521
        %1550 = vmatprep.subr.bf16.mxu0 0
        %1551 = vmatpush1.bf16.msra.mxu0 %v1520
        %1552 = vmatprep.subr.bf16.mxu0 0
        %1553 = vmatpush2.bf16.msra.mxu0 0
        %1554 = vmatprep.subr.bf16.mxu0 0
        %1555 = vmatpush2.bf16.msra.mxu0 0
        %1556 = vmatprep.subr.bf16.mxu0 0
        %1557 = vmatpush2.bf16.msra.mxu0 0
        %1558 = vmatprep.subr.bf16.mxu0 0
        %1559 = vmatpush2.bf16.msra.mxu0 0
        %1560 = vmatprep.subr.bf16.mxu0 0
        %1561 = vmatpush2.bf16.msra.mxu0 0
        %1562 = vmatprep.subr.bf16.mxu0 0
        %1563 = vmatpush2.bf16.msra.mxu0 0
        %1564 = vmatprep.subr.bf16.mxu0 0
        %1565 = vmatpush2.bf16.msra.mxu0 0
        %1566 = vmatprep.subr.bf16.mxu0 0
        %1567 = vmatpush2.bf16.msra.mxu0 0
        %1568 = vmatprep.mubr.bf16.mxu0 0
        %1569 = vmatmul.mubr.bf16.gmra.mxu0 %v1487
        %v1570 = vpop.f32.mrf.mxu0
        %v1571 = vadd.f32 0.0, %v1570
        %v1572 = vpop.f32.mrf.mxu0
        %v1573 = vpop.f32.mrf.mxu0
        %v1574 = vpop.f32.mrf.mxu0
        %1575 = vdwg.mxu0
        %v1576 = vadd.f32 %v1469, %v1571
        %v1577 = vld [vmem:[%s1255 + $0x3] sm:$0xff]
        %v1578 = vld [vmem:[%s1 + $0x340] sm:$0xf]
        %v1579 = vld [vmem:[%s1 + $0x344] sm:$0xf]
        %v1580 = vld [vmem:[%s1 + $0x348] sm:$0xf]
        %v1581 = vld [vmem:[%s1 + $0x34c] sm:$0xf]
        %v1582 = vld [vmem:[%s1 + $0x350] sm:$0xf]
        %v1583 = vld [vmem:[%s1 + $0x354] sm:$0xf]
        %v1584 = vld [vmem:[%s1 + $0x358] sm:$0xf]
        %v1585 = vld [vmem:[%s1 + $0x35c] sm:$0xf]
        %v1586 = vld [vmem:[%s1 + $0x360] sm:$0xf]
        %v1587 = vld [vmem:[%s1 + $0x364] sm:$0xf]
        %v1588 = vld [vmem:[%s1 + $0x368] sm:$0xf]
        %v1589 = vld [vmem:[%s1 + $0x36c] sm:$0xf]
        %v1590 = vld [vmem:[%s1 + $0x370] sm:$0xf]
        %v1591 = vld [vmem:[%s1 + $0x374] sm:$0xf]
        %v1592 = vld [vmem:[%s1 + $0x378] sm:$0xf]
        %v1593 = vld [vmem:[%s1 + $0x37c] sm:$0xf]
        %v1594 = vpack.c.bf16 %v1577, %v1577
        %v1611 = vunpack.c.l.b16 %v1578
        %v1612 = vunpack.c.l.b16 %v1579
        %v1613 = vunpack.c.l.b16 %v1580
        %v1614 = vunpack.c.l.b16 %v1581
        %v1615 = vunpack.c.l.b16 %v1582
        %v1616 = vunpack.c.l.b16 %v1583
        %v1617 = vunpack.c.l.b16 %v1584
        %v1618 = vunpack.c.l.b16 %v1585
        %v1619 = vunpack.c.l.b16 %v1586
        %v1620 = vunpack.c.l.b16 %v1587
        %v1621 = vunpack.c.l.b16 %v1588
        %v1622 = vunpack.c.l.b16 %v1589
        %v1623 = vunpack.c.l.b16 %v1590
        %v1624 = vunpack.c.l.b16 %v1591
        %v1625 = vunpack.c.l.b16 %v1592
        %v1626 = vunpack.c.l.b16 %v1593
        %v1627 = vpack.c.b16 %v1612, %v1611
        %v1628 = vpack.c.b16 %v1614, %v1613
        %v1629 = vpack.c.b16 %v1616, %v1615
        %v1630 = vpack.c.b16 %v1618, %v1617
        %v1631 = vpack.c.b16 %v1620, %v1619
        %v1632 = vpack.c.b16 %v1622, %v1621
        %v1633 = vpack.c.b16 %v1624, %v1623
        %v1634 = vpack.c.b16 %v1626, %v1625
        %1643 = vmatprep.subr.bf16.mxu0 0
        %1644 = vmatpush1.bf16.msra.mxu0 %v1634
        %1645 = vmatprep.subr.bf16.mxu0 0
        %1646 = vmatpush1.bf16.msra.mxu0 %v1633
        %1647 = vmatprep.subr.bf16.mxu0 0
        %1648 = vmatpush1.bf16.msra.mxu0 %v1632
        %1649 = vmatprep.subr.bf16.mxu0 0
        %1650 = vmatpush1.bf16.msra.mxu0 %v1631
        %1651 = vmatprep.subr.bf16.mxu0 0
        %1652 = vmatpush1.bf16.msra.mxu0 %v1630
        %1653 = vmatprep.subr.bf16.mxu0 0
        %1654 = vmatpush1.bf16.msra.mxu0 %v1629
        %1655 = vmatprep.subr.bf16.mxu0 0
        %1656 = vmatpush1.bf16.msra.mxu0 %v1628
        %1657 = vmatprep.subr.bf16.mxu0 0
        %1658 = vmatpush1.bf16.msra.mxu0 %v1627
        %1659 = vmatprep.subr.bf16.mxu0 0
        %1660 = vmatpush2.bf16.msra.mxu0 0
        %1661 = vmatprep.subr.bf16.mxu0 0
        %1662 = vmatpush2.bf16.msra.mxu0 0
        %1663 = vmatprep.subr.bf16.mxu0 0
        %1664 = vmatpush2.bf16.msra.mxu0 0
        %1665 = vmatprep.subr.bf16.mxu0 0
        %1666 = vmatpush2.bf16.msra.mxu0 0
        %1667 = vmatprep.subr.bf16.mxu0 0
        %1668 = vmatpush2.bf16.msra.mxu0 0
        %1669 = vmatprep.subr.bf16.mxu0 0
        %1670 = vmatpush2.bf16.msra.mxu0 0
        %1671 = vmatprep.subr.bf16.mxu0 0
        %1672 = vmatpush2.bf16.msra.mxu0 0
        %1673 = vmatprep.subr.bf16.mxu0 0
        %1674 = vmatpush2.bf16.msra.mxu0 0
        %1675 = vmatprep.mubr.bf16.mxu0 0
        %1676 = vmatmul.mubr.bf16.gmra.mxu0 %v1594
        %v1677 = vpop.f32.mrf.mxu0
        %v1678 = vadd.f32 0.0, %v1677
        %v1679 = vpop.f32.mrf.mxu0
        %v1680 = vpop.f32.mrf.mxu0
        %v1681 = vpop.f32.mrf.mxu0
        %1682 = vdwg.mxu0
        %v1683 = vadd.f32 %v1576, %v1678
        %v1684 = vld [vmem:[%s1255 + $0x4] sm:$0xff]
        %v1685 = vld [vmem:[%s1 + $0x380] sm:$0xf]
        %v1686 = vld [vmem:[%s1 + $0x384] sm:$0xf]
        %v1687 = vld [vmem:[%s1 + $0x388] sm:$0xf]
        %v1688 = vld [vmem:[%s1 + $0x38c] sm:$0xf]
        %v1689 = vld [vmem:[%s1 + $0x390] sm:$0xf]
        %v1690 = vld [vmem:[%s1 + $0x394] sm:$0xf]
        %v1691 = vld [vmem:[%s1 + $0x398] sm:$0xf]
        %v1692 = vld [vmem:[%s1 + $0x39c] sm:$0xf]
        %v1693 = vld [vmem:[%s1 + $0x3a0] sm:$0xf]
        %v1694 = vld [vmem:[%s1 + $0x3a4] sm:$0xf]
        %v1695 = vld [vmem:[%s1 + $0x3a8] sm:$0xf]
        %v1696 = vld [vmem:[%s1 + $0x3ac] sm:$0xf]
        %v1697 = vld [vmem:[%s1 + $0x3b0] sm:$0xf]
        %v1698 = vld [vmem:[%s1 + $0x3b4] sm:$0xf]
        %v1699 = vld [vmem:[%s1 + $0x3b8] sm:$0xf]
        %v1700 = vld [vmem:[%s1 + $0x3bc] sm:$0xf]
        %v1701 = vpack.c.bf16 %v1684, %v1684
        %v1718 = vunpack.c.l.b16 %v1685
        %v1719 = vunpack.c.l.b16 %v1686
        %v1720 = vunpack.c.l.b16 %v1687
        %v1721 = vunpack.c.l.b16 %v1688
        %v1722 = vunpack.c.l.b16 %v1689
        %v1723 = vunpack.c.l.b16 %v1690
        %v1724 = vunpack.c.l.b16 %v1691
        %v1725 = vunpack.c.l.b16 %v1692
        %v1726 = vunpack.c.l.b16 %v1693
        %v1727 = vunpack.c.l.b16 %v1694
        %v1728 = vunpack.c.l.b16 %v1695
        %v1729 = vunpack.c.l.b16 %v1696
        %v1730 = vunpack.c.l.b16 %v1697
        %v1731 = vunpack.c.l.b16 %v1698
        %v1732 = vunpack.c.l.b16 %v1699
        %v1733 = vunpack.c.l.b16 %v1700
        %v1734 = vpack.c.b16 %v1719, %v1718
        %v1735 = vpack.c.b16 %v1721, %v1720
        %v1736 = vpack.c.b16 %v1723, %v1722
        %v1737 = vpack.c.b16 %v1725, %v1724
        %v1738 = vpack.c.b16 %v1727, %v1726
        %v1739 = vpack.c.b16 %v1729, %v1728
        %v1740 = vpack.c.b16 %v1731, %v1730
        %v1741 = vpack.c.b16 %v1733, %v1732
        %1750 = vmatprep.subr.bf16.mxu0 0
        %1751 = vmatpush1.bf16.msra.mxu0 %v1741
        %1752 = vmatprep.subr.bf16.mxu0 0
        %1753 = vmatpush1.bf16.msra.mxu0 %v1740
        %1754 = vmatprep.subr.bf16.mxu0 0
        %1755 = vmatpush1.bf16.msra.mxu0 %v1739
        %1756 = vmatprep.subr.bf16.mxu0 0
        %1757 = vmatpush1.bf16.msra.mxu0 %v1738
        %1758 = vmatprep.subr.bf16.mxu0 0
        %1759 = vmatpush1.bf16.msra.mxu0 %v1737
        %1760 = vmatprep.subr.bf16.mxu0 0
        %1761 = vmatpush1.bf16.msra.mxu0 %v1736
        %1762 = vmatprep.subr.bf16.mxu0 0
        %1763 = vmatpush1.bf16.msra.mxu0 %v1735
        %1764 = vmatprep.subr.bf16.mxu0 0
        %1765 = vmatpush1.bf16.msra.mxu0 %v1734
        %1766 = vmatprep.subr.bf16.mxu0 0
        %1767 = vmatpush2.bf16.msra.mxu0 0
        %1768 = vmatprep.subr.bf16.mxu0 0
        %1769 = vmatpush2.bf16.msra.mxu0 0
        %1770 = vmatprep.subr.bf16.mxu0 0
        %1771 = vmatpush2.bf16.msra.mxu0 0
        %1772 = vmatprep.subr.bf16.mxu0 0
        %1773 = vmatpush2.bf16.msra.mxu0 0
        %1774 = vmatprep.subr.bf16.mxu0 0
        %1775 = vmatpush2.bf16.msra.mxu0 0
        %1776 = vmatprep.subr.bf16.mxu0 0
        %1777 = vmatpush2.bf16.msra.mxu0 0
        %1778 = vmatprep.subr.bf16.mxu0 0
        %1779 = vmatpush2.bf16.msra.mxu0 0
        %1780 = vmatprep.subr.bf16.mxu0 0
        %1781 = vmatpush2.bf16.msra.mxu0 0
        %1782 = vmatprep.mubr.bf16.mxu0 0
        %1783 = vmatmul.mubr.bf16.gmra.mxu0 %v1701
        %v1784 = vpop.f32.mrf.mxu0
        %v1785 = vadd.f32 0.0, %v1784
        %v1786 = vpop.f32.mrf.mxu0
        %v1787 = vpop.f32.mrf.mxu0
        %v1788 = vpop.f32.mrf.mxu0
        %1789 = vdwg.mxu0
        %v1790 = vadd.f32 %v1683, %v1785
        %s1791 = sadd.s32 %s179, 3
        %s1792 = smul.u32 %s1791, 16
        %s1793 = scalar_lea.vmem %s165, %s1792
        %v1794 = vld [vmem:[%s1793] sm:$0xff]
        %v1795 = vld [vmem:[%s1 + $0x3c0] sm:$0xf]
        %v1796 = vld [vmem:[%s1 + $0x3c4] sm:$0xf]
        %v1797 = vld [vmem:[%s1 + $0x3c8] sm:$0xf]
        %v1798 = vld [vmem:[%s1 + $0x3cc] sm:$0xf]
        %v1799 = vld [vmem:[%s1 + $0x3d0] sm:$0xf]
        %v1800 = vld [vmem:[%s1 + $0x3d4] sm:$0xf]
        %v1801 = vld [vmem:[%s1 + $0x3d8] sm:$0xf]
        %v1802 = vld [vmem:[%s1 + $0x3dc] sm:$0xf]
        %v1803 = vld [vmem:[%s1 + $0x3e0] sm:$0xf]
        %v1804 = vld [vmem:[%s1 + $0x3e4] sm:$0xf]
        %v1805 = vld [vmem:[%s1 + $0x3e8] sm:$0xf]
        %v1806 = vld [vmem:[%s1 + $0x3ec] sm:$0xf]
        %v1807 = vld [vmem:[%s1 + $0x3f0] sm:$0xf]
        %v1808 = vld [vmem:[%s1 + $0x3f4] sm:$0xf]
        %v1809 = vld [vmem:[%s1 + $0x3f8] sm:$0xf]
        %v1810 = vld [vmem:[%s1 + $0x3fc] sm:$0xf]
        %v1811 = vpack.c.bf16 %v1794, %v1794
        %v1828 = vunpack.c.l.b16 %v1795
        %v1829 = vunpack.c.l.b16 %v1796
        %v1830 = vunpack.c.l.b16 %v1797
        %v1831 = vunpack.c.l.b16 %v1798
        %v1832 = vunpack.c.l.b16 %v1799
        %v1833 = vunpack.c.l.b16 %v1800
        %v1834 = vunpack.c.l.b16 %v1801
        %v1835 = vunpack.c.l.b16 %v1802
        %v1836 = vunpack.c.l.b16 %v1803
        %v1837 = vunpack.c.l.b16 %v1804
        %v1838 = vunpack.c.l.b16 %v1805
        %v1839 = vunpack.c.l.b16 %v1806
        %v1840 = vunpack.c.l.b16 %v1807
        %v1841 = vunpack.c.l.b16 %v1808
        %v1842 = vunpack.c.l.b16 %v1809
        %v1843 = vunpack.c.l.b16 %v1810
        %v1844 = vpack.c.b16 %v1829, %v1828
        %v1845 = vpack.c.b16 %v1831, %v1830
        %v1846 = vpack.c.b16 %v1833, %v1832
        %v1847 = vpack.c.b16 %v1835, %v1834
        %v1848 = vpack.c.b16 %v1837, %v1836
        %v1849 = vpack.c.b16 %v1839, %v1838
        %v1850 = vpack.c.b16 %v1841, %v1840
        %v1851 = vpack.c.b16 %v1843, %v1842
        %1860 = vmatprep.subr.bf16.mxu0 0
        %1861 = vmatpush1.bf16.msra.mxu0 %v1851
        %1862 = vmatprep.subr.bf16.mxu0 0
        %1863 = vmatpush1.bf16.msra.mxu0 %v1850
        %1864 = vmatprep.subr.bf16.mxu0 0
        %1865 = vmatpush1.bf16.msra.mxu0 %v1849
        %1866 = vmatprep.subr.bf16.mxu0 0
        %1867 = vmatpush1.bf16.msra.mxu0 %v1848
        %1868 = vmatprep.subr.bf16.mxu0 0
        %1869 = vmatpush1.bf16.msra.mxu0 %v1847
        %1870 = vmatprep.subr.bf16.mxu0 0
        %1871 = vmatpush1.bf16.msra.mxu0 %v1846
        %1872 = vmatprep.subr.bf16.mxu0 0
        %1873 = vmatpush1.bf16.msra.mxu0 %v1845
        %1874 = vmatprep.subr.bf16.mxu0 0
        %1875 = vmatpush1.bf16.msra.mxu0 %v1844
        %1876 = vmatprep.subr.bf16.mxu0 0
        %1877 = vmatpush2.bf16.msra.mxu0 0
        %1878 = vmatprep.subr.bf16.mxu0 0
        %1879 = vmatpush2.bf16.msra.mxu0 0
        %1880 = vmatprep.subr.bf16.mxu0 0
        %1881 = vmatpush2.bf16.msra.mxu0 0
        %1882 = vmatprep.subr.bf16.mxu0 0
        %1883 = vmatpush2.bf16.msra.mxu0 0
        %1884 = vmatprep.subr.bf16.mxu0 0
        %1885 = vmatpush2.bf16.msra.mxu0 0
        %1886 = vmatprep.subr.bf16.mxu0 0
        %1887 = vmatpush2.bf16.msra.mxu0 0
        %1888 = vmatprep.subr.bf16.mxu0 0
        %1889 = vmatpush2.bf16.msra.mxu0 0
        %1890 = vmatprep.subr.bf16.mxu0 0
        %1891 = vmatpush2.bf16.msra.mxu0 0
        %1892 = vmatprep.mubr.bf16.mxu0 0
        %1893 = vmatmul.mubr.bf16.gmra.mxu0 %v1811
        %v1894 = vpop.f32.mrf.mxu0
        %v1895 = vadd.f32 0.0, %v1894
        %v1896 = vpop.f32.mrf.mxu0
        %v1897 = vpop.f32.mrf.mxu0
        %v1898 = vpop.f32.mrf.mxu0
        %1899 = vdwg.mxu0
        %v1900 = vadd.f32 %v1790, %v1895
        %v1901 = vld [vmem:[%s1793 + $0x1] sm:$0xff]
        %v1902 = vld [vmem:[%s1 + $0x400] sm:$0xf]
        %v1903 = vld [vmem:[%s1 + $0x404] sm:$0xf]
        %v1904 = vld [vmem:[%s1 + $0x408] sm:$0xf]
        %v1905 = vld [vmem:[%s1 + $0x40c] sm:$0xf]
        %v1906 = vld [vmem:[%s1 + $0x410] sm:$0xf]
        %v1907 = vld [vmem:[%s1 + $0x414] sm:$0xf]
        %v1908 = vld [vmem:[%s1 + $0x418] sm:$0xf]
        %v1909 = vld [vmem:[%s1 + $0x41c] sm:$0xf]
        %v1910 = vld [vmem:[%s1 + $0x420] sm:$0xf]
        %v1911 = vld [vmem:[%s1 + $0x424] sm:$0xf]
        %v1912 = vld [vmem:[%s1 + $0x428] sm:$0xf]
        %v1913 = vld [vmem:[%s1 + $0x42c] sm:$0xf]
        %v1914 = vld [vmem:[%s1 + $0x430] sm:$0xf]
        %v1915 = vld [vmem:[%s1 + $0x434] sm:$0xf]
        %v1916 = vld [vmem:[%s1 + $0x438] sm:$0xf]
        %v1917 = vld [vmem:[%s1 + $0x43c] sm:$0xf]
        %v1918 = vpack.c.bf16 %v1901, %v1901
        %v1935 = vunpack.c.l.b16 %v1902
        %v1936 = vunpack.c.l.b16 %v1903
        %v1937 = vunpack.c.l.b16 %v1904
        %v1938 = vunpack.c.l.b16 %v1905
        %v1939 = vunpack.c.l.b16 %v1906
        %v1940 = vunpack.c.l.b16 %v1907
        %v1941 = vunpack.c.l.b16 %v1908
        %v1942 = vunpack.c.l.b16 %v1909
        %v1943 = vunpack.c.l.b16 %v1910
        %v1944 = vunpack.c.l.b16 %v1911
        %v1945 = vunpack.c.l.b16 %v1912
        %v1946 = vunpack.c.l.b16 %v1913
        %v1947 = vunpack.c.l.b16 %v1914
        %v1948 = vunpack.c.l.b16 %v1915
        %v1949 = vunpack.c.l.b16 %v1916
        %v1950 = vunpack.c.l.b16 %v1917
        %v1951 = vpack.c.b16 %v1936, %v1935
        %v1952 = vpack.c.b16 %v1938, %v1937
        %v1953 = vpack.c.b16 %v1940, %v1939
        %v1954 = vpack.c.b16 %v1942, %v1941
        %v1955 = vpack.c.b16 %v1944, %v1943
        %v1956 = vpack.c.b16 %v1946, %v1945
        %v1957 = vpack.c.b16 %v1948, %v1947
        %v1958 = vpack.c.b16 %v1950, %v1949
        %1967 = vmatprep.subr.bf16.mxu0 0
        %1968 = vmatpush1.bf16.msra.mxu0 %v1958
        %1969 = vmatprep.subr.bf16.mxu0 0
        %1970 = vmatpush1.bf16.msra.mxu0 %v1957
        %1971 = vmatprep.subr.bf16.mxu0 0
        %1972 = vmatpush1.bf16.msra.mxu0 %v1956
        %1973 = vmatprep.subr.bf16.mxu0 0
        %1974 = vmatpush1.bf16.msra.mxu0 %v1955
        %1975 = vmatprep.subr.bf16.mxu0 0
        %1976 = vmatpush1.bf16.msra.mxu0 %v1954
        %1977 = vmatprep.subr.bf16.mxu0 0
        %1978 = vmatpush1.bf16.msra.mxu0 %v1953
        %1979 = vmatprep.subr.bf16.mxu0 0
        %1980 = vmatpush1.bf16.msra.mxu0 %v1952
        %1981 = vmatprep.subr.bf16.mxu0 0
        %1982 = vmatpush1.bf16.msra.mxu0 %v1951
        %1983 = vmatprep.subr.bf16.mxu0 0
        %1984 = vmatpush2.bf16.msra.mxu0 0
        %1985 = vmatprep.subr.bf16.mxu0 0
        %1986 = vmatpush2.bf16.msra.mxu0 0
        %1987 = vmatprep.subr.bf16.mxu0 0
        %1988 = vmatpush2.bf16.msra.mxu0 0
        %1989 = vmatprep.subr.bf16.mxu0 0
        %1990 = vmatpush2.bf16.msra.mxu0 0
        %1991 = vmatprep.subr.bf16.mxu0 0
        %1992 = vmatpush2.bf16.msra.mxu0 0
        %1993 = vmatprep.subr.bf16.mxu0 0
        %1994 = vmatpush2.bf16.msra.mxu0 0
        %1995 = vmatprep.subr.bf16.mxu0 0
        %1996 = vmatpush2.bf16.msra.mxu0 0
        %1997 = vmatprep.subr.bf16.mxu0 0
        %1998 = vmatpush2.bf16.msra.mxu0 0
        %1999 = vmatprep.mubr.bf16.mxu0 0
        %2000 = vmatmul.mubr.bf16.gmra.mxu0 %v1918
        %v2001 = vpop.f32.mrf.mxu0
        %v2002 = vadd.f32 0.0, %v2001
        %v2003 = vpop.f32.mrf.mxu0
        %v2004 = vpop.f32.mrf.mxu0
        %v2005 = vpop.f32.mrf.mxu0
        %2006 = vdwg.mxu0
        %v2007 = vadd.f32 %v1900, %v2002
        %v2008 = vld [vmem:[%s1793 + $0x2] sm:$0xff]
        %v2009 = vld [vmem:[%s1 + $0x440] sm:$0xf]
        %v2010 = vld [vmem:[%s1 + $0x444] sm:$0xf]
        %v2011 = vld [vmem:[%s1 + $0x448] sm:$0xf]
        %v2012 = vld [vmem:[%s1 + $0x44c] sm:$0xf]
        %v2013 = vld [vmem:[%s1 + $0x450] sm:$0xf]
        %v2014 = vld [vmem:[%s1 + $0x454] sm:$0xf]
        %v2015 = vld [vmem:[%s1 + $0x458] sm:$0xf]
        %v2016 = vld [vmem:[%s1 + $0x45c] sm:$0xf]
        %v2017 = vld [vmem:[%s1 + $0x460] sm:$0xf]
        %v2018 = vld [vmem:[%s1 + $0x464] sm:$0xf]
        %v2019 = vld [vmem:[%s1 + $0x468] sm:$0xf]
        %v2020 = vld [vmem:[%s1 + $0x46c] sm:$0xf]
        %v2021 = vld [vmem:[%s1 + $0x470] sm:$0xf]
        %v2022 = vld [vmem:[%s1 + $0x474] sm:$0xf]
        %v2023 = vld [vmem:[%s1 + $0x478] sm:$0xf]
        %v2024 = vld [vmem:[%s1 + $0x47c] sm:$0xf]
        %v2025 = vpack.c.bf16 %v2008, %v2008
        %v2042 = vunpack.c.l.b16 %v2009
        %v2043 = vunpack.c.l.b16 %v2010
        %v2044 = vunpack.c.l.b16 %v2011
        %v2045 = vunpack.c.l.b16 %v2012
        %v2046 = vunpack.c.l.b16 %v2013
        %v2047 = vunpack.c.l.b16 %v2014
        %v2048 = vunpack.c.l.b16 %v2015
        %v2049 = vunpack.c.l.b16 %v2016
        %v2050 = vunpack.c.l.b16 %v2017
        %v2051 = vunpack.c.l.b16 %v2018
        %v2052 = vunpack.c.l.b16 %v2019
        %v2053 = vunpack.c.l.b16 %v2020
        %v2054 = vunpack.c.l.b16 %v2021
        %v2055 = vunpack.c.l.b16 %v2022
        %v2056 = vunpack.c.l.b16 %v2023
        %v2057 = vunpack.c.l.b16 %v2024
        %v2058 = vpack.c.b16 %v2043, %v2042
        %v2059 = vpack.c.b16 %v2045, %v2044
        %v2060 = vpack.c.b16 %v2047, %v2046
        %v2061 = vpack.c.b16 %v2049, %v2048
        %v2062 = vpack.c.b16 %v2051, %v2050
        %v2063 = vpack.c.b16 %v2053, %v2052
        %v2064 = vpack.c.b16 %v2055, %v2054
        %v2065 = vpack.c.b16 %v2057, %v2056
        %2074 = vmatprep.subr.bf16.mxu0 0
        %2075 = vmatpush1.bf16.msra.mxu0 %v2065
        %2076 = vmatprep.subr.bf16.mxu0 0
        %2077 = vmatpush1.bf16.msra.mxu0 %v2064
        %2078 = vmatprep.subr.bf16.mxu0 0
        %2079 = vmatpush1.bf16.msra.mxu0 %v2063
        %2080 = vmatprep.subr.bf16.mxu0 0
        %2081 = vmatpush1.bf16.msra.mxu0 %v2062
        %2082 = vmatprep.subr.bf16.mxu0 0
        %2083 = vmatpush1.bf16.msra.mxu0 %v2061
        %2084 = vmatprep.subr.bf16.mxu0 0
        %2085 = vmatpush1.bf16.msra.mxu0 %v2060
        %2086 = vmatprep.subr.bf16.mxu0 0
        %2087 = vmatpush1.bf16.msra.mxu0 %v2059
        %2088 = vmatprep.subr.bf16.mxu0 0
        %2089 = vmatpush1.bf16.msra.mxu0 %v2058
        %2090 = vmatprep.subr.bf16.mxu0 0
        %2091 = vmatpush2.bf16.msra.mxu0 0
        %2092 = vmatprep.subr.bf16.mxu0 0
        %2093 = vmatpush2.bf16.msra.mxu0 0
        %2094 = vmatprep.subr.bf16.mxu0 0
        %2095 = vmatpush2.bf16.msra.mxu0 0
        %2096 = vmatprep.subr.bf16.mxu0 0
        %2097 = vmatpush2.bf16.msra.mxu0 0
        %2098 = vmatprep.subr.bf16.mxu0 0
        %2099 = vmatpush2.bf16.msra.mxu0 0
        %2100 = vmatprep.subr.bf16.mxu0 0
        %2101 = vmatpush2.bf16.msra.mxu0 0
        %2102 = vmatprep.subr.bf16.mxu0 0
        %2103 = vmatpush2.bf16.msra.mxu0 0
        %2104 = vmatprep.subr.bf16.mxu0 0
        %2105 = vmatpush2.bf16.msra.mxu0 0
        %2106 = vmatprep.mubr.bf16.mxu0 0
        %2107 = vmatmul.mubr.bf16.gmra.mxu0 %v2025
        %v2108 = vpop.f32.mrf.mxu0
        %v2109 = vadd.f32 0.0, %v2108
        %v2110 = vpop.f32.mrf.mxu0
        %v2111 = vpop.f32.mrf.mxu0
        %v2112 = vpop.f32.mrf.mxu0
        %2113 = vdwg.mxu0
        %v2114 = vadd.f32 %v2007, %v2109
        %v2115 = vld [vmem:[%s1793 + $0x3] sm:$0xff]
        %v2116 = vld [vmem:[%s1 + $0x480] sm:$0xf]
        %v2117 = vld [vmem:[%s1 + $0x484] sm:$0xf]
        %v2118 = vld [vmem:[%s1 + $0x488] sm:$0xf]
        %v2119 = vld [vmem:[%s1 + $0x48c] sm:$0xf]
        %v2120 = vld [vmem:[%s1 + $0x490] sm:$0xf]
        %v2121 = vld [vmem:[%s1 + $0x494] sm:$0xf]
        %v2122 = vld [vmem:[%s1 + $0x498] sm:$0xf]
        %v2123 = vld [vmem:[%s1 + $0x49c] sm:$0xf]
        %v2124 = vld [vmem:[%s1 + $0x4a0] sm:$0xf]
        %v2125 = vld [vmem:[%s1 + $0x4a4] sm:$0xf]
        %v2126 = vld [vmem:[%s1 + $0x4a8] sm:$0xf]
        %v2127 = vld [vmem:[%s1 + $0x4ac] sm:$0xf]
        %v2128 = vld [vmem:[%s1 + $0x4b0] sm:$0xf]
        %v2129 = vld [vmem:[%s1 + $0x4b4] sm:$0xf]
        %v2130 = vld [vmem:[%s1 + $0x4b8] sm:$0xf]
        %v2131 = vld [vmem:[%s1 + $0x4bc] sm:$0xf]
        %v2132 = vpack.c.bf16 %v2115, %v2115
        %v2149 = vunpack.c.l.b16 %v2116
        %v2150 = vunpack.c.l.b16 %v2117
        %v2151 = vunpack.c.l.b16 %v2118
        %v2152 = vunpack.c.l.b16 %v2119
        %v2153 = vunpack.c.l.b16 %v2120
        %v2154 = vunpack.c.l.b16 %v2121
        %v2155 = vunpack.c.l.b16 %v2122
        %v2156 = vunpack.c.l.b16 %v2123
        %v2157 = vunpack.c.l.b16 %v2124
        %v2158 = vunpack.c.l.b16 %v2125
        %v2159 = vunpack.c.l.b16 %v2126
        %v2160 = vunpack.c.l.b16 %v2127
        %v2161 = vunpack.c.l.b16 %v2128
        %v2162 = vunpack.c.l.b16 %v2129
        %v2163 = vunpack.c.l.b16 %v2130
        %v2164 = vunpack.c.l.b16 %v2131
        %v2165 = vpack.c.b16 %v2150, %v2149
        %v2166 = vpack.c.b16 %v2152, %v2151
        %v2167 = vpack.c.b16 %v2154, %v2153
        %v2168 = vpack.c.b16 %v2156, %v2155
        %v2169 = vpack.c.b16 %v2158, %v2157
        %v2170 = vpack.c.b16 %v2160, %v2159
        %v2171 = vpack.c.b16 %v2162, %v2161
        %v2172 = vpack.c.b16 %v2164, %v2163
        %2181 = vmatprep.subr.bf16.mxu0 0
        %2182 = vmatpush1.bf16.msra.mxu0 %v2172
        %2183 = vmatprep.subr.bf16.mxu0 0
        %2184 = vmatpush1.bf16.msra.mxu0 %v2171
        %2185 = vmatprep.subr.bf16.mxu0 0
        %2186 = vmatpush1.bf16.msra.mxu0 %v2170
        %2187 = vmatprep.subr.bf16.mxu0 0
        %2188 = vmatpush1.bf16.msra.mxu0 %v2169
        %2189 = vmatprep.subr.bf16.mxu0 0
        %2190 = vmatpush1.bf16.msra.mxu0 %v2168
        %2191 = vmatprep.subr.bf16.mxu0 0
        %2192 = vmatpush1.bf16.msra.mxu0 %v2167
        %2193 = vmatprep.subr.bf16.mxu0 0
        %2194 = vmatpush1.bf16.msra.mxu0 %v2166
        %2195 = vmatprep.subr.bf16.mxu0 0
        %2196 = vmatpush1.bf16.msra.mxu0 %v2165
        %2197 = vmatprep.subr.bf16.mxu0 0
        %2198 = vmatpush2.bf16.msra.mxu0 0
        %2199 = vmatprep.subr.bf16.mxu0 0
        %2200 = vmatpush2.bf16.msra.mxu0 0
        %2201 = vmatprep.subr.bf16.mxu0 0
        %2202 = vmatpush2.bf16.msra.mxu0 0
        %2203 = vmatprep.subr.bf16.mxu0 0
        %2204 = vmatpush2.bf16.msra.mxu0 0
        %2205 = vmatprep.subr.bf16.mxu0 0
        %2206 = vmatpush2.bf16.msra.mxu0 0
        %2207 = vmatprep.subr.bf16.mxu0 0
        %2208 = vmatpush2.bf16.msra.mxu0 0
        %2209 = vmatprep.subr.bf16.mxu0 0
        %2210 = vmatpush2.bf16.msra.mxu0 0
        %2211 = vmatprep.subr.bf16.mxu0 0
        %2212 = vmatpush2.bf16.msra.mxu0 0
        %2213 = vmatprep.mubr.bf16.mxu0 0
        %2214 = vmatmul.mubr.bf16.gmra.mxu0 %v2132
        %v2215 = vpop.f32.mrf.mxu0
        %v2216 = vadd.f32 0.0, %v2215
        %v2217 = vpop.f32.mrf.mxu0
        %v2218 = vpop.f32.mrf.mxu0
        %v2219 = vpop.f32.mrf.mxu0
        %2220 = vdwg.mxu0
        %v2221 = vadd.f32 %v2114, %v2216
        %v2222 = vld [vmem:[%s1793 + $0x4] sm:$0xff]
        %v2223 = vld [vmem:[%s1 + $0x4c0] sm:$0xf]
        %v2224 = vld [vmem:[%s1 + $0x4c4] sm:$0xf]
        %v2225 = vld [vmem:[%s1 + $0x4c8] sm:$0xf]
        %v2226 = vld [vmem:[%s1 + $0x4cc] sm:$0xf]
        %v2227 = vld [vmem:[%s1 + $0x4d0] sm:$0xf]
        %v2228 = vld [vmem:[%s1 + $0x4d4] sm:$0xf]
        %v2229 = vld [vmem:[%s1 + $0x4d8] sm:$0xf]
        %v2230 = vld [vmem:[%s1 + $0x4dc] sm:$0xf]
        %v2231 = vld [vmem:[%s1 + $0x4e0] sm:$0xf]
        %v2232 = vld [vmem:[%s1 + $0x4e4] sm:$0xf]
        %v2233 = vld [vmem:[%s1 + $0x4e8] sm:$0xf]
        %v2234 = vld [vmem:[%s1 + $0x4ec] sm:$0xf]
        %v2235 = vld [vmem:[%s1 + $0x4f0] sm:$0xf]
        %v2236 = vld [vmem:[%s1 + $0x4f4] sm:$0xf]
        %v2237 = vld [vmem:[%s1 + $0x4f8] sm:$0xf]
        %v2238 = vld [vmem:[%s1 + $0x4fc] sm:$0xf]
        %v2239 = vpack.c.bf16 %v2222, %v2222
        %v2256 = vunpack.c.l.b16 %v2223
        %v2257 = vunpack.c.l.b16 %v2224
        %v2258 = vunpack.c.l.b16 %v2225
        %v2259 = vunpack.c.l.b16 %v2226
        %v2260 = vunpack.c.l.b16 %v2227
        %v2261 = vunpack.c.l.b16 %v2228
        %v2262 = vunpack.c.l.b16 %v2229
        %v2263 = vunpack.c.l.b16 %v2230
        %v2264 = vunpack.c.l.b16 %v2231
        %v2265 = vunpack.c.l.b16 %v2232
        %v2266 = vunpack.c.l.b16 %v2233
        %v2267 = vunpack.c.l.b16 %v2234
        %v2268 = vunpack.c.l.b16 %v2235
        %v2269 = vunpack.c.l.b16 %v2236
        %v2270 = vunpack.c.l.b16 %v2237
        %v2271 = vunpack.c.l.b16 %v2238
        %v2272 = vpack.c.b16 %v2257, %v2256
        %v2273 = vpack.c.b16 %v2259, %v2258
        %v2274 = vpack.c.b16 %v2261, %v2260
        %v2275 = vpack.c.b16 %v2263, %v2262
        %v2276 = vpack.c.b16 %v2265, %v2264
        %v2277 = vpack.c.b16 %v2267, %v2266
        %v2278 = vpack.c.b16 %v2269, %v2268
        %v2279 = vpack.c.b16 %v2271, %v2270
        %2288 = vmatprep.subr.bf16.mxu0 0
        %2289 = vmatpush1.bf16.msra.mxu0 %v2279
        %2290 = vmatprep.subr.bf16.mxu0 0
        %2291 = vmatpush1.bf16.msra.mxu0 %v2278
        %2292 = vmatprep.subr.bf16.mxu0 0
        %2293 = vmatpush1.bf16.msra.mxu0 %v2277
        %2294 = vmatprep.subr.bf16.mxu0 0
        %2295 = vmatpush1.bf16.msra.mxu0 %v2276
        %2296 = vmatprep.subr.bf16.mxu0 0
        %2297 = vmatpush1.bf16.msra.mxu0 %v2275
        %2298 = vmatprep.subr.bf16.mxu0 0
        %2299 = vmatpush1.bf16.msra.mxu0 %v2274
        %2300 = vmatprep.subr.bf16.mxu0 0
        %2301 = vmatpush1.bf16.msra.mxu0 %v2273
        %2302 = vmatprep.subr.bf16.mxu0 0
        %2303 = vmatpush1.bf16.msra.mxu0 %v2272
        %2304 = vmatprep.subr.bf16.mxu0 0
        %2305 = vmatpush2.bf16.msra.mxu0 0
        %2306 = vmatprep.subr.bf16.mxu0 0
        %2307 = vmatpush2.bf16.msra.mxu0 0
        %2308 = vmatprep.subr.bf16.mxu0 0
        %2309 = vmatpush2.bf16.msra.mxu0 0
        %2310 = vmatprep.subr.bf16.mxu0 0
        %2311 = vmatpush2.bf16.msra.mxu0 0
        %2312 = vmatprep.subr.bf16.mxu0 0
        %2313 = vmatpush2.bf16.msra.mxu0 0
        %2314 = vmatprep.subr.bf16.mxu0 0
        %2315 = vmatpush2.bf16.msra.mxu0 0
        %2316 = vmatprep.subr.bf16.mxu0 0
        %2317 = vmatpush2.bf16.msra.mxu0 0
        %2318 = vmatprep.subr.bf16.mxu0 0
        %2319 = vmatpush2.bf16.msra.mxu0 0
        %2320 = vmatprep.mubr.bf16.mxu0 0
        %2321 = vmatmul.mubr.bf16.gmra.mxu0 %v2239
        %v2322 = vpop.f32.mrf.mxu0
        %v2323 = vadd.f32 0.0, %v2322
        %v2324 = vpop.f32.mrf.mxu0
        %v2325 = vpop.f32.mrf.mxu0
        %v2326 = vpop.f32.mrf.mxu0
        %2327 = vdwg.mxu0
        %v2328 = vadd.f32 %v2221, %v2323
        %s2329 = sadd.s32 %s179, 4
        %s2330 = smul.u32 %s2329, 16
        %s2331 = scalar_lea.vmem %s165, %s2330
        %v2332 = vld [vmem:[%s2331] sm:$0xff]
        %v2333 = vld [vmem:[%s1 + $0x500] sm:$0xf]
        %v2334 = vld [vmem:[%s1 + $0x504] sm:$0xf]
        %v2335 = vld [vmem:[%s1 + $0x508] sm:$0xf]
        %v2336 = vld [vmem:[%s1 + $0x50c] sm:$0xf]
        %v2337 = vld [vmem:[%s1 + $0x510] sm:$0xf]
        %v2338 = vld [vmem:[%s1 + $0x514] sm:$0xf]
        %v2339 = vld [vmem:[%s1 + $0x518] sm:$0xf]
        %v2340 = vld [vmem:[%s1 + $0x51c] sm:$0xf]
        %v2341 = vld [vmem:[%s1 + $0x520] sm:$0xf]
        %v2342 = vld [vmem:[%s1 + $0x524] sm:$0xf]
        %v2343 = vld [vmem:[%s1 + $0x528] sm:$0xf]
        %v2344 = vld [vmem:[%s1 + $0x52c] sm:$0xf]
        %v2345 = vld [vmem:[%s1 + $0x530] sm:$0xf]
        %v2346 = vld [vmem:[%s1 + $0x534] sm:$0xf]
        %v2347 = vld [vmem:[%s1 + $0x538] sm:$0xf]
        %v2348 = vld [vmem:[%s1 + $0x53c] sm:$0xf]
        %v2349 = vpack.c.bf16 %v2332, %v2332
        %v2366 = vunpack.c.l.b16 %v2333
        %v2367 = vunpack.c.l.b16 %v2334
        %v2368 = vunpack.c.l.b16 %v2335
        %v2369 = vunpack.c.l.b16 %v2336
        %v2370 = vunpack.c.l.b16 %v2337
        %v2371 = vunpack.c.l.b16 %v2338
        %v2372 = vunpack.c.l.b16 %v2339
        %v2373 = vunpack.c.l.b16 %v2340
        %v2374 = vunpack.c.l.b16 %v2341
        %v2375 = vunpack.c.l.b16 %v2342
        %v2376 = vunpack.c.l.b16 %v2343
        %v2377 = vunpack.c.l.b16 %v2344
        %v2378 = vunpack.c.l.b16 %v2345
        %v2379 = vunpack.c.l.b16 %v2346
        %v2380 = vunpack.c.l.b16 %v2347
        %v2381 = vunpack.c.l.b16 %v2348
        %v2382 = vpack.c.b16 %v2367, %v2366
        %v2383 = vpack.c.b16 %v2369, %v2368
        %v2384 = vpack.c.b16 %v2371, %v2370
        %v2385 = vpack.c.b16 %v2373, %v2372
        %v2386 = vpack.c.b16 %v2375, %v2374
        %v2387 = vpack.c.b16 %v2377, %v2376
        %v2388 = vpack.c.b16 %v2379, %v2378
        %v2389 = vpack.c.b16 %v2381, %v2380
        %2398 = vmatprep.subr.bf16.mxu0 0
        %2399 = vmatpush1.bf16.msra.mxu0 %v2389
        %2400 = vmatprep.subr.bf16.mxu0 0
        %2401 = vmatpush1.bf16.msra.mxu0 %v2388
        %2402 = vmatprep.subr.bf16.mxu0 0
        %2403 = vmatpush1.bf16.msra.mxu0 %v2387
        %2404 = vmatprep.subr.bf16.mxu0 0
        %2405 = vmatpush1.bf16.msra.mxu0 %v2386
        %2406 = vmatprep.subr.bf16.mxu0 0
        %2407 = vmatpush1.bf16.msra.mxu0 %v2385
        %2408 = vmatprep.subr.bf16.mxu0 0
        %2409 = vmatpush1.bf16.msra.mxu0 %v2384
        %2410 = vmatprep.subr.bf16.mxu0 0
        %2411 = vmatpush1.bf16.msra.mxu0 %v2383
        %2412 = vmatprep.subr.bf16.mxu0 0
        %2413 = vmatpush1.bf16.msra.mxu0 %v2382
        %2414 = vmatprep.subr.bf16.mxu0 0
        %2415 = vmatpush2.bf16.msra.mxu0 0
        %2416 = vmatprep.subr.bf16.mxu0 0
        %2417 = vmatpush2.bf16.msra.mxu0 0
        %2418 = vmatprep.subr.bf16.mxu0 0
        %2419 = vmatpush2.bf16.msra.mxu0 0
        %2420 = vmatprep.subr.bf16.mxu0 0
        %2421 = vmatpush2.bf16.msra.mxu0 0
        %2422 = vmatprep.subr.bf16.mxu0 0
        %2423 = vmatpush2.bf16.msra.mxu0 0
        %2424 = vmatprep.subr.bf16.mxu0 0
        %2425 = vmatpush2.bf16.msra.mxu0 0
        %2426 = vmatprep.subr.bf16.mxu0 0
        %2427 = vmatpush2.bf16.msra.mxu0 0
        %2428 = vmatprep.subr.bf16.mxu0 0
        %2429 = vmatpush2.bf16.msra.mxu0 0
        %2430 = vmatprep.mubr.bf16.mxu0 0
        %2431 = vmatmul.mubr.bf16.gmra.mxu0 %v2349
        %v2432 = vpop.f32.mrf.mxu0
        %v2433 = vadd.f32 0.0, %v2432
        %v2434 = vpop.f32.mrf.mxu0
        %v2435 = vpop.f32.mrf.mxu0
        %v2436 = vpop.f32.mrf.mxu0
        %2437 = vdwg.mxu0
        %v2438 = vadd.f32 %v2328, %v2433
        %v2439 = vld [vmem:[%s2331 + $0x1] sm:$0xff]
        %v2440 = vld [vmem:[%s1 + $0x540] sm:$0xf]
        %v2441 = vld [vmem:[%s1 + $0x544] sm:$0xf]
        %v2442 = vld [vmem:[%s1 + $0x548] sm:$0xf]
        %v2443 = vld [vmem:[%s1 + $0x54c] sm:$0xf]
        %v2444 = vld [vmem:[%s1 + $0x550] sm:$0xf]
        %v2445 = vld [vmem:[%s1 + $0x554] sm:$0xf]
        %v2446 = vld [vmem:[%s1 + $0x558] sm:$0xf]
        %v2447 = vld [vmem:[%s1 + $0x55c] sm:$0xf]
        %v2448 = vld [vmem:[%s1 + $0x560] sm:$0xf]
        %v2449 = vld [vmem:[%s1 + $0x564] sm:$0xf]
        %v2450 = vld [vmem:[%s1 + $0x568] sm:$0xf]
        %v2451 = vld [vmem:[%s1 + $0x56c] sm:$0xf]
        %v2452 = vld [vmem:[%s1 + $0x570] sm:$0xf]
        %v2453 = vld [vmem:[%s1 + $0x574] sm:$0xf]
        %v2454 = vld [vmem:[%s1 + $0x578] sm:$0xf]
        %v2455 = vld [vmem:[%s1 + $0x57c] sm:$0xf]
        %v2456 = vpack.c.bf16 %v2439, %v2439
        %v2473 = vunpack.c.l.b16 %v2440
        %v2474 = vunpack.c.l.b16 %v2441
        %v2475 = vunpack.c.l.b16 %v2442
        %v2476 = vunpack.c.l.b16 %v2443
        %v2477 = vunpack.c.l.b16 %v2444
        %v2478 = vunpack.c.l.b16 %v2445
        %v2479 = vunpack.c.l.b16 %v2446
        %v2480 = vunpack.c.l.b16 %v2447
        %v2481 = vunpack.c.l.b16 %v2448
        %v2482 = vunpack.c.l.b16 %v2449
        %v2483 = vunpack.c.l.b16 %v2450
        %v2484 = vunpack.c.l.b16 %v2451
        %v2485 = vunpack.c.l.b16 %v2452
        %v2486 = vunpack.c.l.b16 %v2453
        %v2487 = vunpack.c.l.b16 %v2454
        %v2488 = vunpack.c.l.b16 %v2455
        %v2489 = vpack.c.b16 %v2474, %v2473
        %v2490 = vpack.c.b16 %v2476, %v2475
        %v2491 = vpack.c.b16 %v2478, %v2477
        %v2492 = vpack.c.b16 %v2480, %v2479
        %v2493 = vpack.c.b16 %v2482, %v2481
        %v2494 = vpack.c.b16 %v2484, %v2483
        %v2495 = vpack.c.b16 %v2486, %v2485
        %v2496 = vpack.c.b16 %v2488, %v2487
        %2505 = vmatprep.subr.bf16.mxu0 0
        %2506 = vmatpush1.bf16.msra.mxu0 %v2496
        %2507 = vmatprep.subr.bf16.mxu0 0
        %2508 = vmatpush1.bf16.msra.mxu0 %v2495
        %2509 = vmatprep.subr.bf16.mxu0 0
        %2510 = vmatpush1.bf16.msra.mxu0 %v2494
        %2511 = vmatprep.subr.bf16.mxu0 0
        %2512 = vmatpush1.bf16.msra.mxu0 %v2493
        %2513 = vmatprep.subr.bf16.mxu0 0
        %2514 = vmatpush1.bf16.msra.mxu0 %v2492
        %2515 = vmatprep.subr.bf16.mxu0 0
        %2516 = vmatpush1.bf16.msra.mxu0 %v2491
        %2517 = vmatprep.subr.bf16.mxu0 0
        %2518 = vmatpush1.bf16.msra.mxu0 %v2490
        %2519 = vmatprep.subr.bf16.mxu0 0
        %2520 = vmatpush1.bf16.msra.mxu0 %v2489
        %2521 = vmatprep.subr.bf16.mxu0 0
        %2522 = vmatpush2.bf16.msra.mxu0 0
        %2523 = vmatprep.subr.bf16.mxu0 0
        %2524 = vmatpush2.bf16.msra.mxu0 0
        %2525 = vmatprep.subr.bf16.mxu0 0
        %2526 = vmatpush2.bf16.msra.mxu0 0
        %2527 = vmatprep.subr.bf16.mxu0 0
        %2528 = vmatpush2.bf16.msra.mxu0 0
        %2529 = vmatprep.subr.bf16.mxu0 0
        %2530 = vmatpush2.bf16.msra.mxu0 0
        %2531 = vmatprep.subr.bf16.mxu0 0
        %2532 = vmatpush2.bf16.msra.mxu0 0
        %2533 = vmatprep.subr.bf16.mxu0 0
        %2534 = vmatpush2.bf16.msra.mxu0 0
        %2535 = vmatprep.subr.bf16.mxu0 0
        %2536 = vmatpush2.bf16.msra.mxu0 0
        %2537 = vmatprep.mubr.bf16.mxu0 0
        %2538 = vmatmul.mubr.bf16.gmra.mxu0 %v2456
        %v2539 = vpop.f32.mrf.mxu0
        %v2540 = vadd.f32 0.0, %v2539
        %v2541 = vpop.f32.mrf.mxu0
        %v2542 = vpop.f32.mrf.mxu0
        %v2543 = vpop.f32.mrf.mxu0
        %2544 = vdwg.mxu0
        %v2545 = vadd.f32 %v2438, %v2540
        %v2546 = vld [vmem:[%s2331 + $0x2] sm:$0xff]
        %v2547 = vld [vmem:[%s1 + $0x580] sm:$0xf]
        %v2548 = vld [vmem:[%s1 + $0x584] sm:$0xf]
        %v2549 = vld [vmem:[%s1 + $0x588] sm:$0xf]
        %v2550 = vld [vmem:[%s1 + $0x58c] sm:$0xf]
        %v2551 = vld [vmem:[%s1 + $0x590] sm:$0xf]
        %v2552 = vld [vmem:[%s1 + $0x594] sm:$0xf]
        %v2553 = vld [vmem:[%s1 + $0x598] sm:$0xf]
        %v2554 = vld [vmem:[%s1 + $0x59c] sm:$0xf]
        %v2555 = vld [vmem:[%s1 + $0x5a0] sm:$0xf]
        %v2556 = vld [vmem:[%s1 + $0x5a4] sm:$0xf]
        %v2557 = vld [vmem:[%s1 + $0x5a8] sm:$0xf]
        %v2558 = vld [vmem:[%s1 + $0x5ac] sm:$0xf]
        %v2559 = vld [vmem:[%s1 + $0x5b0] sm:$0xf]
        %v2560 = vld [vmem:[%s1 + $0x5b4] sm:$0xf]
        %v2561 = vld [vmem:[%s1 + $0x5b8] sm:$0xf]
        %v2562 = vld [vmem:[%s1 + $0x5bc] sm:$0xf]
        %v2563 = vpack.c.bf16 %v2546, %v2546
        %v2580 = vunpack.c.l.b16 %v2547
        %v2581 = vunpack.c.l.b16 %v2548
        %v2582 = vunpack.c.l.b16 %v2549
        %v2583 = vunpack.c.l.b16 %v2550
        %v2584 = vunpack.c.l.b16 %v2551
        %v2585 = vunpack.c.l.b16 %v2552
        %v2586 = vunpack.c.l.b16 %v2553
        %v2587 = vunpack.c.l.b16 %v2554
        %v2588 = vunpack.c.l.b16 %v2555
        %v2589 = vunpack.c.l.b16 %v2556
        %v2590 = vunpack.c.l.b16 %v2557
        %v2591 = vunpack.c.l.b16 %v2558
        %v2592 = vunpack.c.l.b16 %v2559
        %v2593 = vunpack.c.l.b16 %v2560
        %v2594 = vunpack.c.l.b16 %v2561
        %v2595 = vunpack.c.l.b16 %v2562
        %v2596 = vpack.c.b16 %v2581, %v2580
        %v2597 = vpack.c.b16 %v2583, %v2582
        %v2598 = vpack.c.b16 %v2585, %v2584
        %v2599 = vpack.c.b16 %v2587, %v2586
        %v2600 = vpack.c.b16 %v2589, %v2588
        %v2601 = vpack.c.b16 %v2591, %v2590
        %v2602 = vpack.c.b16 %v2593, %v2592
        %v2603 = vpack.c.b16 %v2595, %v2594
        %2612 = vmatprep.subr.bf16.mxu0 0
        %2613 = vmatpush1.bf16.msra.mxu0 %v2603
        %2614 = vmatprep.subr.bf16.mxu0 0
        %2615 = vmatpush1.bf16.msra.mxu0 %v2602
        %2616 = vmatprep.subr.bf16.mxu0 0
        %2617 = vmatpush1.bf16.msra.mxu0 %v2601
        %2618 = vmatprep.subr.bf16.mxu0 0
        %2619 = vmatpush1.bf16.msra.mxu0 %v2600
        %2620 = vmatprep.subr.bf16.mxu0 0
        %2621 = vmatpush1.bf16.msra.mxu0 %v2599
        %2622 = vmatprep.subr.bf16.mxu0 0
        %2623 = vmatpush1.bf16.msra.mxu0 %v2598
        %2624 = vmatprep.subr.bf16.mxu0 0
        %2625 = vmatpush1.bf16.msra.mxu0 %v2597
        %2626 = vmatprep.subr.bf16.mxu0 0
        %2627 = vmatpush1.bf16.msra.mxu0 %v2596
        %2628 = vmatprep.subr.bf16.mxu0 0
        %2629 = vmatpush2.bf16.msra.mxu0 0
        %2630 = vmatprep.subr.bf16.mxu0 0
        %2631 = vmatpush2.bf16.msra.mxu0 0
        %2632 = vmatprep.subr.bf16.mxu0 0
        %2633 = vmatpush2.bf16.msra.mxu0 0
        %2634 = vmatprep.subr.bf16.mxu0 0
        %2635 = vmatpush2.bf16.msra.mxu0 0
        %2636 = vmatprep.subr.bf16.mxu0 0
        %2637 = vmatpush2.bf16.msra.mxu0 0
        %2638 = vmatprep.subr.bf16.mxu0 0
        %2639 = vmatpush2.bf16.msra.mxu0 0
        %2640 = vmatprep.subr.bf16.mxu0 0
        %2641 = vmatpush2.bf16.msra.mxu0 0
        %2642 = vmatprep.subr.bf16.mxu0 0
        %2643 = vmatpush2.bf16.msra.mxu0 0
        %2644 = vmatprep.mubr.bf16.mxu0 0
        %2645 = vmatmul.mubr.bf16.gmra.mxu0 %v2563
        %v2646 = vpop.f32.mrf.mxu0
        %v2647 = vadd.f32 0.0, %v2646
        %v2648 = vpop.f32.mrf.mxu0
        %v2649 = vpop.f32.mrf.mxu0
        %v2650 = vpop.f32.mrf.mxu0
        %2651 = vdwg.mxu0
        %v2652 = vadd.f32 %v2545, %v2647
        %v2653 = vld [vmem:[%s2331 + $0x3] sm:$0xff]
        %v2654 = vld [vmem:[%s1 + $0x5c0] sm:$0xf]
        %v2655 = vld [vmem:[%s1 + $0x5c4] sm:$0xf]
        %v2656 = vld [vmem:[%s1 + $0x5c8] sm:$0xf]
        %v2657 = vld [vmem:[%s1 + $0x5cc] sm:$0xf]
        %v2658 = vld [vmem:[%s1 + $0x5d0] sm:$0xf]
        %v2659 = vld [vmem:[%s1 + $0x5d4] sm:$0xf]
        %v2660 = vld [vmem:[%s1 + $0x5d8] sm:$0xf]
        %v2661 = vld [vmem:[%s1 + $0x5dc] sm:$0xf]
        %v2662 = vld [vmem:[%s1 + $0x5e0] sm:$0xf]
        %v2663 = vld [vmem:[%s1 + $0x5e4] sm:$0xf]
        %v2664 = vld [vmem:[%s1 + $0x5e8] sm:$0xf]
        %v2665 = vld [vmem:[%s1 + $0x5ec] sm:$0xf]
        %v2666 = vld [vmem:[%s1 + $0x5f0] sm:$0xf]
        %v2667 = vld [vmem:[%s1 + $0x5f4] sm:$0xf]
        %v2668 = vld [vmem:[%s1 + $0x5f8] sm:$0xf]
        %v2669 = vld [vmem:[%s1 + $0x5fc] sm:$0xf]
        %v2670 = vpack.c.bf16 %v2653, %v2653
        %v2687 = vunpack.c.l.b16 %v2654
        %v2688 = vunpack.c.l.b16 %v2655
        %v2689 = vunpack.c.l.b16 %v2656
        %v2690 = vunpack.c.l.b16 %v2657
        %v2691 = vunpack.c.l.b16 %v2658
        %v2692 = vunpack.c.l.b16 %v2659
        %v2693 = vunpack.c.l.b16 %v2660
        %v2694 = vunpack.c.l.b16 %v2661
        %v2695 = vunpack.c.l.b16 %v2662
        %v2696 = vunpack.c.l.b16 %v2663
        %v2697 = vunpack.c.l.b16 %v2664
        %v2698 = vunpack.c.l.b16 %v2665
        %v2699 = vunpack.c.l.b16 %v2666
        %v2700 = vunpack.c.l.b16 %v2667
        %v2701 = vunpack.c.l.b16 %v2668
        %v2702 = vunpack.c.l.b16 %v2669
        %v2703 = vpack.c.b16 %v2688, %v2687
        %v2704 = vpack.c.b16 %v2690, %v2689
        %v2705 = vpack.c.b16 %v2692, %v2691
        %v2706 = vpack.c.b16 %v2694, %v2693
        %v2707 = vpack.c.b16 %v2696, %v2695
        %v2708 = vpack.c.b16 %v2698, %v2697
        %v2709 = vpack.c.b16 %v2700, %v2699
        %v2710 = vpack.c.b16 %v2702, %v2701
        %2719 = vmatprep.subr.bf16.mxu0 0
        %2720 = vmatpush1.bf16.msra.mxu0 %v2710
        %2721 = vmatprep.subr.bf16.mxu0 0
        %2722 = vmatpush1.bf16.msra.mxu0 %v2709
        %2723 = vmatprep.subr.bf16.mxu0 0
        %2724 = vmatpush1.bf16.msra.mxu0 %v2708
        %2725 = vmatprep.subr.bf16.mxu0 0
        %2726 = vmatpush1.bf16.msra.mxu0 %v2707
        %2727 = vmatprep.subr.bf16.mxu0 0
        %2728 = vmatpush1.bf16.msra.mxu0 %v2706
        %2729 = vmatprep.subr.bf16.mxu0 0
        %2730 = vmatpush1.bf16.msra.mxu0 %v2705
        %2731 = vmatprep.subr.bf16.mxu0 0
        %2732 = vmatpush1.bf16.msra.mxu0 %v2704
        %2733 = vmatprep.subr.bf16.mxu0 0
        %2734 = vmatpush1.bf16.msra.mxu0 %v2703
        %2735 = vmatprep.subr.bf16.mxu0 0
        %2736 = vmatpush2.bf16.msra.mxu0 0
        %2737 = vmatprep.subr.bf16.mxu0 0
        %2738 = vmatpush2.bf16.msra.mxu0 0
        %2739 = vmatprep.subr.bf16.mxu0 0
        %2740 = vmatpush2.bf16.msra.mxu0 0
        %2741 = vmatprep.subr.bf16.mxu0 0
        %2742 = vmatpush2.bf16.msra.mxu0 0
        %2743 = vmatprep.subr.bf16.mxu0 0
        %2744 = vmatpush2.bf16.msra.mxu0 0
        %2745 = vmatprep.subr.bf16.mxu0 0
        %2746 = vmatpush2.bf16.msra.mxu0 0
        %2747 = vmatprep.subr.bf16.mxu0 0
        %2748 = vmatpush2.bf16.msra.mxu0 0
        %2749 = vmatprep.subr.bf16.mxu0 0
        %2750 = vmatpush2.bf16.msra.mxu0 0
        %2751 = vmatprep.mubr.bf16.mxu0 0
        %2752 = vmatmul.mubr.bf16.gmra.mxu0 %v2670
        %v2753 = vpop.f32.mrf.mxu0
        %v2754 = vadd.f32 0.0, %v2753
        %v2755 = vpop.f32.mrf.mxu0
        %v2756 = vpop.f32.mrf.mxu0
        %v2757 = vpop.f32.mrf.mxu0
        %2758 = vdwg.mxu0
        %v2759 = vadd.f32 %v2652, %v2754
        %v2760 = vld [vmem:[%s2331 + $0x4] sm:$0xff]
        %v2761 = vld [vmem:[%s1 + $0x600] sm:$0xf]
        %v2762 = vld [vmem:[%s1 + $0x604] sm:$0xf]
        %v2763 = vld [vmem:[%s1 + $0x608] sm:$0xf]
        %v2764 = vld [vmem:[%s1 + $0x60c] sm:$0xf]
        %v2765 = vld [vmem:[%s1 + $0x610] sm:$0xf]
        %v2766 = vld [vmem:[%s1 + $0x614] sm:$0xf]
        %v2767 = vld [vmem:[%s1 + $0x618] sm:$0xf]
        %v2768 = vld [vmem:[%s1 + $0x61c] sm:$0xf]
        %v2769 = vld [vmem:[%s1 + $0x620] sm:$0xf]
        %v2770 = vld [vmem:[%s1 + $0x624] sm:$0xf]
        %v2771 = vld [vmem:[%s1 + $0x628] sm:$0xf]
        %v2772 = vld [vmem:[%s1 + $0x62c] sm:$0xf]
        %v2773 = vld [vmem:[%s1 + $0x630] sm:$0xf]
        %v2774 = vld [vmem:[%s1 + $0x634] sm:$0xf]
        %v2775 = vld [vmem:[%s1 + $0x638] sm:$0xf]
        %v2776 = vld [vmem:[%s1 + $0x63c] sm:$0xf]
        %v2777 = vpack.c.bf16 %v2760, %v2760
        %v2794 = vunpack.c.l.b16 %v2761
        %v2795 = vunpack.c.l.b16 %v2762
        %v2796 = vunpack.c.l.b16 %v2763
        %v2797 = vunpack.c.l.b16 %v2764
        %v2798 = vunpack.c.l.b16 %v2765
        %v2799 = vunpack.c.l.b16 %v2766
        %v2800 = vunpack.c.l.b16 %v2767
        %v2801 = vunpack.c.l.b16 %v2768
        %v2802 = vunpack.c.l.b16 %v2769
        %v2803 = vunpack.c.l.b16 %v2770
        %v2804 = vunpack.c.l.b16 %v2771
        %v2805 = vunpack.c.l.b16 %v2772
        %v2806 = vunpack.c.l.b16 %v2773
        %v2807 = vunpack.c.l.b16 %v2774
        %v2808 = vunpack.c.l.b16 %v2775
        %v2809 = vunpack.c.l.b16 %v2776
        %v2810 = vpack.c.b16 %v2795, %v2794
        %v2811 = vpack.c.b16 %v2797, %v2796
        %v2812 = vpack.c.b16 %v2799, %v2798
        %v2813 = vpack.c.b16 %v2801, %v2800
        %v2814 = vpack.c.b16 %v2803, %v2802
        %v2815 = vpack.c.b16 %v2805, %v2804
        %v2816 = vpack.c.b16 %v2807, %v2806
        %v2817 = vpack.c.b16 %v2809, %v2808
        %2826 = vmatprep.subr.bf16.mxu0 0
        %2827 = vmatpush1.bf16.msra.mxu0 %v2817
        %2828 = vmatprep.subr.bf16.mxu0 0
        %2829 = vmatpush1.bf16.msra.mxu0 %v2816
        %2830 = vmatprep.subr.bf16.mxu0 0
        %2831 = vmatpush1.bf16.msra.mxu0 %v2815
        %2832 = vmatprep.subr.bf16.mxu0 0
        %2833 = vmatpush1.bf16.msra.mxu0 %v2814
        %2834 = vmatprep.subr.bf16.mxu0 0
        %2835 = vmatpush1.bf16.msra.mxu0 %v2813
        %2836 = vmatprep.subr.bf16.mxu0 0
        %2837 = vmatpush1.bf16.msra.mxu0 %v2812
        %2838 = vmatprep.subr.bf16.mxu0 0
        %2839 = vmatpush1.bf16.msra.mxu0 %v2811
        %2840 = vmatprep.subr.bf16.mxu0 0
        %2841 = vmatpush1.bf16.msra.mxu0 %v2810
        %2842 = vmatprep.subr.bf16.mxu0 0
        %2843 = vmatpush2.bf16.msra.mxu0 0
        %2844 = vmatprep.subr.bf16.mxu0 0
        %2845 = vmatpush2.bf16.msra.mxu0 0
        %2846 = vmatprep.subr.bf16.mxu0 0
        %2847 = vmatpush2.bf16.msra.mxu0 0
        %2848 = vmatprep.subr.bf16.mxu0 0
        %2849 = vmatpush2.bf16.msra.mxu0 0
        %2850 = vmatprep.subr.bf16.mxu0 0
        %2851 = vmatpush2.bf16.msra.mxu0 0
        %2852 = vmatprep.subr.bf16.mxu0 0
        %2853 = vmatpush2.bf16.msra.mxu0 0
        %2854 = vmatprep.subr.bf16.mxu0 0
        %2855 = vmatpush2.bf16.msra.mxu0 0
        %2856 = vmatprep.subr.bf16.mxu0 0
        %2857 = vmatpush2.bf16.msra.mxu0 0
        %2858 = vmatprep.mubr.bf16.mxu0 0
        %2859 = vmatmul.mubr.bf16.gmra.mxu0 %v2777
        %v2860 = vpop.f32.mrf.mxu0
        %v2861 = vadd.f32 0.0, %v2860
        %v2862 = vpop.f32.mrf.mxu0
        %v2863 = vpop.f32.mrf.mxu0
        %v2864 = vpop.f32.mrf.mxu0
        %2865 = vdwg.mxu0
        %v2866 = vadd.f32 %v2759, %v2861
        %2867 = vmatprep.subr.bf16.mxu0 0
        %2868 = vmatpush1.bf16.msra.mxu0 %v257
        %2869 = vmatprep.subr.bf16.mxu0 0
        %2870 = vmatpush1.bf16.msra.mxu0 %v256
        %2871 = vmatprep.subr.bf16.mxu0 0
        %2872 = vmatpush1.bf16.msra.mxu0 %v255
        %2873 = vmatprep.subr.bf16.mxu0 0
        %2874 = vmatpush1.bf16.msra.mxu0 %v254
        %2875 = vmatprep.subr.bf16.mxu0 0
        %2876 = vmatpush1.bf16.msra.mxu0 %v253
        %2877 = vmatprep.subr.bf16.mxu0 0
        %2878 = vmatpush1.bf16.msra.mxu0 %v252
        %2879 = vmatprep.subr.bf16.mxu0 0
        %2880 = vmatpush1.bf16.msra.mxu0 %v251
        %2881 = vmatprep.subr.bf16.mxu0 0
        %2882 = vmatpush1.bf16.msra.mxu0 %v250
        %2883 = vmatprep.subr.bf16.mxu0 0
        %2884 = vmatpush2.bf16.msra.mxu0 0
        %2885 = vmatprep.subr.bf16.mxu0 0
        %2886 = vmatpush2.bf16.msra.mxu0 0
        %2887 = vmatprep.subr.bf16.mxu0 0
        %2888 = vmatpush2.bf16.msra.mxu0 0
        %2889 = vmatprep.subr.bf16.mxu0 0
        %2890 = vmatpush2.bf16.msra.mxu0 0
        %2891 = vmatprep.subr.bf16.mxu0 0
        %2892 = vmatpush2.bf16.msra.mxu0 0
        %2893 = vmatprep.subr.bf16.mxu0 0
        %2894 = vmatpush2.bf16.msra.mxu0 0
        %2895 = vmatprep.subr.bf16.mxu0 0
        %2896 = vmatpush2.bf16.msra.mxu0 0
        %2897 = vmatprep.subr.bf16.mxu0 0
        %2898 = vmatpush2.bf16.msra.mxu0 0
        %2899 = vmatprep.mubr.bf16.mxu0 0
        %2900 = vmatmul.mubr.bf16.gmra.mxu0 %v842
        %v2901 = vpop.f32.mrf.mxu0
        %v2902 = vadd.f32 0.0, %v2901
        %v2903 = vpop.f32.mrf.mxu0
        %v2904 = vpop.f32.mrf.mxu0
        %v2905 = vpop.f32.mrf.mxu0
        %2906 = vdwg.mxu0
        %2907 = vmatprep.subr.bf16.mxu0 0
        %2908 = vmatpush1.bf16.msra.mxu0 %v345
        %2909 = vmatprep.subr.bf16.mxu0 0
        %2910 = vmatpush1.bf16.msra.mxu0 %v344
        %2911 = vmatprep.subr.bf16.mxu0 0
        %2912 = vmatpush1.bf16.msra.mxu0 %v343
        %2913 = vmatprep.subr.bf16.mxu0 0
        %2914 = vmatpush1.bf16.msra.mxu0 %v342
        %2915 = vmatprep.subr.bf16.mxu0 0
        %2916 = vmatpush1.bf16.msra.mxu0 %v341
        %2917 = vmatprep.subr.bf16.mxu0 0
        %2918 = vmatpush1.bf16.msra.mxu0 %v340
        %2919 = vmatprep.subr.bf16.mxu0 0
        %2920 = vmatpush1.bf16.msra.mxu0 %v339
        %2921 = vmatprep.subr.bf16.mxu0 0
        %2922 = vmatpush1.bf16.msra.mxu0 %v338
        %2923 = vmatprep.subr.bf16.mxu0 0
        %2924 = vmatpush2.bf16.msra.mxu0 0
        %2925 = vmatprep.subr.bf16.mxu0 0
        %2926 = vmatpush2.bf16.msra.mxu0 0
        %2927 = vmatprep.subr.bf16.mxu0 0
        %2928 = vmatpush2.bf16.msra.mxu0 0
        %2929 = vmatprep.subr.bf16.mxu0 0
        %2930 = vmatpush2.bf16.msra.mxu0 0
        %2931 = vmatprep.subr.bf16.mxu0 0
        %2932 = vmatpush2.bf16.msra.mxu0 0
        %2933 = vmatprep.subr.bf16.mxu0 0
        %2934 = vmatpush2.bf16.msra.mxu0 0
        %2935 = vmatprep.subr.bf16.mxu0 0
        %2936 = vmatpush2.bf16.msra.mxu0 0
        %2937 = vmatprep.subr.bf16.mxu0 0
        %2938 = vmatpush2.bf16.msra.mxu0 0
        %2939 = vmatprep.mubr.bf16.mxu0 0
        %2940 = vmatmul.mubr.bf16.gmra.mxu0 %v735
        %v2941 = vpop.f32.mrf.mxu0
        %v2942 = vadd.f32 %v2902, %v2941
        %v2943 = vpop.f32.mrf.mxu0
        %v2944 = vpop.f32.mrf.mxu0
        %v2945 = vpop.f32.mrf.mxu0
        %2946 = vdwg.mxu0
        %2947 = vmatprep.subr.bf16.mxu0 0
        %2948 = vmatpush1.bf16.msra.mxu0 %v451
        %2949 = vmatprep.subr.bf16.mxu0 0
        %2950 = vmatpush1.bf16.msra.mxu0 %v450
        %2951 = vmatprep.subr.bf16.mxu0 0
        %2952 = vmatpush1.bf16.msra.mxu0 %v449
        %2953 = vmatprep.subr.bf16.mxu0 0
        %2954 = vmatpush1.bf16.msra.mxu0 %v448
        %2955 = vmatprep.subr.bf16.mxu0 0
        %2956 = vmatpush1.bf16.msra.mxu0 %v447
        %2957 = vmatprep.subr.bf16.mxu0 0
        %2958 = vmatpush1.bf16.msra.mxu0 %v446
        %2959 = vmatprep.subr.bf16.mxu0 0
        %2960 = vmatpush1.bf16.msra.mxu0 %v445
        %2961 = vmatprep.subr.bf16.mxu0 0
        %2962 = vmatpush1.bf16.msra.mxu0 %v444
        %2963 = vmatprep.subr.bf16.mxu0 0
        %2964 = vmatpush2.bf16.msra.mxu0 0
        %2965 = vmatprep.subr.bf16.mxu0 0
        %2966 = vmatpush2.bf16.msra.mxu0 0
        %2967 = vmatprep.subr.bf16.mxu0 0
        %2968 = vmatpush2.bf16.msra.mxu0 0
        %2969 = vmatprep.subr.bf16.mxu0 0
        %2970 = vmatpush2.bf16.msra.mxu0 0
        %2971 = vmatprep.subr.bf16.mxu0 0
        %2972 = vmatpush2.bf16.msra.mxu0 0
        %2973 = vmatprep.subr.bf16.mxu0 0
        %2974 = vmatpush2.bf16.msra.mxu0 0
        %2975 = vmatprep.subr.bf16.mxu0 0
        %2976 = vmatpush2.bf16.msra.mxu0 0
        %2977 = vmatprep.subr.bf16.mxu0 0
        %2978 = vmatpush2.bf16.msra.mxu0 0
        %2979 = vmatprep.mubr.bf16.mxu0 0
        %2980 = vmatmul.mubr.bf16.gmra.mxu0 %v949
        %v2981 = vpop.f32.mrf.mxu0
        %v2982 = vadd.f32 0.0, %v2981
        %v2983 = vpop.f32.mrf.mxu0
        %v2984 = vpop.f32.mrf.mxu0
        %v2985 = vpop.f32.mrf.mxu0
        %2986 = vdwg.mxu0
        %v2987 = vadd.f32 %v2942, %v2982
        %2988 = vmatprep.subr.bf16.mxu0 0
        %2989 = vmatpush1.bf16.msra.mxu0 %v558
        %2990 = vmatprep.subr.bf16.mxu0 0
        %2991 = vmatpush1.bf16.msra.mxu0 %v557
        %2992 = vmatprep.subr.bf16.mxu0 0
        %2993 = vmatpush1.bf16.msra.mxu0 %v556
        %2994 = vmatprep.subr.bf16.mxu0 0
        %2995 = vmatpush1.bf16.msra.mxu0 %v555
        %2996 = vmatprep.subr.bf16.mxu0 0
        %2997 = vmatpush1.bf16.msra.mxu0 %v554
        %2998 = vmatprep.subr.bf16.mxu0 0
        %2999 = vmatpush1.bf16.msra.mxu0 %v553
        %3000 = vmatprep.subr.bf16.mxu0 0
        %3001 = vmatpush1.bf16.msra.mxu0 %v552
        %3002 = vmatprep.subr.bf16.mxu0 0
        %3003 = vmatpush1.bf16.msra.mxu0 %v551
        %3004 = vmatprep.subr.bf16.mxu0 0
        %3005 = vmatpush2.bf16.msra.mxu0 0
        %3006 = vmatprep.subr.bf16.mxu0 0
        %3007 = vmatpush2.bf16.msra.mxu0 0
        %3008 = vmatprep.subr.bf16.mxu0 0
        %3009 = vmatpush2.bf16.msra.mxu0 0
        %3010 = vmatprep.subr.bf16.mxu0 0
        %3011 = vmatpush2.bf16.msra.mxu0 0
        %3012 = vmatprep.subr.bf16.mxu0 0
        %3013 = vmatpush2.bf16.msra.mxu0 0
        %3014 = vmatprep.subr.bf16.mxu0 0
        %3015 = vmatpush2.bf16.msra.mxu0 0
        %3016 = vmatprep.subr.bf16.mxu0 0
        %3017 = vmatpush2.bf16.msra.mxu0 0
        %3018 = vmatprep.subr.bf16.mxu0 0
        %3019 = vmatpush2.bf16.msra.mxu0 0
        %3020 = vmatprep.mubr.bf16.mxu0 0
        %3021 = vmatmul.mubr.bf16.gmra.mxu0 %v1056
        %v3022 = vpop.f32.mrf.mxu0
        %v3023 = vadd.f32 0.0, %v3022
        %v3024 = vpop.f32.mrf.mxu0
        %v3025 = vpop.f32.mrf.mxu0
        %v3026 = vpop.f32.mrf.mxu0
        %3027 = vdwg.mxu0
        %v3028 = vadd.f32 %v2987, %v3023
        %3029 = vmatprep.subr.bf16.mxu0 0
        %3030 = vmatpush1.bf16.msra.mxu0 %v665
        %3031 = vmatprep.subr.bf16.mxu0 0
        %3032 = vmatpush1.bf16.msra.mxu0 %v664
        %3033 = vmatprep.subr.bf16.mxu0 0
        %3034 = vmatpush1.bf16.msra.mxu0 %v663
        %3035 = vmatprep.subr.bf16.mxu0 0
        %3036 = vmatpush1.bf16.msra.mxu0 %v662
        %3037 = vmatprep.subr.bf16.mxu0 0
        %3038 = vmatpush1.bf16.msra.mxu0 %v661
        %3039 = vmatprep.subr.bf16.mxu0 0
        %3040 = vmatpush1.bf16.msra.mxu0 %v660
        %3041 = vmatprep.subr.bf16.mxu0 0
        %3042 = vmatpush1.bf16.msra.mxu0 %v659
        %3043 = vmatprep.subr.bf16.mxu0 0
        %3044 = vmatpush1.bf16.msra.mxu0 %v658
        %3045 = vmatprep.subr.bf16.mxu0 0
        %3046 = vmatpush2.bf16.msra.mxu0 0
        %3047 = vmatprep.subr.bf16.mxu0 0
        %3048 = vmatpush2.bf16.msra.mxu0 0
        %3049 = vmatprep.subr.bf16.mxu0 0
        %3050 = vmatpush2.bf16.msra.mxu0 0
        %3051 = vmatprep.subr.bf16.mxu0 0
        %3052 = vmatpush2.bf16.msra.mxu0 0
        %3053 = vmatprep.subr.bf16.mxu0 0
        %3054 = vmatpush2.bf16.msra.mxu0 0
        %3055 = vmatprep.subr.bf16.mxu0 0
        %3056 = vmatpush2.bf16.msra.mxu0 0
        %3057 = vmatprep.subr.bf16.mxu0 0
        %3058 = vmatpush2.bf16.msra.mxu0 0
        %3059 = vmatprep.subr.bf16.mxu0 0
        %3060 = vmatpush2.bf16.msra.mxu0 0
        %3061 = vmatprep.mubr.bf16.mxu0 0
        %3062 = vmatmul.mubr.bf16.gmra.mxu0 %v1163
        %v3063 = vpop.f32.mrf.mxu0
        %v3064 = vadd.f32 0.0, %v3063
        %v3065 = vpop.f32.mrf.mxu0
        %v3066 = vpop.f32.mrf.mxu0
        %v3067 = vpop.f32.mrf.mxu0
        %3068 = vdwg.mxu0
        %v3069 = vadd.f32 %v3028, %v3064
        %3070 = vmatprep.subr.bf16.mxu0 0
        %3071 = vmatpush1.bf16.msra.mxu0 %v775
        %3072 = vmatprep.subr.bf16.mxu0 0
        %3073 = vmatpush1.bf16.msra.mxu0 %v774
        %3074 = vmatprep.subr.bf16.mxu0 0
        %3075 = vmatpush1.bf16.msra.mxu0 %v773
        %3076 = vmatprep.subr.bf16.mxu0 0
        %3077 = vmatpush1.bf16.msra.mxu0 %v772
        %3078 = vmatprep.subr.bf16.mxu0 0
        %3079 = vmatpush1.bf16.msra.mxu0 %v771
        %3080 = vmatprep.subr.bf16.mxu0 0
        %3081 = vmatpush1.bf16.msra.mxu0 %v770
        %3082 = vmatprep.subr.bf16.mxu0 0
        %3083 = vmatpush1.bf16.msra.mxu0 %v769
        %3084 = vmatprep.subr.bf16.mxu0 0
        %3085 = vmatpush1.bf16.msra.mxu0 %v768
        %3086 = vmatprep.subr.bf16.mxu0 0
        %3087 = vmatpush2.bf16.msra.mxu0 0
        %3088 = vmatprep.subr.bf16.mxu0 0
        %3089 = vmatpush2.bf16.msra.mxu0 0
        %3090 = vmatprep.subr.bf16.mxu0 0
        %3091 = vmatpush2.bf16.msra.mxu0 0
        %3092 = vmatprep.subr.bf16.mxu0 0
        %3093 = vmatpush2.bf16.msra.mxu0 0
        %3094 = vmatprep.subr.bf16.mxu0 0
        %3095 = vmatpush2.bf16.msra.mxu0 0
        %3096 = vmatprep.subr.bf16.mxu0 0
        %3097 = vmatpush2.bf16.msra.mxu0 0
        %3098 = vmatprep.subr.bf16.mxu0 0
        %3099 = vmatpush2.bf16.msra.mxu0 0
        %3100 = vmatprep.subr.bf16.mxu0 0
        %3101 = vmatpush2.bf16.msra.mxu0 0
        %3102 = vmatprep.mubr.bf16.mxu0 0
        %3103 = vmatmul.mubr.bf16.gmra.mxu0 %v1273
        %v3104 = vpop.f32.mrf.mxu0
        %v3105 = vadd.f32 0.0, %v3104
        %v3106 = vpop.f32.mrf.mxu0
        %v3107 = vpop.f32.mrf.mxu0
        %v3108 = vpop.f32.mrf.mxu0
        %3109 = vdwg.mxu0
        %v3110 = vadd.f32 %v3069, %v3105
        %3111 = vmatprep.subr.bf16.mxu0 0
        %3112 = vmatpush1.bf16.msra.mxu0 %v882
        %3113 = vmatprep.subr.bf16.mxu0 0
        %3114 = vmatpush1.bf16.msra.mxu0 %v881
        %3115 = vmatprep.subr.bf16.mxu0 0
        %3116 = vmatpush1.bf16.msra.mxu0 %v880
        %3117 = vmatprep.subr.bf16.mxu0 0
        %3118 = vmatpush1.bf16.msra.mxu0 %v879
        %3119 = vmatprep.subr.bf16.mxu0 0
        %3120 = vmatpush1.bf16.msra.mxu0 %v878
        %3121 = vmatprep.subr.bf16.mxu0 0
        %3122 = vmatpush1.bf16.msra.mxu0 %v877
        %3123 = vmatprep.subr.bf16.mxu0 0
        %3124 = vmatpush1.bf16.msra.mxu0 %v876
        %3125 = vmatprep.subr.bf16.mxu0 0
        %3126 = vmatpush1.bf16.msra.mxu0 %v875
        %3127 = vmatprep.subr.bf16.mxu0 0
        %3128 = vmatpush2.bf16.msra.mxu0 0
        %3129 = vmatprep.subr.bf16.mxu0 0
        %3130 = vmatpush2.bf16.msra.mxu0 0
        %3131 = vmatprep.subr.bf16.mxu0 0
        %3132 = vmatpush2.bf16.msra.mxu0 0
        %3133 = vmatprep.subr.bf16.mxu0 0
        %3134 = vmatpush2.bf16.msra.mxu0 0
        %3135 = vmatprep.subr.bf16.mxu0 0
        %3136 = vmatpush2.bf16.msra.mxu0 0
        %3137 = vmatprep.subr.bf16.mxu0 0
        %3138 = vmatpush2.bf16.msra.mxu0 0
        %3139 = vmatprep.subr.bf16.mxu0 0
        %3140 = vmatpush2.bf16.msra.mxu0 0
        %3141 = vmatprep.subr.bf16.mxu0 0
        %3142 = vmatpush2.bf16.msra.mxu0 0
        %3143 = vmatprep.mubr.bf16.mxu0 0
        %3144 = vmatmul.mubr.bf16.gmra.mxu0 %v1380
        %v3145 = vpop.f32.mrf.mxu0
        %v3146 = vadd.f32 0.0, %v3145
        %v3147 = vpop.f32.mrf.mxu0
        %v3148 = vpop.f32.mrf.mxu0
        %v3149 = vpop.f32.mrf.mxu0
        %3150 = vdwg.mxu0
        %v3151 = vadd.f32 %v3110, %v3146
        %3152 = vmatprep.subr.bf16.mxu0 0
        %3153 = vmatpush1.bf16.msra.mxu0 %v989
        %3154 = vmatprep.subr.bf16.mxu0 0
        %3155 = vmatpush1.bf16.msra.mxu0 %v988
        %3156 = vmatprep.subr.bf16.mxu0 0
        %3157 = vmatpush1.bf16.msra.mxu0 %v987
        %3158 = vmatprep.subr.bf16.mxu0 0
        %3159 = vmatpush1.bf16.msra.mxu0 %v986
        %3160 = vmatprep.subr.bf16.mxu0 0
        %3161 = vmatpush1.bf16.msra.mxu0 %v985
        %3162 = vmatprep.subr.bf16.mxu0 0
        %3163 = vmatpush1.bf16.msra.mxu0 %v984
        %3164 = vmatprep.subr.bf16.mxu0 0
        %3165 = vmatpush1.bf16.msra.mxu0 %v983
        %3166 = vmatprep.subr.bf16.mxu0 0
        %3167 = vmatpush1.bf16.msra.mxu0 %v982
        %3168 = vmatprep.subr.bf16.mxu0 0
        %3169 = vmatpush2.bf16.msra.mxu0 0
        %3170 = vmatprep.subr.bf16.mxu0 0
        %3171 = vmatpush2.bf16.msra.mxu0 0
        %3172 = vmatprep.subr.bf16.mxu0 0
        %3173 = vmatpush2.bf16.msra.mxu0 0
        %3174 = vmatprep.subr.bf16.mxu0 0
        %3175 = vmatpush2.bf16.msra.mxu0 0
        %3176 = vmatprep.subr.bf16.mxu0 0
        %3177 = vmatpush2.bf16.msra.mxu0 0
        %3178 = vmatprep.subr.bf16.mxu0 0
        %3179 = vmatpush2.bf16.msra.mxu0 0
        %3180 = vmatprep.subr.bf16.mxu0 0
        %3181 = vmatpush2.bf16.msra.mxu0 0
        %3182 = vmatprep.subr.bf16.mxu0 0
        %3183 = vmatpush2.bf16.msra.mxu0 0
        %3184 = vmatprep.mubr.bf16.mxu0 0
        %3185 = vmatmul.mubr.bf16.gmra.mxu0 %v1487
        %v3186 = vpop.f32.mrf.mxu0
        %v3187 = vadd.f32 0.0, %v3186
        %v3188 = vpop.f32.mrf.mxu0
        %v3189 = vpop.f32.mrf.mxu0
        %v3190 = vpop.f32.mrf.mxu0
        %3191 = vdwg.mxu0
        %v3192 = vadd.f32 %v3151, %v3187
        %3193 = vmatprep.subr.bf16.mxu0 0
        %3194 = vmatpush1.bf16.msra.mxu0 %v1096
        %3195 = vmatprep.subr.bf16.mxu0 0
        %3196 = vmatpush1.bf16.msra.mxu0 %v1095
        %3197 = vmatprep.subr.bf16.mxu0 0
        %3198 = vmatpush1.bf16.msra.mxu0 %v1094
        %3199 = vmatprep.subr.bf16.mxu0 0
        %3200 = vmatpush1.bf16.msra.mxu0 %v1093
        %3201 = vmatprep.subr.bf16.mxu0 0
        %3202 = vmatpush1.bf16.msra.mxu0 %v1092
        %3203 = vmatprep.subr.bf16.mxu0 0
        %3204 = vmatpush1.bf16.msra.mxu0 %v1091
        %3205 = vmatprep.subr.bf16.mxu0 0
        %3206 = vmatpush1.bf16.msra.mxu0 %v1090
        %3207 = vmatprep.subr.bf16.mxu0 0
        %3208 = vmatpush1.bf16.msra.mxu0 %v1089
        %3209 = vmatprep.subr.bf16.mxu0 0
        %3210 = vmatpush2.bf16.msra.mxu0 0
        %3211 = vmatprep.subr.bf16.mxu0 0
        %3212 = vmatpush2.bf16.msra.mxu0 0
        %3213 = vmatprep.subr.bf16.mxu0 0
        %3214 = vmatpush2.bf16.msra.mxu0 0
        %3215 = vmatprep.subr.bf16.mxu0 0
        %3216 = vmatpush2.bf16.msra.mxu0 0
        %3217 = vmatprep.subr.bf16.mxu0 0
        %3218 = vmatpush2.bf16.msra.mxu0 0
        %3219 = vmatprep.subr.bf16.mxu0 0
        %3220 = vmatpush2.bf16.msra.mxu0 0
        %3221 = vmatprep.subr.bf16.mxu0 0
        %3222 = vmatpush2.bf16.msra.mxu0 0
        %3223 = vmatprep.subr.bf16.mxu0 0
        %3224 = vmatpush2.bf16.msra.mxu0 0
        %3225 = vmatprep.mubr.bf16.mxu0 0
        %3226 = vmatmul.mubr.bf16.gmra.mxu0 %v1594
        %v3227 = vpop.f32.mrf.mxu0
        %v3228 = vadd.f32 0.0, %v3227
        %v3229 = vpop.f32.mrf.mxu0
        %v3230 = vpop.f32.mrf.mxu0
        %v3231 = vpop.f32.mrf.mxu0
        %3232 = vdwg.mxu0
        %v3233 = vadd.f32 %v3192, %v3228
        %3234 = vmatprep.subr.bf16.mxu0 0
        %3235 = vmatpush1.bf16.msra.mxu0 %v1203
        %3236 = vmatprep.subr.bf16.mxu0 0
        %3237 = vmatpush1.bf16.msra.mxu0 %v1202
        %3238 = vmatprep.subr.bf16.mxu0 0
        %3239 = vmatpush1.bf16.msra.mxu0 %v1201
        %3240 = vmatprep.subr.bf16.mxu0 0
        %3241 = vmatpush1.bf16.msra.mxu0 %v1200
        %3242 = vmatprep.subr.bf16.mxu0 0
        %3243 = vmatpush1.bf16.msra.mxu0 %v1199
        %3244 = vmatprep.subr.bf16.mxu0 0
        %3245 = vmatpush1.bf16.msra.mxu0 %v1198
        %3246 = vmatprep.subr.bf16.mxu0 0
        %3247 = vmatpush1.bf16.msra.mxu0 %v1197
        %3248 = vmatprep.subr.bf16.mxu0 0
        %3249 = vmatpush1.bf16.msra.mxu0 %v1196
        %3250 = vmatprep.subr.bf16.mxu0 0
        %3251 = vmatpush2.bf16.msra.mxu0 0
        %3252 = vmatprep.subr.bf16.mxu0 0
        %3253 = vmatpush2.bf16.msra.mxu0 0
        %3254 = vmatprep.subr.bf16.mxu0 0
        %3255 = vmatpush2.bf16.msra.mxu0 0
        %3256 = vmatprep.subr.bf16.mxu0 0
        %3257 = vmatpush2.bf16.msra.mxu0 0
        %3258 = vmatprep.subr.bf16.mxu0 0
        %3259 = vmatpush2.bf16.msra.mxu0 0
        %3260 = vmatprep.subr.bf16.mxu0 0
        %3261 = vmatpush2.bf16.msra.mxu0 0
        %3262 = vmatprep.subr.bf16.mxu0 0
        %3263 = vmatpush2.bf16.msra.mxu0 0
        %3264 = vmatprep.subr.bf16.mxu0 0
        %3265 = vmatpush2.bf16.msra.mxu0 0
        %3266 = vmatprep.mubr.bf16.mxu0 0
        %3267 = vmatmul.mubr.bf16.gmra.mxu0 %v1701
        %v3268 = vpop.f32.mrf.mxu0
        %v3269 = vadd.f32 0.0, %v3268
        %v3270 = vpop.f32.mrf.mxu0
        %v3271 = vpop.f32.mrf.mxu0
        %v3272 = vpop.f32.mrf.mxu0
        %3273 = vdwg.mxu0
        %v3274 = vadd.f32 %v3233, %v3269
        %3275 = vmatprep.subr.bf16.mxu0 0
        %3276 = vmatpush1.bf16.msra.mxu0 %v1313
        %3277 = vmatprep.subr.bf16.mxu0 0
        %3278 = vmatpush1.bf16.msra.mxu0 %v1312
        %3279 = vmatprep.subr.bf16.mxu0 0
        %3280 = vmatpush1.bf16.msra.mxu0 %v1311
        %3281 = vmatprep.subr.bf16.mxu0 0
        %3282 = vmatpush1.bf16.msra.mxu0 %v1310
        %3283 = vmatprep.subr.bf16.mxu0 0
        %3284 = vmatpush1.bf16.msra.mxu0 %v1309
        %3285 = vmatprep.subr.bf16.mxu0 0
        %3286 = vmatpush1.bf16.msra.mxu0 %v1308
        %3287 = vmatprep.subr.bf16.mxu0 0
        %3288 = vmatpush1.bf16.msra.mxu0 %v1307
        %3289 = vmatprep.subr.bf16.mxu0 0
        %3290 = vmatpush1.bf16.msra.mxu0 %v1306
        %3291 = vmatprep.subr.bf16.mxu0 0
        %3292 = vmatpush2.bf16.msra.mxu0 0
        %3293 = vmatprep.subr.bf16.mxu0 0
        %3294 = vmatpush2.bf16.msra.mxu0 0
        %3295 = vmatprep.subr.bf16.mxu0 0
        %3296 = vmatpush2.bf16.msra.mxu0 0
        %3297 = vmatprep.subr.bf16.mxu0 0
        %3298 = vmatpush2.bf16.msra.mxu0 0
        %3299 = vmatprep.subr.bf16.mxu0 0
        %3300 = vmatpush2.bf16.msra.mxu0 0
        %3301 = vmatprep.subr.bf16.mxu0 0
        %3302 = vmatpush2.bf16.msra.mxu0 0
        %3303 = vmatprep.subr.bf16.mxu0 0
        %3304 = vmatpush2.bf16.msra.mxu0 0
        %3305 = vmatprep.subr.bf16.mxu0 0
        %3306 = vmatpush2.bf16.msra.mxu0 0
        %3307 = vmatprep.mubr.bf16.mxu0 0
        %3308 = vmatmul.mubr.bf16.gmra.mxu0 %v1811
        %v3309 = vpop.f32.mrf.mxu0
        %v3310 = vadd.f32 0.0, %v3309
        %v3311 = vpop.f32.mrf.mxu0
        %v3312 = vpop.f32.mrf.mxu0
        %v3313 = vpop.f32.mrf.mxu0
        %3314 = vdwg.mxu0
        %v3315 = vadd.f32 %v3274, %v3310
        %3316 = vmatprep.subr.bf16.mxu0 0
        %3317 = vmatpush1.bf16.msra.mxu0 %v1420
        %3318 = vmatprep.subr.bf16.mxu0 0
        %3319 = vmatpush1.bf16.msra.mxu0 %v1419
        %3320 = vmatprep.subr.bf16.mxu0 0
        %3321 = vmatpush1.bf16.msra.mxu0 %v1418
        %3322 = vmatprep.subr.bf16.mxu0 0
        %3323 = vmatpush1.bf16.msra.mxu0 %v1417
        %3324 = vmatprep.subr.bf16.mxu0 0
        %3325 = vmatpush1.bf16.msra.mxu0 %v1416
        %3326 = vmatprep.subr.bf16.mxu0 0
        %3327 = vmatpush1.bf16.msra.mxu0 %v1415
        %3328 = vmatprep.subr.bf16.mxu0 0
        %3329 = vmatpush1.bf16.msra.mxu0 %v1414
        %3330 = vmatprep.subr.bf16.mxu0 0
        %3331 = vmatpush1.bf16.msra.mxu0 %v1413
        %3332 = vmatprep.subr.bf16.mxu0 0
        %3333 = vmatpush2.bf16.msra.mxu0 0
        %3334 = vmatprep.subr.bf16.mxu0 0
        %3335 = vmatpush2.bf16.msra.mxu0 0
        %3336 = vmatprep.subr.bf16.mxu0 0
        %3337 = vmatpush2.bf16.msra.mxu0 0
        %3338 = vmatprep.subr.bf16.mxu0 0
        %3339 = vmatpush2.bf16.msra.mxu0 0
        %3340 = vmatprep.subr.bf16.mxu0 0
        %3341 = vmatpush2.bf16.msra.mxu0 0
        %3342 = vmatprep.subr.bf16.mxu0 0
        %3343 = vmatpush2.bf16.msra.mxu0 0
        %3344 = vmatprep.subr.bf16.mxu0 0
        %3345 = vmatpush2.bf16.msra.mxu0 0
        %3346 = vmatprep.subr.bf16.mxu0 0
        %3347 = vmatpush2.bf16.msra.mxu0 0
        %3348 = vmatprep.mubr.bf16.mxu0 0
        %3349 = vmatmul.mubr.bf16.gmra.mxu0 %v1918
        %v3350 = vpop.f32.mrf.mxu0
        %v3351 = vadd.f32 0.0, %v3350
        %v3352 = vpop.f32.mrf.mxu0
        %v3353 = vpop.f32.mrf.mxu0
        %v3354 = vpop.f32.mrf.mxu0
        %3355 = vdwg.mxu0
        %v3356 = vadd.f32 %v3315, %v3351
        %3357 = vmatprep.subr.bf16.mxu0 0
        %3358 = vmatpush1.bf16.msra.mxu0 %v1527
        %3359 = vmatprep.subr.bf16.mxu0 0
        %3360 = vmatpush1.bf16.msra.mxu0 %v1526
        %3361 = vmatprep.subr.bf16.mxu0 0
        %3362 = vmatpush1.bf16.msra.mxu0 %v1525
        %3363 = vmatprep.subr.bf16.mxu0 0
        %3364 = vmatpush1.bf16.msra.mxu0 %v1524
        %3365 = vmatprep.subr.bf16.mxu0 0
        %3366 = vmatpush1.bf16.msra.mxu0 %v1523
        %3367 = vmatprep.subr.bf16.mxu0 0
        %3368 = vmatpush1.bf16.msra.mxu0 %v1522
        %3369 = vmatprep.subr.bf16.mxu0 0
        %3370 = vmatpush1.bf16.msra.mxu0 %v1521
        %3371 = vmatprep.subr.bf16.mxu0 0
        %3372 = vmatpush1.bf16.msra.mxu0 %v1520
        %3373 = vmatprep.subr.bf16.mxu0 0
        %3374 = vmatpush2.bf16.msra.mxu0 0
        %3375 = vmatprep.subr.bf16.mxu0 0
        %3376 = vmatpush2.bf16.msra.mxu0 0
        %3377 = vmatprep.subr.bf16.mxu0 0
        %3378 = vmatpush2.bf16.msra.mxu0 0
        %3379 = vmatprep.subr.bf16.mxu0 0
        %3380 = vmatpush2.bf16.msra.mxu0 0
        %3381 = vmatprep.subr.bf16.mxu0 0
        %3382 = vmatpush2.bf16.msra.mxu0 0
        %3383 = vmatprep.subr.bf16.mxu0 0
        %3384 = vmatpush2.bf16.msra.mxu0 0
        %3385 = vmatprep.subr.bf16.mxu0 0
        %3386 = vmatpush2.bf16.msra.mxu0 0
        %3387 = vmatprep.subr.bf16.mxu0 0
        %3388 = vmatpush2.bf16.msra.mxu0 0
        %3389 = vmatprep.mubr.bf16.mxu0 0
        %3390 = vmatmul.mubr.bf16.gmra.mxu0 %v2025
        %v3391 = vpop.f32.mrf.mxu0
        %v3392 = vadd.f32 0.0, %v3391
        %v3393 = vpop.f32.mrf.mxu0
        %v3394 = vpop.f32.mrf.mxu0
        %v3395 = vpop.f32.mrf.mxu0
        %3396 = vdwg.mxu0
        %v3397 = vadd.f32 %v3356, %v3392
        %3398 = vmatprep.subr.bf16.mxu0 0
        %3399 = vmatpush1.bf16.msra.mxu0 %v1634
        %3400 = vmatprep.subr.bf16.mxu0 0
        %3401 = vmatpush1.bf16.msra.mxu0 %v1633
        %3402 = vmatprep.subr.bf16.mxu0 0
        %3403 = vmatpush1.bf16.msra.mxu0 %v1632
        %3404 = vmatprep.subr.bf16.mxu0 0
        %3405 = vmatpush1.bf16.msra.mxu0 %v1631
        %3406 = vmatprep.subr.bf16.mxu0 0
        %3407 = vmatpush1.bf16.msra.mxu0 %v1630
        %3408 = vmatprep.subr.bf16.mxu0 0
        %3409 = vmatpush1.bf16.msra.mxu0 %v1629
        %3410 = vmatprep.subr.bf16.mxu0 0
        %3411 = vmatpush1.bf16.msra.mxu0 %v1628
        %3412 = vmatprep.subr.bf16.mxu0 0
        %3413 = vmatpush1.bf16.msra.mxu0 %v1627
        %3414 = vmatprep.subr.bf16.mxu0 0
        %3415 = vmatpush2.bf16.msra.mxu0 0
        %3416 = vmatprep.subr.bf16.mxu0 0
        %3417 = vmatpush2.bf16.msra.mxu0 0
        %3418 = vmatprep.subr.bf16.mxu0 0
        %3419 = vmatpush2.bf16.msra.mxu0 0
        %3420 = vmatprep.subr.bf16.mxu0 0
        %3421 = vmatpush2.bf16.msra.mxu0 0
        %3422 = vmatprep.subr.bf16.mxu0 0
        %3423 = vmatpush2.bf16.msra.mxu0 0
        %3424 = vmatprep.subr.bf16.mxu0 0
        %3425 = vmatpush2.bf16.msra.mxu0 0
        %3426 = vmatprep.subr.bf16.mxu0 0
        %3427 = vmatpush2.bf16.msra.mxu0 0
        %3428 = vmatprep.subr.bf16.mxu0 0
        %3429 = vmatpush2.bf16.msra.mxu0 0
        %3430 = vmatprep.mubr.bf16.mxu0 0
        %3431 = vmatmul.mubr.bf16.gmra.mxu0 %v2132
        %v3432 = vpop.f32.mrf.mxu0
        %v3433 = vadd.f32 0.0, %v3432
        %v3434 = vpop.f32.mrf.mxu0
        %v3435 = vpop.f32.mrf.mxu0
        %v3436 = vpop.f32.mrf.mxu0
        %3437 = vdwg.mxu0
        %v3438 = vadd.f32 %v3397, %v3433
        %3439 = vmatprep.subr.bf16.mxu0 0
        %3440 = vmatpush1.bf16.msra.mxu0 %v1741
        %3441 = vmatprep.subr.bf16.mxu0 0
        %3442 = vmatpush1.bf16.msra.mxu0 %v1740
        %3443 = vmatprep.subr.bf16.mxu0 0
        %3444 = vmatpush1.bf16.msra.mxu0 %v1739
        %3445 = vmatprep.subr.bf16.mxu0 0
        %3446 = vmatpush1.bf16.msra.mxu0 %v1738
        %3447 = vmatprep.subr.bf16.mxu0 0
        %3448 = vmatpush1.bf16.msra.mxu0 %v1737
        %3449 = vmatprep.subr.bf16.mxu0 0
        %3450 = vmatpush1.bf16.msra.mxu0 %v1736
        %3451 = vmatprep.subr.bf16.mxu0 0
        %3452 = vmatpush1.bf16.msra.mxu0 %v1735
        %3453 = vmatprep.subr.bf16.mxu0 0
        %3454 = vmatpush1.bf16.msra.mxu0 %v1734
        %3455 = vmatprep.subr.bf16.mxu0 0
        %3456 = vmatpush2.bf16.msra.mxu0 0
        %3457 = vmatprep.subr.bf16.mxu0 0
        %3458 = vmatpush2.bf16.msra.mxu0 0
        %3459 = vmatprep.subr.bf16.mxu0 0
        %3460 = vmatpush2.bf16.msra.mxu0 0
        %3461 = vmatprep.subr.bf16.mxu0 0
        %3462 = vmatpush2.bf16.msra.mxu0 0
        %3463 = vmatprep.subr.bf16.mxu0 0
        %3464 = vmatpush2.bf16.msra.mxu0 0
        %3465 = vmatprep.subr.bf16.mxu0 0
        %3466 = vmatpush2.bf16.msra.mxu0 0
        %3467 = vmatprep.subr.bf16.mxu0 0
        %3468 = vmatpush2.bf16.msra.mxu0 0
        %3469 = vmatprep.subr.bf16.mxu0 0
        %3470 = vmatpush2.bf16.msra.mxu0 0
        %3471 = vmatprep.mubr.bf16.mxu0 0
        %3472 = vmatmul.mubr.bf16.gmra.mxu0 %v2239
        %v3473 = vpop.f32.mrf.mxu0
        %v3474 = vadd.f32 0.0, %v3473
        %v3475 = vpop.f32.mrf.mxu0
        %v3476 = vpop.f32.mrf.mxu0
        %v3477 = vpop.f32.mrf.mxu0
        %3478 = vdwg.mxu0
        %v3479 = vadd.f32 %v3438, %v3474
        %3480 = vmatprep.subr.bf16.mxu0 0
        %3481 = vmatpush1.bf16.msra.mxu0 %v1851
        %3482 = vmatprep.subr.bf16.mxu0 0
        %3483 = vmatpush1.bf16.msra.mxu0 %v1850
        %3484 = vmatprep.subr.bf16.mxu0 0
        %3485 = vmatpush1.bf16.msra.mxu0 %v1849
        %3486 = vmatprep.subr.bf16.mxu0 0
        %3487 = vmatpush1.bf16.msra.mxu0 %v1848
        %3488 = vmatprep.subr.bf16.mxu0 0
        %3489 = vmatpush1.bf16.msra.mxu0 %v1847
        %3490 = vmatprep.subr.bf16.mxu0 0
        %3491 = vmatpush1.bf16.msra.mxu0 %v1846
        %3492 = vmatprep.subr.bf16.mxu0 0
        %3493 = vmatpush1.bf16.msra.mxu0 %v1845
        %3494 = vmatprep.subr.bf16.mxu0 0
        %3495 = vmatpush1.bf16.msra.mxu0 %v1844
        %3496 = vmatprep.subr.bf16.mxu0 0
        %3497 = vmatpush2.bf16.msra.mxu0 0
        %3498 = vmatprep.subr.bf16.mxu0 0
        %3499 = vmatpush2.bf16.msra.mxu0 0
        %3500 = vmatprep.subr.bf16.mxu0 0
        %3501 = vmatpush2.bf16.msra.mxu0 0
        %3502 = vmatprep.subr.bf16.mxu0 0
        %3503 = vmatpush2.bf16.msra.mxu0 0
        %3504 = vmatprep.subr.bf16.mxu0 0
        %3505 = vmatpush2.bf16.msra.mxu0 0
        %3506 = vmatprep.subr.bf16.mxu0 0
        %3507 = vmatpush2.bf16.msra.mxu0 0
        %3508 = vmatprep.subr.bf16.mxu0 0
        %3509 = vmatpush2.bf16.msra.mxu0 0
        %3510 = vmatprep.subr.bf16.mxu0 0
        %3511 = vmatpush2.bf16.msra.mxu0 0
        %3512 = vmatprep.mubr.bf16.mxu0 0
        %3513 = vmatmul.mubr.bf16.gmra.mxu0 %v2349
        %v3514 = vpop.f32.mrf.mxu0
        %v3515 = vadd.f32 0.0, %v3514
        %v3516 = vpop.f32.mrf.mxu0
        %v3517 = vpop.f32.mrf.mxu0
        %v3518 = vpop.f32.mrf.mxu0
        %3519 = vdwg.mxu0
        %v3520 = vadd.f32 %v3479, %v3515
        %3521 = vmatprep.subr.bf16.mxu0 0
        %3522 = vmatpush1.bf16.msra.mxu0 %v1958
        %3523 = vmatprep.subr.bf16.mxu0 0
        %3524 = vmatpush1.bf16.msra.mxu0 %v1957
        %3525 = vmatprep.subr.bf16.mxu0 0
        %3526 = vmatpush1.bf16.msra.mxu0 %v1956
        %3527 = vmatprep.subr.bf16.mxu0 0
        %3528 = vmatpush1.bf16.msra.mxu0 %v1955
        %3529 = vmatprep.subr.bf16.mxu0 0
        %3530 = vmatpush1.bf16.msra.mxu0 %v1954
        %3531 = vmatprep.subr.bf16.mxu0 0
        %3532 = vmatpush1.bf16.msra.mxu0 %v1953
        %3533 = vmatprep.subr.bf16.mxu0 0
        %3534 = vmatpush1.bf16.msra.mxu0 %v1952
        %3535 = vmatprep.subr.bf16.mxu0 0
        %3536 = vmatpush1.bf16.msra.mxu0 %v1951
        %3537 = vmatprep.subr.bf16.mxu0 0
        %3538 = vmatpush2.bf16.msra.mxu0 0
        %3539 = vmatprep.subr.bf16.mxu0 0
        %3540 = vmatpush2.bf16.msra.mxu0 0
        %3541 = vmatprep.subr.bf16.mxu0 0
        %3542 = vmatpush2.bf16.msra.mxu0 0
        %3543 = vmatprep.subr.bf16.mxu0 0
        %3544 = vmatpush2.bf16.msra.mxu0 0
        %3545 = vmatprep.subr.bf16.mxu0 0
        %3546 = vmatpush2.bf16.msra.mxu0 0
        %3547 = vmatprep.subr.bf16.mxu0 0
        %3548 = vmatpush2.bf16.msra.mxu0 0
        %3549 = vmatprep.subr.bf16.mxu0 0
        %3550 = vmatpush2.bf16.msra.mxu0 0
        %3551 = vmatprep.subr.bf16.mxu0 0
        %3552 = vmatpush2.bf16.msra.mxu0 0
        %3553 = vmatprep.mubr.bf16.mxu0 0
        %3554 = vmatmul.mubr.bf16.gmra.mxu0 %v2456
        %v3555 = vpop.f32.mrf.mxu0
        %v3556 = vadd.f32 0.0, %v3555
        %v3557 = vpop.f32.mrf.mxu0
        %v3558 = vpop.f32.mrf.mxu0
        %v3559 = vpop.f32.mrf.mxu0
        %3560 = vdwg.mxu0
        %v3561 = vadd.f32 %v3520, %v3556
        %3562 = vmatprep.subr.bf16.mxu0 0
        %3563 = vmatpush1.bf16.msra.mxu0 %v2065
        %3564 = vmatprep.subr.bf16.mxu0 0
        %3565 = vmatpush1.bf16.msra.mxu0 %v2064
        %3566 = vmatprep.subr.bf16.mxu0 0
        %3567 = vmatpush1.bf16.msra.mxu0 %v2063
        %3568 = vmatprep.subr.bf16.mxu0 0
        %3569 = vmatpush1.bf16.msra.mxu0 %v2062
        %3570 = vmatprep.subr.bf16.mxu0 0
        %3571 = vmatpush1.bf16.msra.mxu0 %v2061
        %3572 = vmatprep.subr.bf16.mxu0 0
        %3573 = vmatpush1.bf16.msra.mxu0 %v2060
        %3574 = vmatprep.subr.bf16.mxu0 0
        %3575 = vmatpush1.bf16.msra.mxu0 %v2059
        %3576 = vmatprep.subr.bf16.mxu0 0
        %3577 = vmatpush1.bf16.msra.mxu0 %v2058
        %3578 = vmatprep.subr.bf16.mxu0 0
        %3579 = vmatpush2.bf16.msra.mxu0 0
        %3580 = vmatprep.subr.bf16.mxu0 0
        %3581 = vmatpush2.bf16.msra.mxu0 0
        %3582 = vmatprep.subr.bf16.mxu0 0
        %3583 = vmatpush2.bf16.msra.mxu0 0
        %3584 = vmatprep.subr.bf16.mxu0 0
        %3585 = vmatpush2.bf16.msra.mxu0 0
        %3586 = vmatprep.subr.bf16.mxu0 0
        %3587 = vmatpush2.bf16.msra.mxu0 0
        %3588 = vmatprep.subr.bf16.mxu0 0
        %3589 = vmatpush2.bf16.msra.mxu0 0
        %3590 = vmatprep.subr.bf16.mxu0 0
        %3591 = vmatpush2.bf16.msra.mxu0 0
        %3592 = vmatprep.subr.bf16.mxu0 0
        %3593 = vmatpush2.bf16.msra.mxu0 0
        %3594 = vmatprep.mubr.bf16.mxu0 0
        %3595 = vmatmul.mubr.bf16.gmra.mxu0 %v2563
        %v3596 = vpop.f32.mrf.mxu0
        %v3597 = vadd.f32 0.0, %v3596
        %v3598 = vpop.f32.mrf.mxu0
        %v3599 = vpop.f32.mrf.mxu0
        %v3600 = vpop.f32.mrf.mxu0
        %3601 = vdwg.mxu0
        %v3602 = vadd.f32 %v3561, %v3597
        %3603 = vmatprep.subr.bf16.mxu0 0
        %3604 = vmatpush1.bf16.msra.mxu0 %v2172
        %3605 = vmatprep.subr.bf16.mxu0 0
        %3606 = vmatpush1.bf16.msra.mxu0 %v2171
        %3607 = vmatprep.subr.bf16.mxu0 0
        %3608 = vmatpush1.bf16.msra.mxu0 %v2170
        %3609 = vmatprep.subr.bf16.mxu0 0
        %3610 = vmatpush1.bf16.msra.mxu0 %v2169
        %3611 = vmatprep.subr.bf16.mxu0 0
        %3612 = vmatpush1.bf16.msra.mxu0 %v2168
        %3613 = vmatprep.subr.bf16.mxu0 0
        %3614 = vmatpush1.bf16.msra.mxu0 %v2167
        %3615 = vmatprep.subr.bf16.mxu0 0
        %3616 = vmatpush1.bf16.msra.mxu0 %v2166
        %3617 = vmatprep.subr.bf16.mxu0 0
        %3618 = vmatpush1.bf16.msra.mxu0 %v2165
        %3619 = vmatprep.subr.bf16.mxu0 0
        %3620 = vmatpush2.bf16.msra.mxu0 0
        %3621 = vmatprep.subr.bf16.mxu0 0
        %3622 = vmatpush2.bf16.msra.mxu0 0
        %3623 = vmatprep.subr.bf16.mxu0 0
        %3624 = vmatpush2.bf16.msra.mxu0 0
        %3625 = vmatprep.subr.bf16.mxu0 0
        %3626 = vmatpush2.bf16.msra.mxu0 0
        %3627 = vmatprep.subr.bf16.mxu0 0
        %3628 = vmatpush2.bf16.msra.mxu0 0
        %3629 = vmatprep.subr.bf16.mxu0 0
        %3630 = vmatpush2.bf16.msra.mxu0 0
        %3631 = vmatprep.subr.bf16.mxu0 0
        %3632 = vmatpush2.bf16.msra.mxu0 0
        %3633 = vmatprep.subr.bf16.mxu0 0
        %3634 = vmatpush2.bf16.msra.mxu0 0
        %3635 = vmatprep.mubr.bf16.mxu0 0
        %3636 = vmatmul.mubr.bf16.gmra.mxu0 %v2670
        %v3637 = vpop.f32.mrf.mxu0
        %v3638 = vadd.f32 0.0, %v3637
        %v3639 = vpop.f32.mrf.mxu0
        %v3640 = vpop.f32.mrf.mxu0
        %v3641 = vpop.f32.mrf.mxu0
        %3642 = vdwg.mxu0
        %v3643 = vadd.f32 %v3602, %v3638
        %3644 = vmatprep.subr.bf16.mxu0 0
        %3645 = vmatpush1.bf16.msra.mxu0 %v2279
        %3646 = vmatprep.subr.bf16.mxu0 0
        %3647 = vmatpush1.bf16.msra.mxu0 %v2278
        %3648 = vmatprep.subr.bf16.mxu0 0
        %3649 = vmatpush1.bf16.msra.mxu0 %v2277
        %3650 = vmatprep.subr.bf16.mxu0 0
        %3651 = vmatpush1.bf16.msra.mxu0 %v2276
        %3652 = vmatprep.subr.bf16.mxu0 0
        %3653 = vmatpush1.bf16.msra.mxu0 %v2275
        %3654 = vmatprep.subr.bf16.mxu0 0
        %3655 = vmatpush1.bf16.msra.mxu0 %v2274
        %3656 = vmatprep.subr.bf16.mxu0 0
        %3657 = vmatpush1.bf16.msra.mxu0 %v2273
        %3658 = vmatprep.subr.bf16.mxu0 0
        %3659 = vmatpush1.bf16.msra.mxu0 %v2272
        %3660 = vmatprep.subr.bf16.mxu0 0
        %3661 = vmatpush2.bf16.msra.mxu0 0
        %3662 = vmatprep.subr.bf16.mxu0 0
        %3663 = vmatpush2.bf16.msra.mxu0 0
        %3664 = vmatprep.subr.bf16.mxu0 0
        %3665 = vmatpush2.bf16.msra.mxu0 0
        %3666 = vmatprep.subr.bf16.mxu0 0
        %3667 = vmatpush2.bf16.msra.mxu0 0
        %3668 = vmatprep.subr.bf16.mxu0 0
        %3669 = vmatpush2.bf16.msra.mxu0 0
        %3670 = vmatprep.subr.bf16.mxu0 0
        %3671 = vmatpush2.bf16.msra.mxu0 0
        %3672 = vmatprep.subr.bf16.mxu0 0
        %3673 = vmatpush2.bf16.msra.mxu0 0
        %3674 = vmatprep.subr.bf16.mxu0 0
        %3675 = vmatpush2.bf16.msra.mxu0 0
        %3676 = vmatprep.mubr.bf16.mxu0 0
        %3677 = vmatmul.mubr.bf16.gmra.mxu0 %v2777
        %v3678 = vpop.f32.mrf.mxu0
        %v3679 = vadd.f32 0.0, %v3678
        %v3680 = vpop.f32.mrf.mxu0
        %v3681 = vpop.f32.mrf.mxu0
        %v3682 = vpop.f32.mrf.mxu0
        %3683 = vdwg.mxu0
        %v3684 = vadd.f32 %v3643, %v3679
        %s3685 = sadd.s32 %s179, 5
        %s3686 = smul.u32 %s3685, 16
        %s3687 = scalar_lea.vmem %s165, %s3686
        %v3688 = vld [vmem:[%s3687] sm:$0xff]
        %v3689 = vpack.c.bf16 %v3688, %v3688
        %3690 = vmatprep.subr.bf16.mxu0 0
        %3691 = vmatpush1.bf16.msra.mxu0 %v2389
        %3692 = vmatprep.subr.bf16.mxu0 0
        %3693 = vmatpush1.bf16.msra.mxu0 %v2388
        %3694 = vmatprep.subr.bf16.mxu0 0
        %3695 = vmatpush1.bf16.msra.mxu0 %v2387
        %3696 = vmatprep.subr.bf16.mxu0 0
        %3697 = vmatpush1.bf16.msra.mxu0 %v2386
        %3698 = vmatprep.subr.bf16.mxu0 0
        %3699 = vmatpush1.bf16.msra.mxu0 %v2385
        %3700 = vmatprep.subr.bf16.mxu0 0
        %3701 = vmatpush1.bf16.msra.mxu0 %v2384
        %3702 = vmatprep.subr.bf16.mxu0 0
        %3703 = vmatpush1.bf16.msra.mxu0 %v2383
        %3704 = vmatprep.subr.bf16.mxu0 0
        %3705 = vmatpush1.bf16.msra.mxu0 %v2382
        %3706 = vmatprep.subr.bf16.mxu0 0
        %3707 = vmatpush2.bf16.msra.mxu0 0
        %3708 = vmatprep.subr.bf16.mxu0 0
        %3709 = vmatpush2.bf16.msra.mxu0 0
        %3710 = vmatprep.subr.bf16.mxu0 0
        %3711 = vmatpush2.bf16.msra.mxu0 0
        %3712 = vmatprep.subr.bf16.mxu0 0
        %3713 = vmatpush2.bf16.msra.mxu0 0
        %3714 = vmatprep.subr.bf16.mxu0 0
        %3715 = vmatpush2.bf16.msra.mxu0 0
        %3716 = vmatprep.subr.bf16.mxu0 0
        %3717 = vmatpush2.bf16.msra.mxu0 0
        %3718 = vmatprep.subr.bf16.mxu0 0
        %3719 = vmatpush2.bf16.msra.mxu0 0
        %3720 = vmatprep.subr.bf16.mxu0 0
        %3721 = vmatpush2.bf16.msra.mxu0 0
        %3722 = vmatprep.mubr.bf16.mxu0 0
        %3723 = vmatmul.mubr.bf16.gmra.mxu0 %v3689
        %v3724 = vpop.f32.mrf.mxu0
        %v3725 = vadd.f32 0.0, %v3724
        %v3726 = vpop.f32.mrf.mxu0
        %v3727 = vpop.f32.mrf.mxu0
        %v3728 = vpop.f32.mrf.mxu0
        %3729 = vdwg.mxu0
        %v3730 = vadd.f32 %v3684, %v3725
        %v3731 = vld [vmem:[%s3687 + $0x1] sm:$0xff]
        %v3732 = vpack.c.bf16 %v3731, %v3731
        %3733 = vmatprep.subr.bf16.mxu0 0
        %3734 = vmatpush1.bf16.msra.mxu0 %v2496
        %3735 = vmatprep.subr.bf16.mxu0 0
        %3736 = vmatpush1.bf16.msra.mxu0 %v2495
        %3737 = vmatprep.subr.bf16.mxu0 0
        %3738 = vmatpush1.bf16.msra.mxu0 %v2494
        %3739 = vmatprep.subr.bf16.mxu0 0
        %3740 = vmatpush1.bf16.msra.mxu0 %v2493
        %3741 = vmatprep.subr.bf16.mxu0 0
        %3742 = vmatpush1.bf16.msra.mxu0 %v2492
        %3743 = vmatprep.subr.bf16.mxu0 0
        %3744 = vmatpush1.bf16.msra.mxu0 %v2491
        %3745 = vmatprep.subr.bf16.mxu0 0
        %3746 = vmatpush1.bf16.msra.mxu0 %v2490
        %3747 = vmatprep.subr.bf16.mxu0 0
        %3748 = vmatpush1.bf16.msra.mxu0 %v2489
        %3749 = vmatprep.subr.bf16.mxu0 0
        %3750 = vmatpush2.bf16.msra.mxu0 0
        %3751 = vmatprep.subr.bf16.mxu0 0
        %3752 = vmatpush2.bf16.msra.mxu0 0
        %3753 = vmatprep.subr.bf16.mxu0 0
        %3754 = vmatpush2.bf16.msra.mxu0 0
        %3755 = vmatprep.subr.bf16.mxu0 0
        %3756 = vmatpush2.bf16.msra.mxu0 0
        %3757 = vmatprep.subr.bf16.mxu0 0
        %3758 = vmatpush2.bf16.msra.mxu0 0
        %3759 = vmatprep.subr.bf16.mxu0 0
        %3760 = vmatpush2.bf16.msra.mxu0 0
        %3761 = vmatprep.subr.bf16.mxu0 0
        %3762 = vmatpush2.bf16.msra.mxu0 0
        %3763 = vmatprep.subr.bf16.mxu0 0
        %3764 = vmatpush2.bf16.msra.mxu0 0
        %3765 = vmatprep.mubr.bf16.mxu0 0
        %3766 = vmatmul.mubr.bf16.gmra.mxu0 %v3732
        %v3767 = vpop.f32.mrf.mxu0
        %v3768 = vadd.f32 0.0, %v3767
        %v3769 = vpop.f32.mrf.mxu0
        %v3770 = vpop.f32.mrf.mxu0
        %v3771 = vpop.f32.mrf.mxu0
        %3772 = vdwg.mxu0
        %v3773 = vadd.f32 %v3730, %v3768
        %v3774 = vld [vmem:[%s3687 + $0x2] sm:$0xff]
        %v3775 = vpack.c.bf16 %v3774, %v3774
        %3776 = vmatprep.subr.bf16.mxu0 0
        %3777 = vmatpush1.bf16.msra.mxu0 %v2603
        %3778 = vmatprep.subr.bf16.mxu0 0
        %3779 = vmatpush1.bf16.msra.mxu0 %v2602
        %3780 = vmatprep.subr.bf16.mxu0 0
        %3781 = vmatpush1.bf16.msra.mxu0 %v2601
        %3782 = vmatprep.subr.bf16.mxu0 0
        %3783 = vmatpush1.bf16.msra.mxu0 %v2600
        %3784 = vmatprep.subr.bf16.mxu0 0
        %3785 = vmatpush1.bf16.msra.mxu0 %v2599
        %3786 = vmatprep.subr.bf16.mxu0 0
        %3787 = vmatpush1.bf16.msra.mxu0 %v2598
        %3788 = vmatprep.subr.bf16.mxu0 0
        %3789 = vmatpush1.bf16.msra.mxu0 %v2597
        %3790 = vmatprep.subr.bf16.mxu0 0
        %3791 = vmatpush1.bf16.msra.mxu0 %v2596
        %3792 = vmatprep.subr.bf16.mxu0 0
        %3793 = vmatpush2.bf16.msra.mxu0 0
        %3794 = vmatprep.subr.bf16.mxu0 0
        %3795 = vmatpush2.bf16.msra.mxu0 0
        %3796 = vmatprep.subr.bf16.mxu0 0
        %3797 = vmatpush2.bf16.msra.mxu0 0
        %3798 = vmatprep.subr.bf16.mxu0 0
        %3799 = vmatpush2.bf16.msra.mxu0 0
        %3800 = vmatprep.subr.bf16.mxu0 0
        %3801 = vmatpush2.bf16.msra.mxu0 0
        %3802 = vmatprep.subr.bf16.mxu0 0
        %3803 = vmatpush2.bf16.msra.mxu0 0
        %3804 = vmatprep.subr.bf16.mxu0 0
        %3805 = vmatpush2.bf16.msra.mxu0 0
        %3806 = vmatprep.subr.bf16.mxu0 0
        %3807 = vmatpush2.bf16.msra.mxu0 0
        %3808 = vmatprep.mubr.bf16.mxu0 0
        %3809 = vmatmul.mubr.bf16.gmra.mxu0 %v3775
        %v3810 = vpop.f32.mrf.mxu0
        %v3811 = vadd.f32 0.0, %v3810
        %v3812 = vpop.f32.mrf.mxu0
        %v3813 = vpop.f32.mrf.mxu0
        %v3814 = vpop.f32.mrf.mxu0
        %3815 = vdwg.mxu0
        %v3816 = vadd.f32 %v3773, %v3811
        %v3817 = vld [vmem:[%s3687 + $0x3] sm:$0xff]
        %v3818 = vpack.c.bf16 %v3817, %v3817
        %3819 = vmatprep.subr.bf16.mxu0 0
        %3820 = vmatpush1.bf16.msra.mxu0 %v2710
        %3821 = vmatprep.subr.bf16.mxu0 0
        %3822 = vmatpush1.bf16.msra.mxu0 %v2709
        %3823 = vmatprep.subr.bf16.mxu0 0
        %3824 = vmatpush1.bf16.msra.mxu0 %v2708
        %3825 = vmatprep.subr.bf16.mxu0 0
        %3826 = vmatpush1.bf16.msra.mxu0 %v2707
        %3827 = vmatprep.subr.bf16.mxu0 0
        %3828 = vmatpush1.bf16.msra.mxu0 %v2706
        %3829 = vmatprep.subr.bf16.mxu0 0
        %3830 = vmatpush1.bf16.msra.mxu0 %v2705
        %3831 = vmatprep.subr.bf16.mxu0 0
        %3832 = vmatpush1.bf16.msra.mxu0 %v2704
        %3833 = vmatprep.subr.bf16.mxu0 0
        %3834 = vmatpush1.bf16.msra.mxu0 %v2703
        %3835 = vmatprep.subr.bf16.mxu0 0
        %3836 = vmatpush2.bf16.msra.mxu0 0
        %3837 = vmatprep.subr.bf16.mxu0 0
        %3838 = vmatpush2.bf16.msra.mxu0 0
        %3839 = vmatprep.subr.bf16.mxu0 0
        %3840 = vmatpush2.bf16.msra.mxu0 0
        %3841 = vmatprep.subr.bf16.mxu0 0
        %3842 = vmatpush2.bf16.msra.mxu0 0
        %3843 = vmatprep.subr.bf16.mxu0 0
        %3844 = vmatpush2.bf16.msra.mxu0 0
        %3845 = vmatprep.subr.bf16.mxu0 0
        %3846 = vmatpush2.bf16.msra.mxu0 0
        %3847 = vmatprep.subr.bf16.mxu0 0
        %3848 = vmatpush2.bf16.msra.mxu0 0
        %3849 = vmatprep.subr.bf16.mxu0 0
        %3850 = vmatpush2.bf16.msra.mxu0 0
        %3851 = vmatprep.mubr.bf16.mxu0 0
        %3852 = vmatmul.mubr.bf16.gmra.mxu0 %v3818
        %v3853 = vpop.f32.mrf.mxu0
        %v3854 = vadd.f32 0.0, %v3853
        %v3855 = vpop.f32.mrf.mxu0
        %v3856 = vpop.f32.mrf.mxu0
        %v3857 = vpop.f32.mrf.mxu0
        %3858 = vdwg.mxu0
        %v3859 = vadd.f32 %v3816, %v3854
        %v3860 = vld [vmem:[%s3687 + $0x4] sm:$0xff]
        %v3861 = vpack.c.bf16 %v3860, %v3860
        %3862 = vmatprep.subr.bf16.mxu0 0
        %3863 = vmatpush1.bf16.msra.mxu0 %v2817
        %3864 = vmatprep.subr.bf16.mxu0 0
        %3865 = vmatpush1.bf16.msra.mxu0 %v2816
        %3866 = vmatprep.subr.bf16.mxu0 0
        %3867 = vmatpush1.bf16.msra.mxu0 %v2815
        %3868 = vmatprep.subr.bf16.mxu0 0
        %3869 = vmatpush1.bf16.msra.mxu0 %v2814
        %3870 = vmatprep.subr.bf16.mxu0 0
        %3871 = vmatpush1.bf16.msra.mxu0 %v2813
        %3872 = vmatprep.subr.bf16.mxu0 0
        %3873 = vmatpush1.bf16.msra.mxu0 %v2812
        %3874 = vmatprep.subr.bf16.mxu0 0
        %3875 = vmatpush1.bf16.msra.mxu0 %v2811
        %3876 = vmatprep.subr.bf16.mxu0 0
        %3877 = vmatpush1.bf16.msra.mxu0 %v2810
        %3878 = vmatprep.subr.bf16.mxu0 0
        %3879 = vmatpush2.bf16.msra.mxu0 0
        %3880 = vmatprep.subr.bf16.mxu0 0
        %3881 = vmatpush2.bf16.msra.mxu0 0
        %3882 = vmatprep.subr.bf16.mxu0 0
        %3883 = vmatpush2.bf16.msra.mxu0 0
        %3884 = vmatprep.subr.bf16.mxu0 0
        %3885 = vmatpush2.bf16.msra.mxu0 0
        %3886 = vmatprep.subr.bf16.mxu0 0
        %3887 = vmatpush2.bf16.msra.mxu0 0
        %3888 = vmatprep.subr.bf16.mxu0 0
        %3889 = vmatpush2.bf16.msra.mxu0 0
        %3890 = vmatprep.subr.bf16.mxu0 0
        %3891 = vmatpush2.bf16.msra.mxu0 0
        %3892 = vmatprep.subr.bf16.mxu0 0
        %3893 = vmatpush2.bf16.msra.mxu0 0
        %3894 = vmatprep.mubr.bf16.mxu0 0
        %3895 = vmatmul.mubr.bf16.gmra.mxu0 %v3861
        %v3896 = vpop.f32.mrf.mxu0
        %v3897 = vadd.f32 0.0, %v3896
        %v3898 = vpop.f32.mrf.mxu0
        %v3899 = vpop.f32.mrf.mxu0
        %v3900 = vpop.f32.mrf.mxu0
        %3901 = vdwg.mxu0
        %v3902 = vadd.f32 %v3859, %v3897
        %v3903 = vmax.f32 %v2866, %v3902
        %3904 = vst [vmem:[#allocation2] sm:$0xff] %v3903
        %v3905 = vld [vmem:[#allocation2] ss:$2 sm:$0xf]
        %s3906 = scalar_lea.vmem [#allocation2], 1
        %v3907 = vld [vmem:[%s3906] ss:$2 sm:$0xf]
        %v3908 = vmax.f32 %v3905, %v3907
        %v3910 = vlaneseq
        %v3911 = vshrl.u32 %v3910, 7
        %v3912 = vsub.s32 0, %v3911
        %v3913 = vrot.slane %v172, %v3912
        %v3915 = vadd.f32 %v3908, %v3913
        %v3916 = vmax.f32 %v3915, 0.0
        %s3917 = smul.u32 %s174, 4
        %s3918 = scalar_lea.vmem %s170, %s3917
        %3919 = vst [vmem:[%s3918] sm:$0xf] %v3916
      $region37: #{simple_classifier_forward.4} parent=31 // loop_footer
        %s178 = sadd.s32 1, %s174
      $region38: #{simple_classifier_forward.4} parent=31 // loop_footer_branch
        %173 = sbr.rel target = $region34
      $region39: #{simple_classifier_forward.4} parent=31 // loop_exit
        _
      %p3920 = scmp.lt.s32.totalorder %s14, 1
      %s3921 = scalar_select %p3920, %s14, 1
      %s3922 = smul.addr %s3921, 4
      %s3923 = smul.addr %s3922, 4
      %s3924 = scalar_lea.vmem %s3, %s3923
      // Predicated region
      $region40: #{simple_classifier_forward.4} parent=31 // pred_check
        %p3925 = pneg %p100
      $region41: #{simple_classifier_forward.4} parent=31 // pred_check_branch
        %3927 = sbr.rel (%p3925) target = $region43
      $region42: #{simple_classifier_forward.4} parent=31 // pred_region
        _
      $region43: #{simple_classifier_forward.4} parent=31 // pred_fallthru
        _
    $region32: #{simple_classifier_forward.4} parent=5 // pred_fallthru
      _
    %p3928 = scmp.le.s32.totalorder 2, %s9
    // Predicated region
    $region44: #{simple_classifier_forward.4} parent=5 // pred_check
      %p3929 = pneg %p3928
    $region45: #{simple_classifier_forward.4} parent=5 // pred_check_branch
      %3931 = sbr.rel (%p3929) target = $region47
    $region46: #{simple_classifier_forward.4} parent=5 // pred_region
      %s3932 = ssub.s32 %s9, 2
      // Predicated region
      $region48: #{simple_classifier_forward.4} parent=46 // pred_check
        %p3933 = pneg %p106
      $region49: #{simple_classifier_forward.4} parent=46 // pred_check_branch
        %3935 = sbr.rel (%p3933) target = $region51
      $region50: #{simple_classifier_forward.4} parent=46 // pred_region
        %p3936 = scmp.lt.s32.totalorder %s15, 1
        %s3937 = scalar_select %p3936, %s15, 1
        %s3938 = smul.addr %s3937, 4
        %s3939 = smul.addr %s3938, 4
        %s3940 = scalar_lea.vmem %s3, %s3939
      $region51: #{simple_classifier_forward.4} parent=46 // pred_fallthru
        _
    $region47: #{simple_classifier_forward.4} parent=5 // pred_fallthru
      _
  $region6: #{simple_classifier_forward.4} parent=0 // loop_footer
    %s13 = sadd.s32 1, %s9
  $region7: #{simple_classifier_forward.4} parent=0 // loop_footer_branch
    %8 = sbr.rel target = $region3
  $region8: #{simple_classifier_forward.4} parent=0 // loop_exit
    _

</llo_original>
